<compile_context>
chip_gen: v7x
topology: tpu7x:2x2x1
jax: 0.10.0
libtpu: 0.0.40
codegen_flags: <defaults>
</compile_context>

<pallas_src>
import math
import numpy as np
import jax
import jax.numpy as jnp
from jax import lax
from jax.experimental import pallas as pl
from jax.experimental.pallas import tpu as pltpu

EPS = 1e-5
INV_SQRT2 = 0.7071067811865476
# Set to jnp.bfloat16 on v6e/v7x for higher MXU throughput (accumulation stays
# f32 via preferred_element_type). Kept at f32 to match PyTorch numerics.
MXU_DTYPE = jnp.float32


def _pick_row_tile(total, cap=512):
    """Largest multiple-of-8 divisor of `total` <= cap leaving >= 2 grid steps."""
    best = None
    t = 8
    while t <= min(total, cap):
        if total % t == 0 and total // t >= 2:
            best = t
        t += 8
    return best if best is not None else total


# ---------------------------------------------------------------------------
# Pallas kernels
# ---------------------------------------------------------------------------
def layernorm_pallas(x, gamma, beta):
    """Standalone LayerNorm (only used when window padding is needed, so that
    padded tokens enter attention as exact zeros like the reference)."""
    B, L, C = x.shape
    BL = B * L
    tile = _pick_row_tile(BL)
    x2 = x.reshape(BL, C)

    def kernel(x_ref, g_ref, b_ref, o_ref):
        xv = x_ref[...].astype(jnp.float32)
        mean = jnp.mean(xv, axis=-1, keepdims=True)
        var = jnp.mean((xv - mean) ** 2, axis=-1, keepdims=True)
        o_ref[...] = ((xv - mean) * lax.rsqrt(var + EPS) * g_ref[...]
                      + b_ref[...]).astype(o_ref.dtype)

    out2 = pl.pallas_call(
        kernel,
        out_shape=jax.ShapeDtypeStruct((BL, C), x.dtype),
        grid=(BL // tile,),
        in_specs=[
            pl.BlockSpec((tile, C), lambda i: (i, 0)),
            pl.BlockSpec((1, C), lambda i: (0, 0)),
            pl.BlockSpec((1, C), lambda i: (0, 0)),
        ],
        out_specs=pl.BlockSpec((tile, C), lambda i: (i, 0)),
        compiler_params=pltpu.CompilerParams(dimension_semantics=("parallel",)),
    )(x2, gamma.reshape(1, C), beta.reshape(1, C))
    return out2.reshape(B, L, C)


def window_attention_pallas(xw, bias, g1, b1, wqkv, bqkv, wp, bp, num_heads,
                            apply_ln):
    """Fused [LN1 +] windowed multi-head self attention + output projection.

    xw:   (B, nW, N, C)            all windows of each batch element
    bias: (nW_b, num_heads, N, N)  rel-pos bias (+ shift mask); nW_b in {1, nW}
    One grid step processes all nW windows of one batch element; grid=(B,) is
    marked "parallel" so v7x megacore splits batch elements across TensorCores.
    """
    B, nW, N, C = xw.shape
    hd = C // num_heads
    T = nW * N
    C3 = 3 * C
    nW_b = bias.shape[0]

    def kernel(x_ref, g_ref, bln_ref, wqkv_ref, bqkv_ref, wp_ref, bp_ref,
               bias_ref, o_ref, acc_ref):
        x = x_ref[0].reshape(T, C).astype(jnp.float32)
        if apply_ln:  # static: pre-attention LayerNorm fused in (no-pad case)
            mean = jnp.mean(x, axis=-1, keepdims=True)
            var = jnp.mean((x - mean) ** 2, axis=-1, keepdims=True)
            x = (x - mean) * lax.rsqrt(var + EPS) * g_ref[...] + bln_ref[...]
        # one fused QKV matmul (1/sqrt(head_dim) already folded into q slice)
        qkv = jnp.dot(x.astype(MXU_DTYPE), wqkv_ref[...].astype(MXU_DTYPE),
                      preferred_element_type=jnp.float32) + bqkv_ref[...]
        q = qkv[:, :C].reshape(nW, N, C)
        k = qkv[:, C:2 * C].reshape(nW, N, C)
        v = qkv[:, 2 * C:].reshape(nW, N, C)
        bias_v = bias_ref[...]                                  # (nW_b, H, N, N)
        for h in range(num_heads):      # static loop; each matmul batched over nW windows
            qh = q[:, :, h * hd:(h + 1) * hd]
            kh = k[:, :, h * hd:(h + 1) * hd]
            vh = v[:, :, h * hd:(h + 1) * hd]
            # contract on last dims (no explicit transpose), batched over windows
            s = jnp.einsum('wnd,wmd->wnm', qh.astype(MXU_DTYPE),
                           kh.astype(MXU_DTYPE),
                           preferred_element_type=jnp.float32)  # (nW, N, N)
            s = s + bias_v[:, h]               # broadcasts over windows if nW_b == 1
            s = s - jnp.max(s, axis=-1, keepdims=True)
            e = jnp.exp(s)
            # EUP approximate reciprocal: softmax denominator off the VALU critical path
            p = e * pl.reciprocal(jnp.sum(e, axis=-1, keepdims=True), approx=True)
            oh = jnp.einsum('wnm,wmd->wnd', p.astype(MXU_DTYPE),
                            vh.astype(MXU_DTYPE),
                            preferred_element_type=jnp.float32)  # (nW, N, hd)
            acc_ref[:, h * hd:(h + 1) * hd] = oh.reshape(T, hd)  # slab write, no concat
        out = jnp.dot(acc_ref[...].astype(MXU_DTYPE), wp_ref[...].astype(MXU_DTYPE),
                      preferred_element_type=jnp.float32) + bp_ref[...]
        o_ref[0] = out.reshape(nW, N, C).astype(o_ref.dtype)

    return pl.pallas_call(
        kernel,
        out_shape=jax.ShapeDtypeStruct((B, nW, N, C), xw.dtype),
        grid=(B,),
        in_specs=[
            pl.BlockSpec((1, nW, N, C), lambda b: (b, 0, 0, 0)),
            pl.BlockSpec((1, C), lambda b: (0, 0)),
            pl.BlockSpec((1, C), lambda b: (0, 0)),
            pl.BlockSpec((C, C3), lambda b: (0, 0)),
            pl.BlockSpec((1, C3), lambda b: (0, 0)),
            pl.BlockSpec((C, C), lambda b: (0, 0)),
            pl.BlockSpec((1, C), lambda b: (0, 0)),
            pl.BlockSpec((nW_b, num_heads, N, N), lambda b: (0, 0, 0, 0)),
        ],
        out_specs=pl.BlockSpec((1, nW, N, C), lambda b: (b, 0, 0, 0)),
        scratch_shapes=[pltpu.VMEM((T, C), jnp.float32)],
        compiler_params=pltpu.CompilerParams(dimension_semantics=("parallel",)),
    )(xw, g1.reshape(1, C), b1.reshape(1, C), wqkv, bqkv.reshape(1, C3),
      wp, bp.reshape(1, C), bias)


def mlp_residual_pallas(shortcut, attn_out, gamma, beta, w1, b1, w2, b2):
    """x = shortcut + attn_out; out = x + MLP(LayerNorm(x)); row-tiled."""
    B, L, C = shortcut.shape
    Hd = w1.shape[1]
    BL = B * L
    tile = _pick_row_tile(BL)
    s2 = shortcut.reshape(BL, C)
    a2 = attn_out.reshape(BL, C)

    def kernel(s_ref, a_ref, g_ref, be_ref, w1_ref, b1_ref, w2_ref, b2_ref, o_ref):
        x = s_ref[...].astype(jnp.float32) + a_ref[...].astype(jnp.float32)
        mean = jnp.mean(x, axis=-1, keepdims=True)
        var = jnp.mean((x - mean) ** 2, axis=-1, keepdims=True)
        y = (x - mean) * lax.rsqrt(var + EPS) * g_ref[...] + be_ref[...]
        h = jnp.dot(y.astype(MXU_DTYPE), w1_ref[...].astype(MXU_DTYPE),
                    preferred_element_type=jnp.float32) + b1_ref[...]
        h = 0.5 * h * (1.0 + lax.erf(h * INV_SQRT2))        # exact GELU (PyTorch default)
        out = x + jnp.dot(h.astype(MXU_DTYPE), w2_ref[...].astype(MXU_DTYPE),
                          preferred_element_type=jnp.float32) + b2_ref[...]
        o_ref[...] = out.astype(o_ref.dtype)

    out2 = pl.pallas_call(
        kernel,
        out_shape=jax.ShapeDtypeStruct((BL, C), shortcut.dtype),
        grid=(BL // tile,),
        in_specs=[
            pl.BlockSpec((tile, C), lambda i: (i, 0)),
            pl.BlockSpec((tile, C), lambda i: (i, 0)),
            pl.BlockSpec((1, C), lambda i: (0, 0)),
            pl.BlockSpec((1, C), lambda i: (0, 0)),
            pl.BlockSpec((C, Hd), lambda i: (0, 0)),
            pl.BlockSpec((1, Hd), lambda i: (0, 0)),
            pl.BlockSpec((Hd, C), lambda i: (0, 0)),
            pl.BlockSpec((1, C), lambda i: (0, 0)),
        ],
        out_specs=pl.BlockSpec((tile, C), lambda i: (i, 0)),
        compiler_params=pltpu.CompilerParams(dimension_semantics=("parallel",)),
    )(s2, a2, gamma.reshape(1, C), beta.reshape(1, C), w1, b1.reshape(1, Hd),
      w2, b2.reshape(1, C))
    return out2.reshape(B, L, C)


# ---------------------------------------------------------------------------
# Glue: Swin block / BasicLayer forward (dropout / drop_path = 0, eval mode)
# ---------------------------------------------------------------------------
def relative_position_index_np(ws):
    coords = np.stack(np.meshgrid(np.arange(ws), np.arange(ws), indexing="ij"))
    coords_flatten = coords.reshape(2, -1)
    rel = coords_flatten[:, :, None] - coords_flatten[:, None, :]
    rel = rel.transpose(1, 2, 0).astype(np.int64).copy()
    rel[:, :, 0] += ws - 1
    rel[:, :, 1] += ws - 1
    rel[:, :, 0] *= 2 * ws - 1
    return rel.sum(-1)                                          # (N, N)


def create_mask_np(H, W, window_size, shift_size):
    Hp = int(np.ceil(H / window_size)) * window_size
    Wp = int(np.ceil(W / window_size)) * window_size
    img_mask = np.zeros((1, Hp, Wp, 1), dtype=np.float32)
    slices = (slice(0, -window_size),
              slice(-window_size, -shift_size),
              slice(-shift_size, None))
    cnt = 0
    for h in slices:
        for w in slices:
            img_mask[:, h, w, :] = cnt
            cnt += 1
    ws = window_size
    mw = img_mask.reshape(1, Hp // ws, ws, Wp // ws, ws, 1)
    mw = mw.transpose(0, 1, 3, 2, 4, 5).reshape(-1, ws * ws)    # (nW, N)
    attn_mask = mw[:, None, :] - mw[:, :, None]
    attn_mask = np.where(attn_mask != 0, -100.0, 0.0).astype(np.float32)
    return attn_mask                                            # (nW, N, N)


def swin_block_forward(x, H, W, p, window_size, shift_size, num_heads, attn_mask):
    B, L, C = x.shape
    ws = window_size
    N = ws * ws

    shortcut = x
    pad_r = (ws - W % ws) % ws
    pad_b = (ws - H % ws) % ws
    fuse_ln = (pad_r == 0 and pad_b == 0)
    if fuse_ln:
        xn = x                              # LN1 fused into the attention kernel
    else:
        xn = layernorm_pallas(x, p["g1"], p["b1"])   # keep reference pad-after-LN order
    xn = xn.reshape(B, H, W, C)
    if pad_r > 0 or pad_b > 0:
        xn = jnp.pad(xn, ((0, 0), (0, pad_b), (0, pad_r), (0, 0)))
    Hp, Wp = H + pad_b, W + pad_r
    nWh, nWw = Hp // ws, Wp // ws
    nW = nWh * nWw

    if shift_size > 0:
        xn = jnp.roll(xn, shift=(-shift_size, -shift_size), axis=(1, 2))
        # combine rel-pos bias + shift mask once per block: (nW, heads, N, N)
        bias = attn_mask[:, None, :, :] + p["rel_bias"][None, :, :, :]
    else:
        bias = p["rel_bias"][None, :, :, :]          # (1, heads, N, N); no mask at all

    # window partition -> (B, nW, N, C)
    xw = xn.reshape(B, nWh, ws, nWw, ws, C).transpose(0, 1, 3, 2, 4, 5)
    xw = xw.reshape(B, nW, N, C)

    attn_out = window_attention_pallas(
        xw, bias, p["g1"], p["b1"], p["wqkv"], p["bqkv"], p["wp"], p["bp"],
        num_heads, apply_ln=fuse_ln)

    # window reverse -> (B, Hp, Wp, C)
    xr = attn_out.reshape(B, nWh, nWw, ws, ws, C).transpose(0, 1, 3, 2, 4, 5)
    xr = xr.reshape(B, Hp, Wp, C)
    if shift_size > 0:
        xr = jnp.roll(xr, shift=(shift_size, shift_size), axis=(1, 2))
    if pad_r > 0 or pad_b > 0:
        xr = xr[:, :H, :W, :]
    xr = xr.reshape(B, H * W, C)

    # fused: x = shortcut + attn (drop_path=0); out = x + MLP(LN2(x))
    return mlp_residual_pallas(shortcut, xr, p["g2"], p["b2"],
                               p["w1"], p["bb1"], p["w2"], p["bb2"])


def basic_layer_forward(x, H, W, block_params, window_size, num_heads):
    shift_size = window_size // 2
    attn_mask = jnp.asarray(create_mask_np(H, W, window_size, shift_size))
    for i, p in enumerate(block_params):
        s = 0 if i % 2 == 0 else shift_size
        x = swin_block_forward(x, H, W, p, window_size, s, num_heads, attn_mask)
    # downsample is None -> (x, H, W) returned unchanged
    return x, H, W


# ---------------------------------------------------------------------------
# Deterministic parameter init (synthetic weights)
# ---------------------------------------------------------------------------
def init_block_params(key, dim, num_heads, window_size, mlp_ratio=4.0):
    hidden = int(dim * mlp_ratio)
    N = window_size * window_size
    hd = dim // num_heads
    scale = hd ** (-0.5)
    keys = jax.random.split(key, 10)
    rpi = relative_position_index_np(window_size)               # (N, N)
    table = jax.random.normal(keys[0], ((2 * window_size - 1) ** 2, num_heads),
                              jnp.float32) * 0.02
    rel_bias = table[rpi.reshape(-1)].reshape(N, N, num_heads).transpose(2, 0, 1)

    def w(k, shape):
        return jax.random.normal(k, shape, jnp.float32) * 0.02

    wq, wk, wv = w(keys[1], (dim, dim)), w(keys[2], (dim, dim)), w(keys[3], (dim, dim))
    bq = jnp.zeros((dim,), jnp.float32)
    bk = jnp.zeros((dim,), jnp.float32)
    bv = jnp.zeros((dim,), jnp.float32)
    # fused QKV with 1/sqrt(head_dim) folded into the q slice at prep time
    wqkv = jnp.concatenate([wq * scale, wk, wv], axis=1)        # (dim, 3*dim)
    bqkv = jnp.concatenate([bq * scale, bk, bv], axis=0)        # (3*dim,)

    return {
        "g1": jnp.ones((dim,), jnp.float32), "b1": jnp.zeros((dim,), jnp.float32),
        "wqkv": wqkv, "bqkv": bqkv,
        "wp": w(keys[4], (dim, dim)), "bp": jnp.zeros((dim,), jnp.float32),
        "rel_bias": rel_bias,
        "g2": jnp.ones((dim,), jnp.float32), "b2": jnp.zeros((dim,), jnp.float32),
        "w1": w(keys[5], (dim, hidden)), "bb1": jnp.zeros((hidden,), jnp.float32),
        "w2": w(keys[6], (hidden, dim)), "bb2": jnp.zeros((dim,), jnp.float32),
    }


if __name__ == "__main__":
    # Small config consistent with BasicLayer: dim=32, depth=2, num_heads=4,
    # window_size=4, feature map H=W=8, batch=2.
    B, H, W = 2, 8, 8
    dim, depth, num_heads, window_size = 32, 2, 4, 4

    key = jax.random.PRNGKey(0)
    kx, kp = jax.random.split(key)
    x = jax.random.normal(kx, (B, H * W, dim), jnp.float32)

    block_keys = jax.random.split(kp, depth)
    block_params = [init_block_params(block_keys[i], dim, num_heads, window_size)
                    for i in range(depth)]

    # jit the ENTIRE BasicLayer forward: all window-partition / roll / pad glue
    # fuses into the surrounding XLA program, bias+mask combine is folded, and
    # per-op dispatch overhead disappears (both Pallas kernels stay as-is).
    fwd = jax.jit(lambda xx, pp: basic_layer_forward(
        xx, H, W, pp, window_size, num_heads)[0])

    out = fwd(x, block_params)
    out = jax.block_until_ready(out)
    Ho, Wo = H, W                           # downsample is None
    assert out.shape == (B, H * W, dim) and (Ho, Wo) == (H, W)
    print("KERNEL_OK")
</pallas_src>

<mosaic_0001>
module attributes {stable_mosaic.version = 11 : i64} {
  func.func @kernel(%arg0: i32, %arg1: memref<1x4x16x32xf32, #tpu.memory_space<vmem>>, %arg2: memref<1x32xf32, #tpu.memory_space<vmem>>, %arg3: memref<1x32xf32, #tpu.memory_space<vmem>>, %arg4: memref<32x96xf32, #tpu.memory_space<vmem>>, %arg5: memref<1x96xf32, #tpu.memory_space<vmem>>, %arg6: memref<32x32xf32, #tpu.memory_space<vmem>>, %arg7: memref<1x32xf32, #tpu.memory_space<vmem>>, %arg8: memref<1x4x16x16xf32, #tpu.memory_space<vmem>>, %arg9: memref<1x4x16x32xf32, #tpu.memory_space<vmem>>, %arg10: memref<64x32xf32, #tpu.memory_space<vmem>>) attributes {dimension_semantics = [#tpu.dimension_semantics<parallel>], iteration_bounds = array<i64: 2>, scalar_prefetch = 0 : i64, scratch_operands = 1 : i64, tpu.core_type = #tpu.core_type<tc>, window_params = [{transform_indices = @transform_0, window_bounds = array<i64: 1, 4, 16, 32>}, {pipeline_mode = #tpu.pipeline_mode<synchronous>, transform_indices = @transform_1, window_bounds = array<i64: 1, 32>}, {pipeline_mode = #tpu.pipeline_mode<synchronous>, transform_indices = @transform_2, window_bounds = array<i64: 1, 32>}, {pipeline_mode = #tpu.pipeline_mode<synchronous>, transform_indices = @transform_3, window_bounds = array<i64: 32, 96>}, {pipeline_mode = #tpu.pipeline_mode<synchronous>, transform_indices = @transform_4, window_bounds = array<i64: 1, 96>}, {pipeline_mode = #tpu.pipeline_mode<synchronous>, transform_indices = @transform_5, window_bounds = array<i64: 32, 32>}, {pipeline_mode = #tpu.pipeline_mode<synchronous>, transform_indices = @transform_6, window_bounds = array<i64: 1, 32>}, {pipeline_mode = #tpu.pipeline_mode<synchronous>, transform_indices = @transform_7, window_bounds = array<i64: 1, 4, 16, 16>}, {transform_indices = @transform_8, window_bounds = array<i64: 1, 4, 16, 32>}]} {
    %c0 = arith.constant 0 : index
    %c0_0 = arith.constant 0 : index
    %c0_1 = arith.constant 0 : index
    %c0_2 = arith.constant 0 : index
    %0 = vector.load %arg1[%c0, %c0_0, %c0_1, %c0_2] : memref<1x4x16x32xf32, #tpu.memory_space<vmem>>, vector<1x4x16x32xf32>
    %1 = vector.shape_cast %0 : vector<1x4x16x32xf32> to vector<4x16x32xf32>
    %2 = vector.shape_cast %1 : vector<4x16x32xf32> to vector<64x32xf32>
    %cst = arith.constant dense<0.000000e+00> : vector<64xf32>
    %3 = vector.multi_reduction <add>, %2, %cst [1] : vector<64x32xf32> to vector<64xf32>
    %4 = vector.shape_cast %3 : vector<64xf32> to vector<64x1xf32>
    %cst_3 = arith.constant 3.200000e+01 : f32
    %5 = vector.broadcast %cst_3 : f32 to vector<64x1xf32>
    %6 = arith.divf %4, %5 : vector<64x1xf32>
    %7 = vector.broadcast %6 : vector<64x1xf32> to vector<64x32xf32>
    %8 = arith.subf %2, %7 : vector<64x32xf32>
    %9 = arith.mulf %8, %8 : vector<64x32xf32>
    %cst_4 = arith.constant dense<0.000000e+00> : vector<64xf32>
    %10 = vector.multi_reduction <add>, %9, %cst_4 [1] : vector<64x32xf32> to vector<64xf32>
    %11 = vector.shape_cast %10 : vector<64xf32> to vector<64x1xf32>
    %cst_5 = arith.constant 3.200000e+01 : f32
    %12 = vector.broadcast %cst_5 : f32 to vector<64x1xf32>
    %13 = arith.divf %11, %12 : vector<64x1xf32>
    %14 = vector.broadcast %6 : vector<64x1xf32> to vector<64x32xf32>
    %15 = arith.subf %2, %14 : vector<64x32xf32>
    %cst_6 = arith.constant 9.99999974E-6 : f32
    %16 = vector.broadcast %cst_6 : f32 to vector<64x1xf32>
    %17 = arith.addf %13, %16 : vector<64x1xf32>
    %18 = math.rsqrt %17 : vector<64x1xf32>
    %19 = vector.broadcast %18 : vector<64x1xf32> to vector<64x32xf32>
    %20 = arith.mulf %15, %19 : vector<64x32xf32>
    %c0_7 = arith.constant 0 : index
    %c0_8 = arith.constant 0 : index
    %21 = vector.load %arg2[%c0_7, %c0_8] : memref<1x32xf32, #tpu.memory_space<vmem>>, vector<1x32xf32>
    %22 = vector.broadcast %21 : vector<1x32xf32> to vector<64x32xf32>
    %23 = arith.mulf %20, %22 : vector<64x32xf32>
    %c0_9 = arith.constant 0 : index
    %c0_10 = arith.constant 0 : index
    %24 = vector.load %arg3[%c0_9, %c0_10] : memref<1x32xf32, #tpu.memory_space<vmem>>, vector<1x32xf32>
    %25 = vector.broadcast %24 : vector<1x32xf32> to vector<64x32xf32>
    %26 = arith.addf %23, %25 : vector<64x32xf32>
    %c0_11 = arith.constant 0 : index
    %c0_12 = arith.constant 0 : index
    %27 = vector.load %arg4[%c0_11, %c0_12] : memref<32x96xf32, #tpu.memory_space<vmem>>, vector<32x96xf32>
    %cst_13 = arith.constant dense<0.000000e+00> : vector<64x96xf32>
    %28 = tpu.matmul %26, %27, %cst_13 {dimension_numbers = #tpu.dot_dimension_numbers<[1], [0], [0], [1], [0, 0, 1, 1], [], []>} : vector<64x32xf32>, vector<32x96xf32>, vector<64x96xf32> -> vector<64x96xf32>
    %c0_14 = arith.constant 0 : index
    %c0_15 = arith.constant 0 : index
    %29 = vector.load %arg5[%c0_14, %c0_15] : memref<1x96xf32, #tpu.memory_space<vmem>>, vector<1x96xf32>
    %30 = vector.broadcast %29 : vector<1x96xf32> to vector<64x96xf32>
    %31 = arith.addf %28, %30 : vector<64x96xf32>
    %32 = vector.extract_strided_slice %31 {offsets = [0, 0], sizes = [64, 32], strides = [1, 1]} : vector<64x96xf32> to vector<64x32xf32>
    %33 = vector.shape_cast %32 : vector<64x32xf32> to vector<4x16x32xf32>
    %34 = vector.extract_strided_slice %31 {offsets = [0, 32], sizes = [64, 32], strides = [1, 1]} : vector<64x96xf32> to vector<64x32xf32>
    %35 = vector.shape_cast %34 : vector<64x32xf32> to vector<4x16x32xf32>
    %36 = vector.extract_strided_slice %31 {offsets = [0, 64], sizes = [64, 32], strides = [1, 1]} : vector<64x96xf32> to vector<64x32xf32>
    %37 = vector.shape_cast %36 : vector<64x32xf32> to vector<4x16x32xf32>
    %c0_16 = arith.constant 0 : index
    %c0_17 = arith.constant 0 : index
    %c0_18 = arith.constant 0 : index
    %c0_19 = arith.constant 0 : index
    %38 = vector.load %arg8[%c0_16, %c0_17, %c0_18, %c0_19] : memref<1x4x16x16xf32, #tpu.memory_space<vmem>>, vector<1x4x16x16xf32>
    %39 = vector.extract_strided_slice %33 {offsets = [0, 0, 0], sizes = [4, 16, 8], strides = [1, 1, 1]} : vector<4x16x32xf32> to vector<4x16x8xf32>
    %40 = vector.extract_strided_slice %35 {offsets = [0, 0, 0], sizes = [4, 16, 8], strides = [1, 1, 1]} : vector<4x16x32xf32> to vector<4x16x8xf32>
    %41 = vector.extract_strided_slice %37 {offsets = [0, 0, 0], sizes = [4, 16, 8], strides = [1, 1, 1]} : vector<4x16x32xf32> to vector<4x16x8xf32>
    "tpu.trace_start"() <{level = 10 : i32, message = "wnd,wmd->wnm"}> : () -> ()
    %cst_20 = arith.constant dense<0.000000e+00> : vector<4x16x16xf32>
    %42 = tpu.matmul %39, %40, %cst_20 {dimension_numbers = #tpu.dot_dimension_numbers<[2], [2], [1], [1], [0, 0, 0, 1, 1, 1], [0], [0]>} : vector<4x16x8xf32>, vector<4x16x8xf32>, vector<4x16x16xf32> -> vector<4x16x16xf32>
    "tpu.trace_stop"() : () -> ()
    %43 = vector.extract_strided_slice %38 {offsets = [0, 0, 0, 0], sizes = [1, 1, 16, 16], strides = [1, 1, 1, 1]} : vector<1x4x16x16xf32> to vector<1x1x16x16xf32>
    %44 = vector.shape_cast %43 : vector<1x1x16x16xf32> to vector<1x16x16xf32>
    %45 = vector.broadcast %44 : vector<1x16x16xf32> to vector<4x16x16xf32>
    %46 = arith.addf %42, %45 : vector<4x16x16xf32>
    %cst_21 = arith.constant dense<0xFF800000> : vector<4x16xf32>
    %47 = vector.multi_reduction <maximumf>, %46, %cst_21 [2] : vector<4x16x16xf32> to vector<4x16xf32>
    %48 = vector.shape_cast %47 : vector<4x16xf32> to vector<4x16x1xf32>
    %49 = vector.broadcast %48 : vector<4x16x1xf32> to vector<4x16x16xf32>
    %50 = arith.subf %46, %49 : vector<4x16x16xf32>
    %51 = math.exp %50 : vector<4x16x16xf32>
    %cst_22 = arith.constant dense<0.000000e+00> : vector<4x16xf32>
    %52 = vector.multi_reduction <add>, %51, %cst_22 [2] : vector<4x16x16xf32> to vector<4x16xf32>
    %53 = vector.shape_cast %52 : vector<4x16xf32> to vector<4x16x1xf32>
    %54 = tpu.reciprocal %53 {approx = true} : vector<4x16x1xf32> -> vector<4x16x1xf32>
    %55 = vector.broadcast %54 : vector<4x16x1xf32> to vector<4x16x16xf32>
    %56 = arith.mulf %51, %55 : vector<4x16x16xf32>
    "tpu.trace_start"() <{level = 10 : i32, message = "wnm,wmd->wnd"}> : () -> ()
    %cst_23 = arith.constant dense<0.000000e+00> : vector<4x16x8xf32>
    %57 = tpu.matmul %56, %41, %cst_23 {dimension_numbers = #tpu.dot_dimension_numbers<[2], [1], [1], [2], [0, 0, 0, 1, 1, 2], [0], [0]>} : vector<4x16x16xf32>, vector<4x16x8xf32>, vector<4x16x8xf32> -> vector<4x16x8xf32>
    "tpu.trace_stop"() : () -> ()
    %58 = vector.shape_cast %57 : vector<4x16x8xf32> to vector<64x8xf32>
    %c0_24 = arith.constant 0 : index
    %c0_25 = arith.constant 0 : index
    %59 = vector.load %arg10[%c0_24, %c0_25] : memref<64x32xf32, #tpu.memory_space<vmem>>, vector<64x8xf32>
    tpu.vector_store %arg10[%c0_24, %c0_25], %58 {strides = array<i32>} : memref<64x32xf32, #tpu.memory_space<vmem>>, vector<64x8xf32>,
    %60 = vector.extract_strided_slice %33 {offsets = [0, 0, 8], sizes = [4, 16, 8], strides = [1, 1, 1]} : vector<4x16x32xf32> to vector<4x16x8xf32>
    %61 = vector.extract_strided_slice %35 {offsets = [0, 0, 8], sizes = [4, 16, 8], strides = [1, 1, 1]} : vector<4x16x32xf32> to vector<4x16x8xf32>
    %62 = vector.extract_strided_slice %37 {offsets = [0, 0, 8], sizes = [4, 16, 8], strides = [1, 1, 1]} : vector<4x16x32xf32> to vector<4x16x8xf32>
    "tpu.trace_start"() <{level = 10 : i32, message = "wnd,wmd->wnm"}> : () -> ()
    %cst_26 = arith.constant dense<0.000000e+00> : vector<4x16x16xf32>
    %63 = tpu.matmul %60, %61, %cst_26 {dimension_numbers = #tpu.dot_dimension_numbers<[2], [2], [1], [1], [0, 0, 0, 1, 1, 1], [0], [0]>} : vector<4x16x8xf32>, vector<4x16x8xf32>, vector<4x16x16xf32> -> vector<4x16x16xf32>
    "tpu.trace_stop"() : () -> ()
    %64 = vector.extract_strided_slice %38 {offsets = [0, 1, 0, 0], sizes = [1, 1, 16, 16], strides = [1, 1, 1, 1]} : vector<1x4x16x16xf32> to vector<1x1x16x16xf32>
    %65 = vector.shape_cast %64 : vector<1x1x16x16xf32> to vector<1x16x16xf32>
    %66 = vector.broadcast %65 : vector<1x16x16xf32> to vector<4x16x16xf32>
    %67 = arith.addf %63, %66 : vector<4x16x16xf32>
    %cst_27 = arith.constant dense<0xFF800000> : vector<4x16xf32>
    %68 = vector.multi_reduction <maximumf>, %67, %cst_27 [2] : vector<4x16x16xf32> to vector<4x16xf32>
    %69 = vector.shape_cast %68 : vector<4x16xf32> to vector<4x16x1xf32>
    %70 = vector.broadcast %69 : vector<4x16x1xf32> to vector<4x16x16xf32>
    %71 = arith.subf %67, %70 : vector<4x16x16xf32>
    %72 = math.exp %71 : vector<4x16x16xf32>
    %cst_28 = arith.constant dense<0.000000e+00> : vector<4x16xf32>
    %73 = vector.multi_reduction <add>, %72, %cst_28 [2] : vector<4x16x16xf32> to vector<4x16xf32>
    %74 = vector.shape_cast %73 : vector<4x16xf32> to vector<4x16x1xf32>
    %75 = tpu.reciprocal %74 {approx = true} : vector<4x16x1xf32> -> vector<4x16x1xf32>
    %76 = vector.broadcast %75 : vector<4x16x1xf32> to vector<4x16x16xf32>
    %77 = arith.mulf %72, %76 : vector<4x16x16xf32>
    "tpu.trace_start"() <{level = 10 : i32, message = "wnm,wmd->wnd"}> : () -> ()
    %cst_29 = arith.constant dense<0.000000e+00> : vector<4x16x8xf32>
    %78 = tpu.matmul %77, %62, %cst_29 {dimension_numbers = #tpu.dot_dimension_numbers<[2], [1], [1], [2], [0, 0, 0, 1, 1, 2], [0], [0]>} : vector<4x16x16xf32>, vector<4x16x8xf32>, vector<4x16x8xf32> -> vector<4x16x8xf32>
    "tpu.trace_stop"() : () -> ()
    %79 = vector.shape_cast %78 : vector<4x16x8xf32> to vector<64x8xf32>
    %c0_30 = arith.constant 0 : index
    %c8 = arith.constant 8 : index
    %80 = vector.load %arg10[%c0_30, %c8] : memref<64x32xf32, #tpu.memory_space<vmem>>, vector<64x8xf32>
    tpu.vector_store %arg10[%c0_30, %c8], %79 {strides = array<i32>} : memref<64x32xf32, #tpu.memory_space<vmem>>, vector<64x8xf32>,
    %81 = vector.extract_strided_slice %33 {offsets = [0, 0, 16], sizes = [4, 16, 8], strides = [1, 1, 1]} : vector<4x16x32xf32> to vector<4x16x8xf32>
    %82 = vector.extract_strided_slice %35 {offsets = [0, 0, 16], sizes = [4, 16, 8], strides = [1, 1, 1]} : vector<4x16x32xf32> to vector<4x16x8xf32>
    %83 = vector.extract_strided_slice %37 {offsets = [0, 0, 16], sizes = [4, 16, 8], strides = [1, 1, 1]} : vector<4x16x32xf32> to vector<4x16x8xf32>
    "tpu.trace_start"() <{level = 10 : i32, message = "wnd,wmd->wnm"}> : () -> ()
    %cst_31 = arith.constant dense<0.000000e+00> : vector<4x16x16xf32>
    %84 = tpu.matmul %81, %82, %cst_31 {dimension_numbers = #tpu.dot_dimension_numbers<[2], [2], [1], [1], [0, 0, 0, 1, 1, 1], [0], [0]>} : vector<4x16x8xf32>, vector<4x16x8xf32>, vector<4x16x16xf32> -> vector<4x16x16xf32>
    "tpu.trace_stop"() : () -> ()
    %85 = vector.extract_strided_slice %38 {offsets = [0, 2, 0, 0], sizes = [1, 1, 16, 16], strides = [1, 1, 1, 1]} : vector<1x4x16x16xf32> to vector<1x1x16x16xf32>
    %86 = vector.shape_cast %85 : vector<1x1x16x16xf32> to vector<1x16x16xf32>
    %87 = vector.broadcast %86 : vector<1x16x16xf32> to vector<4x16x16xf32>
    %88 = arith.addf %84, %87 : vector<4x16x16xf32>
    %cst_32 = arith.constant dense<0xFF800000> : vector<4x16xf32>
    %89 = vector.multi_reduction <maximumf>, %88, %cst_32 [2] : vector<4x16x16xf32> to vector<4x16xf32>
    %90 = vector.shape_cast %89 : vector<4x16xf32> to vector<4x16x1xf32>
    %91 = vector.broadcast %90 : vector<4x16x1xf32> to vector<4x16x16xf32>
    %92 = arith.subf %88, %91 : vector<4x16x16xf32>
    %93 = math.exp %92 : vector<4x16x16xf32>
    %cst_33 = arith.constant dense<0.000000e+00> : vector<4x16xf32>
    %94 = vector.multi_reduction <add>, %93, %cst_33 [2] : vector<4x16x16xf32> to vector<4x16xf32>
    %95 = vector.shape_cast %94 : vector<4x16xf32> to vector<4x16x1xf32>
    %96 = tpu.reciprocal %95 {approx = true} : vector<4x16x1xf32> -> vector<4x16x1xf32>
    %97 = vector.broadcast %96 : vector<4x16x1xf32> to vector<4x16x16xf32>
    %98 = arith.mulf %93, %97 : vector<4x16x16xf32>
    "tpu.trace_start"() <{level = 10 : i32, message = "wnm,wmd->wnd"}> : () -> ()
    %cst_34 = arith.constant dense<0.000000e+00> : vector<4x16x8xf32>
    %99 = tpu.matmul %98, %83, %cst_34 {dimension_numbers = #tpu.dot_dimension_numbers<[2], [1], [1], [2], [0, 0, 0, 1, 1, 2], [0], [0]>} : vector<4x16x16xf32>, vector<4x16x8xf32>, vector<4x16x8xf32> -> vector<4x16x8xf32>
    "tpu.trace_stop"() : () -> ()
    %100 = vector.shape_cast %99 : vector<4x16x8xf32> to vector<64x8xf32>
    %c0_35 = arith.constant 0 : index
    %c16 = arith.constant 16 : index
    %101 = vector.load %arg10[%c0_35, %c16] : memref<64x32xf32, #tpu.memory_space<vmem>>, vector<64x8xf32>
    tpu.vector_store %arg10[%c0_35, %c16], %100 {strides = array<i32>} : memref<64x32xf32, #tpu.memory_space<vmem>>, vector<64x8xf32>,
    %102 = vector.extract_strided_slice %33 {offsets = [0, 0, 24], sizes = [4, 16, 8], strides = [1, 1, 1]} : vector<4x16x32xf32> to vector<4x16x8xf32>
    %103 = vector.extract_strided_slice %35 {offsets = [0, 0, 24], sizes = [4, 16, 8], strides = [1, 1, 1]} : vector<4x16x32xf32> to vector<4x16x8xf32>
    %104 = vector.extract_strided_slice %37 {offsets = [0, 0, 24], sizes = [4, 16, 8], strides = [1, 1, 1]} : vector<4x16x32xf32> to vector<4x16x8xf32>
    "tpu.trace_start"() <{level = 10 : i32, message = "wnd,wmd->wnm"}> : () -> ()
    %cst_36 = arith.constant dense<0.000000e+00> : vector<4x16x16xf32>
    %105 = tpu.matmul %102, %103, %cst_36 {dimension_numbers = #tpu.dot_dimension_numbers<[2], [2], [1], [1], [0, 0, 0, 1, 1, 1], [0], [0]>} : vector<4x16x8xf32>, vector<4x16x8xf32>, vector<4x16x16xf32> -> vector<4x16x16xf32>
    "tpu.trace_stop"() : () -> ()
    %106 = vector.extract_strided_slice %38 {offsets = [0, 3, 0, 0], sizes = [1, 1, 16, 16], strides = [1, 1, 1, 1]} : vector<1x4x16x16xf32> to vector<1x1x16x16xf32>
    %107 = vector.shape_cast %106 : vector<1x1x16x16xf32> to vector<1x16x16xf32>
    %108 = vector.broadcast %107 : vector<1x16x16xf32> to vector<4x16x16xf32>
    %109 = arith.addf %105, %108 : vector<4x16x16xf32>
    %cst_37 = arith.constant dense<0xFF800000> : vector<4x16xf32>
    %110 = vector.multi_reduction <maximumf>, %109, %cst_37 [2] : vector<4x16x16xf32> to vector<4x16xf32>
    %111 = vector.shape_cast %110 : vector<4x16xf32> to vector<4x16x1xf32>
    %112 = vector.broadcast %111 : vector<4x16x1xf32> to vector<4x16x16xf32>
    %113 = arith.subf %109, %112 : vector<4x16x16xf32>
    %114 = math.exp %113 : vector<4x16x16xf32>
    %cst_38 = arith.constant dense<0.000000e+00> : vector<4x16xf32>
    %115 = vector.multi_reduction <add>, %114, %cst_38 [2] : vector<4x16x16xf32> to vector<4x16xf32>
    %116 = vector.shape_cast %115 : vector<4x16xf32> to vector<4x16x1xf32>
    %117 = tpu.reciprocal %116 {approx = true} : vector<4x16x1xf32> -> vector<4x16x1xf32>
    %118 = vector.broadcast %117 : vector<4x16x1xf32> to vector<4x16x16xf32>
    %119 = arith.mulf %114, %118 : vector<4x16x16xf32>
    "tpu.trace_start"() <{level = 10 : i32, message = "wnm,wmd->wnd"}> : () -> ()
    %cst_39 = arith.constant dense<0.000000e+00> : vector<4x16x8xf32>
    %120 = tpu.matmul %119, %104, %cst_39 {dimension_numbers = #tpu.dot_dimension_numbers<[2], [1], [1], [2], [0, 0, 0, 1, 1, 2], [0], [0]>} : vector<4x16x16xf32>, vector<4x16x8xf32>, vector<4x16x8xf32> -> vector<4x16x8xf32>
    "tpu.trace_stop"() : () -> ()
    %121 = vector.shape_cast %120 : vector<4x16x8xf32> to vector<64x8xf32>
    %c0_40 = arith.constant 0 : index
    %c24 = arith.constant 24 : index
    %122 = vector.load %arg10[%c0_40, %c24] : memref<64x32xf32, #tpu.memory_space<vmem>>, vector<64x8xf32>
    tpu.vector_store %arg10[%c0_40, %c24], %121 {strides = array<i32>} : memref<64x32xf32, #tpu.memory_space<vmem>>, vector<64x8xf32>,
    %c0_41 = arith.constant 0 : index
    %c0_42 = arith.constant 0 : index
    %123 = vector.load %arg10[%c0_41, %c0_42] : memref<64x32xf32, #tpu.memory_space<vmem>>, vector<64x32xf32>
    %c0_43 = arith.constant 0 : index
    %c0_44 = arith.constant 0 : index
    %124 = vector.load %arg6[%c0_43, %c0_44] : memref<32x32xf32, #tpu.memory_space<vmem>>, vector<32x32xf32>
    %cst_45 = arith.constant dense<0.000000e+00> : vector<64x32xf32>
    %125 = tpu.matmul %123, %124, %cst_45 {dimension_numbers = #tpu.dot_dimension_numbers<[1], [0], [0], [1], [0, 0, 1, 1], [], []>} : vector<64x32xf32>, vector<32x32xf32>, vector<64x32xf32> -> vector<64x32xf32>
    %c0_46 = arith.constant 0 : index
    %c0_47 = arith.constant 0 : index
    %126 = vector.load %arg7[%c0_46, %c0_47] : memref<1x32xf32, #tpu.memory_space<vmem>>, vector<1x32xf32>
    %127 = vector.broadcast %126 : vector<1x32xf32> to vector<64x32xf32>
    %128 = arith.addf %125, %127 : vector<64x32xf32>
    %129 = vector.shape_cast %128 : vector<64x32xf32> to vector<4x16x32xf32>
    %c0_48 = arith.constant 0 : index
    %c0_49 = arith.constant 0 : index
    %c0_50 = arith.constant 0 : index
    %c0_51 = arith.constant 0 : index
    %130 = vector.load %arg9[%c0_48, %c0_49, %c0_50, %c0_51] : memref<1x4x16x32xf32, #tpu.memory_space<vmem>>, vector<1x4x16x32xf32>
    %131 = vector.shape_cast %130 : vector<1x4x16x32xf32> to vector<4x16x32xf32>
    %132 = vector.shape_cast %129 : vector<4x16x32xf32> to vector<1x4x16x32xf32>
    tpu.vector_store %arg9[%c0_48, %c0_49, %c0_50, %c0_51], %132 {strides = array<i32>} : memref<1x4x16x32xf32, #tpu.memory_space<vmem>>, vector<1x4x16x32xf32>,
    return
  }
  func.func @transform_0(%arg0: i32) -> (i32, i32, i32, i32) {
    %c0_i32 = arith.constant 0 : i32
    %c0_i32_0 = arith.constant 0 : i32
    %c0_i32_1 = arith.constant 0 : i32
    %c0_i32_2 = arith.constant 0 : i32
    return %arg0, %c0_i32, %c0_i32_0, %c0_i32_1 : i32, i32, i32, i32
  }
  func.func @transform_1(%arg0: i32) -> (i32, i32) {
    %c0_i32 = arith.constant 0 : i32
    %c0_i32_0 = arith.constant 0 : i32
    %c0_i32_1 = arith.constant 0 : i32
    return %c0_i32, %c0_i32_0 : i32, i32
  }
  func.func @transform_2(%arg0: i32) -> (i32, i32) {
    %c0_i32 = arith.constant 0 : i32
    %c0_i32_0 = arith.constant 0 : i32
    %c0_i32_1 = arith.constant 0 : i32
    return %c0_i32, %c0_i32_0 : i32, i32
  }
  func.func @transform_3(%arg0: i32) -> (i32, i32) {
    %c0_i32 = arith.constant 0 : i32
    %c0_i32_0 = arith.constant 0 : i32
    %c0_i32_1 = arith.constant 0 : i32
    return %c0_i32, %c0_i32_0 : i32, i32
  }
  func.func @transform_4(%arg0: i32) -> (i32, i32) {
    %c0_i32 = arith.constant 0 : i32
    %c0_i32_0 = arith.constant 0 : i32
    %c0_i32_1 = arith.constant 0 : i32
    return %c0_i32, %c0_i32_0 : i32, i32
  }
  func.func @transform_5(%arg0: i32) -> (i32, i32) {
    %c0_i32 = arith.constant 0 : i32
    %c0_i32_0 = arith.constant 0 : i32
    %c0_i32_1 = arith.constant 0 : i32
    return %c0_i32, %c0_i32_0 : i32, i32
  }
  func.func @transform_6(%arg0: i32) -> (i32, i32) {
    %c0_i32 = arith.constant 0 : i32
    %c0_i32_0 = arith.constant 0 : i32
    %c0_i32_1 = arith.constant 0 : i32
    return %c0_i32, %c0_i32_0 : i32, i32
  }
  func.func @transform_7(%arg0: i32) -> (i32, i32, i32, i32) {
    %c0_i32 = arith.constant 0 : i32
    %c0_i32_0 = arith.constant 0 : i32
    %c0_i32_1 = arith.constant 0 : i32
    %c0_i32_2 = arith.constant 0 : i32
    %c0_i32_3 = arith.constant 0 : i32
    return %c0_i32, %c0_i32_0, %c0_i32_1, %c0_i32_2 : i32, i32, i32, i32
  }
  func.func @transform_8(%arg0: i32) -> (i32, i32, i32, i32) {
    %c0_i32 = arith.constant 0 : i32
    %c0_i32_0 = arith.constant 0 : i32
    %c0_i32_1 = arith.constant 0 : i32
    %c0_i32_2 = arith.constant 0 : i32
    return %arg0, %c0_i32, %c0_i32_0, %c0_i32_1 : i32, i32, i32, i32
  }
}

module attributes {stable_mosaic.version = 11 : i64} {
  func.func @kernel(%arg0: i32, %arg1: memref<64x32xf32, #tpu.memory_space<vmem>>, %arg2: memref<64x32xf32, #tpu.memory_space<vmem>>, %arg3: memref<1x32xf32, #tpu.memory_space<vmem>>, %arg4: memref<1x32xf32, #tpu.memory_space<vmem>>, %arg5: memref<32x128xf32, #tpu.memory_space<vmem>>, %arg6: memref<1x128xf32, #tpu.memory_space<vmem>>, %arg7: memref<128x32xf32, #tpu.memory_space<vmem>>, %arg8: memref<1x32xf32, #tpu.memory_space<vmem>>, %arg9: memref<64x32xf32, #tpu.memory_space<vmem>>) attributes {dimension_semantics = [#tpu.dimension_semantics<parallel>], iteration_bounds = array<i64: 2>, scalar_prefetch = 0 : i64, scratch_operands = 0 : i64, tpu.core_type = #tpu.core_type<tc>, window_params = [{transform_indices = @transform_0, window_bounds = array<i64: 64, 32>}, {transform_indices = @transform_1, window_bounds = array<i64: 64, 32>}, {pipeline_mode = #tpu.pipeline_mode<synchronous>, transform_indices = @transform_2, window_bounds = array<i64: 1, 32>}, {pipeline_mode = #tpu.pipeline_mode<synchronous>, transform_indices = @transform_3, window_bounds = array<i64: 1, 32>}, {pipeline_mode = #tpu.pipeline_mode<synchronous>, transform_indices = @transform_4, window_bounds = array<i64: 32, 128>}, {pipeline_mode = #tpu.pipeline_mode<synchronous>, transform_indices = @transform_5, window_bounds = array<i64: 1, 128>}, {pipeline_mode = #tpu.pipeline_mode<synchronous>, transform_indices = @transform_6, window_bounds = array<i64: 128, 32>}, {pipeline_mode = #tpu.pipeline_mode<synchronous>, transform_indices = @transform_7, window_bounds = array<i64: 1, 32>}, {transform_indices = @transform_8, window_bounds = array<i64: 64, 32>}]} {
    %c0 = arith.constant 0 : index
    %c0_0 = arith.constant 0 : index
    %0 = vector.load %arg1[%c0, %c0_0] : memref<64x32xf32, #tpu.memory_space<vmem>>, vector<64x32xf32>
    %c0_1 = arith.constant 0 : index
    %c0_2 = arith.constant 0 : index
    %1 = vector.load %arg2[%c0_1, %c0_2] : memref<64x32xf32, #tpu.memory_space<vmem>>, vector<64x32xf32>
    %2 = arith.addf %0, %1 : vector<64x32xf32>
    %cst = arith.constant dense<0.000000e+00> : vector<64xf32>
    %3 = vector.multi_reduction <add>, %2, %cst [1] : vector<64x32xf32> to vector<64xf32>
    %4 = vector.shape_cast %3 : vector<64xf32> to vector<64x1xf32>
    %cst_3 = arith.constant 3.200000e+01 : f32
    %5 = vector.broadcast %cst_3 : f32 to vector<64x1xf32>
    %6 = arith.divf %4, %5 : vector<64x1xf32>
    %7 = vector.broadcast %6 : vector<64x1xf32> to vector<64x32xf32>
    %8 = arith.subf %2, %7 : vector<64x32xf32>
    %9 = arith.mulf %8, %8 : vector<64x32xf32>
    %cst_4 = arith.constant dense<0.000000e+00> : vector<64xf32>
    %10 = vector.multi_reduction <add>, %9, %cst_4 [1] : vector<64x32xf32> to vector<64xf32>
    %11 = vector.shape_cast %10 : vector<64xf32> to vector<64x1xf32>
    %cst_5 = arith.constant 3.200000e+01 : f32
    %12 = vector.broadcast %cst_5 : f32 to vector<64x1xf32>
    %13 = arith.divf %11, %12 : vector<64x1xf32>
    %14 = vector.broadcast %6 : vector<64x1xf32> to vector<64x32xf32>
    %15 = arith.subf %2, %14 : vector<64x32xf32>
    %cst_6 = arith.constant 9.99999974E-6 : f32
    %16 = vector.broadcast %cst_6 : f32 to vector<64x1xf32>
    %17 = arith.addf %13, %16 : vector<64x1xf32>
    %18 = math.rsqrt %17 : vector<64x1xf32>
    %19 = vector.broadcast %18 : vector<64x1xf32> to vector<64x32xf32>
    %20 = arith.mulf %15, %19 : vector<64x32xf32>
    %c0_7 = arith.constant 0 : index
    %c0_8 = arith.constant 0 : index
    %21 = vector.load %arg3[%c0_7, %c0_8] : memref<1x32xf32, #tpu.memory_space<vmem>>, vector<1x32xf32>
    %22 = vector.broadcast %21 : vector<1x32xf32> to vector<64x32xf32>
    %23 = arith.mulf %20, %22 : vector<64x32xf32>
    %c0_9 = arith.constant 0 : index
    %c0_10 = arith.constant 0 : index
    %24 = vector.load %arg4[%c0_9, %c0_10] : memref<1x32xf32, #tpu.memory_space<vmem>>, vector<1x32xf32>
    %25 = vector.broadcast %24 : vector<1x32xf32> to vector<64x32xf32>
    %26 = arith.addf %23, %25 : vector<64x32xf32>
    %c0_11 = arith.constant 0 : index
    %c0_12 = arith.constant 0 : index
    %27 = vector.load %arg5[%c0_11, %c0_12] : memref<32x128xf32, #tpu.memory_space<vmem>>, vector<32x128xf32>
    %cst_13 = arith.constant dense<0.000000e+00> : vector<64x128xf32>
    %28 = tpu.matmul %26, %27, %cst_13 {dimension_numbers = #tpu.dot_dimension_numbers<[1], [0], [0], [1], [0, 0, 1, 1], [], []>} : vector<64x32xf32>, vector<32x128xf32>, vector<64x128xf32> -> vector<64x128xf32>
    %c0_14 = arith.constant 0 : index
    %c0_15 = arith.constant 0 : index
    %29 = vector.load %arg6[%c0_14, %c0_15] : memref<1x128xf32, #tpu.memory_space<vmem>>, vector<1x128xf32>
    %30 = vector.broadcast %29 : vector<1x128xf32> to vector<64x128xf32>
    %31 = arith.addf %28, %30 : vector<64x128xf32>
    %cst_16 = arith.constant 5.000000e-01 : f32
    %32 = vector.broadcast %cst_16 : f32 to vector<64x128xf32>
    %33 = arith.mulf %32, %31 : vector<64x128xf32>
    %cst_17 = arith.constant 0.707106769 : f32
    %34 = vector.broadcast %cst_17 : f32 to vector<64x128xf32>
    %35 = arith.mulf %31, %34 : vector<64x128xf32>
    %36 = math.erf %35 : vector<64x128xf32>
    %cst_18 = arith.constant 1.000000e+00 : f32
    %37 = vector.broadcast %cst_18 : f32 to vector<64x128xf32>
    %38 = arith.addf %37, %36 : vector<64x128xf32>
    %39 = arith.mulf %33, %38 : vector<64x128xf32>
    %c0_19 = arith.constant 0 : index
    %c0_20 = arith.constant 0 : index
    %40 = vector.load %arg7[%c0_19, %c0_20] : memref<128x32xf32, #tpu.memory_space<vmem>>, vector<128x32xf32>
    %cst_21 = arith.constant dense<0.000000e+00> : vector<64x32xf32>
    %41 = tpu.matmul %39, %40, %cst_21 {dimension_numbers = #tpu.dot_dimension_numbers<[1], [0], [0], [1], [0, 0, 1, 1], [], []>} : vector<64x128xf32>, vector<128x32xf32>, vector<64x32xf32> -> vector<64x32xf32>
    %42 = arith.addf %2, %41 : vector<64x32xf32>
    %c0_22 = arith.constant 0 : index
    %c0_23 = arith.constant 0 : index
    %43 = vector.load %arg8[%c0_22, %c0_23] : memref<1x32xf32, #tpu.memory_space<vmem>>, vector<1x32xf32>
    %44 = vector.broadcast %43 : vector<1x32xf32> to vector<64x32xf32>
    %45 = arith.addf %42, %44 : vector<64x32xf32>
    %c0_24 = arith.constant 0 : index
    %c0_25 = arith.constant 0 : index
    %46 = vector.load %arg9[%c0_24, %c0_25] : memref<64x32xf32, #tpu.memory_space<vmem>>, vector<64x32xf32>
    tpu.vector_store %arg9[%c0_24, %c0_25], %45 {strides = array<i32>} : memref<64x32xf32, #tpu.memory_space<vmem>>, vector<64x32xf32>,
    return
  }
  func.func @transform_0(%arg0: i32) -> (i32, i32) {
    %c0_i32 = arith.constant 0 : i32
    %c0_i32_0 = arith.constant 0 : i32
    return %arg0, %c0_i32 : i32, i32
  }
  func.func @transform_1(%arg0: i32) -> (i32, i32) {
    %c0_i32 = arith.constant 0 : i32
    %c0_i32_0 = arith.constant 0 : i32
    return %arg0, %c0_i32 : i32, i32
  }
  func.func @transform_2(%arg0: i32) -> (i32, i32) {
    %c0_i32 = arith.constant 0 : i32
    %c0_i32_0 = arith.constant 0 : i32
    %c0_i32_1 = arith.constant 0 : i32
    return %c0_i32, %c0_i32_0 : i32, i32
  }
  func.func @transform_3(%arg0: i32) -> (i32, i32) {
    %c0_i32 = arith.constant 0 : i32
    %c0_i32_0 = arith.constant 0 : i32
    %c0_i32_1 = arith.constant 0 : i32
    return %c0_i32, %c0_i32_0 : i32, i32
  }
  func.func @transform_4(%arg0: i32) -> (i32, i32) {
    %c0_i32 = arith.constant 0 : i32
    %c0_i32_0 = arith.constant 0 : i32
    %c0_i32_1 = arith.constant 0 : i32
    return %c0_i32, %c0_i32_0 : i32, i32
  }
  func.func @transform_5(%arg0: i32) -> (i32, i32) {
    %c0_i32 = arith.constant 0 : i32
    %c0_i32_0 = arith.constant 0 : i32
    %c0_i32_1 = arith.constant 0 : i32
    return %c0_i32, %c0_i32_0 : i32, i32
  }
  func.func @transform_6(%arg0: i32) -> (i32, i32) {
    %c0_i32 = arith.constant 0 : i32
    %c0_i32_0 = arith.constant 0 : i32
    %c0_i32_1 = arith.constant 0 : i32
    return %c0_i32, %c0_i32_0 : i32, i32
  }
  func.func @transform_7(%arg0: i32) -> (i32, i32) {
    %c0_i32 = arith.constant 0 : i32
    %c0_i32_0 = arith.constant 0 : i32
    %c0_i32_1 = arith.constant 0 : i32
    return %c0_i32, %c0_i32_0 : i32, i32
  }
  func.func @transform_8(%arg0: i32) -> (i32, i32) {
    %c0_i32 = arith.constant 0 : i32
    %c0_i32_0 = arith.constant 0 : i32
    return %arg0, %c0_i32 : i32, i32
  }
}

module attributes {stable_mosaic.version = 11 : i64} {
  func.func @kernel(%arg0: i32, %arg1: memref<1x4x16x32xf32, #tpu.memory_space<vmem>>, %arg2: memref<1x32xf32, #tpu.memory_space<vmem>>, %arg3: memref<1x32xf32, #tpu.memory_space<vmem>>, %arg4: memref<32x96xf32, #tpu.memory_space<vmem>>, %arg5: memref<1x96xf32, #tpu.memory_space<vmem>>, %arg6: memref<32x32xf32, #tpu.memory_space<vmem>>, %arg7: memref<1x32xf32, #tpu.memory_space<vmem>>, %arg8: memref<4x4x16x16xf32, #tpu.memory_space<vmem>>, %arg9: memref<1x4x16x32xf32, #tpu.memory_space<vmem>>, %arg10: memref<64x32xf32, #tpu.memory_space<vmem>>) attributes {dimension_semantics = [#tpu.dimension_semantics<parallel>], iteration_bounds = array<i64: 2>, scalar_prefetch = 0 : i64, scratch_operands = 1 : i64, tpu.core_type = #tpu.core_type<tc>, window_params = [{transform_indices = @transform_0, window_bounds = array<i64: 1, 4, 16, 32>}, {pipeline_mode = #tpu.pipeline_mode<synchronous>, transform_indices = @transform_1, window_bounds = array<i64: 1, 32>}, {pipeline_mode = #tpu.pipeline_mode<synchronous>, transform_indices = @transform_2, window_bounds = array<i64: 1, 32>}, {pipeline_mode = #tpu.pipeline_mode<synchronous>, transform_indices = @transform_3, window_bounds = array<i64: 32, 96>}, {pipeline_mode = #tpu.pipeline_mode<synchronous>, transform_indices = @transform_4, window_bounds = array<i64: 1, 96>}, {pipeline_mode = #tpu.pipeline_mode<synchronous>, transform_indices = @transform_5, window_bounds = array<i64: 32, 32>}, {pipeline_mode = #tpu.pipeline_mode<synchronous>, transform_indices = @transform_6, window_bounds = array<i64: 1, 32>}, {pipeline_mode = #tpu.pipeline_mode<synchronous>, transform_indices = @transform_7, window_bounds = array<i64: 4, 4, 16, 16>}, {transform_indices = @transform_8, window_bounds = array<i64: 1, 4, 16, 32>}]} {
    %c0 = arith.constant 0 : index
    %c0_0 = arith.constant 0 : index
    %c0_1 = arith.constant 0 : index
    %c0_2 = arith.constant 0 : index
    %0 = vector.load %arg1[%c0, %c0_0, %c0_1, %c0_2] : memref<1x4x16x32xf32, #tpu.memory_space<vmem>>, vector<1x4x16x32xf32>
    %1 = vector.shape_cast %0 : vector<1x4x16x32xf32> to vector<4x16x32xf32>
    %2 = vector.shape_cast %1 : vector<4x16x32xf32> to vector<64x32xf32>
    %cst = arith.constant dense<0.000000e+00> : vector<64xf32>
    %3 = vector.multi_reduction <add>, %2, %cst [1] : vector<64x32xf32> to vector<64xf32>
    %4 = vector.shape_cast %3 : vector<64xf32> to vector<64x1xf32>
    %cst_3 = arith.constant 3.200000e+01 : f32
    %5 = vector.broadcast %cst_3 : f32 to vector<64x1xf32>
    %6 = arith.divf %4, %5 : vector<64x1xf32>
    %7 = vector.broadcast %6 : vector<64x1xf32> to vector<64x32xf32>
    %8 = arith.subf %2, %7 : vector<64x32xf32>
    %9 = arith.mulf %8, %8 : vector<64x32xf32>
    %cst_4 = arith.constant dense<0.000000e+00> : vector<64xf32>
    %10 = vector.multi_reduction <add>, %9, %cst_4 [1] : vector<64x32xf32> to vector<64xf32>
    %11 = vector.shape_cast %10 : vector<64xf32> to vector<64x1xf32>
    %cst_5 = arith.constant 3.200000e+01 : f32
    %12 = vector.broadcast %cst_5 : f32 to vector<64x1xf32>
    %13 = arith.divf %11, %12 : vector<64x1xf32>
    %14 = vector.broadcast %6 : vector<64x1xf32> to vector<64x32xf32>
    %15 = arith.subf %2, %14 : vector<64x32xf32>
    %cst_6 = arith.constant 9.99999974E-6 : f32
    %16 = vector.broadcast %cst_6 : f32 to vector<64x1xf32>
    %17 = arith.addf %13, %16 : vector<64x1xf32>
    %18 = math.rsqrt %17 : vector<64x1xf32>
    %19 = vector.broadcast %18 : vector<64x1xf32> to vector<64x32xf32>
    %20 = arith.mulf %15, %19 : vector<64x32xf32>
    %c0_7 = arith.constant 0 : index
    %c0_8 = arith.constant 0 : index
    %21 = vector.load %arg2[%c0_7, %c0_8] : memref<1x32xf32, #tpu.memory_space<vmem>>, vector<1x32xf32>
    %22 = vector.broadcast %21 : vector<1x32xf32> to vector<64x32xf32>
    %23 = arith.mulf %20, %22 : vector<64x32xf32>
    %c0_9 = arith.constant 0 : index
    %c0_10 = arith.constant 0 : index
    %24 = vector.load %arg3[%c0_9, %c0_10] : memref<1x32xf32, #tpu.memory_space<vmem>>, vector<1x32xf32>
    %25 = vector.broadcast %24 : vector<1x32xf32> to vector<64x32xf32>
    %26 = arith.addf %23, %25 : vector<64x32xf32>
    %c0_11 = arith.constant 0 : index
    %c0_12 = arith.constant 0 : index
    %27 = vector.load %arg4[%c0_11, %c0_12] : memref<32x96xf32, #tpu.memory_space<vmem>>, vector<32x96xf32>
    %cst_13 = arith.constant dense<0.000000e+00> : vector<64x96xf32>
    %28 = tpu.matmul %26, %27, %cst_13 {dimension_numbers = #tpu.dot_dimension_numbers<[1], [0], [0], [1], [0, 0, 1, 1], [], []>} : vector<64x32xf32>, vector<32x96xf32>, vector<64x96xf32> -> vector<64x96xf32>
    %c0_14 = arith.constant 0 : index
    %c0_15 = arith.constant 0 : index
    %29 = vector.load %arg5[%c0_14, %c0_15] : memref<1x96xf32, #tpu.memory_space<vmem>>, vector<1x96xf32>
    %30 = vector.broadcast %29 : vector<1x96xf32> to vector<64x96xf32>
    %31 = arith.addf %28, %30 : vector<64x96xf32>
    %32 = vector.extract_strided_slice %31 {offsets = [0, 0], sizes = [64, 32], strides = [1, 1]} : vector<64x96xf32> to vector<64x32xf32>
    %33 = vector.shape_cast %32 : vector<64x32xf32> to vector<4x16x32xf32>
    %34 = vector.extract_strided_slice %31 {offsets = [0, 32], sizes = [64, 32], strides = [1, 1]} : vector<64x96xf32> to vector<64x32xf32>
    %35 = vector.shape_cast %34 : vector<64x32xf32> to vector<4x16x32xf32>
    %36 = vector.extract_strided_slice %31 {offsets = [0, 64], sizes = [64, 32], strides = [1, 1]} : vector<64x96xf32> to vector<64x32xf32>
    %37 = vector.shape_cast %36 : vector<64x32xf32> to vector<4x16x32xf32>
    %c0_16 = arith.constant 0 : index
    %c0_17 = arith.constant 0 : index
    %c0_18 = arith.constant 0 : index
    %c0_19 = arith.constant 0 : index
    %38 = vector.load %arg8[%c0_16, %c0_17, %c0_18, %c0_19] : memref<4x4x16x16xf32, #tpu.memory_space<vmem>>, vector<4x4x16x16xf32>
    %39 = vector.extract_strided_slice %33 {offsets = [0, 0, 0], sizes = [4, 16, 8], strides = [1, 1, 1]} : vector<4x16x32xf32> to vector<4x16x8xf32>
    %40 = vector.extract_strided_slice %35 {offsets = [0, 0, 0], sizes = [4, 16, 8], strides = [1, 1, 1]} : vector<4x16x32xf32> to vector<4x16x8xf32>
    %41 = vector.extract_strided_slice %37 {offsets = [0, 0, 0], sizes = [4, 16, 8], strides = [1, 1, 1]} : vector<4x16x32xf32> to vector<4x16x8xf32>
    "tpu.trace_start"() <{level = 10 : i32, message = "wnd,wmd->wnm"}> : () -> ()
    %cst_20 = arith.constant dense<0.000000e+00> : vector<4x16x16xf32>
    %42 = tpu.matmul %39, %40, %cst_20 {dimension_numbers = #tpu.dot_dimension_numbers<[2], [2], [1], [1], [0, 0, 0, 1, 1, 1], [0], [0]>} : vector<4x16x8xf32>, vector<4x16x8xf32>, vector<4x16x16xf32> -> vector<4x16x16xf32>
    "tpu.trace_stop"() : () -> ()
    %43 = vector.extract_strided_slice %38 {offsets = [0, 0, 0, 0], sizes = [4, 1, 16, 16], strides = [1, 1, 1, 1]} : vector<4x4x16x16xf32> to vector<4x1x16x16xf32>
    %44 = vector.shape_cast %43 : vector<4x1x16x16xf32> to vector<4x16x16xf32>
    %45 = arith.addf %42, %44 : vector<4x16x16xf32>
    %cst_21 = arith.constant dense<0xFF800000> : vector<4x16xf32>
    %46 = vector.multi_reduction <maximumf>, %45, %cst_21 [2] : vector<4x16x16xf32> to vector<4x16xf32>
    %47 = vector.shape_cast %46 : vector<4x16xf32> to vector<4x16x1xf32>
    %48 = vector.broadcast %47 : vector<4x16x1xf32> to vector<4x16x16xf32>
    %49 = arith.subf %45, %48 : vector<4x16x16xf32>
    %50 = math.exp %49 : vector<4x16x16xf32>
    %cst_22 = arith.constant dense<0.000000e+00> : vector<4x16xf32>
    %51 = vector.multi_reduction <add>, %50, %cst_22 [2] : vector<4x16x16xf32> to vector<4x16xf32>
    %52 = vector.shape_cast %51 : vector<4x16xf32> to vector<4x16x1xf32>
    %53 = tpu.reciprocal %52 {approx = true} : vector<4x16x1xf32> -> vector<4x16x1xf32>
    %54 = vector.broadcast %53 : vector<4x16x1xf32> to vector<4x16x16xf32>
    %55 = arith.mulf %50, %54 : vector<4x16x16xf32>
    "tpu.trace_start"() <{level = 10 : i32, message = "wnm,wmd->wnd"}> : () -> ()
    %cst_23 = arith.constant dense<0.000000e+00> : vector<4x16x8xf32>
    %56 = tpu.matmul %55, %41, %cst_23 {dimension_numbers = #tpu.dot_dimension_numbers<[2], [1], [1], [2], [0, 0, 0, 1, 1, 2], [0], [0]>} : vector<4x16x16xf32>, vector<4x16x8xf32>, vector<4x16x8xf32> -> vector<4x16x8xf32>
    "tpu.trace_stop"() : () -> ()
    %57 = vector.shape_cast %56 : vector<4x16x8xf32> to vector<64x8xf32>
    %c0_24 = arith.constant 0 : index
    %c0_25 = arith.constant 0 : index
    %58 = vector.load %arg10[%c0_24, %c0_25] : memref<64x32xf32, #tpu.memory_space<vmem>>, vector<64x8xf32>
    tpu.vector_store %arg10[%c0_24, %c0_25], %57 {strides = array<i32>} : memref<64x32xf32, #tpu.memory_space<vmem>>, vector<64x8xf32>,
    %59 = vector.extract_strided_slice %33 {offsets = [0, 0, 8], sizes = [4, 16, 8], strides = [1, 1, 1]} : vector<4x16x32xf32> to vector<4x16x8xf32>
    %60 = vector.extract_strided_slice %35 {offsets = [0, 0, 8], sizes = [4, 16, 8], strides = [1, 1, 1]} : vector<4x16x32xf32> to vector<4x16x8xf32>
    %61 = vector.extract_strided_slice %37 {offsets = [0, 0, 8], sizes = [4, 16, 8], strides = [1, 1, 1]} : vector<4x16x32xf32> to vector<4x16x8xf32>
    "tpu.trace_start"() <{level = 10 : i32, message = "wnd,wmd->wnm"}> : () -> ()
    %cst_26 = arith.constant dense<0.000000e+00> : vector<4x16x16xf32>
    %62 = tpu.matmul %59, %60, %cst_26 {dimension_numbers = #tpu.dot_dimension_numbers<[2], [2], [1], [1], [0, 0, 0, 1, 1, 1], [0], [0]>} : vector<4x16x8xf32>, vector<4x16x8xf32>, vector<4x16x16xf32> -> vector<4x16x16xf32>
    "tpu.trace_stop"() : () -> ()
    %63 = vector.extract_strided_slice %38 {offsets = [0, 1, 0, 0], sizes = [4, 1, 16, 16], strides = [1, 1, 1, 1]} : vector<4x4x16x16xf32> to vector<4x1x16x16xf32>
    %64 = vector.shape_cast %63 : vector<4x1x16x16xf32> to vector<4x16x16xf32>
    %65 = arith.addf %62, %64 : vector<4x16x16xf32>
    %cst_27 = arith.constant dense<0xFF800000> : vector<4x16xf32>
    %66 = vector.multi_reduction <maximumf>, %65, %cst_27 [2] : vector<4x16x16xf32> to vector<4x16xf32>
    %67 = vector.shape_cast %66 : vector<4x16xf32> to vector<4x16x1xf32>
    %68 = vector.broadcast %67 : vector<4x16x1xf32> to vector<4x16x16xf32>
    %69 = arith.subf %65, %68 : vector<4x16x16xf32>
    %70 = math.exp %69 : vector<4x16x16xf32>
    %cst_28 = arith.constant dense<0.000000e+00> : vector<4x16xf32>
    %71 = vector.multi_reduction <add>, %70, %cst_28 [2] : vector<4x16x16xf32> to vector<4x16xf32>
    %72 = vector.shape_cast %71 : vector<4x16xf32> to vector<4x16x1xf32>
    %73 = tpu.reciprocal %72 {approx = true} : vector<4x16x1xf32> -> vector<4x16x1xf32>
    %74 = vector.broadcast %73 : vector<4x16x1xf32> to vector<4x16x16xf32>
    %75 = arith.mulf %70, %74 : vector<4x16x16xf32>
    "tpu.trace_start"() <{level = 10 : i32, message = "wnm,wmd->wnd"}> : () -> ()
    %cst_29 = arith.constant dense<0.000000e+00> : vector<4x16x8xf32>
    %76 = tpu.matmul %75, %61, %cst_29 {dimension_numbers = #tpu.dot_dimension_numbers<[2], [1], [1], [2], [0, 0, 0, 1, 1, 2], [0], [0]>} : vector<4x16x16xf32>, vector<4x16x8xf32>, vector<4x16x8xf32> -> vector<4x16x8xf32>
    "tpu.trace_stop"() : () -> ()
    %77 = vector.shape_cast %76 : vector<4x16x8xf32> to vector<64x8xf32>
    %c0_30 = arith.constant 0 : index
    %c8 = arith.constant 8 : index
    %78 = vector.load %arg10[%c0_30, %c8] : memref<64x32xf32, #tpu.memory_space<vmem>>, vector<64x8xf32>
    tpu.vector_store %arg10[%c0_30, %c8], %77 {strides = array<i32>} : memref<64x32xf32, #tpu.memory_space<vmem>>, vector<64x8xf32>,
    %79 = vector.extract_strided_slice %33 {offsets = [0, 0, 16], sizes = [4, 16, 8], strides = [1, 1, 1]} : vector<4x16x32xf32> to vector<4x16x8xf32>
    %80 = vector.extract_strided_slice %35 {offsets = [0, 0, 16], sizes = [4, 16, 8], strides = [1, 1, 1]} : vector<4x16x32xf32> to vector<4x16x8xf32>
    %81 = vector.extract_strided_slice %37 {offsets = [0, 0, 16], sizes = [4, 16, 8], strides = [1, 1, 1]} : vector<4x16x32xf32> to vector<4x16x8xf32>
    "tpu.trace_start"() <{level = 10 : i32, message = "wnd,wmd->wnm"}> : () -> ()
    %cst_31 = arith.constant dense<0.000000e+00> : vector<4x16x16xf32>
    %82 = tpu.matmul %79, %80, %cst_31 {dimension_numbers = #tpu.dot_dimension_numbers<[2], [2], [1], [1], [0, 0, 0, 1, 1, 1], [0], [0]>} : vector<4x16x8xf32>, vector<4x16x8xf32>, vector<4x16x16xf32> -> vector<4x16x16xf32>
    "tpu.trace_stop"() : () -> ()
    %83 = vector.extract_strided_slice %38 {offsets = [0, 2, 0, 0], sizes = [4, 1, 16, 16], strides = [1, 1, 1, 1]} : vector<4x4x16x16xf32> to vector<4x1x16x16xf32>
    %84 = vector.shape_cast %83 : vector<4x1x16x16xf32> to vector<4x16x16xf32>
    %85 = arith.addf %82, %84 : vector<4x16x16xf32>
    %cst_32 = arith.constant dense<0xFF800000> : vector<4x16xf32>
    %86 = vector.multi_reduction <maximumf>, %85, %cst_32 [2] : vector<4x16x16xf32> to vector<4x16xf32>
    %87 = vector.shape_cast %86 : vector<4x16xf32> to vector<4x16x1xf32>
    %88 = vector.broadcast %87 : vector<4x16x1xf32> to vector<4x16x16xf32>
    %89 = arith.subf %85, %88 : vector<4x16x16xf32>
    %90 = math.exp %89 : vector<4x16x16xf32>
    %cst_33 = arith.constant dense<0.000000e+00> : vector<4x16xf32>
    %91 = vector.multi_reduction <add>, %90, %cst_33 [2] : vector<4x16x16xf32> to vector<4x16xf32>
    %92 = vector.shape_cast %91 : vector<4x16xf32> to vector<4x16x1xf32>
    %93 = tpu.reciprocal %92 {approx = true} : vector<4x16x1xf32> -> vector<4x16x1xf32>
    %94 = vector.broadcast %93 : vector<4x16x1xf32> to vector<4x16x16xf32>
    %95 = arith.mulf %90, %94 : vector<4x16x16xf32>
    "tpu.trace_start"() <{level = 10 : i32, message = "wnm,wmd->wnd"}> : () -> ()
    %cst_34 = arith.constant dense<0.000000e+00> : vector<4x16x8xf32>
    %96 = tpu.matmul %95, %81, %cst_34 {dimension_numbers = #tpu.dot_dimension_numbers<[2], [1], [1], [2], [0, 0, 0, 1, 1, 2], [0], [0]>} : vector<4x16x16xf32>, vector<4x16x8xf32>, vector<4x16x8xf32> -> vector<4x16x8xf32>
    "tpu.trace_stop"() : () -> ()
    %97 = vector.shape_cast %96 : vector<4x16x8xf32> to vector<64x8xf32>
    %c0_35 = arith.constant 0 : index
    %c16 = arith.constant 16 : index
    %98 = vector.load %arg10[%c0_35, %c16] : memref<64x32xf32, #tpu.memory_space<vmem>>, vector<64x8xf32>
    tpu.vector_store %arg10[%c0_35, %c16], %97 {strides = array<i32>} : memref<64x32xf32, #tpu.memory_space<vmem>>, vector<64x8xf32>,
    %99 = vector.extract_strided_slice %33 {offsets = [0, 0, 24], sizes = [4, 16, 8], strides = [1, 1, 1]} : vector<4x16x32xf32> to vector<4x16x8xf32>
    %100 = vector.extract_strided_slice %35 {offsets = [0, 0, 24], sizes = [4, 16, 8], strides = [1, 1, 1]} : vector<4x16x32xf32> to vector<4x16x8xf32>
    %101 = vector.extract_strided_slice %37 {offsets = [0, 0, 24], sizes = [4, 16, 8], strides = [1, 1, 1]} : vector<4x16x32xf32> to vector<4x16x8xf32>
    "tpu.trace_start"() <{level = 10 : i32, message = "wnd,wmd->wnm"}> : () -> ()
    %cst_36 = arith.constant dense<0.000000e+00> : vector<4x16x16xf32>
    %102 = tpu.matmul %99, %100, %cst_36 {dimension_numbers = #tpu.dot_dimension_numbers<[2], [2], [1], [1], [0, 0, 0, 1, 1, 1], [0], [0]>} : vector<4x16x8xf32>, vector<4x16x8xf32>, vector<4x16x16xf32> -> vector<4x16x16xf32>
    "tpu.trace_stop"() : () -> ()
    %103 = vector.extract_strided_slice %38 {offsets = [0, 3, 0, 0], sizes = [4, 1, 16, 16], strides = [1, 1, 1, 1]} : vector<4x4x16x16xf32> to vector<4x1x16x16xf32>
    %104 = vector.shape_cast %103 : vector<4x1x16x16xf32> to vector<4x16x16xf32>
    %105 = arith.addf %102, %104 : vector<4x16x16xf32>
    %cst_37 = arith.constant dense<0xFF800000> : vector<4x16xf32>
    %106 = vector.multi_reduction <maximumf>, %105, %cst_37 [2] : vector<4x16x16xf32> to vector<4x16xf32>
    %107 = vector.shape_cast %106 : vector<4x16xf32> to vector<4x16x1xf32>
    %108 = vector.broadcast %107 : vector<4x16x1xf32> to vector<4x16x16xf32>
    %109 = arith.subf %105, %108 : vector<4x16x16xf32>
    %110 = math.exp %109 : vector<4x16x16xf32>
    %cst_38 = arith.constant dense<0.000000e+00> : vector<4x16xf32>
    %111 = vector.multi_reduction <add>, %110, %cst_38 [2] : vector<4x16x16xf32> to vector<4x16xf32>
    %112 = vector.shape_cast %111 : vector<4x16xf32> to vector<4x16x1xf32>
    %113 = tpu.reciprocal %112 {approx = true} : vector<4x16x1xf32> -> vector<4x16x1xf32>
    %114 = vector.broadcast %113 : vector<4x16x1xf32> to vector<4x16x16xf32>
    %115 = arith.mulf %110, %114 : vector<4x16x16xf32>
    "tpu.trace_start"() <{level = 10 : i32, message = "wnm,wmd->wnd"}> : () -> ()
    %cst_39 = arith.constant dense<0.000000e+00> : vector<4x16x8xf32>
    %116 = tpu.matmul %115, %101, %cst_39 {dimension_numbers = #tpu.dot_dimension_numbers<[2], [1], [1], [2], [0, 0, 0, 1, 1, 2], [0], [0]>} : vector<4x16x16xf32>, vector<4x16x8xf32>, vector<4x16x8xf32> -> vector<4x16x8xf32>
    "tpu.trace_stop"() : () -> ()
    %117 = vector.shape_cast %116 : vector<4x16x8xf32> to vector<64x8xf32>
    %c0_40 = arith.constant 0 : index
    %c24 = arith.constant 24 : index
    %118 = vector.load %arg10[%c0_40, %c24] : memref<64x32xf32, #tpu.memory_space<vmem>>, vector<64x8xf32>
    tpu.vector_store %arg10[%c0_40, %c24], %117 {strides = array<i32>} : memref<64x32xf32, #tpu.memory_space<vmem>>, vector<64x8xf32>,
    %c0_41 = arith.constant 0 : index
    %c0_42 = arith.constant 0 : index
    %119 = vector.load %arg10[%c0_41, %c0_42] : memref<64x32xf32, #tpu.memory_space<vmem>>, vector<64x32xf32>
    %c0_43 = arith.constant 0 : index
    %c0_44 = arith.constant 0 : index
    %120 = vector.load %arg6[%c0_43, %c0_44] : memref<32x32xf32, #tpu.memory_space<vmem>>, vector<32x32xf32>
    %cst_45 = arith.constant dense<0.000000e+00> : vector<64x32xf32>
    %121 = tpu.matmul %119, %120, %cst_45 {dimension_numbers = #tpu.dot_dimension_numbers<[1], [0], [0], [1], [0, 0, 1, 1], [], []>} : vector<64x32xf32>, vector<32x32xf32>, vector<64x32xf32> -> vector<64x32xf32>
    %c0_46 = arith.constant 0 : index
    %c0_47 = arith.constant 0 : index
    %122 = vector.load %arg7[%c0_46, %c0_47] : memref<1x32xf32, #tpu.memory_space<vmem>>, vector<1x32xf32>
    %123 = vector.broadcast %122 : vector<1x32xf32> to vector<64x32xf32>
    %124 = arith.addf %121, %123 : vector<64x32xf32>
    %125 = vector.shape_cast %124 : vector<64x32xf32> to vector<4x16x32xf32>
    %c0_48 = arith.constant 0 : index
    %c0_49 = arith.constant 0 : index
    %c0_50 = arith.constant 0 : index
    %c0_51 = arith.constant 0 : index
    %126 = vector.load %arg9[%c0_48, %c0_49, %c0_50, %c0_51] : memref<1x4x16x32xf32, #tpu.memory_space<vmem>>, vector<1x4x16x32xf32>
    %127 = vector.shape_cast %126 : vector<1x4x16x32xf32> to vector<4x16x32xf32>
    %128 = vector.shape_cast %125 : vector<4x16x32xf32> to vector<1x4x16x32xf32>
    tpu.vector_store %arg9[%c0_48, %c0_49, %c0_50, %c0_51], %128 {strides = array<i32>} : memref<1x4x16x32xf32, #tpu.memory_space<vmem>>, vector<1x4x16x32xf32>,
    return
  }
  func.func @transform_0(%arg0: i32) -> (i32, i32, i32, i32) {
    %c0_i32 = arith.constant 0 : i32
    %c0_i32_0 = arith.constant 0 : i32
    %c0_i32_1 = arith.constant 0 : i32
    %c0_i32_2 = arith.constant 0 : i32
    return %arg0, %c0_i32, %c0_i32_0, %c0_i32_1 : i32, i32, i32, i32
  }
  func.func @transform_1(%arg0: i32) -> (i32, i32) {
    %c0_i32 = arith.constant 0 : i32
    %c0_i32_0 = arith.constant 0 : i32
    %c0_i32_1 = arith.constant 0 : i32
    return %c0_i32, %c0_i32_0 : i32, i32
  }
  func.func @transform_2(%arg0: i32) -> (i32, i32) {
    %c0_i32 = arith.constant 0 : i32
    %c0_i32_0 = arith.constant 0 : i32
    %c0_i32_1 = arith.constant 0 : i32
    return %c0_i32, %c0_i32_0 : i32, i32
  }
  func.func @transform_3(%arg0: i32) -> (i32, i32) {
    %c0_i32 = arith.constant 0 : i32
    %c0_i32_0 = arith.constant 0 : i32
    %c0_i32_1 = arith.constant 0 : i32
    return %c0_i32, %c0_i32_0 : i32, i32
  }
  func.func @transform_4(%arg0: i32) -> (i32, i32) {
    %c0_i32 = arith.constant 0 : i32
    %c0_i32_0 = arith.constant 0 : i32
    %c0_i32_1 = arith.constant 0 : i32
    return %c0_i32, %c0_i32_0 : i32, i32
  }
  func.func @transform_5(%arg0: i32) -> (i32, i32) {
    %c0_i32 = arith.constant 0 : i32
    %c0_i32_0 = arith.constant 0 : i32
    %c0_i32_1 = arith.constant 0 : i32
    return %c0_i32, %c0_i32_0 : i32, i32
  }
  func.func @transform_6(%arg0: i32) -> (i32, i32) {
    %c0_i32 = arith.constant 0 : i32
    %c0_i32_0 = arith.constant 0 : i32
    %c0_i32_1 = arith.constant 0 : i32
    return %c0_i32, %c0_i32_0 : i32, i32
  }
  func.func @transform_7(%arg0: i32) -> (i32, i32, i32, i32) {
    %c0_i32 = arith.constant 0 : i32
    %c0_i32_0 = arith.constant 0 : i32
    %c0_i32_1 = arith.constant 0 : i32
    %c0_i32_2 = arith.constant 0 : i32
    %c0_i32_3 = arith.constant 0 : i32
    return %c0_i32, %c0_i32_0, %c0_i32_1, %c0_i32_2 : i32, i32, i32, i32
  }
  func.func @transform_8(%arg0: i32) -> (i32, i32, i32, i32) {
    %c0_i32 = arith.constant 0 : i32
    %c0_i32_0 = arith.constant 0 : i32
    %c0_i32_1 = arith.constant 0 : i32
    %c0_i32_2 = arith.constant 0 : i32
    return %arg0, %c0_i32, %c0_i32_0, %c0_i32_1 : i32, i32, i32, i32
  }
}

</mosaic_0001>

<llo_original>
// kernel: _lambda_.5
$region0: #{_lambda_.5}
  #allocation0 [shape = 'u32[]', space=smem, size = 0x4, offset = 0x4, fixed_abs, tag = 'smem constant byte address 0x4 - core index']
  #allocation1 [shape = 'u32[144,128]{1,0:T(1,128)}', space=vmem, size = 0x12000, scoped, tag = 'internal scratch']
  %s0 = inlined_call_operand.vmem [shape: f32[128,32], index: 0, kind: input, shape index: {}]
  %s1 = inlined_call_operand.vmem [shape: f32[128,32], index: 1, kind: input, shape index: {}]
  %s2 = inlined_call_operand.vmem [shape: f32[1,32], index: 2, kind: input, shape index: {}]
  %s3 = inlined_call_operand.vmem [shape: f32[1,32], index: 3, kind: input, shape index: {}]
  %s4 = inlined_call_operand.vmem [shape: f32[32,128], index: 4, kind: input, shape index: {}]
  %s5 = inlined_call_operand.vmem [shape: f32[1,128], index: 5, kind: input, shape index: {}]
  %s6 = inlined_call_operand.vmem [shape: f32[128,32], index: 6, kind: input, shape index: {}]
  %s7 = inlined_call_operand.vmem [shape: f32[1,32], index: 7, kind: input, shape index: {}]
  %s8 = inlined_call_operand.vmem [shape: f32[128,32], index: 8, kind: output, shape index: {}]
  %s9 = sld [smem:[#allocation0]]
  $region65: #{_lambda_.5} parent=0
    _
  %s11 = ssub.s32 1, %s9
  %s12 = scalar_select 0, %s11, %s9
  loop: start=0, step=1, limit=4
  $region2: #{_lambda_.5} parent=0 // loop_pre_header
    _
  $region3: #{_lambda_.5} parent=0 // loop_header
    %s14 = sphi 0, %s18
    %p15 = scmp.ge.s32.totalorder %s14, 4
    %s24 = sphi 0, %s26
    %s27 = sphi 0, %s24
    %s28 = sphi 0, %s27
    %s44 = sphi 0, %s28
    %s50 = sphi 0, %s52
    %s53 = sphi 0, %s50
    %s54 = sphi 0, %s53
    %s70 = sphi 0, %s54
    %s74 = sphi 0, %s74
    %s76 = sphi 0, %s74
    %s77 = sphi 0, %s76
    %s91 = sphi 0, %s77
    %s95 = sphi 0, %s95
    %s97 = sphi 0, %s95
    %s98 = sphi 0, %s97
    %s112 = sphi 0, %s98
    %s116 = sphi 0, %s116
    %s118 = sphi 0, %s116
    %s119 = sphi 0, %s118
    %s133 = sphi 0, %s119
    %s137 = sphi 0, %s137
    %s139 = sphi 0, %s137
    %s140 = sphi 0, %s139
    %s154 = sphi 0, %s140
    %s158 = sphi 0, %s158
    %s160 = sphi 0, %s158
    %s161 = sphi 0, %s160
    %s175 = sphi 0, %s161
    %s179 = sphi 0, %s179
    %s181 = sphi 0, %s179
    %s182 = sphi 0, %s181
    %s196 = sphi 0, %s182
    %s202 = sphi 0, %s204
    %s205 = sphi 0, %s202
    %s206 = sphi 0, %s205
    %s222 = sphi 0, %s206
  $region4: #{_lambda_.5} parent=0 // loop_header_branch
    %17 = sbr.rel (%p15) target = $region8
  $region5: #{_lambda_.5} parent=0 // loop_body
    %s19 = ssub.s32 %s14, 1
    %s20 = ssub.s32 %s14, 2
    %s21 = sadd.s32 %s14, 1
    %s22 = ssub.s32 %s14, %s21
    %p23 = scmp.eq.s32.totalorder %s22, 0
    %s25 = sadd.s32 %s24, 1
    %s26 = scalar_select %p23, %s24, %s25
    %p29 = pneg %p23
    %p30 = scmp.eq.s32.totalorder %s14, 1
    %p31 = por %p29, %p30
    %p32 = scmp.ne.s32.totalorder %s24, %s27
    %p33 = scmp.eq.s32.totalorder %s14, 0
    %p34 = por %p32, %p33
    %p35 = scmp.ne.s32.totalorder %s24, %s27
    %p36 = scmp.eq.s32.totalorder %s19, 1
    %p37 = por %p35, %p36
    %p38 = scmp.ne.s32.totalorder %s27, %s28
    %p39 = scmp.eq.s32.totalorder %s19, 0
    %p40 = por %p38, %p39
    %p41 = scmp.ne.s32.totalorder %s27, %s28
    %p42 = scmp.eq.s32.totalorder %s20, 1
    %p43 = por %p41, %p42
    %p45 = scmp.ne.s32.totalorder %s28, %s44
    %p46 = scmp.eq.s32.totalorder %s20, 0
    %p47 = por %p45, %p46
    %s48 = ssub.s32 %s14, %s21
    %p49 = scmp.eq.s32.totalorder %s48, 0
    %s51 = sadd.s32 %s50, 1
    %s52 = scalar_select %p49, %s50, %s51
    %p55 = pneg %p49
    %p56 = scmp.eq.s32.totalorder %s14, 1
    %p57 = por %p55, %p56
    %p58 = scmp.ne.s32.totalorder %s50, %s53
    %p59 = scmp.eq.s32.totalorder %s14, 0
    %p60 = por %p58, %p59
    %p61 = scmp.ne.s32.totalorder %s50, %s53
    %p62 = scmp.eq.s32.totalorder %s19, 1
    %p63 = por %p61, %p62
    %p64 = scmp.ne.s32.totalorder %s53, %s54
    %p65 = scmp.eq.s32.totalorder %s19, 0
    %p66 = por %p64, %p65
    %p67 = scmp.ne.s32.totalorder %s53, %s54
    %p68 = scmp.eq.s32.totalorder %s20, 1
    %p69 = por %p67, %p68
    %p71 = scmp.ne.s32.totalorder %s54, %s70
    %p72 = scmp.eq.s32.totalorder %s20, 0
    %p73 = por %p71, %p72
    %s75 = sadd.s32 %s74, 1
    %p78 = scmp.eq.s32.totalorder %s14, 1
    %p79 = scmp.ne.s32.totalorder %s74, %s76
    %p80 = scmp.eq.s32.totalorder %s14, 0
    %p81 = por %p79, %p80
    %p82 = scmp.ne.s32.totalorder %s74, %s76
    %p83 = scmp.eq.s32.totalorder %s19, 1
    %p84 = por %p82, %p83
    %p85 = scmp.ne.s32.totalorder %s76, %s77
    %p86 = scmp.eq.s32.totalorder %s19, 0
    %p87 = por %p85, %p86
    %p88 = scmp.ne.s32.totalorder %s76, %s77
    %p89 = scmp.eq.s32.totalorder %s20, 1
    %p90 = por %p88, %p89
    %p92 = scmp.ne.s32.totalorder %s77, %s91
    %p93 = scmp.eq.s32.totalorder %s20, 0
    %p94 = por %p92, %p93
    %s96 = sadd.s32 %s95, 1
    %p99 = scmp.eq.s32.totalorder %s14, 1
    %p100 = scmp.ne.s32.totalorder %s95, %s97
    %p101 = scmp.eq.s32.totalorder %s14, 0
    %p102 = por %p100, %p101
    %p103 = scmp.ne.s32.totalorder %s95, %s97
    %p104 = scmp.eq.s32.totalorder %s19, 1
    %p105 = por %p103, %p104
    %p106 = scmp.ne.s32.totalorder %s97, %s98
    %p107 = scmp.eq.s32.totalorder %s19, 0
    %p108 = por %p106, %p107
    %p109 = scmp.ne.s32.totalorder %s97, %s98
    %p110 = scmp.eq.s32.totalorder %s20, 1
    %p111 = por %p109, %p110
    %p113 = scmp.ne.s32.totalorder %s98, %s112
    %p114 = scmp.eq.s32.totalorder %s20, 0
    %p115 = por %p113, %p114
    %s117 = sadd.s32 %s116, 1
    %p120 = scmp.eq.s32.totalorder %s14, 1
    %p121 = scmp.ne.s32.totalorder %s116, %s118
    %p122 = scmp.eq.s32.totalorder %s14, 0
    %p123 = por %p121, %p122
    %p124 = scmp.ne.s32.totalorder %s116, %s118
    %p125 = scmp.eq.s32.totalorder %s19, 1
    %p126 = por %p124, %p125
    %p127 = scmp.ne.s32.totalorder %s118, %s119
    %p128 = scmp.eq.s32.totalorder %s19, 0
    %p129 = por %p127, %p128
    %p130 = scmp.ne.s32.totalorder %s118, %s119
    %p131 = scmp.eq.s32.totalorder %s20, 1
    %p132 = por %p130, %p131
    %p134 = scmp.ne.s32.totalorder %s119, %s133
    %p135 = scmp.eq.s32.totalorder %s20, 0
    %p136 = por %p134, %p135
    %s138 = sadd.s32 %s137, 1
    %p141 = scmp.eq.s32.totalorder %s14, 1
    %p142 = scmp.ne.s32.totalorder %s137, %s139
    %p143 = scmp.eq.s32.totalorder %s14, 0
    %p144 = por %p142, %p143
    %p145 = scmp.ne.s32.totalorder %s137, %s139
    %p146 = scmp.eq.s32.totalorder %s19, 1
    %p147 = por %p145, %p146
    %p148 = scmp.ne.s32.totalorder %s139, %s140
    %p149 = scmp.eq.s32.totalorder %s19, 0
    %p150 = por %p148, %p149
    %p151 = scmp.ne.s32.totalorder %s139, %s140
    %p152 = scmp.eq.s32.totalorder %s20, 1
    %p153 = por %p151, %p152
    %p155 = scmp.ne.s32.totalorder %s140, %s154
    %p156 = scmp.eq.s32.totalorder %s20, 0
    %p157 = por %p155, %p156
    %s159 = sadd.s32 %s158, 1
    %p162 = scmp.eq.s32.totalorder %s14, 1
    %p163 = scmp.ne.s32.totalorder %s158, %s160
    %p164 = scmp.eq.s32.totalorder %s14, 0
    %p165 = por %p163, %p164
    %p166 = scmp.ne.s32.totalorder %s158, %s160
    %p167 = scmp.eq.s32.totalorder %s19, 1
    %p168 = por %p166, %p167
    %p169 = scmp.ne.s32.totalorder %s160, %s161
    %p170 = scmp.eq.s32.totalorder %s19, 0
    %p171 = por %p169, %p170
    %p172 = scmp.ne.s32.totalorder %s160, %s161
    %p173 = scmp.eq.s32.totalorder %s20, 1
    %p174 = por %p172, %p173
    %p176 = scmp.ne.s32.totalorder %s161, %s175
    %p177 = scmp.eq.s32.totalorder %s20, 0
    %p178 = por %p176, %p177
    %s180 = sadd.s32 %s179, 1
    %p183 = scmp.eq.s32.totalorder %s14, 1
    %p184 = scmp.ne.s32.totalorder %s179, %s181
    %p185 = scmp.eq.s32.totalorder %s14, 0
    %p186 = por %p184, %p185
    %p187 = scmp.ne.s32.totalorder %s179, %s181
    %p188 = scmp.eq.s32.totalorder %s19, 1
    %p189 = por %p187, %p188
    %p190 = scmp.ne.s32.totalorder %s181, %s182
    %p191 = scmp.eq.s32.totalorder %s19, 0
    %p192 = por %p190, %p191
    %p193 = scmp.ne.s32.totalorder %s181, %s182
    %p194 = scmp.eq.s32.totalorder %s20, 1
    %p195 = por %p193, %p194
    %p197 = scmp.ne.s32.totalorder %s182, %s196
    %p198 = scmp.eq.s32.totalorder %s20, 0
    %p199 = por %p197, %p198
    %s200 = ssub.s32 %s14, %s21
    %p201 = scmp.eq.s32.totalorder %s200, 0
    %s203 = sadd.s32 %s202, 1
    %s204 = scalar_select %p201, %s202, %s203
    %p207 = pneg %p201
    %p208 = scmp.eq.s32.totalorder %s14, 1
    %p209 = por %p207, %p208
    %p210 = scmp.ne.s32.totalorder %s202, %s205
    %p211 = scmp.eq.s32.totalorder %s14, 0
    %p212 = por %p210, %p211
    %p213 = scmp.ne.s32.totalorder %s202, %s205
    %p214 = scmp.eq.s32.totalorder %s19, 1
    %p215 = por %p213, %p214
    %p216 = scmp.ne.s32.totalorder %s205, %s206
    %p217 = scmp.eq.s32.totalorder %s19, 0
    %p218 = por %p216, %p217
    %p219 = scmp.ne.s32.totalorder %s205, %s206
    %p220 = scmp.eq.s32.totalorder %s20, 1
    %p221 = por %p219, %p220
    %p223 = scmp.ne.s32.totalorder %s206, %s222
    %p224 = scmp.eq.s32.totalorder %s20, 0
    %p225 = por %p223, %p224
    %p226 = scmp.le.s32.totalorder 1, %s14
    %p227 = scmp.lt.s32.totalorder %s14, 3
    %p228 = pnand %p226, %p227
    %p229 = pneg %p228
    // Predicated region
    $region9: #{_lambda_.5} parent=5 // pred_check
      _
    $region10: #{_lambda_.5} parent=5 // pred_check_branch
      %231 = sbr.rel (%p228) target = $region12
    $region11: #{_lambda_.5} parent=5 // pred_region
      %s232 = ssub.s32 %s14, 1
      // Predicated region
      $region13: #{_lambda_.5} parent=11 // pred_check
        %p233 = pneg %p87
      $region14: #{_lambda_.5} parent=11 // pred_check_branch
        %235 = sbr.rel (%p233) target = $region16
      $region15: #{_lambda_.5} parent=11 // pred_region
        _
      $region16: #{_lambda_.5} parent=11 // pred_fallthru
        _
      // Predicated region
      $region17: #{_lambda_.5} parent=11 // pred_check
        %p236 = pneg %p108
      $region18: #{_lambda_.5} parent=11 // pred_check_branch
        %238 = sbr.rel (%p236) target = $region20
      $region19: #{_lambda_.5} parent=11 // pred_region
        _
      $region20: #{_lambda_.5} parent=11 // pred_fallthru
        _
      // Predicated region
      $region21: #{_lambda_.5} parent=11 // pred_check
        %p239 = pneg %p129
      $region22: #{_lambda_.5} parent=11 // pred_check_branch
        %241 = sbr.rel (%p239) target = $region24
      $region23: #{_lambda_.5} parent=11 // pred_region
        _
      $region24: #{_lambda_.5} parent=11 // pred_fallthru
        _
      // Predicated region
      $region25: #{_lambda_.5} parent=11 // pred_check
        %p242 = pneg %p150
      $region26: #{_lambda_.5} parent=11 // pred_check_branch
        %244 = sbr.rel (%p242) target = $region28
      $region27: #{_lambda_.5} parent=11 // pred_region
        _
      $region28: #{_lambda_.5} parent=11 // pred_fallthru
        _
      // Predicated region
      $region29: #{_lambda_.5} parent=11 // pred_check
        %p245 = pneg %p171
      $region30: #{_lambda_.5} parent=11 // pred_check_branch
        %247 = sbr.rel (%p245) target = $region32
      $region31: #{_lambda_.5} parent=11 // pred_region
        _
      $region32: #{_lambda_.5} parent=11 // pred_fallthru
        _
      // Predicated region
      $region33: #{_lambda_.5} parent=11 // pred_check
        %p248 = pneg %p192
      $region34: #{_lambda_.5} parent=11 // pred_check_branch
        %250 = sbr.rel (%p248) target = $region36
      $region35: #{_lambda_.5} parent=11 // pred_region
        _
      $region36: #{_lambda_.5} parent=11 // pred_fallthru
        _
    $region12: #{_lambda_.5} parent=5 // pred_fallthru
      _
    %p251 = scmp.lt.s32.totalorder %s14, 2
    // Predicated region
    $region37: #{_lambda_.5} parent=5 // pred_check
      %p252 = pneg %p251
    $region38: #{_lambda_.5} parent=5 // pred_check_branch
      %254 = sbr.rel (%p252) target = $region40
    $region39: #{_lambda_.5} parent=5 // pred_region
      // Predicated region
      $region41: #{_lambda_.5} parent=39 // pred_check
        %p255 = pneg %p34
      $region42: #{_lambda_.5} parent=39 // pred_check_branch
        %257 = sbr.rel (%p255) target = $region44
      $region43: #{_lambda_.5} parent=39 // pred_region
        %s258 = smul.u32 8, %s14
        %p259 = scmp.lt.s32.totalorder %s258, 15
        %s260 = scalar_select %p259, %s258, 15
        %s261 = smul.addr %s260, 8
        %s262 = scalar_lea.vmem %s0, %s261
        %s263 = smul.u32 8, %s14
      $region44: #{_lambda_.5} parent=39 // pred_fallthru
        _
      // Predicated region
      $region45: #{_lambda_.5} parent=39 // pred_check
        %p264 = pneg %p60
      $region46: #{_lambda_.5} parent=39 // pred_check_branch
        %266 = sbr.rel (%p264) target = $region48
      $region47: #{_lambda_.5} parent=39 // pred_region
        %s267 = smul.u32 8, %s14
        %p268 = scmp.lt.s32.totalorder %s267, 15
        %s269 = scalar_select %p268, %s267, 15
        %s270 = smul.addr %s269, 8
        %s271 = scalar_lea.vmem %s1, %s270
        %s272 = smul.u32 8, %s14
      $region48: #{_lambda_.5} parent=39 // pred_fallthru
        _
    $region40: #{_lambda_.5} parent=5 // pred_fallthru
      _
    %p273 = scmp.le.s32.totalorder 1, %s14
    %p274 = scmp.lt.s32.totalorder %s14, 3
    %p275 = pnand %p273, %p274
    %p276 = pneg %p275
    // Predicated region
    $region49: #{_lambda_.5} parent=5 // pred_check
      _
    $region50: #{_lambda_.5} parent=5 // pred_check_branch
      %278 = sbr.rel (%p275) target = $region52
    $region51: #{_lambda_.5} parent=5 // pred_region
      %s279 = ssub.s32 %s14, 1
      %s280 = smul.u32 8, %s19
      %p281 = scmp.lt.s32.totalorder %s280, 15
      %s282 = scalar_select %p281, %s280, 15
      %s283 = smul.addr %s282, 8
      %s284 = scalar_lea.vmem %s0, %s283
      %p285 = pneg %p40
      %p286 = pneg %p37
      %s287 = smul.u32 8, %s19
      %p288 = scmp.lt.s32.totalorder %s287, 15
      %s289 = scalar_select %p288, %s287, 15
      %s290 = smul.addr %s289, 8
      %s291 = scalar_lea.vmem %s1, %s290
      %p292 = pneg %p66
      %p293 = pneg %p63
      %p294 = pneg %p87
      %p295 = pneg %p84
      %p296 = pneg %p108
      %p297 = pneg %p105
      %p298 = pneg %p129
      %p299 = pneg %p126
      %p300 = pneg %p150
      %p301 = pneg %p147
      %p302 = pneg %p171
      %p303 = pneg %p168
      %p304 = pneg %p192
      %p305 = pneg %p189
      %p306 = pneg %p218
      %p307 = pneg %p215
      %s308 = smul.u32 8, %s19
      %p309 = scmp.lt.s32.totalorder %s308, 15
      %s310 = scalar_select %p309, %s308, 15
      %s311 = smul.addr %s310, 8
      %s312 = scalar_lea.vmem %s8, %s311
      %s313 = smul.u32 8, %s19
      %p314 = scmp.lt.s32.totalorder %s313, 15
      %s315 = scalar_select %p314, %s313, 15
      %s316 = smul.addr %s315, 8
      %s317 = scalar_lea.vmem %s0, %s316
      %s318 = smul.u32 8, %s19
      %s319 = smul.u32 8, %s19
      %p320 = scmp.lt.s32.totalorder %s319, 15
      %s321 = scalar_select %p320, %s319, 15
      %s322 = smul.addr %s321, 8
      %s323 = scalar_lea.vmem %s1, %s322
      %s324 = smul.u32 8, %s19
      %s325 = smul.u32 8, %s19
      %p326 = scmp.lt.s32.totalorder %s325, 15
      %s327 = scalar_select %p326, %s325, 15
      %s328 = smul.addr %s327, 8
      %s329 = scalar_lea.vmem %s8, %s328
      %s330 = smul.u32 8, %s19
      %v331 = vld [vmem:[%s317] sm:$0xff]
      %v332 = vld [vmem:[%s317 + $0x8] sm:$0xff]
      %v333 = vld [vmem:[%s317 + $0x10] sm:$0xff]
      %v334 = vld [vmem:[%s317 + $0x18] sm:$0xff]
      %v335 = vld [vmem:[%s317 + $0x20] sm:$0xff]
      %v336 = vld [vmem:[%s317 + $0x28] sm:$0xff]
      %v337 = vld [vmem:[%s317 + $0x30] sm:$0xff]
      %v338 = vld [vmem:[%s317 + $0x38] sm:$0xff]
      %v339 = vld [vmem:[%s323] sm:$0xff]
      %v340 = vld [vmem:[%s323 + $0x8] sm:$0xff]
      %v341 = vld [vmem:[%s323 + $0x10] sm:$0xff]
      %v342 = vld [vmem:[%s323 + $0x18] sm:$0xff]
      %v343 = vld [vmem:[%s323 + $0x20] sm:$0xff]
      %v344 = vld [vmem:[%s323 + $0x28] sm:$0xff]
      %v345 = vld [vmem:[%s323 + $0x30] sm:$0xff]
      %v346 = vld [vmem:[%s323 + $0x38] sm:$0xff]
      %v347 = vadd.f32 %v331, %v339
      %v348 = vadd.f32 %v332, %v340
      %v349 = vadd.f32 %v333, %v341
      %v350 = vadd.f32 %v334, %v342
      %v351 = vadd.f32 %v335, %v343
      %v352 = vadd.f32 %v336, %v344
      %v353 = vadd.f32 %v337, %v345
      %v354 = vadd.f32 %v338, %v346
      %vm355 = vcmask 261120
      %v356 = vsel %vm355, %v347, 0.0
      %357 = vadd.xlane.f32.xlu0 %v356
      %v358 = vpop.xlane.xlu0 %357
      %v359 = vsel %vm355, %v348, 0.0
      %360 = vadd.xlane.f32.xlu0 %v359
      %v361 = vpop.xlane.xlu0 %360
      %v362 = vsel %vm355, %v349, 0.0
      %363 = vadd.xlane.f32.xlu0 %v362
      %v364 = vpop.xlane.xlu0 %363
      %v365 = vsel %vm355, %v350, 0.0
      %366 = vadd.xlane.f32.xlu0 %v365
      %v367 = vpop.xlane.xlu0 %366
      %v368 = vsel %vm355, %v351, 0.0
      %369 = vadd.xlane.f32.xlu0 %v368
      %v370 = vpop.xlane.xlu0 %369
      %v371 = vsel %vm355, %v352, 0.0
      %372 = vadd.xlane.f32.xlu0 %v371
      %v373 = vpop.xlane.xlu0 %372
      %v374 = vsel %vm355, %v353, 0.0
      %375 = vadd.xlane.f32.xlu0 %v374
      %v376 = vpop.xlane.xlu0 %375
      %v377 = vsel %vm355, %v354, 0.0
      %378 = vadd.xlane.f32.xlu0 %v377
      %v379 = vpop.xlane.xlu0 %378
      %v380 = vrcp.pop 32.0
      %v381 = vmul.f32 %v358, %v380
      %v382 = vmul.f32 %v361, %v380
      %v383 = vmul.f32 %v364, %v380
      %v384 = vmul.f32 %v367, %v380
      %v385 = vmul.f32 %v370, %v380
      %v386 = vmul.f32 %v373, %v380
      %v387 = vmul.f32 %v376, %v380
      %v388 = vmul.f32 %v379, %v380
      %v389 = vsub.f32 %v347, %v381
      %v390 = vsub.f32 %v348, %v382
      %v391 = vsub.f32 %v349, %v383
      %v392 = vsub.f32 %v350, %v384
      %v393 = vsub.f32 %v351, %v385
      %v394 = vsub.f32 %v352, %v386
      %v395 = vsub.f32 %v353, %v387
      %v396 = vsub.f32 %v354, %v388
      %v397 = vmul.f32 %v389, %v389
      %v398 = vmul.f32 %v390, %v390
      %v399 = vmul.f32 %v391, %v391
      %v400 = vmul.f32 %v392, %v392
      %v401 = vmul.f32 %v393, %v393
      %v402 = vmul.f32 %v394, %v394
      %v403 = vmul.f32 %v395, %v395
      %v404 = vmul.f32 %v396, %v396
      %v405 = vsel %vm355, %v397, 0.0
      %406 = vadd.xlane.f32.xlu0 %v405
      %v407 = vpop.xlane.xlu0 %406
      %v408 = vsel %vm355, %v398, 0.0
      %409 = vadd.xlane.f32.xlu0 %v408
      %v410 = vpop.xlane.xlu0 %409
      %v411 = vsel %vm355, %v399, 0.0
      %412 = vadd.xlane.f32.xlu0 %v411
      %v413 = vpop.xlane.xlu0 %412
      %v414 = vsel %vm355, %v400, 0.0
      %415 = vadd.xlane.f32.xlu0 %v414
      %v416 = vpop.xlane.xlu0 %415
      %v417 = vsel %vm355, %v401, 0.0
      %418 = vadd.xlane.f32.xlu0 %v417
      %v419 = vpop.xlane.xlu0 %418
      %v420 = vsel %vm355, %v402, 0.0
      %421 = vadd.xlane.f32.xlu0 %v420
      %v422 = vpop.xlane.xlu0 %421
      %v423 = vsel %vm355, %v403, 0.0
      %424 = vadd.xlane.f32.xlu0 %v423
      %v425 = vpop.xlane.xlu0 %424
      %v426 = vsel %vm355, %v404, 0.0
      %427 = vadd.xlane.f32.xlu0 %v426
      %v428 = vpop.xlane.xlu0 %427
      %v429 = vmul.f32 %v407, %v380
      %v430 = vmul.f32 %v410, %v380
      %v431 = vmul.f32 %v413, %v380
      %v432 = vmul.f32 %v416, %v380
      %v433 = vmul.f32 %v419, %v380
      %v434 = vmul.f32 %v422, %v380
      %v435 = vmul.f32 %v425, %v380
      %v436 = vmul.f32 %v428, %v380
      %v437 = vadd.f32 %v429, 1e-05
      %v438 = vadd.f32 %v430, 1e-05
      %v439 = vadd.f32 %v431, 1e-05
      %v440 = vadd.f32 %v432, 1e-05
      %v441 = vadd.f32 %v433, 1e-05
      %v442 = vadd.f32 %v434, 1e-05
      %v443 = vadd.f32 %v435, 1e-05
      %v444 = vadd.f32 %v436, 1e-05
      %v445 = vrsqrt.pop %v437
      %v446 = vrsqrt.pop %v438
      %v447 = vrsqrt.pop %v439
      %v448 = vrsqrt.pop %v440
      %v449 = vrsqrt.pop %v441
      %v450 = vrsqrt.pop %v442
      %v451 = vrsqrt.pop %v443
      %v452 = vrsqrt.pop %v444
      %v453 = vmul.f32 %v389, %v445
      %v454 = vmul.f32 %v390, %v446
      %v455 = vmul.f32 %v391, %v447
      %v456 = vmul.f32 %v392, %v448
      %v457 = vmul.f32 %v393, %v449
      %v458 = vmul.f32 %v394, %v450
      %v459 = vmul.f32 %v395, %v451
      %v460 = vmul.f32 %v396, %v452
      %v461 = vld [vmem:[%s2] sm:$0x1]
      %v463 = vlaneseq
      %v464 = vshrl.u32 %v463, 7
      %v465 = vsub.s32 0, %v464
      %v466 = vrot.slane %v461, %v465
      %v468 = vmul.f32 %v453, %v466
      %v469 = vmul.f32 %v454, %v466
      %v470 = vmul.f32 %v455, %v466
      %v471 = vmul.f32 %v456, %v466
      %v472 = vmul.f32 %v457, %v466
      %v473 = vmul.f32 %v458, %v466
      %v474 = vmul.f32 %v459, %v466
      %v475 = vmul.f32 %v460, %v466
      %v476 = vld [vmem:[%s3] sm:$0x1]
      %v478 = vlaneseq
      %v479 = vshrl.u32 %v478, 7
      %v480 = vsub.s32 0, %v479
      %v481 = vrot.slane %v476, %v480
      %v483 = vadd.f32 %v468, %v481
      %v484 = vadd.f32 %v469, %v481
      %v485 = vadd.f32 %v470, %v481
      %v486 = vadd.f32 %v471, %v481
      %v487 = vadd.f32 %v472, %v481
      %v488 = vadd.f32 %v473, %v481
      %v489 = vadd.f32 %v474, %v481
      %v490 = vadd.f32 %v475, %v481
      %v491 = vld [vmem:[%s4] sm:$0xff]
      %v492 = vld [vmem:[%s4 + $0x8] sm:$0xff]
      %v493 = vld [vmem:[%s4 + $0x10] sm:$0xff]
      %v494 = vld [vmem:[%s4 + $0x18] sm:$0xff]
      %v495 = vld [vmem:[%s5] sm:$0x1]
      %v497 = vlaneseq
      %v498 = vshrl.u32 %v497, 7
      %v499 = vsub.s32 0, %v498
      %v500 = vrot.slane %v495, %v499
      %v503 = vsel %vm355, %v483, 0
      %v506 = vsel %vm355, %v484, 0
      %v509 = vsel %vm355, %v485, 0
      %v512 = vsel %vm355, %v486, 0
      %v515 = vsel %vm355, %v487, 0
      %v518 = vsel %vm355, %v488, 0
      %v521 = vsel %vm355, %v489, 0
      %v524 = vsel %vm355, %v490, 0
      %526 = vmatprep.subr.mxu0 0.0
      %527 = vmatpush1.msra.mxu0 %v491
      %528 = vmatprep.subr.mxu0 0.0
      %529 = vmatpush1.msra.mxu0 %v492
      %530 = vmatprep.subr.mxu0 0.0
      %531 = vmatpush1.msra.mxu0 %v493
      %532 = vmatprep.subr.mxu0 0.0
      %533 = vmatpush1.msra.mxu0 %v494
      %534 = vmatprep.subr.mxu0 0.0
      %535 = vmatpush1.msra.mxu0 0.0
      %536 = vmatprep.subr.mxu0 0.0
      %537 = vmatpush1.msra.mxu0 0.0
      %538 = vmatprep.subr.mxu0 0.0
      %539 = vmatpush1.msra.mxu0 0.0
      %540 = vmatprep.subr.mxu0 0.0
      %541 = vmatpush1.msra.mxu0 0.0
      %542 = vmatprep.subr.mxu0 0.0
      %543 = vmatpush1.msra.mxu0 0.0
      %544 = vmatprep.subr.mxu0 0.0
      %545 = vmatpush1.msra.mxu0 0.0
      %546 = vmatprep.subr.mxu0 0.0
      %547 = vmatpush1.msra.mxu0 0.0
      %548 = vmatprep.subr.mxu0 0.0
      %549 = vmatpush1.msra.mxu0 0.0
      %550 = vmatprep.subr.mxu0 0.0
      %551 = vmatpush1.msra.mxu0 0.0
      %552 = vmatprep.subr.mxu0 0.0
      %553 = vmatpush1.msra.mxu0 0.0
      %554 = vmatprep.subr.mxu0 0.0
      %555 = vmatpush1.msra.mxu0 0.0
      %556 = vmatprep.subr.mxu0 0.0
      %557 = vmatpush1.msra.mxu0 0.0
      %558 = vmatprep.subr.mxu0 0.0
      %559 = vmatpush1.msra.mxu0 0.0
      %560 = vmatprep.subr.mxu0 0.0
      %561 = vmatpush1.msra.mxu0 0.0
      %562 = vmatprep.subr.mxu0 0.0
      %563 = vmatpush1.msra.mxu0 0.0
      %564 = vmatprep.subr.mxu0 0.0
      %565 = vmatpush1.msra.mxu0 0.0
      %566 = vmatprep.subr.mxu0 0.0
      %567 = vmatpush1.msra.mxu0 0.0
      %568 = vmatprep.subr.mxu0 0.0
      %569 = vmatpush1.msra.mxu0 0.0
      %570 = vmatprep.subr.mxu0 0.0
      %571 = vmatpush1.msra.mxu0 0.0
      %572 = vmatprep.subr.mxu0 0.0
      %573 = vmatpush1.msra.mxu0 0.0
      %574 = vmatprep.subr.mxu0 0.0
      %575 = vmatpush1.msra.mxu0 0.0
      %576 = vmatprep.subr.mxu0 0.0
      %577 = vmatpush1.msra.mxu0 0.0
      %578 = vmatprep.subr.mxu0 0.0
      %579 = vmatpush1.msra.mxu0 0.0
      %580 = vmatprep.subr.mxu0 0.0
      %581 = vmatpush1.msra.mxu0 0.0
      %582 = vmatprep.subr.mxu0 0.0
      %583 = vmatpush1.msra.mxu0 0.0
      %584 = vmatprep.subr.mxu0 0.0
      %585 = vmatpush1.msra.mxu0 0.0
      %586 = vmatprep.subr.mxu0 0.0
      %587 = vmatpush1.msra.mxu0 0.0
      %588 = vmatprep.subr.mxu0 0.0
      %589 = vmatpush1.msra.mxu0 0.0
      %590 = vmatprep.mubr.f32.mxu0 0.0
      %591 = vmatmul.mubr.f32.gmra.mrb[0].mxu0 %v503
      %v592 = vpop.f32.mrb[0].mxu0
      %v593 = vadd.f32 %v500, %v592
      %v594 = vpop.f32.mrb[0].mxu0
      %595 = vmatprep.mubr.f32.mxu0 0.0
      %596 = vmatmul.mubr.f32.gmra.mrb[0].mxu0 %v506
      %v597 = vpop.f32.mrb[0].mxu0
      %v598 = vadd.f32 %v500, %v597
      %v599 = vpop.f32.mrb[0].mxu0
      %600 = vmatprep.mubr.f32.mxu0 0.0
      %601 = vmatmul.mubr.f32.gmra.mrb[0].mxu0 %v509
      %v602 = vpop.f32.mrb[0].mxu0
      %v603 = vadd.f32 %v500, %v602
      %v604 = vpop.f32.mrb[0].mxu0
      %605 = vmatprep.mubr.f32.mxu0 0.0
      %606 = vmatmul.mubr.f32.gmra.mrb[0].mxu0 %v512
      %v607 = vpop.f32.mrb[0].mxu0
      %v608 = vadd.f32 %v500, %v607
      %v609 = vpop.f32.mrb[0].mxu0
      %610 = vmatprep.mubr.f32.mxu0 0.0
      %611 = vmatmul.mubr.f32.gmra.mrb[0].mxu0 %v515
      %v612 = vpop.f32.mrb[0].mxu0
      %v613 = vadd.f32 %v500, %v612
      %v614 = vpop.f32.mrb[0].mxu0
      %615 = vmatprep.mubr.f32.mxu0 0.0
      %616 = vmatmul.mubr.f32.gmra.mrb[0].mxu0 %v518
      %v617 = vpop.f32.mrb[0].mxu0
      %v618 = vadd.f32 %v500, %v617
      %v619 = vpop.f32.mrb[0].mxu0
      %620 = vmatprep.mubr.f32.mxu0 0.0
      %621 = vmatmul.mubr.f32.gmra.mrb[0].mxu0 %v521
      %v622 = vpop.f32.mrb[0].mxu0
      %v623 = vadd.f32 %v500, %v622
      %v624 = vpop.f32.mrb[0].mxu0
      %625 = vmatprep.mubr.f32.mxu0 0.0
      %626 = vmatmul.mubr.f32.gmra.mrb[0].mxu0 %v524
      %v627 = vpop.f32.mrb[0].mxu0
      %v628 = vadd.f32 %v500, %v627
      %v629 = vpop.f32.mrb[0].mxu0
      %630 = vdwg.mxu0
      %v631 = vmul.f32 %v593, 0.5
      %v632 = vmul.f32 %v598, 0.5
      %v633 = vmul.f32 %v603, 0.5
      %v634 = vmul.f32 %v608, 0.5
      %v635 = vmul.f32 %v613, 0.5
      %v636 = vmul.f32 %v618, 0.5
      %v637 = vmul.f32 %v623, 0.5
      %v638 = vmul.f32 %v628, 0.5
      %v639 = vmul.f32 %v593, 0.70710677
      %v640 = vmul.f32 %v598, 0.70710677
      %v641 = vmul.f32 %v603, 0.70710677
      %v642 = vmul.f32 %v608, 0.70710677
      %v643 = vmul.f32 %v613, 0.70710677
      %v644 = vmul.f32 %v618, 0.70710677
      %v645 = vmul.f32 %v623, 0.70710677
      %v646 = vmul.f32 %v628, 0.70710677
      %v647 = verf.f32.pop %v639
      %v648 = verf.f32.pop %v640
      %v649 = verf.f32.pop %v641
      %v650 = verf.f32.pop %v642
      %v651 = verf.f32.pop %v643
      %v652 = verf.f32.pop %v644
      %v653 = verf.f32.pop %v645
      %v654 = verf.f32.pop %v646
      %v655 = vadd.f32 %v647, 1.0
      %v656 = vadd.f32 %v648, 1.0
      %v657 = vadd.f32 %v649, 1.0
      %v658 = vadd.f32 %v650, 1.0
      %v659 = vadd.f32 %v651, 1.0
      %v660 = vadd.f32 %v652, 1.0
      %v661 = vadd.f32 %v653, 1.0
      %v662 = vadd.f32 %v654, 1.0
      %v663 = vmul.f32 %v631, %v655
      %v664 = vmul.f32 %v632, %v656
      %v665 = vmul.f32 %v633, %v657
      %v666 = vmul.f32 %v634, %v658
      %v667 = vmul.f32 %v635, %v659
      %v668 = vmul.f32 %v636, %v660
      %v669 = vmul.f32 %v637, %v661
      %v670 = vmul.f32 %v638, %v662
      %v671 = vld [vmem:[%s6] sm:$0xff]
      %v672 = vld [vmem:[%s6 + $0x8] sm:$0xff]
      %v673 = vld [vmem:[%s6 + $0x10] sm:$0xff]
      %v674 = vld [vmem:[%s6 + $0x18] sm:$0xff]
      %v675 = vld [vmem:[%s6 + $0x20] sm:$0xff]
      %v676 = vld [vmem:[%s6 + $0x28] sm:$0xff]
      %v677 = vld [vmem:[%s6 + $0x30] sm:$0xff]
      %v678 = vld [vmem:[%s6 + $0x38] sm:$0xff]
      %v679 = vld [vmem:[%s6 + $0x40] sm:$0xff]
      %v680 = vld [vmem:[%s6 + $0x48] sm:$0xff]
      %v681 = vld [vmem:[%s6 + $0x50] sm:$0xff]
      %v682 = vld [vmem:[%s6 + $0x58] sm:$0xff]
      %v683 = vld [vmem:[%s6 + $0x60] sm:$0xff]
      %v684 = vld [vmem:[%s6 + $0x68] sm:$0xff]
      %v685 = vld [vmem:[%s6 + $0x70] sm:$0xff]
      %v686 = vld [vmem:[%s6 + $0x78] sm:$0xff]
      %687 = vmatprep.subr.mxu0 0.0
      %688 = vmatpush1.msra.mxu0 %v671
      %689 = vmatprep.subr.mxu0 0.0
      %690 = vmatpush1.msra.mxu0 %v672
      %691 = vmatprep.subr.mxu0 0.0
      %692 = vmatpush1.msra.mxu0 %v673
      %693 = vmatprep.subr.mxu0 0.0
      %694 = vmatpush1.msra.mxu0 %v674
      %695 = vmatprep.subr.mxu0 0.0
      %696 = vmatpush1.msra.mxu0 %v675
      %697 = vmatprep.subr.mxu0 0.0
      %698 = vmatpush1.msra.mxu0 %v676
      %699 = vmatprep.subr.mxu0 0.0
      %700 = vmatpush1.msra.mxu0 %v677
      %701 = vmatprep.subr.mxu0 0.0
      %702 = vmatpush1.msra.mxu0 %v678
      %703 = vmatprep.subr.mxu0 0.0
      %704 = vmatpush1.msra.mxu0 %v679
      %705 = vmatprep.subr.mxu0 0.0
      %706 = vmatpush1.msra.mxu0 %v680
      %707 = vmatprep.subr.mxu0 0.0
      %708 = vmatpush1.msra.mxu0 %v681
      %709 = vmatprep.subr.mxu0 0.0
      %710 = vmatpush1.msra.mxu0 %v682
      %711 = vmatprep.subr.mxu0 0.0
      %712 = vmatpush1.msra.mxu0 %v683
      %713 = vmatprep.subr.mxu0 0.0
      %714 = vmatpush1.msra.mxu0 %v684
      %715 = vmatprep.subr.mxu0 0.0
      %716 = vmatpush1.msra.mxu0 %v685
      %717 = vmatprep.subr.mxu0 0.0
      %718 = vmatpush1.msra.mxu0 %v686
      %719 = vmatprep.subr.mxu0 0.0
      %720 = vmatpush1.msra.mxu0 0.0
      %721 = vmatprep.subr.mxu0 0.0
      %722 = vmatpush1.msra.mxu0 0.0
      %723 = vmatprep.subr.mxu0 0.0
      %724 = vmatpush1.msra.mxu0 0.0
      %725 = vmatprep.subr.mxu0 0.0
      %726 = vmatpush1.msra.mxu0 0.0
      %727 = vmatprep.subr.mxu0 0.0
      %728 = vmatpush1.msra.mxu0 0.0
      %729 = vmatprep.subr.mxu0 0.0
      %730 = vmatpush1.msra.mxu0 0.0
      %731 = vmatprep.subr.mxu0 0.0
      %732 = vmatpush1.msra.mxu0 0.0
      %733 = vmatprep.subr.mxu0 0.0
      %734 = vmatpush1.msra.mxu0 0.0
      %735 = vmatprep.subr.mxu0 0.0
      %736 = vmatpush1.msra.mxu0 0.0
      %737 = vmatprep.subr.mxu0 0.0
      %738 = vmatpush1.msra.mxu0 0.0
      %739 = vmatprep.subr.mxu0 0.0
      %740 = vmatpush1.msra.mxu0 0.0
      %741 = vmatprep.subr.mxu0 0.0
      %742 = vmatpush1.msra.mxu0 0.0
      %743 = vmatprep.subr.mxu0 0.0
      %744 = vmatpush1.msra.mxu0 0.0
      %745 = vmatprep.subr.mxu0 0.0
      %746 = vmatpush1.msra.mxu0 0.0
      %747 = vmatprep.subr.mxu0 0.0
      %748 = vmatpush1.msra.mxu0 0.0
      %749 = vmatprep.subr.mxu0 0.0
      %750 = vmatpush1.msra.mxu0 0.0
      %751 = vmatprep.mubr.f32.mxu0 0.0
      %752 = vmatmul.mubr.f32.gmra.mrb[0].mxu0 %v663
      %v753 = vpop.f32.mrb[0].mxu0
      %v754 = vadd.f32 0.0, %v753
      %v755 = vpop.f32.mrb[0].mxu0
      %756 = vmatprep.mubr.f32.mxu0 0.0
      %757 = vmatmul.mubr.f32.gmra.mrb[0].mxu0 %v664
      %v758 = vpop.f32.mrb[0].mxu0
      %v759 = vadd.f32 0.0, %v758
      %v760 = vpop.f32.mrb[0].mxu0
      %761 = vmatprep.mubr.f32.mxu0 0.0
      %762 = vmatmul.mubr.f32.gmra.mrb[0].mxu0 %v665
      %v763 = vpop.f32.mrb[0].mxu0
      %v764 = vadd.f32 0.0, %v763
      %v765 = vpop.f32.mrb[0].mxu0
      %766 = vmatprep.mubr.f32.mxu0 0.0
      %767 = vmatmul.mubr.f32.gmra.mrb[0].mxu0 %v666
      %v768 = vpop.f32.mrb[0].mxu0
      %v769 = vadd.f32 0.0, %v768
      %v770 = vpop.f32.mrb[0].mxu0
      %771 = vmatprep.mubr.f32.mxu0 0.0
      %772 = vmatmul.mubr.f32.gmra.mrb[0].mxu0 %v667
      %v773 = vpop.f32.mrb[0].mxu0
      %v774 = vadd.f32 0.0, %v773
      %v775 = vpop.f32.mrb[0].mxu0
      %776 = vmatprep.mubr.f32.mxu0 0.0
      %777 = vmatmul.mubr.f32.gmra.mrb[0].mxu0 %v668
      %v778 = vpop.f32.mrb[0].mxu0
      %v779 = vadd.f32 0.0, %v778
      %v780 = vpop.f32.mrb[0].mxu0
      %781 = vmatprep.mubr.f32.mxu0 0.0
      %782 = vmatmul.mubr.f32.gmra.mrb[0].mxu0 %v669
      %v783 = vpop.f32.mrb[0].mxu0
      %v784 = vadd.f32 0.0, %v783
      %v785 = vpop.f32.mrb[0].mxu0
      %786 = vmatprep.mubr.f32.mxu0 0.0
      %787 = vmatmul.mubr.f32.gmra.mrb[0].mxu0 %v670
      %v788 = vpop.f32.mrb[0].mxu0
      %v789 = vadd.f32 0.0, %v788
      %v790 = vpop.f32.mrb[0].mxu0
      %791 = vdwg.mxu0
      %v792 = vadd.f32 %v347, %v754
      %v793 = vadd.f32 %v348, %v759
      %v794 = vadd.f32 %v349, %v764
      %v795 = vadd.f32 %v350, %v769
      %v796 = vadd.f32 %v351, %v774
      %v797 = vadd.f32 %v352, %v779
      %v798 = vadd.f32 %v353, %v784
      %v799 = vadd.f32 %v354, %v789
      %v800 = vld [vmem:[%s7] sm:$0x1]
      %v802 = vlaneseq
      %v803 = vshrl.u32 %v802, 7
      %v804 = vsub.s32 0, %v803
      %v805 = vrot.slane %v800, %v804
      %v807 = vadd.f32 %v792, %v805
      %v808 = vadd.f32 %v793, %v805
      %v809 = vadd.f32 %v794, %v805
      %v810 = vadd.f32 %v795, %v805
      %v811 = vadd.f32 %v796, %v805
      %v812 = vadd.f32 %v797, %v805
      %v813 = vadd.f32 %v798, %v805
      %v814 = vadd.f32 %v799, %v805
      %815 = vst.msk [vmem:[%s329] sm:$0xff] %vm355, %v807
      %816 = vst.msk [vmem:[%s329 + $0x8] sm:$0xff] %vm355, %v808
      %817 = vst.msk [vmem:[%s329 + $0x10] sm:$0xff] %vm355, %v809
      %818 = vst.msk [vmem:[%s329 + $0x18] sm:$0xff] %vm355, %v810
      %819 = vst.msk [vmem:[%s329 + $0x20] sm:$0xff] %vm355, %v811
      %820 = vst.msk [vmem:[%s329 + $0x28] sm:$0xff] %vm355, %v812
      %821 = vst.msk [vmem:[%s329 + $0x30] sm:$0xff] %vm355, %v813
      %822 = vst.msk [vmem:[%s329 + $0x38] sm:$0xff] %vm355, %v814
      %s823 = smul.u32 8, %s19
      %p824 = scmp.lt.s32.totalorder %s823, 15
      %s825 = scalar_select %p824, %s823, 15
      %s826 = smul.addr %s825, 8
      %s827 = scalar_lea.vmem %s8, %s826
      // Predicated region
      $region53: #{_lambda_.5} parent=51 // pred_check
        %p828 = pneg %p215
      $region54: #{_lambda_.5} parent=51 // pred_check_branch
        %830 = sbr.rel (%p828) target = $region56
      $region55: #{_lambda_.5} parent=51 // pred_region
        %s831 = smul.u32 8, %s19
      $region56: #{_lambda_.5} parent=51 // pred_fallthru
        _
    $region52: #{_lambda_.5} parent=5 // pred_fallthru
      _
    %p832 = scmp.le.s32.totalorder 2, %s14
    // Predicated region
    $region57: #{_lambda_.5} parent=5 // pred_check
      %p833 = pneg %p832
    $region58: #{_lambda_.5} parent=5 // pred_check_branch
      %835 = sbr.rel (%p833) target = $region60
    $region59: #{_lambda_.5} parent=5 // pred_region
      %s836 = ssub.s32 %s14, 2
      // Predicated region
      $region61: #{_lambda_.5} parent=59 // pred_check
        %p837 = pneg %p221
      $region62: #{_lambda_.5} parent=59 // pred_check_branch
        %839 = sbr.rel (%p837) target = $region64
      $region63: #{_lambda_.5} parent=59 // pred_region
        %s840 = smul.u32 8, %s20
        %p841 = scmp.lt.s32.totalorder %s840, 15
        %s842 = scalar_select %p841, %s840, 15
        %s843 = smul.addr %s842, 8
        %s844 = scalar_lea.vmem %s8, %s843
      $region64: #{_lambda_.5} parent=59 // pred_fallthru
        _
    $region60: #{_lambda_.5} parent=5 // pred_fallthru
      _
  $region6: #{_lambda_.5} parent=0 // loop_footer
    %s18 = sadd.s32 1, %s14
  $region7: #{_lambda_.5} parent=0 // loop_footer_branch
    %13 = sbr.rel target = $region3
  $region8: #{_lambda_.5} parent=0 // loop_exit
    _

// kernel: _lambda_.4
$region0: #{_lambda_.4}
  #allocation0 [shape = 'u32[]', space=smem, size = 0x4, offset = 0x4, fixed_abs, tag = 'smem constant byte address 0x4 - core index']
  #allocation1 [shape = 'u32[144,128]{1,0:T(1,128)}', space=vmem, size = 0x12000, scoped, tag = 'internal scratch']
  #allocation2 [shape = 'f32[64,32]{1,0:T(8,128)}', space=vmem, size = 0x8000, scoped, tag = 'scratch operand']
  %s0 = inlined_call_operand.vmem [shape: f32[2,4,16,32], index: 0, kind: input, shape index: {}]
  %s1 = inlined_call_operand.vmem [shape: f32[1,32], index: 1, kind: input, shape index: {}]
  %s2 = inlined_call_operand.vmem [shape: f32[1,32], index: 2, kind: input, shape index: {}]
  %s3 = inlined_call_operand.vmem [shape: f32[32,96], index: 3, kind: input, shape index: {}]
  %s4 = inlined_call_operand.vmem [shape: f32[1,96], index: 4, kind: input, shape index: {}]
  %s5 = inlined_call_operand.vmem [shape: f32[32,32], index: 5, kind: input, shape index: {}]
  %s6 = inlined_call_operand.vmem [shape: f32[1,32], index: 6, kind: input, shape index: {}]
  %s7 = inlined_call_operand.vmem [shape: f32[1,4,16,16], index: 7, kind: input, shape index: {}]
  %s8 = inlined_call_operand.vmem [shape: f32[2,4,16,32], index: 8, kind: output, shape index: {}]
  %s9 = sld [smem:[#allocation0]]
  $region65: #{_lambda_.4} parent=0
    _
  %s11 = ssub.s32 1, %s9
  %s12 = scalar_select 0, %s11, %s9
  loop: start=0, step=1, limit=4
  $region2: #{_lambda_.4} parent=0 // loop_pre_header
    _
  $region3: #{_lambda_.4} parent=0 // loop_header
    %s14 = sphi 0, %s18
    %p15 = scmp.ge.s32.totalorder %s14, 4
    %s24 = sphi 0, %s26
    %s27 = sphi 0, %s24
    %s28 = sphi 0, %s27
    %s44 = sphi 0, %s28
    %s48 = sphi 0, %s48
    %s50 = sphi 0, %s48
    %s51 = sphi 0, %s50
    %s65 = sphi 0, %s51
    %s69 = sphi 0, %s69
    %s71 = sphi 0, %s69
    %s72 = sphi 0, %s71
    %s86 = sphi 0, %s72
    %s90 = sphi 0, %s90
    %s92 = sphi 0, %s90
    %s93 = sphi 0, %s92
    %s107 = sphi 0, %s93
    %s111 = sphi 0, %s111
    %s113 = sphi 0, %s111
    %s114 = sphi 0, %s113
    %s128 = sphi 0, %s114
    %s132 = sphi 0, %s132
    %s134 = sphi 0, %s132
    %s135 = sphi 0, %s134
    %s149 = sphi 0, %s135
    %s153 = sphi 0, %s153
    %s155 = sphi 0, %s153
    %s156 = sphi 0, %s155
    %s170 = sphi 0, %s156
    %s174 = sphi 0, %s174
    %s176 = sphi 0, %s174
    %s177 = sphi 0, %s176
    %s191 = sphi 0, %s177
    %s197 = sphi 0, %s199
    %s200 = sphi 0, %s197
    %s201 = sphi 0, %s200
    %s217 = sphi 0, %s201
  $region4: #{_lambda_.4} parent=0 // loop_header_branch
    %17 = sbr.rel (%p15) target = $region8
  $region5: #{_lambda_.4} parent=0 // loop_body
    %s19 = ssub.s32 %s14, 1
    %s20 = ssub.s32 %s14, 2
    %s21 = sadd.s32 %s14, 1
    %s22 = ssub.s32 %s14, %s21
    %p23 = scmp.eq.s32.totalorder %s22, 0
    %s25 = sadd.s32 %s24, 1
    %s26 = scalar_select %p23, %s24, %s25
    %p29 = pneg %p23
    %p30 = scmp.eq.s32.totalorder %s14, 1
    %p31 = por %p29, %p30
    %p32 = scmp.ne.s32.totalorder %s24, %s27
    %p33 = scmp.eq.s32.totalorder %s14, 0
    %p34 = por %p32, %p33
    %p35 = scmp.ne.s32.totalorder %s24, %s27
    %p36 = scmp.eq.s32.totalorder %s19, 1
    %p37 = por %p35, %p36
    %p38 = scmp.ne.s32.totalorder %s27, %s28
    %p39 = scmp.eq.s32.totalorder %s19, 0
    %p40 = por %p38, %p39
    %p41 = scmp.ne.s32.totalorder %s27, %s28
    %p42 = scmp.eq.s32.totalorder %s20, 1
    %p43 = por %p41, %p42
    %p45 = scmp.ne.s32.totalorder %s28, %s44
    %p46 = scmp.eq.s32.totalorder %s20, 0
    %p47 = por %p45, %p46
    %s49 = sadd.s32 %s48, 1
    %p52 = scmp.eq.s32.totalorder %s14, 1
    %p53 = scmp.ne.s32.totalorder %s48, %s50
    %p54 = scmp.eq.s32.totalorder %s14, 0
    %p55 = por %p53, %p54
    %p56 = scmp.ne.s32.totalorder %s48, %s50
    %p57 = scmp.eq.s32.totalorder %s19, 1
    %p58 = por %p56, %p57
    %p59 = scmp.ne.s32.totalorder %s50, %s51
    %p60 = scmp.eq.s32.totalorder %s19, 0
    %p61 = por %p59, %p60
    %p62 = scmp.ne.s32.totalorder %s50, %s51
    %p63 = scmp.eq.s32.totalorder %s20, 1
    %p64 = por %p62, %p63
    %p66 = scmp.ne.s32.totalorder %s51, %s65
    %p67 = scmp.eq.s32.totalorder %s20, 0
    %p68 = por %p66, %p67
    %s70 = sadd.s32 %s69, 1
    %p73 = scmp.eq.s32.totalorder %s14, 1
    %p74 = scmp.ne.s32.totalorder %s69, %s71
    %p75 = scmp.eq.s32.totalorder %s14, 0
    %p76 = por %p74, %p75
    %p77 = scmp.ne.s32.totalorder %s69, %s71
    %p78 = scmp.eq.s32.totalorder %s19, 1
    %p79 = por %p77, %p78
    %p80 = scmp.ne.s32.totalorder %s71, %s72
    %p81 = scmp.eq.s32.totalorder %s19, 0
    %p82 = por %p80, %p81
    %p83 = scmp.ne.s32.totalorder %s71, %s72
    %p84 = scmp.eq.s32.totalorder %s20, 1
    %p85 = por %p83, %p84
    %p87 = scmp.ne.s32.totalorder %s72, %s86
    %p88 = scmp.eq.s32.totalorder %s20, 0
    %p89 = por %p87, %p88
    %s91 = sadd.s32 %s90, 1
    %p94 = scmp.eq.s32.totalorder %s14, 1
    %p95 = scmp.ne.s32.totalorder %s90, %s92
    %p96 = scmp.eq.s32.totalorder %s14, 0
    %p97 = por %p95, %p96
    %p98 = scmp.ne.s32.totalorder %s90, %s92
    %p99 = scmp.eq.s32.totalorder %s19, 1
    %p100 = por %p98, %p99
    %p101 = scmp.ne.s32.totalorder %s92, %s93
    %p102 = scmp.eq.s32.totalorder %s19, 0
    %p103 = por %p101, %p102
    %p104 = scmp.ne.s32.totalorder %s92, %s93
    %p105 = scmp.eq.s32.totalorder %s20, 1
    %p106 = por %p104, %p105
    %p108 = scmp.ne.s32.totalorder %s93, %s107
    %p109 = scmp.eq.s32.totalorder %s20, 0
    %p110 = por %p108, %p109
    %s112 = sadd.s32 %s111, 1
    %p115 = scmp.eq.s32.totalorder %s14, 1
    %p116 = scmp.ne.s32.totalorder %s111, %s113
    %p117 = scmp.eq.s32.totalorder %s14, 0
    %p118 = por %p116, %p117
    %p119 = scmp.ne.s32.totalorder %s111, %s113
    %p120 = scmp.eq.s32.totalorder %s19, 1
    %p121 = por %p119, %p120
    %p122 = scmp.ne.s32.totalorder %s113, %s114
    %p123 = scmp.eq.s32.totalorder %s19, 0
    %p124 = por %p122, %p123
    %p125 = scmp.ne.s32.totalorder %s113, %s114
    %p126 = scmp.eq.s32.totalorder %s20, 1
    %p127 = por %p125, %p126
    %p129 = scmp.ne.s32.totalorder %s114, %s128
    %p130 = scmp.eq.s32.totalorder %s20, 0
    %p131 = por %p129, %p130
    %s133 = sadd.s32 %s132, 1
    %p136 = scmp.eq.s32.totalorder %s14, 1
    %p137 = scmp.ne.s32.totalorder %s132, %s134
    %p138 = scmp.eq.s32.totalorder %s14, 0
    %p139 = por %p137, %p138
    %p140 = scmp.ne.s32.totalorder %s132, %s134
    %p141 = scmp.eq.s32.totalorder %s19, 1
    %p142 = por %p140, %p141
    %p143 = scmp.ne.s32.totalorder %s134, %s135
    %p144 = scmp.eq.s32.totalorder %s19, 0
    %p145 = por %p143, %p144
    %p146 = scmp.ne.s32.totalorder %s134, %s135
    %p147 = scmp.eq.s32.totalorder %s20, 1
    %p148 = por %p146, %p147
    %p150 = scmp.ne.s32.totalorder %s135, %s149
    %p151 = scmp.eq.s32.totalorder %s20, 0
    %p152 = por %p150, %p151
    %s154 = sadd.s32 %s153, 1
    %p157 = scmp.eq.s32.totalorder %s14, 1
    %p158 = scmp.ne.s32.totalorder %s153, %s155
    %p159 = scmp.eq.s32.totalorder %s14, 0
    %p160 = por %p158, %p159
    %p161 = scmp.ne.s32.totalorder %s153, %s155
    %p162 = scmp.eq.s32.totalorder %s19, 1
    %p163 = por %p161, %p162
    %p164 = scmp.ne.s32.totalorder %s155, %s156
    %p165 = scmp.eq.s32.totalorder %s19, 0
    %p166 = por %p164, %p165
    %p167 = scmp.ne.s32.totalorder %s155, %s156
    %p168 = scmp.eq.s32.totalorder %s20, 1
    %p169 = por %p167, %p168
    %p171 = scmp.ne.s32.totalorder %s156, %s170
    %p172 = scmp.eq.s32.totalorder %s20, 0
    %p173 = por %p171, %p172
    %s175 = sadd.s32 %s174, 1
    %p178 = scmp.eq.s32.totalorder %s14, 1
    %p179 = scmp.ne.s32.totalorder %s174, %s176
    %p180 = scmp.eq.s32.totalorder %s14, 0
    %p181 = por %p179, %p180
    %p182 = scmp.ne.s32.totalorder %s174, %s176
    %p183 = scmp.eq.s32.totalorder %s19, 1
    %p184 = por %p182, %p183
    %p185 = scmp.ne.s32.totalorder %s176, %s177
    %p186 = scmp.eq.s32.totalorder %s19, 0
    %p187 = por %p185, %p186
    %p188 = scmp.ne.s32.totalorder %s176, %s177
    %p189 = scmp.eq.s32.totalorder %s20, 1
    %p190 = por %p188, %p189
    %p192 = scmp.ne.s32.totalorder %s177, %s191
    %p193 = scmp.eq.s32.totalorder %s20, 0
    %p194 = por %p192, %p193
    %s195 = ssub.s32 %s14, %s21
    %p196 = scmp.eq.s32.totalorder %s195, 0
    %s198 = sadd.s32 %s197, 1
    %s199 = scalar_select %p196, %s197, %s198
    %p202 = pneg %p196
    %p203 = scmp.eq.s32.totalorder %s14, 1
    %p204 = por %p202, %p203
    %p205 = scmp.ne.s32.totalorder %s197, %s200
    %p206 = scmp.eq.s32.totalorder %s14, 0
    %p207 = por %p205, %p206
    %p208 = scmp.ne.s32.totalorder %s197, %s200
    %p209 = scmp.eq.s32.totalorder %s19, 1
    %p210 = por %p208, %p209
    %p211 = scmp.ne.s32.totalorder %s200, %s201
    %p212 = scmp.eq.s32.totalorder %s19, 0
    %p213 = por %p211, %p212
    %p214 = scmp.ne.s32.totalorder %s200, %s201
    %p215 = scmp.eq.s32.totalorder %s20, 1
    %p216 = por %p214, %p215
    %p218 = scmp.ne.s32.totalorder %s201, %s217
    %p219 = scmp.eq.s32.totalorder %s20, 0
    %p220 = por %p218, %p219
    %p221 = scmp.le.s32.totalorder 1, %s14
    %p222 = scmp.lt.s32.totalorder %s14, 3
    %p223 = pnand %p221, %p222
    %p224 = pneg %p223
    // Predicated region
    $region9: #{_lambda_.4} parent=5 // pred_check
      _
    $region10: #{_lambda_.4} parent=5 // pred_check_branch
      %226 = sbr.rel (%p223) target = $region12
    $region11: #{_lambda_.4} parent=5 // pred_region
      %s227 = ssub.s32 %s14, 1
      // Predicated region
      $region13: #{_lambda_.4} parent=11 // pred_check
        %p228 = pneg %p61
      $region14: #{_lambda_.4} parent=11 // pred_check_branch
        %230 = sbr.rel (%p228) target = $region16
      $region15: #{_lambda_.4} parent=11 // pred_region
        _
      $region16: #{_lambda_.4} parent=11 // pred_fallthru
        _
      // Predicated region
      $region17: #{_lambda_.4} parent=11 // pred_check
        %p231 = pneg %p82
      $region18: #{_lambda_.4} parent=11 // pred_check_branch
        %233 = sbr.rel (%p231) target = $region20
      $region19: #{_lambda_.4} parent=11 // pred_region
        _
      $region20: #{_lambda_.4} parent=11 // pred_fallthru
        _
      // Predicated region
      $region21: #{_lambda_.4} parent=11 // pred_check
        %p234 = pneg %p103
      $region22: #{_lambda_.4} parent=11 // pred_check_branch
        %236 = sbr.rel (%p234) target = $region24
      $region23: #{_lambda_.4} parent=11 // pred_region
        _
      $region24: #{_lambda_.4} parent=11 // pred_fallthru
        _
      // Predicated region
      $region25: #{_lambda_.4} parent=11 // pred_check
        %p237 = pneg %p124
      $region26: #{_lambda_.4} parent=11 // pred_check_branch
        %239 = sbr.rel (%p237) target = $region28
      $region27: #{_lambda_.4} parent=11 // pred_region
        _
      $region28: #{_lambda_.4} parent=11 // pred_fallthru
        _
      // Predicated region
      $region29: #{_lambda_.4} parent=11 // pred_check
        %p240 = pneg %p145
      $region30: #{_lambda_.4} parent=11 // pred_check_branch
        %242 = sbr.rel (%p240) target = $region32
      $region31: #{_lambda_.4} parent=11 // pred_region
        _
      $region32: #{_lambda_.4} parent=11 // pred_fallthru
        _
      // Predicated region
      $region33: #{_lambda_.4} parent=11 // pred_check
        %p243 = pneg %p166
      $region34: #{_lambda_.4} parent=11 // pred_check_branch
        %245 = sbr.rel (%p243) target = $region36
      $region35: #{_lambda_.4} parent=11 // pred_region
        _
      $region36: #{_lambda_.4} parent=11 // pred_fallthru
        _
      // Predicated region
      $region37: #{_lambda_.4} parent=11 // pred_check
        %p246 = pneg %p187
      $region38: #{_lambda_.4} parent=11 // pred_check_branch
        %248 = sbr.rel (%p246) target = $region40
      $region39: #{_lambda_.4} parent=11 // pred_region
        _
      $region40: #{_lambda_.4} parent=11 // pred_fallthru
        _
    $region12: #{_lambda_.4} parent=5 // pred_fallthru
      _
    %p249 = scmp.lt.s32.totalorder %s14, 2
    // Predicated region
    $region41: #{_lambda_.4} parent=5 // pred_check
      %p250 = pneg %p249
    $region42: #{_lambda_.4} parent=5 // pred_check_branch
      %252 = sbr.rel (%p250) target = $region44
    $region43: #{_lambda_.4} parent=5 // pred_region
      // Predicated region
      $region45: #{_lambda_.4} parent=43 // pred_check
        %p253 = pneg %p34
      $region46: #{_lambda_.4} parent=43 // pred_check_branch
        %255 = sbr.rel (%p253) target = $region48
      $region47: #{_lambda_.4} parent=43 // pred_region
        %p256 = scmp.lt.s32.totalorder %s14, 1
        %s257 = scalar_select %p256, %s14, 1
        %s258 = smul.addr %s257, 8
        %s259 = smul.addr %s258, 8
        %s260 = scalar_lea.vmem %s0, %s259
      $region48: #{_lambda_.4} parent=43 // pred_fallthru
        _
    $region44: #{_lambda_.4} parent=5 // pred_fallthru
      _
    %p261 = scmp.le.s32.totalorder 1, %s14
    %p262 = scmp.lt.s32.totalorder %s14, 3
    %p263 = pnand %p261, %p262
    %p264 = pneg %p263
    // Predicated region
    $region49: #{_lambda_.4} parent=5 // pred_check
      _
    $region50: #{_lambda_.4} parent=5 // pred_check_branch
      %266 = sbr.rel (%p263) target = $region52
    $region51: #{_lambda_.4} parent=5 // pred_region
      %s267 = ssub.s32 %s14, 1
      %p268 = scmp.lt.s32.totalorder %s19, 1
      %s269 = scalar_select %p268, %s19, 1
      %s270 = smul.addr %s269, 8
      %s271 = smul.addr %s270, 8
      %s272 = scalar_lea.vmem %s0, %s271
      %p273 = pneg %p40
      %p274 = pneg %p37
      %p275 = pneg %p61
      %p276 = pneg %p58
      %p277 = pneg %p82
      %p278 = pneg %p79
      %p279 = pneg %p103
      %p280 = pneg %p100
      %p281 = pneg %p124
      %p282 = pneg %p121
      %p283 = pneg %p145
      %p284 = pneg %p142
      %p285 = pneg %p166
      %p286 = pneg %p163
      %p287 = pneg %p187
      %p288 = pneg %p184
      %p289 = pneg %p213
      %p290 = pneg %p210
      %p291 = scmp.lt.s32.totalorder %s19, 1
      %s292 = scalar_select %p291, %s19, 1
      %s293 = smul.addr %s292, 8
      %s294 = smul.addr %s293, 8
      %s295 = scalar_lea.vmem %s8, %s294
      %p296 = scmp.lt.s32.totalorder %s19, 1
      %s297 = scalar_select %p296, %s19, 1
      %s298 = smul.addr %s297, 8
      %s299 = smul.addr %s298, 8
      %s300 = scalar_lea.vmem %s0, %s299
      %p301 = scmp.lt.s32.totalorder %s19, 1
      %s302 = scalar_select %p301, %s19, 1
      %s303 = smul.addr %s302, 8
      %s304 = smul.addr %s303, 8
      %s305 = scalar_lea.vmem %s8, %s304
      %v306 = vld [vmem:[%s300] sm:$0xff]
      %v307 = vld [vmem:[%s300 + $0x8] sm:$0xff]
      %v308 = vld [vmem:[%s300 + $0x10] sm:$0xff]
      %v309 = vld [vmem:[%s300 + $0x18] sm:$0xff]
      %v310 = vld [vmem:[%s300 + $0x20] sm:$0xff]
      %v311 = vld [vmem:[%s300 + $0x28] sm:$0xff]
      %v312 = vld [vmem:[%s300 + $0x30] sm:$0xff]
      %v313 = vld [vmem:[%s300 + $0x38] sm:$0xff]
      %vm314 = vcmask 261120
      %v315 = vsel %vm314, %v306, 0.0
      %316 = vadd.xlane.f32.xlu0 %v315
      %v317 = vpop.xlane.xlu0 %316
      %v318 = vsel %vm314, %v307, 0.0
      %319 = vadd.xlane.f32.xlu0 %v318
      %v320 = vpop.xlane.xlu0 %319
      %v321 = vsel %vm314, %v308, 0.0
      %322 = vadd.xlane.f32.xlu0 %v321
      %v323 = vpop.xlane.xlu0 %322
      %v324 = vsel %vm314, %v309, 0.0
      %325 = vadd.xlane.f32.xlu0 %v324
      %v326 = vpop.xlane.xlu0 %325
      %v327 = vsel %vm314, %v310, 0.0
      %328 = vadd.xlane.f32.xlu0 %v327
      %v329 = vpop.xlane.xlu0 %328
      %v330 = vsel %vm314, %v311, 0.0
      %331 = vadd.xlane.f32.xlu0 %v330
      %v332 = vpop.xlane.xlu0 %331
      %v333 = vsel %vm314, %v312, 0.0
      %334 = vadd.xlane.f32.xlu0 %v333
      %v335 = vpop.xlane.xlu0 %334
      %v336 = vsel %vm314, %v313, 0.0
      %337 = vadd.xlane.f32.xlu0 %v336
      %v338 = vpop.xlane.xlu0 %337
      %v339 = vrcp.pop 32.0
      %v340 = vmul.f32 %v317, %v339
      %v341 = vmul.f32 %v320, %v339
      %v342 = vmul.f32 %v323, %v339
      %v343 = vmul.f32 %v326, %v339
      %v344 = vmul.f32 %v329, %v339
      %v345 = vmul.f32 %v332, %v339
      %v346 = vmul.f32 %v335, %v339
      %v347 = vmul.f32 %v338, %v339
      %v348 = vsub.f32 %v306, %v340
      %v349 = vsub.f32 %v307, %v341
      %v350 = vsub.f32 %v308, %v342
      %v351 = vsub.f32 %v309, %v343
      %v352 = vsub.f32 %v310, %v344
      %v353 = vsub.f32 %v311, %v345
      %v354 = vsub.f32 %v312, %v346
      %v355 = vsub.f32 %v313, %v347
      %v356 = vmul.f32 %v348, %v348
      %v357 = vmul.f32 %v349, %v349
      %v358 = vmul.f32 %v350, %v350
      %v359 = vmul.f32 %v351, %v351
      %v360 = vmul.f32 %v352, %v352
      %v361 = vmul.f32 %v353, %v353
      %v362 = vmul.f32 %v354, %v354
      %v363 = vmul.f32 %v355, %v355
      %v364 = vsel %vm314, %v356, 0.0
      %365 = vadd.xlane.f32.xlu0 %v364
      %v366 = vpop.xlane.xlu0 %365
      %v367 = vsel %vm314, %v357, 0.0
      %368 = vadd.xlane.f32.xlu0 %v367
      %v369 = vpop.xlane.xlu0 %368
      %v370 = vsel %vm314, %v358, 0.0
      %371 = vadd.xlane.f32.xlu0 %v370
      %v372 = vpop.xlane.xlu0 %371
      %v373 = vsel %vm314, %v359, 0.0
      %374 = vadd.xlane.f32.xlu0 %v373
      %v375 = vpop.xlane.xlu0 %374
      %v376 = vsel %vm314, %v360, 0.0
      %377 = vadd.xlane.f32.xlu0 %v376
      %v378 = vpop.xlane.xlu0 %377
      %v379 = vsel %vm314, %v361, 0.0
      %380 = vadd.xlane.f32.xlu0 %v379
      %v381 = vpop.xlane.xlu0 %380
      %v382 = vsel %vm314, %v362, 0.0
      %383 = vadd.xlane.f32.xlu0 %v382
      %v384 = vpop.xlane.xlu0 %383
      %v385 = vsel %vm314, %v363, 0.0
      %386 = vadd.xlane.f32.xlu0 %v385
      %v387 = vpop.xlane.xlu0 %386
      %v388 = vmul.f32 %v366, %v339
      %v389 = vmul.f32 %v369, %v339
      %v390 = vmul.f32 %v372, %v339
      %v391 = vmul.f32 %v375, %v339
      %v392 = vmul.f32 %v378, %v339
      %v393 = vmul.f32 %v381, %v339
      %v394 = vmul.f32 %v384, %v339
      %v395 = vmul.f32 %v387, %v339
      %v396 = vadd.f32 %v388, 1e-05
      %v397 = vadd.f32 %v389, 1e-05
      %v398 = vadd.f32 %v390, 1e-05
      %v399 = vadd.f32 %v391, 1e-05
      %v400 = vadd.f32 %v392, 1e-05
      %v401 = vadd.f32 %v393, 1e-05
      %v402 = vadd.f32 %v394, 1e-05
      %v403 = vadd.f32 %v395, 1e-05
      %v404 = vrsqrt.pop %v396
      %v405 = vrsqrt.pop %v397
      %v406 = vrsqrt.pop %v398
      %v407 = vrsqrt.pop %v399
      %v408 = vrsqrt.pop %v400
      %v409 = vrsqrt.pop %v401
      %v410 = vrsqrt.pop %v402
      %v411 = vrsqrt.pop %v403
      %v412 = vmul.f32 %v348, %v404
      %v413 = vmul.f32 %v349, %v405
      %v414 = vmul.f32 %v350, %v406
      %v415 = vmul.f32 %v351, %v407
      %v416 = vmul.f32 %v352, %v408
      %v417 = vmul.f32 %v353, %v409
      %v418 = vmul.f32 %v354, %v410
      %v419 = vmul.f32 %v355, %v411
      %v420 = vld [vmem:[%s1] sm:$0x1]
      %v422 = vlaneseq
      %v423 = vshrl.u32 %v422, 7
      %v424 = vsub.s32 0, %v423
      %v425 = vrot.slane %v420, %v424
      %v427 = vmul.f32 %v412, %v425
      %v428 = vmul.f32 %v413, %v425
      %v429 = vmul.f32 %v414, %v425
      %v430 = vmul.f32 %v415, %v425
      %v431 = vmul.f32 %v416, %v425
      %v432 = vmul.f32 %v417, %v425
      %v433 = vmul.f32 %v418, %v425
      %v434 = vmul.f32 %v419, %v425
      %v435 = vld [vmem:[%s2] sm:$0x1]
      %v437 = vlaneseq
      %v438 = vshrl.u32 %v437, 7
      %v439 = vsub.s32 0, %v438
      %v440 = vrot.slane %v435, %v439
      %v442 = vadd.f32 %v427, %v440
      %v443 = vadd.f32 %v428, %v440
      %v444 = vadd.f32 %v429, %v440
      %v445 = vadd.f32 %v430, %v440
      %v446 = vadd.f32 %v431, %v440
      %v447 = vadd.f32 %v432, %v440
      %v448 = vadd.f32 %v433, %v440
      %v449 = vadd.f32 %v434, %v440
      %v450 = vld [vmem:[%s3] sm:$0xff]
      %v451 = vld [vmem:[%s3 + $0x8] sm:$0xff]
      %v452 = vld [vmem:[%s3 + $0x10] sm:$0xff]
      %v453 = vld [vmem:[%s3 + $0x18] sm:$0xff]
      %v454 = vld [vmem:[%s4] sm:$0x1]
      %v456 = vlaneseq
      %v457 = vshrl.u32 %v456, 7
      %v458 = vsub.s32 0, %v457
      %v459 = vrot.slane %v454, %v458
      %v462 = vsel %vm314, %v442, 0
      %v465 = vsel %vm314, %v443, 0
      %v468 = vsel %vm314, %v444, 0
      %v471 = vsel %vm314, %v445, 0
      %v474 = vsel %vm314, %v446, 0
      %v477 = vsel %vm314, %v447, 0
      %v480 = vsel %vm314, %v448, 0
      %v483 = vsel %vm314, %v449, 0
      %485 = vmatprep.subr.mxu0 0.0
      %486 = vmatpush1.msra.mxu0 %v450
      %487 = vmatprep.subr.mxu0 0.0
      %488 = vmatpush1.msra.mxu0 %v451
      %489 = vmatprep.subr.mxu0 0.0
      %490 = vmatpush1.msra.mxu0 %v452
      %491 = vmatprep.subr.mxu0 0.0
      %492 = vmatpush1.msra.mxu0 %v453
      %493 = vmatprep.subr.mxu0 0.0
      %494 = vmatpush1.msra.mxu0 0.0
      %495 = vmatprep.subr.mxu0 0.0
      %496 = vmatpush1.msra.mxu0 0.0
      %497 = vmatprep.subr.mxu0 0.0
      %498 = vmatpush1.msra.mxu0 0.0
      %499 = vmatprep.subr.mxu0 0.0
      %500 = vmatpush1.msra.mxu0 0.0
      %501 = vmatprep.subr.mxu0 0.0
      %502 = vmatpush1.msra.mxu0 0.0
      %503 = vmatprep.subr.mxu0 0.0
      %504 = vmatpush1.msra.mxu0 0.0
      %505 = vmatprep.subr.mxu0 0.0
      %506 = vmatpush1.msra.mxu0 0.0
      %507 = vmatprep.subr.mxu0 0.0
      %508 = vmatpush1.msra.mxu0 0.0
      %509 = vmatprep.subr.mxu0 0.0
      %510 = vmatpush1.msra.mxu0 0.0
      %511 = vmatprep.subr.mxu0 0.0
      %512 = vmatpush1.msra.mxu0 0.0
      %513 = vmatprep.subr.mxu0 0.0
      %514 = vmatpush1.msra.mxu0 0.0
      %515 = vmatprep.subr.mxu0 0.0
      %516 = vmatpush1.msra.mxu0 0.0
      %517 = vmatprep.subr.mxu0 0.0
      %518 = vmatpush1.msra.mxu0 0.0
      %519 = vmatprep.subr.mxu0 0.0
      %520 = vmatpush1.msra.mxu0 0.0
      %521 = vmatprep.subr.mxu0 0.0
      %522 = vmatpush1.msra.mxu0 0.0
      %523 = vmatprep.subr.mxu0 0.0
      %524 = vmatpush1.msra.mxu0 0.0
      %525 = vmatprep.subr.mxu0 0.0
      %526 = vmatpush1.msra.mxu0 0.0
      %527 = vmatprep.subr.mxu0 0.0
      %528 = vmatpush1.msra.mxu0 0.0
      %529 = vmatprep.subr.mxu0 0.0
      %530 = vmatpush1.msra.mxu0 0.0
      %531 = vmatprep.subr.mxu0 0.0
      %532 = vmatpush1.msra.mxu0 0.0
      %533 = vmatprep.subr.mxu0 0.0
      %534 = vmatpush1.msra.mxu0 0.0
      %535 = vmatprep.subr.mxu0 0.0
      %536 = vmatpush1.msra.mxu0 0.0
      %537 = vmatprep.subr.mxu0 0.0
      %538 = vmatpush1.msra.mxu0 0.0
      %539 = vmatprep.subr.mxu0 0.0
      %540 = vmatpush1.msra.mxu0 0.0
      %541 = vmatprep.subr.mxu0 0.0
      %542 = vmatpush1.msra.mxu0 0.0
      %543 = vmatprep.subr.mxu0 0.0
      %544 = vmatpush1.msra.mxu0 0.0
      %545 = vmatprep.subr.mxu0 0.0
      %546 = vmatpush1.msra.mxu0 0.0
      %547 = vmatprep.subr.mxu0 0.0
      %548 = vmatpush1.msra.mxu0 0.0
      %549 = vmatprep.mubr.f32.mxu0 0.0
      %550 = vmatmul.mubr.f32.gmra.mrb[0].mxu0 %v462
      %v551 = vpop.f32.mrb[0].mxu0
      %v552 = vadd.f32 %v459, %v551
      %v553 = vpop.f32.mrb[0].mxu0
      %554 = vmatprep.mubr.f32.mxu0 0.0
      %555 = vmatmul.mubr.f32.gmra.mrb[0].mxu0 %v465
      %v556 = vpop.f32.mrb[0].mxu0
      %v557 = vadd.f32 %v459, %v556
      %v558 = vpop.f32.mrb[0].mxu0
      %559 = vmatprep.mubr.f32.mxu0 0.0
      %560 = vmatmul.mubr.f32.gmra.mrb[0].mxu0 %v468
      %v561 = vpop.f32.mrb[0].mxu0
      %v562 = vadd.f32 %v459, %v561
      %v563 = vpop.f32.mrb[0].mxu0
      %564 = vmatprep.mubr.f32.mxu0 0.0
      %565 = vmatmul.mubr.f32.gmra.mrb[0].mxu0 %v471
      %v566 = vpop.f32.mrb[0].mxu0
      %v567 = vadd.f32 %v459, %v566
      %v568 = vpop.f32.mrb[0].mxu0
      %569 = vmatprep.mubr.f32.mxu0 0.0
      %570 = vmatmul.mubr.f32.gmra.mrb[0].mxu0 %v474
      %v571 = vpop.f32.mrb[0].mxu0
      %v572 = vadd.f32 %v459, %v571
      %v573 = vpop.f32.mrb[0].mxu0
      %574 = vmatprep.mubr.f32.mxu0 0.0
      %575 = vmatmul.mubr.f32.gmra.mrb[0].mxu0 %v477
      %v576 = vpop.f32.mrb[0].mxu0
      %v577 = vadd.f32 %v459, %v576
      %v578 = vpop.f32.mrb[0].mxu0
      %579 = vmatprep.mubr.f32.mxu0 0.0
      %580 = vmatmul.mubr.f32.gmra.mrb[0].mxu0 %v480
      %v581 = vpop.f32.mrb[0].mxu0
      %v582 = vadd.f32 %v459, %v581
      %v583 = vpop.f32.mrb[0].mxu0
      %584 = vmatprep.mubr.f32.mxu0 0.0
      %585 = vmatmul.mubr.f32.gmra.mrb[0].mxu0 %v483
      %v586 = vpop.f32.mrb[0].mxu0
      %v587 = vadd.f32 %v459, %v586
      %v588 = vpop.f32.mrb[0].mxu0
      %589 = vdwg.mxu0
      %v590 = vld [vmem:[%s7] sm:$0xff]
      %v591 = vld [vmem:[%s7 + $0x8] sm:$0xff]
      %v592 = vld [vmem:[%s7 + $0x10] sm:$0xff]
      %v593 = vld [vmem:[%s7 + $0x18] sm:$0xff]
      %v594 = vld [vmem:[%s7 + $0x20] sm:$0xff]
      %v595 = vld [vmem:[%s7 + $0x28] sm:$0xff]
      %v596 = vld [vmem:[%s7 + $0x30] sm:$0xff]
      %v597 = vld [vmem:[%s7 + $0x38] sm:$0xff]
      %600 = vrot.lane.b32.xlu0 %v552, 96
      %v601 = vpop.permute.xlu0 %600
      %602 = vrot.lane.b32.xlu0 %v557, 96
      %v603 = vpop.permute.xlu0 %602
      %vm604 = vcmask 64512
      %v605 = vsel %vm604, %v552, 0
      %v607 = vsel %vm604, %v557, 0
      %v609 = vsel %vm604, %v601, 0
      %v611 = vsel %vm604, %v603, 0
      %613 = vmatprep.subr.mxu0 0.0
      %614 = vmatpush1.xpose.msra.mxu0 %v609
      %615 = vmatprep.subr.mxu0 0.0
      %616 = vmatpush1.xpose.msra.mxu0 %v611
      %617 = vmatprep.subr.mxu0 0.0
      %618 = vmatpush1.xpose.msra.mxu0 0.0
      %619 = vmatprep.subr.mxu0 0.0
      %620 = vmatpush1.xpose.msra.mxu0 0.0
      %621 = vmatprep.subr.mxu0 0.0
      %622 = vmatpush1.xpose.msra.mxu0 0.0
      %623 = vmatprep.subr.mxu0 0.0
      %624 = vmatpush1.xpose.msra.mxu0 0.0
      %625 = vmatprep.subr.mxu0 0.0
      %626 = vmatpush1.xpose.msra.mxu0 0.0
      %627 = vmatprep.subr.mxu0 0.0
      %628 = vmatpush1.xpose.msra.mxu0 0.0
      %629 = vmatprep.subr.mxu0 0.0
      %630 = vmatpush1.xpose.msra.mxu0 0.0
      %631 = vmatprep.subr.mxu0 0.0
      %632 = vmatpush1.xpose.msra.mxu0 0.0
      %633 = vmatprep.subr.mxu0 0.0
      %634 = vmatpush1.xpose.msra.mxu0 0.0
      %635 = vmatprep.subr.mxu0 0.0
      %636 = vmatpush1.xpose.msra.mxu0 0.0
      %637 = vmatprep.subr.mxu0 0.0
      %638 = vmatpush1.xpose.msra.mxu0 0.0
      %639 = vmatprep.subr.mxu0 0.0
      %640 = vmatpush1.xpose.msra.mxu0 0.0
      %641 = vmatprep.subr.mxu0 0.0
      %642 = vmatpush1.xpose.msra.mxu0 0.0
      %643 = vmatprep.subr.mxu0 0.0
      %644 = vmatpush1.xpose.msra.mxu0 0.0
      %645 = vmatprep.subr.mxu0 0.0
      %646 = vmatpush1.xpose.msra.mxu0 0.0
      %647 = vmatprep.subr.mxu0 0.0
      %648 = vmatpush1.xpose.msra.mxu0 0.0
      %649 = vmatprep.subr.mxu0 0.0
      %650 = vmatpush1.xpose.msra.mxu0 0.0
      %651 = vmatprep.subr.mxu0 0.0
      %652 = vmatpush1.xpose.msra.mxu0 0.0
      %653 = vmatprep.subr.mxu0 0.0
      %654 = vmatpush1.xpose.msra.mxu0 0.0
      %655 = vmatprep.subr.mxu0 0.0
      %656 = vmatpush1.xpose.msra.mxu0 0.0
      %657 = vmatprep.subr.mxu0 0.0
      %658 = vmatpush1.xpose.msra.mxu0 0.0
      %659 = vmatprep.subr.mxu0 0.0
      %660 = vmatpush1.xpose.msra.mxu0 0.0
      %661 = vmatprep.subr.mxu0 0.0
      %662 = vmatpush1.xpose.msra.mxu0 0.0
      %663 = vmatprep.subr.mxu0 0.0
      %664 = vmatpush1.xpose.msra.mxu0 0.0
      %665 = vmatprep.subr.mxu0 0.0
      %666 = vmatpush1.xpose.msra.mxu0 0.0
      %667 = vmatprep.subr.mxu0 0.0
      %668 = vmatpush1.xpose.msra.mxu0 0.0
      %669 = vmatprep.subr.mxu0 0.0
      %670 = vmatpush1.xpose.msra.mxu0 0.0
      %671 = vmatprep.subr.mxu0 0.0
      %672 = vmatpush1.xpose.msra.mxu0 0.0
      %673 = vmatprep.subr.mxu0 0.0
      %674 = vmatpush1.xpose.msra.mxu0 0.0
      %675 = vmatprep.subr.mxu0 0.0
      %676 = vmatpush1.xpose.msra.mxu0 0.0
      %677 = vmatprep.mubr.f32.mxu0 0.0
      %678 = vmatmul.mubr.f32.gmra.mrb[0].mxu0 %v605
      %v679 = vpop.f32.mrb[0].mxu0
      %v680 = vadd.f32 %v590, %v679
      %v681 = vpop.f32.mrb[0].mxu0
      %682 = vmatprep.mubr.f32.mxu0 0.0
      %683 = vmatmul.mubr.f32.gmra.mrb[0].mxu0 %v607
      %v684 = vpop.f32.mrb[0].mxu0
      %v685 = vadd.f32 %v591, %v684
      %v686 = vpop.f32.mrb[0].mxu0
      %687 = vdwg.mxu0
      %690 = vrot.lane.b32.xlu0 %v562, 96
      %v691 = vpop.permute.xlu0 %690
      %692 = vrot.lane.b32.xlu0 %v567, 96
      %v693 = vpop.permute.xlu0 %692
      %v694 = vsel %vm604, %v562, 0
      %v696 = vsel %vm604, %v567, 0
      %v698 = vsel %vm604, %v691, 0
      %v700 = vsel %vm604, %v693, 0
      %702 = vmatprep.subr.mxu0 0.0
      %703 = vmatpush1.xpose.msra.mxu0 %v698
      %704 = vmatprep.subr.mxu0 0.0
      %705 = vmatpush1.xpose.msra.mxu0 %v700
      %706 = vmatprep.subr.mxu0 0.0
      %707 = vmatpush1.xpose.msra.mxu0 0.0
      %708 = vmatprep.subr.mxu0 0.0
      %709 = vmatpush1.xpose.msra.mxu0 0.0
      %710 = vmatprep.subr.mxu0 0.0
      %711 = vmatpush1.xpose.msra.mxu0 0.0
      %712 = vmatprep.subr.mxu0 0.0
      %713 = vmatpush1.xpose.msra.mxu0 0.0
      %714 = vmatprep.subr.mxu0 0.0
      %715 = vmatpush1.xpose.msra.mxu0 0.0
      %716 = vmatprep.subr.mxu0 0.0
      %717 = vmatpush1.xpose.msra.mxu0 0.0
      %718 = vmatprep.subr.mxu0 0.0
      %719 = vmatpush1.xpose.msra.mxu0 0.0
      %720 = vmatprep.subr.mxu0 0.0
      %721 = vmatpush1.xpose.msra.mxu0 0.0
      %722 = vmatprep.subr.mxu0 0.0
      %723 = vmatpush1.xpose.msra.mxu0 0.0
      %724 = vmatprep.subr.mxu0 0.0
      %725 = vmatpush1.xpose.msra.mxu0 0.0
      %726 = vmatprep.subr.mxu0 0.0
      %727 = vmatpush1.xpose.msra.mxu0 0.0
      %728 = vmatprep.subr.mxu0 0.0
      %729 = vmatpush1.xpose.msra.mxu0 0.0
      %730 = vmatprep.subr.mxu0 0.0
      %731 = vmatpush1.xpose.msra.mxu0 0.0
      %732 = vmatprep.subr.mxu0 0.0
      %733 = vmatpush1.xpose.msra.mxu0 0.0
      %734 = vmatprep.subr.mxu0 0.0
      %735 = vmatpush1.xpose.msra.mxu0 0.0
      %736 = vmatprep.subr.mxu0 0.0
      %737 = vmatpush1.xpose.msra.mxu0 0.0
      %738 = vmatprep.subr.mxu0 0.0
      %739 = vmatpush1.xpose.msra.mxu0 0.0
      %740 = vmatprep.subr.mxu0 0.0
      %741 = vmatpush1.xpose.msra.mxu0 0.0
      %742 = vmatprep.subr.mxu0 0.0
      %743 = vmatpush1.xpose.msra.mxu0 0.0
      %744 = vmatprep.subr.mxu0 0.0
      %745 = vmatpush1.xpose.msra.mxu0 0.0
      %746 = vmatprep.subr.mxu0 0.0
      %747 = vmatpush1.xpose.msra.mxu0 0.0
      %748 = vmatprep.subr.mxu0 0.0
      %749 = vmatpush1.xpose.msra.mxu0 0.0
      %750 = vmatprep.subr.mxu0 0.0
      %751 = vmatpush1.xpose.msra.mxu0 0.0
      %752 = vmatprep.subr.mxu0 0.0
      %753 = vmatpush1.xpose.msra.mxu0 0.0
      %754 = vmatprep.subr.mxu0 0.0
      %755 = vmatpush1.xpose.msra.mxu0 0.0
      %756 = vmatprep.subr.mxu0 0.0
      %757 = vmatpush1.xpose.msra.mxu0 0.0
      %758 = vmatprep.subr.mxu0 0.0
      %759 = vmatpush1.xpose.msra.mxu0 0.0
      %760 = vmatprep.subr.mxu0 0.0
      %761 = vmatpush1.xpose.msra.mxu0 0.0
      %762 = vmatprep.subr.mxu0 0.0
      %763 = vmatpush1.xpose.msra.mxu0 0.0
      %764 = vmatprep.subr.mxu0 0.0
      %765 = vmatpush1.xpose.msra.mxu0 0.0
      %766 = vmatprep.mubr.f32.mxu0 0.0
      %767 = vmatmul.mubr.f32.gmra.mrb[0].mxu0 %v694
      %v768 = vpop.f32.mrb[0].mxu0
      %v769 = vadd.f32 %v590, %v768
      %v770 = vpop.f32.mrb[0].mxu0
      %771 = vmatprep.mubr.f32.mxu0 0.0
      %772 = vmatmul.mubr.f32.gmra.mrb[0].mxu0 %v696
      %v773 = vpop.f32.mrb[0].mxu0
      %v774 = vadd.f32 %v591, %v773
      %v775 = vpop.f32.mrb[0].mxu0
      %776 = vdwg.mxu0
      %779 = vrot.lane.b32.xlu0 %v572, 96
      %v780 = vpop.permute.xlu0 %779
      %781 = vrot.lane.b32.xlu0 %v577, 96
      %v782 = vpop.permute.xlu0 %781
      %v783 = vsel %vm604, %v572, 0
      %v785 = vsel %vm604, %v577, 0
      %v787 = vsel %vm604, %v780, 0
      %v789 = vsel %vm604, %v782, 0
      %791 = vmatprep.subr.mxu0 0.0
      %792 = vmatpush1.xpose.msra.mxu0 %v787
      %793 = vmatprep.subr.mxu0 0.0
      %794 = vmatpush1.xpose.msra.mxu0 %v789
      %795 = vmatprep.subr.mxu0 0.0
      %796 = vmatpush1.xpose.msra.mxu0 0.0
      %797 = vmatprep.subr.mxu0 0.0
      %798 = vmatpush1.xpose.msra.mxu0 0.0
      %799 = vmatprep.subr.mxu0 0.0
      %800 = vmatpush1.xpose.msra.mxu0 0.0
      %801 = vmatprep.subr.mxu0 0.0
      %802 = vmatpush1.xpose.msra.mxu0 0.0
      %803 = vmatprep.subr.mxu0 0.0
      %804 = vmatpush1.xpose.msra.mxu0 0.0
      %805 = vmatprep.subr.mxu0 0.0
      %806 = vmatpush1.xpose.msra.mxu0 0.0
      %807 = vmatprep.subr.mxu0 0.0
      %808 = vmatpush1.xpose.msra.mxu0 0.0
      %809 = vmatprep.subr.mxu0 0.0
      %810 = vmatpush1.xpose.msra.mxu0 0.0
      %811 = vmatprep.subr.mxu0 0.0
      %812 = vmatpush1.xpose.msra.mxu0 0.0
      %813 = vmatprep.subr.mxu0 0.0
      %814 = vmatpush1.xpose.msra.mxu0 0.0
      %815 = vmatprep.subr.mxu0 0.0
      %816 = vmatpush1.xpose.msra.mxu0 0.0
      %817 = vmatprep.subr.mxu0 0.0
      %818 = vmatpush1.xpose.msra.mxu0 0.0
      %819 = vmatprep.subr.mxu0 0.0
      %820 = vmatpush1.xpose.msra.mxu0 0.0
      %821 = vmatprep.subr.mxu0 0.0
      %822 = vmatpush1.xpose.msra.mxu0 0.0
      %823 = vmatprep.subr.mxu0 0.0
      %824 = vmatpush1.xpose.msra.mxu0 0.0
      %825 = vmatprep.subr.mxu0 0.0
      %826 = vmatpush1.xpose.msra.mxu0 0.0
      %827 = vmatprep.subr.mxu0 0.0
      %828 = vmatpush1.xpose.msra.mxu0 0.0
      %829 = vmatprep.subr.mxu0 0.0
      %830 = vmatpush1.xpose.msra.mxu0 0.0
      %831 = vmatprep.subr.mxu0 0.0
      %832 = vmatpush1.xpose.msra.mxu0 0.0
      %833 = vmatprep.subr.mxu0 0.0
      %834 = vmatpush1.xpose.msra.mxu0 0.0
      %835 = vmatprep.subr.mxu0 0.0
      %836 = vmatpush1.xpose.msra.mxu0 0.0
      %837 = vmatprep.subr.mxu0 0.0
      %838 = vmatpush1.xpose.msra.mxu0 0.0
      %839 = vmatprep.subr.mxu0 0.0
      %840 = vmatpush1.xpose.msra.mxu0 0.0
      %841 = vmatprep.subr.mxu0 0.0
      %842 = vmatpush1.xpose.msra.mxu0 0.0
      %843 = vmatprep.subr.mxu0 0.0
      %844 = vmatpush1.xpose.msra.mxu0 0.0
      %845 = vmatprep.subr.mxu0 0.0
      %846 = vmatpush1.xpose.msra.mxu0 0.0
      %847 = vmatprep.subr.mxu0 0.0
      %848 = vmatpush1.xpose.msra.mxu0 0.0
      %849 = vmatprep.subr.mxu0 0.0
      %850 = vmatpush1.xpose.msra.mxu0 0.0
      %851 = vmatprep.subr.mxu0 0.0
      %852 = vmatpush1.xpose.msra.mxu0 0.0
      %853 = vmatprep.subr.mxu0 0.0
      %854 = vmatpush1.xpose.msra.mxu0 0.0
      %855 = vmatprep.mubr.f32.mxu0 0.0
      %856 = vmatmul.mubr.f32.gmra.mrb[0].mxu0 %v783
      %v857 = vpop.f32.mrb[0].mxu0
      %v858 = vadd.f32 %v590, %v857
      %v859 = vpop.f32.mrb[0].mxu0
      %860 = vmatprep.mubr.f32.mxu0 0.0
      %861 = vmatmul.mubr.f32.gmra.mrb[0].mxu0 %v785
      %v862 = vpop.f32.mrb[0].mxu0
      %v863 = vadd.f32 %v591, %v862
      %v864 = vpop.f32.mrb[0].mxu0
      %865 = vdwg.mxu0
      %868 = vrot.lane.b32.xlu0 %v582, 96
      %v869 = vpop.permute.xlu0 %868
      %870 = vrot.lane.b32.xlu0 %v587, 96
      %v871 = vpop.permute.xlu0 %870
      %v872 = vsel %vm604, %v582, 0
      %v874 = vsel %vm604, %v587, 0
      %v876 = vsel %vm604, %v869, 0
      %v878 = vsel %vm604, %v871, 0
      %880 = vmatprep.subr.mxu0 0.0
      %881 = vmatpush1.xpose.msra.mxu0 %v876
      %882 = vmatprep.subr.mxu0 0.0
      %883 = vmatpush1.xpose.msra.mxu0 %v878
      %884 = vmatprep.subr.mxu0 0.0
      %885 = vmatpush1.xpose.msra.mxu0 0.0
      %886 = vmatprep.subr.mxu0 0.0
      %887 = vmatpush1.xpose.msra.mxu0 0.0
      %888 = vmatprep.subr.mxu0 0.0
      %889 = vmatpush1.xpose.msra.mxu0 0.0
      %890 = vmatprep.subr.mxu0 0.0
      %891 = vmatpush1.xpose.msra.mxu0 0.0
      %892 = vmatprep.subr.mxu0 0.0
      %893 = vmatpush1.xpose.msra.mxu0 0.0
      %894 = vmatprep.subr.mxu0 0.0
      %895 = vmatpush1.xpose.msra.mxu0 0.0
      %896 = vmatprep.subr.mxu0 0.0
      %897 = vmatpush1.xpose.msra.mxu0 0.0
      %898 = vmatprep.subr.mxu0 0.0
      %899 = vmatpush1.xpose.msra.mxu0 0.0
      %900 = vmatprep.subr.mxu0 0.0
      %901 = vmatpush1.xpose.msra.mxu0 0.0
      %902 = vmatprep.subr.mxu0 0.0
      %903 = vmatpush1.xpose.msra.mxu0 0.0
      %904 = vmatprep.subr.mxu0 0.0
      %905 = vmatpush1.xpose.msra.mxu0 0.0
      %906 = vmatprep.subr.mxu0 0.0
      %907 = vmatpush1.xpose.msra.mxu0 0.0
      %908 = vmatprep.subr.mxu0 0.0
      %909 = vmatpush1.xpose.msra.mxu0 0.0
      %910 = vmatprep.subr.mxu0 0.0
      %911 = vmatpush1.xpose.msra.mxu0 0.0
      %912 = vmatprep.subr.mxu0 0.0
      %913 = vmatpush1.xpose.msra.mxu0 0.0
      %914 = vmatprep.subr.mxu0 0.0
      %915 = vmatpush1.xpose.msra.mxu0 0.0
      %916 = vmatprep.subr.mxu0 0.0
      %917 = vmatpush1.xpose.msra.mxu0 0.0
      %918 = vmatprep.subr.mxu0 0.0
      %919 = vmatpush1.xpose.msra.mxu0 0.0
      %920 = vmatprep.subr.mxu0 0.0
      %921 = vmatpush1.xpose.msra.mxu0 0.0
      %922 = vmatprep.subr.mxu0 0.0
      %923 = vmatpush1.xpose.msra.mxu0 0.0
      %924 = vmatprep.subr.mxu0 0.0
      %925 = vmatpush1.xpose.msra.mxu0 0.0
      %926 = vmatprep.subr.mxu0 0.0
      %927 = vmatpush1.xpose.msra.mxu0 0.0
      %928 = vmatprep.subr.mxu0 0.0
      %929 = vmatpush1.xpose.msra.mxu0 0.0
      %930 = vmatprep.subr.mxu0 0.0
      %931 = vmatpush1.xpose.msra.mxu0 0.0
      %932 = vmatprep.subr.mxu0 0.0
      %933 = vmatpush1.xpose.msra.mxu0 0.0
      %934 = vmatprep.subr.mxu0 0.0
      %935 = vmatpush1.xpose.msra.mxu0 0.0
      %936 = vmatprep.subr.mxu0 0.0
      %937 = vmatpush1.xpose.msra.mxu0 0.0
      %938 = vmatprep.subr.mxu0 0.0
      %939 = vmatpush1.xpose.msra.mxu0 0.0
      %940 = vmatprep.subr.mxu0 0.0
      %941 = vmatpush1.xpose.msra.mxu0 0.0
      %942 = vmatprep.subr.mxu0 0.0
      %943 = vmatpush1.xpose.msra.mxu0 0.0
      %944 = vmatprep.mubr.f32.mxu0 0.0
      %945 = vmatmul.mubr.f32.gmra.mrb[0].mxu0 %v872
      %v946 = vpop.f32.mrb[0].mxu0
      %v947 = vadd.f32 %v590, %v946
      %v948 = vpop.f32.mrb[0].mxu0
      %949 = vmatprep.mubr.f32.mxu0 0.0
      %950 = vmatmul.mubr.f32.gmra.mrb[0].mxu0 %v874
      %v951 = vpop.f32.mrb[0].mxu0
      %v952 = vadd.f32 %v591, %v951
      %v953 = vpop.f32.mrb[0].mxu0
      %954 = vdwg.mxu0
      %vm955 = vcmask 130048
      %v956 = vsel %vm955, %v680, -inf
      %957 = vmax.xlane.f32.xlu0 %v956
      %v958 = vpop.xlane.xlu0 %957
      %v959 = vsel %vm955, %v685, -inf
      %960 = vmax.xlane.f32.xlu0 %v959
      %v961 = vpop.xlane.xlu0 %960
      %v962 = vsel %vm955, %v769, -inf
      %963 = vmax.xlane.f32.xlu0 %v962
      %v964 = vpop.xlane.xlu0 %963
      %v965 = vsel %vm955, %v774, -inf
      %966 = vmax.xlane.f32.xlu0 %v965
      %v967 = vpop.xlane.xlu0 %966
      %v968 = vsel %vm955, %v858, -inf
      %969 = vmax.xlane.f32.xlu0 %v968
      %v970 = vpop.xlane.xlu0 %969
      %v971 = vsel %vm955, %v863, -inf
      %972 = vmax.xlane.f32.xlu0 %v971
      %v973 = vpop.xlane.xlu0 %972
      %v974 = vsel %vm955, %v947, -inf
      %975 = vmax.xlane.f32.xlu0 %v974
      %v976 = vpop.xlane.xlu0 %975
      %v977 = vsel %vm955, %v952, -inf
      %978 = vmax.xlane.f32.xlu0 %v977
      %v979 = vpop.xlane.xlu0 %978
      %v980 = vsub.f32 %v680, %v958
      %v981 = vsub.f32 %v685, %v961
      %v982 = vsub.f32 %v769, %v964
      %v983 = vsub.f32 %v774, %v967
      %v984 = vsub.f32 %v858, %v970
      %v985 = vsub.f32 %v863, %v973
      %v986 = vsub.f32 %v947, %v976
      %v987 = vsub.f32 %v952, %v979
      %v988 = vmul.f32 %v980, 1.442695
      %v989 = vpow.pop %v988
      %v990 = vmul.f32 %v981, 1.442695
      %v991 = vpow.pop %v990
      %v992 = vmul.f32 %v982, 1.442695
      %v993 = vpow.pop %v992
      %v994 = vmul.f32 %v983, 1.442695
      %v995 = vpow.pop %v994
      %v996 = vmul.f32 %v984, 1.442695
      %v997 = vpow.pop %v996
      %v998 = vmul.f32 %v985, 1.442695
      %v999 = vpow.pop %v998
      %v1000 = vmul.f32 %v986, 1.442695
      %v1001 = vpow.pop %v1000
      %v1002 = vmul.f32 %v987, 1.442695
      %v1003 = vpow.pop %v1002
      %v1004 = vsel %vm955, %v989, 0.0
      %1005 = vadd.xlane.f32.xlu0 %v1004
      %v1006 = vpop.xlane.xlu0 %1005
      %v1007 = vsel %vm955, %v991, 0.0
      %1008 = vadd.xlane.f32.xlu0 %v1007
      %v1009 = vpop.xlane.xlu0 %1008
      %v1010 = vsel %vm955, %v993, 0.0
      %1011 = vadd.xlane.f32.xlu0 %v1010
      %v1012 = vpop.xlane.xlu0 %1011
      %v1013 = vsel %vm955, %v995, 0.0
      %1014 = vadd.xlane.f32.xlu0 %v1013
      %v1015 = vpop.xlane.xlu0 %1014
      %v1016 = vsel %vm955, %v997, 0.0
      %1017 = vadd.xlane.f32.xlu0 %v1016
      %v1018 = vpop.xlane.xlu0 %1017
      %v1019 = vsel %vm955, %v999, 0.0
      %1020 = vadd.xlane.f32.xlu0 %v1019
      %v1021 = vpop.xlane.xlu0 %1020
      %v1022 = vsel %vm955, %v1001, 0.0
      %1023 = vadd.xlane.f32.xlu0 %v1022
      %v1024 = vpop.xlane.xlu0 %1023
      %v1025 = vsel %vm955, %v1003, 0.0
      %1026 = vadd.xlane.f32.xlu0 %v1025
      %v1027 = vpop.xlane.xlu0 %1026
      %v1028 = vrcp.pop %v1006
      %v1029 = vrcp.pop %v1009
      %v1030 = vrcp.pop %v1012
      %v1031 = vrcp.pop %v1015
      %v1032 = vrcp.pop %v1018
      %v1033 = vrcp.pop %v1021
      %v1034 = vrcp.pop %v1024
      %v1035 = vrcp.pop %v1027
      %v1036 = vmul.f32 %v989, %v1028
      %v1037 = vmul.f32 %v991, %v1029
      %v1038 = vmul.f32 %v993, %v1030
      %v1039 = vmul.f32 %v995, %v1031
      %v1040 = vmul.f32 %v997, %v1032
      %v1041 = vmul.f32 %v999, %v1033
      %v1042 = vmul.f32 %v1001, %v1034
      %v1043 = vmul.f32 %v1003, %v1035
      %1044 = vrot.lane.b32.xlu0 %v552, 64
      %v1045 = vpop.permute.xlu0 %1044
      %1046 = vrot.lane.b32.xlu0 %v557, 64
      %v1047 = vpop.permute.xlu0 %1046
      %v1051 = vsel %vm955, %v1036, 0
      %v1054 = vsel %vm955, %v1037, 0
      %1056 = vmatprep.subr.mxu0 0.0
      %1057 = vmatpush1.msra.mxu0 %v1045
      %1058 = vmatprep.subr.mxu0 0.0
      %1059 = vmatpush1.msra.mxu0 %v1047
      %1060 = vmatprep.subr.mxu0 0.0
      %1061 = vmatpush1.msra.mxu0 0.0
      %1062 = vmatprep.subr.mxu0 0.0
      %1063 = vmatpush1.msra.mxu0 0.0
      %1064 = vmatprep.subr.mxu0 0.0
      %1065 = vmatpush1.msra.mxu0 0.0
      %1066 = vmatprep.subr.mxu0 0.0
      %1067 = vmatpush1.msra.mxu0 0.0
      %1068 = vmatprep.subr.mxu0 0.0
      %1069 = vmatpush1.msra.mxu0 0.0
      %1070 = vmatprep.subr.mxu0 0.0
      %1071 = vmatpush1.msra.mxu0 0.0
      %1072 = vmatprep.subr.mxu0 0.0
      %1073 = vmatpush1.msra.mxu0 0.0
      %1074 = vmatprep.subr.mxu0 0.0
      %1075 = vmatpush1.msra.mxu0 0.0
      %1076 = vmatprep.subr.mxu0 0.0
      %1077 = vmatpush1.msra.mxu0 0.0
      %1078 = vmatprep.subr.mxu0 0.0
      %1079 = vmatpush1.msra.mxu0 0.0
      %1080 = vmatprep.subr.mxu0 0.0
      %1081 = vmatpush1.msra.mxu0 0.0
      %1082 = vmatprep.subr.mxu0 0.0
      %1083 = vmatpush1.msra.mxu0 0.0
      %1084 = vmatprep.subr.mxu0 0.0
      %1085 = vmatpush1.msra.mxu0 0.0
      %1086 = vmatprep.subr.mxu0 0.0
      %1087 = vmatpush1.msra.mxu0 0.0
      %1088 = vmatprep.subr.mxu0 0.0
      %1089 = vmatpush1.msra.mxu0 0.0
      %1090 = vmatprep.subr.mxu0 0.0
      %1091 = vmatpush1.msra.mxu0 0.0
      %1092 = vmatprep.subr.mxu0 0.0
      %1093 = vmatpush1.msra.mxu0 0.0
      %1094 = vmatprep.subr.mxu0 0.0
      %1095 = vmatpush1.msra.mxu0 0.0
      %1096 = vmatprep.subr.mxu0 0.0
      %1097 = vmatpush1.msra.mxu0 0.0
      %1098 = vmatprep.subr.mxu0 0.0
      %1099 = vmatpush1.msra.mxu0 0.0
      %1100 = vmatprep.subr.mxu0 0.0
      %1101 = vmatpush1.msra.mxu0 0.0
      %1102 = vmatprep.subr.mxu0 0.0
      %1103 = vmatpush1.msra.mxu0 0.0
      %1104 = vmatprep.subr.mxu0 0.0
      %1105 = vmatpush1.msra.mxu0 0.0
      %1106 = vmatprep.subr.mxu0 0.0
      %1107 = vmatpush1.msra.mxu0 0.0
      %1108 = vmatprep.subr.mxu0 0.0
      %1109 = vmatpush1.msra.mxu0 0.0
      %1110 = vmatprep.subr.mxu0 0.0
      %1111 = vmatpush1.msra.mxu0 0.0
      %1112 = vmatprep.subr.mxu0 0.0
      %1113 = vmatpush1.msra.mxu0 0.0
      %1114 = vmatprep.subr.mxu0 0.0
      %1115 = vmatpush1.msra.mxu0 0.0
      %1116 = vmatprep.subr.mxu0 0.0
      %1117 = vmatpush1.msra.mxu0 0.0
      %1118 = vmatprep.subr.mxu0 0.0
      %1119 = vmatpush1.msra.mxu0 0.0
      %1120 = vmatprep.mubr.f32.mxu0 0.0
      %1121 = vmatmul.mubr.f32.gmra.mrb[0].mxu0 %v1051
      %v1122 = vpop.f32.mrb[0].mxu0
      %v1123 = vadd.f32 0.0, %v1122
      %v1124 = vpop.f32.mrb[0].mxu0
      %1125 = vmatprep.mubr.f32.mxu0 0.0
      %1126 = vmatmul.mubr.f32.gmra.mrb[0].mxu0 %v1054
      %v1127 = vpop.f32.mrb[0].mxu0
      %v1128 = vadd.f32 0.0, %v1127
      %v1129 = vpop.f32.mrb[0].mxu0
      %1130 = vdwg.mxu0
      %1131 = vrot.lane.b32.xlu0 %v562, 64
      %v1132 = vpop.permute.xlu0 %1131
      %1133 = vrot.lane.b32.xlu0 %v567, 64
      %v1134 = vpop.permute.xlu0 %1133
      %v1138 = vsel %vm955, %v1038, 0
      %v1141 = vsel %vm955, %v1039, 0
      %1143 = vmatprep.subr.mxu0 0.0
      %1144 = vmatpush1.msra.mxu0 %v1132
      %1145 = vmatprep.subr.mxu0 0.0
      %1146 = vmatpush1.msra.mxu0 %v1134
      %1147 = vmatprep.subr.mxu0 0.0
      %1148 = vmatpush1.msra.mxu0 0.0
      %1149 = vmatprep.subr.mxu0 0.0
      %1150 = vmatpush1.msra.mxu0 0.0
      %1151 = vmatprep.subr.mxu0 0.0
      %1152 = vmatpush1.msra.mxu0 0.0
      %1153 = vmatprep.subr.mxu0 0.0
      %1154 = vmatpush1.msra.mxu0 0.0
      %1155 = vmatprep.subr.mxu0 0.0
      %1156 = vmatpush1.msra.mxu0 0.0
      %1157 = vmatprep.subr.mxu0 0.0
      %1158 = vmatpush1.msra.mxu0 0.0
      %1159 = vmatprep.subr.mxu0 0.0
      %1160 = vmatpush1.msra.mxu0 0.0
      %1161 = vmatprep.subr.mxu0 0.0
      %1162 = vmatpush1.msra.mxu0 0.0
      %1163 = vmatprep.subr.mxu0 0.0
      %1164 = vmatpush1.msra.mxu0 0.0
      %1165 = vmatprep.subr.mxu0 0.0
      %1166 = vmatpush1.msra.mxu0 0.0
      %1167 = vmatprep.subr.mxu0 0.0
      %1168 = vmatpush1.msra.mxu0 0.0
      %1169 = vmatprep.subr.mxu0 0.0
      %1170 = vmatpush1.msra.mxu0 0.0
      %1171 = vmatprep.subr.mxu0 0.0
      %1172 = vmatpush1.msra.mxu0 0.0
      %1173 = vmatprep.subr.mxu0 0.0
      %1174 = vmatpush1.msra.mxu0 0.0
      %1175 = vmatprep.subr.mxu0 0.0
      %1176 = vmatpush1.msra.mxu0 0.0
      %1177 = vmatprep.subr.mxu0 0.0
      %1178 = vmatpush1.msra.mxu0 0.0
      %1179 = vmatprep.subr.mxu0 0.0
      %1180 = vmatpush1.msra.mxu0 0.0
      %1181 = vmatprep.subr.mxu0 0.0
      %1182 = vmatpush1.msra.mxu0 0.0
      %1183 = vmatprep.subr.mxu0 0.0
      %1184 = vmatpush1.msra.mxu0 0.0
      %1185 = vmatprep.subr.mxu0 0.0
      %1186 = vmatpush1.msra.mxu0 0.0
      %1187 = vmatprep.subr.mxu0 0.0
      %1188 = vmatpush1.msra.mxu0 0.0
      %1189 = vmatprep.subr.mxu0 0.0
      %1190 = vmatpush1.msra.mxu0 0.0
      %1191 = vmatprep.subr.mxu0 0.0
      %1192 = vmatpush1.msra.mxu0 0.0
      %1193 = vmatprep.subr.mxu0 0.0
      %1194 = vmatpush1.msra.mxu0 0.0
      %1195 = vmatprep.subr.mxu0 0.0
      %1196 = vmatpush1.msra.mxu0 0.0
      %1197 = vmatprep.subr.mxu0 0.0
      %1198 = vmatpush1.msra.mxu0 0.0
      %1199 = vmatprep.subr.mxu0 0.0
      %1200 = vmatpush1.msra.mxu0 0.0
      %1201 = vmatprep.subr.mxu0 0.0
      %1202 = vmatpush1.msra.mxu0 0.0
      %1203 = vmatprep.subr.mxu0 0.0
      %1204 = vmatpush1.msra.mxu0 0.0
      %1205 = vmatprep.subr.mxu0 0.0
      %1206 = vmatpush1.msra.mxu0 0.0
      %1207 = vmatprep.mubr.f32.mxu0 0.0
      %1208 = vmatmul.mubr.f32.gmra.mrb[0].mxu0 %v1138
      %v1209 = vpop.f32.mrb[0].mxu0
      %v1210 = vadd.f32 0.0, %v1209
      %v1211 = vpop.f32.mrb[0].mxu0
      %1212 = vmatprep.mubr.f32.mxu0 0.0
      %1213 = vmatmul.mubr.f32.gmra.mrb[0].mxu0 %v1141
      %v1214 = vpop.f32.mrb[0].mxu0
      %v1215 = vadd.f32 0.0, %v1214
      %v1216 = vpop.f32.mrb[0].mxu0
      %1217 = vdwg.mxu0
      %1218 = vrot.lane.b32.xlu0 %v572, 64
      %v1219 = vpop.permute.xlu0 %1218
      %1220 = vrot.lane.b32.xlu0 %v577, 64
      %v1221 = vpop.permute.xlu0 %1220
      %v1225 = vsel %vm955, %v1040, 0
      %v1228 = vsel %vm955, %v1041, 0
      %1230 = vmatprep.subr.mxu0 0.0
      %1231 = vmatpush1.msra.mxu0 %v1219
      %1232 = vmatprep.subr.mxu0 0.0
      %1233 = vmatpush1.msra.mxu0 %v1221
      %1234 = vmatprep.subr.mxu0 0.0
      %1235 = vmatpush1.msra.mxu0 0.0
      %1236 = vmatprep.subr.mxu0 0.0
      %1237 = vmatpush1.msra.mxu0 0.0
      %1238 = vmatprep.subr.mxu0 0.0
      %1239 = vmatpush1.msra.mxu0 0.0
      %1240 = vmatprep.subr.mxu0 0.0
      %1241 = vmatpush1.msra.mxu0 0.0
      %1242 = vmatprep.subr.mxu0 0.0
      %1243 = vmatpush1.msra.mxu0 0.0
      %1244 = vmatprep.subr.mxu0 0.0
      %1245 = vmatpush1.msra.mxu0 0.0
      %1246 = vmatprep.subr.mxu0 0.0
      %1247 = vmatpush1.msra.mxu0 0.0
      %1248 = vmatprep.subr.mxu0 0.0
      %1249 = vmatpush1.msra.mxu0 0.0
      %1250 = vmatprep.subr.mxu0 0.0
      %1251 = vmatpush1.msra.mxu0 0.0
      %1252 = vmatprep.subr.mxu0 0.0
      %1253 = vmatpush1.msra.mxu0 0.0
      %1254 = vmatprep.subr.mxu0 0.0
      %1255 = vmatpush1.msra.mxu0 0.0
      %1256 = vmatprep.subr.mxu0 0.0
      %1257 = vmatpush1.msra.mxu0 0.0
      %1258 = vmatprep.subr.mxu0 0.0
      %1259 = vmatpush1.msra.mxu0 0.0
      %1260 = vmatprep.subr.mxu0 0.0
      %1261 = vmatpush1.msra.mxu0 0.0
      %1262 = vmatprep.subr.mxu0 0.0
      %1263 = vmatpush1.msra.mxu0 0.0
      %1264 = vmatprep.subr.mxu0 0.0
      %1265 = vmatpush1.msra.mxu0 0.0
      %1266 = vmatprep.subr.mxu0 0.0
      %1267 = vmatpush1.msra.mxu0 0.0
      %1268 = vmatprep.subr.mxu0 0.0
      %1269 = vmatpush1.msra.mxu0 0.0
      %1270 = vmatprep.subr.mxu0 0.0
      %1271 = vmatpush1.msra.mxu0 0.0
      %1272 = vmatprep.subr.mxu0 0.0
      %1273 = vmatpush1.msra.mxu0 0.0
      %1274 = vmatprep.subr.mxu0 0.0
      %1275 = vmatpush1.msra.mxu0 0.0
      %1276 = vmatprep.subr.mxu0 0.0
      %1277 = vmatpush1.msra.mxu0 0.0
      %1278 = vmatprep.subr.mxu0 0.0
      %1279 = vmatpush1.msra.mxu0 0.0
      %1280 = vmatprep.subr.mxu0 0.0
      %1281 = vmatpush1.msra.mxu0 0.0
      %1282 = vmatprep.subr.mxu0 0.0
      %1283 = vmatpush1.msra.mxu0 0.0
      %1284 = vmatprep.subr.mxu0 0.0
      %1285 = vmatpush1.msra.mxu0 0.0
      %1286 = vmatprep.subr.mxu0 0.0
      %1287 = vmatpush1.msra.mxu0 0.0
      %1288 = vmatprep.subr.mxu0 0.0
      %1289 = vmatpush1.msra.mxu0 0.0
      %1290 = vmatprep.subr.mxu0 0.0
      %1291 = vmatpush1.msra.mxu0 0.0
      %1292 = vmatprep.subr.mxu0 0.0
      %1293 = vmatpush1.msra.mxu0 0.0
      %1294 = vmatprep.mubr.f32.mxu0 0.0
      %1295 = vmatmul.mubr.f32.gmra.mrb[0].mxu0 %v1225
      %v1296 = vpop.f32.mrb[0].mxu0
      %v1297 = vadd.f32 0.0, %v1296
      %v1298 = vpop.f32.mrb[0].mxu0
      %1299 = vmatprep.mubr.f32.mxu0 0.0
      %1300 = vmatmul.mubr.f32.gmra.mrb[0].mxu0 %v1228
      %v1301 = vpop.f32.mrb[0].mxu0
      %v1302 = vadd.f32 0.0, %v1301
      %v1303 = vpop.f32.mrb[0].mxu0
      %1304 = vdwg.mxu0
      %1305 = vrot.lane.b32.xlu0 %v582, 64
      %v1306 = vpop.permute.xlu0 %1305
      %1307 = vrot.lane.b32.xlu0 %v587, 64
      %v1308 = vpop.permute.xlu0 %1307
      %v1312 = vsel %vm955, %v1042, 0
      %v1315 = vsel %vm955, %v1043, 0
      %1317 = vmatprep.subr.mxu0 0.0
      %1318 = vmatpush1.msra.mxu0 %v1306
      %1319 = vmatprep.subr.mxu0 0.0
      %1320 = vmatpush1.msra.mxu0 %v1308
      %1321 = vmatprep.subr.mxu0 0.0
      %1322 = vmatpush1.msra.mxu0 0.0
      %1323 = vmatprep.subr.mxu0 0.0
      %1324 = vmatpush1.msra.mxu0 0.0
      %1325 = vmatprep.subr.mxu0 0.0
      %1326 = vmatpush1.msra.mxu0 0.0
      %1327 = vmatprep.subr.mxu0 0.0
      %1328 = vmatpush1.msra.mxu0 0.0
      %1329 = vmatprep.subr.mxu0 0.0
      %1330 = vmatpush1.msra.mxu0 0.0
      %1331 = vmatprep.subr.mxu0 0.0
      %1332 = vmatpush1.msra.mxu0 0.0
      %1333 = vmatprep.subr.mxu0 0.0
      %1334 = vmatpush1.msra.mxu0 0.0
      %1335 = vmatprep.subr.mxu0 0.0
      %1336 = vmatpush1.msra.mxu0 0.0
      %1337 = vmatprep.subr.mxu0 0.0
      %1338 = vmatpush1.msra.mxu0 0.0
      %1339 = vmatprep.subr.mxu0 0.0
      %1340 = vmatpush1.msra.mxu0 0.0
      %1341 = vmatprep.subr.mxu0 0.0
      %1342 = vmatpush1.msra.mxu0 0.0
      %1343 = vmatprep.subr.mxu0 0.0
      %1344 = vmatpush1.msra.mxu0 0.0
      %1345 = vmatprep.subr.mxu0 0.0
      %1346 = vmatpush1.msra.mxu0 0.0
      %1347 = vmatprep.subr.mxu0 0.0
      %1348 = vmatpush1.msra.mxu0 0.0
      %1349 = vmatprep.subr.mxu0 0.0
      %1350 = vmatpush1.msra.mxu0 0.0
      %1351 = vmatprep.subr.mxu0 0.0
      %1352 = vmatpush1.msra.mxu0 0.0
      %1353 = vmatprep.subr.mxu0 0.0
      %1354 = vmatpush1.msra.mxu0 0.0
      %1355 = vmatprep.subr.mxu0 0.0
      %1356 = vmatpush1.msra.mxu0 0.0
      %1357 = vmatprep.subr.mxu0 0.0
      %1358 = vmatpush1.msra.mxu0 0.0
      %1359 = vmatprep.subr.mxu0 0.0
      %1360 = vmatpush1.msra.mxu0 0.0
      %1361 = vmatprep.subr.mxu0 0.0
      %1362 = vmatpush1.msra.mxu0 0.0
      %1363 = vmatprep.subr.mxu0 0.0
      %1364 = vmatpush1.msra.mxu0 0.0
      %1365 = vmatprep.subr.mxu0 0.0
      %1366 = vmatpush1.msra.mxu0 0.0
      %1367 = vmatprep.subr.mxu0 0.0
      %1368 = vmatpush1.msra.mxu0 0.0
      %1369 = vmatprep.subr.mxu0 0.0
      %1370 = vmatpush1.msra.mxu0 0.0
      %1371 = vmatprep.subr.mxu0 0.0
      %1372 = vmatpush1.msra.mxu0 0.0
      %1373 = vmatprep.subr.mxu0 0.0
      %1374 = vmatpush1.msra.mxu0 0.0
      %1375 = vmatprep.subr.mxu0 0.0
      %1376 = vmatpush1.msra.mxu0 0.0
      %1377 = vmatprep.subr.mxu0 0.0
      %1378 = vmatpush1.msra.mxu0 0.0
      %1379 = vmatprep.subr.mxu0 0.0
      %1380 = vmatpush1.msra.mxu0 0.0
      %1381 = vmatprep.mubr.f32.mxu0 0.0
      %1382 = vmatmul.mubr.f32.gmra.mrb[0].mxu0 %v1312
      %v1383 = vpop.f32.mrb[0].mxu0
      %v1384 = vadd.f32 0.0, %v1383
      %v1385 = vpop.f32.mrb[0].mxu0
      %1386 = vmatprep.mubr.f32.mxu0 0.0
      %1387 = vmatmul.mubr.f32.gmra.mrb[0].mxu0 %v1315
      %v1388 = vpop.f32.mrb[0].mxu0
      %v1389 = vadd.f32 0.0, %v1388
      %v1390 = vpop.f32.mrb[0].mxu0
      %1391 = vdwg.mxu0
      %1392 = vst.msk [vmem:[#allocation2] sm:$0xff] %vm604, %v1123
      %1393 = vst.msk [vmem:[#allocation2 + $0x8] sm:$0xff] %vm604, %v1128
      %1394 = vst.msk [vmem:[#allocation2 + $0x10] sm:$0xff] %vm604, %v1210
      %1395 = vst.msk [vmem:[#allocation2 + $0x18] sm:$0xff] %vm604, %v1215
      %1396 = vst.msk [vmem:[#allocation2 + $0x20] sm:$0xff] %vm604, %v1297
      %1397 = vst.msk [vmem:[#allocation2 + $0x28] sm:$0xff] %vm604, %v1302
      %1398 = vst.msk [vmem:[#allocation2 + $0x30] sm:$0xff] %vm604, %v1384
      %1399 = vst.msk [vmem:[#allocation2 + $0x38] sm:$0xff] %vm604, %v1389
      %1400 = vrot.lane.b32.xlu0 %v552, 120
      %v1401 = vpop.permute.xlu0 %1400
      %1402 = vrot.lane.b32.xlu0 %v557, 120
      %v1403 = vpop.permute.xlu0 %1402
      %1404 = vrot.lane.b32.xlu0 %v552, 88
      %v1405 = vpop.permute.xlu0 %1404
      %1406 = vrot.lane.b32.xlu0 %v557, 88
      %v1407 = vpop.permute.xlu0 %1406
      %v1408 = vsel %vm604, %v1401, 0
      %v1410 = vsel %vm604, %v1403, 0
      %v1412 = vsel %vm604, %v1405, 0
      %v1414 = vsel %vm604, %v1407, 0
      %1416 = vmatprep.subr.mxu0 0.0
      %1417 = vmatpush1.xpose.msra.mxu0 %v1412
      %1418 = vmatprep.subr.mxu0 0.0
      %1419 = vmatpush1.xpose.msra.mxu0 %v1414
      %1420 = vmatprep.subr.mxu0 0.0
      %1421 = vmatpush1.xpose.msra.mxu0 0.0
      %1422 = vmatprep.subr.mxu0 0.0
      %1423 = vmatpush1.xpose.msra.mxu0 0.0
      %1424 = vmatprep.subr.mxu0 0.0
      %1425 = vmatpush1.xpose.msra.mxu0 0.0
      %1426 = vmatprep.subr.mxu0 0.0
      %1427 = vmatpush1.xpose.msra.mxu0 0.0
      %1428 = vmatprep.subr.mxu0 0.0
      %1429 = vmatpush1.xpose.msra.mxu0 0.0
      %1430 = vmatprep.subr.mxu0 0.0
      %1431 = vmatpush1.xpose.msra.mxu0 0.0
      %1432 = vmatprep.subr.mxu0 0.0
      %1433 = vmatpush1.xpose.msra.mxu0 0.0
      %1434 = vmatprep.subr.mxu0 0.0
      %1435 = vmatpush1.xpose.msra.mxu0 0.0
      %1436 = vmatprep.subr.mxu0 0.0
      %1437 = vmatpush1.xpose.msra.mxu0 0.0
      %1438 = vmatprep.subr.mxu0 0.0
      %1439 = vmatpush1.xpose.msra.mxu0 0.0
      %1440 = vmatprep.subr.mxu0 0.0
      %1441 = vmatpush1.xpose.msra.mxu0 0.0
      %1442 = vmatprep.subr.mxu0 0.0
      %1443 = vmatpush1.xpose.msra.mxu0 0.0
      %1444 = vmatprep.subr.mxu0 0.0
      %1445 = vmatpush1.xpose.msra.mxu0 0.0
      %1446 = vmatprep.subr.mxu0 0.0
      %1447 = vmatpush1.xpose.msra.mxu0 0.0
      %1448 = vmatprep.subr.mxu0 0.0
      %1449 = vmatpush1.xpose.msra.mxu0 0.0
      %1450 = vmatprep.subr.mxu0 0.0
      %1451 = vmatpush1.xpose.msra.mxu0 0.0
      %1452 = vmatprep.subr.mxu0 0.0
      %1453 = vmatpush1.xpose.msra.mxu0 0.0
      %1454 = vmatprep.subr.mxu0 0.0
      %1455 = vmatpush1.xpose.msra.mxu0 0.0
      %1456 = vmatprep.subr.mxu0 0.0
      %1457 = vmatpush1.xpose.msra.mxu0 0.0
      %1458 = vmatprep.subr.mxu0 0.0
      %1459 = vmatpush1.xpose.msra.mxu0 0.0
      %1460 = vmatprep.subr.mxu0 0.0
      %1461 = vmatpush1.xpose.msra.mxu0 0.0
      %1462 = vmatprep.subr.mxu0 0.0
      %1463 = vmatpush1.xpose.msra.mxu0 0.0
      %1464 = vmatprep.subr.mxu0 0.0
      %1465 = vmatpush1.xpose.msra.mxu0 0.0
      %1466 = vmatprep.subr.mxu0 0.0
      %1467 = vmatpush1.xpose.msra.mxu0 0.0
      %1468 = vmatprep.subr.mxu0 0.0
      %1469 = vmatpush1.xpose.msra.mxu0 0.0
      %1470 = vmatprep.subr.mxu0 0.0
      %1471 = vmatpush1.xpose.msra.mxu0 0.0
      %1472 = vmatprep.subr.mxu0 0.0
      %1473 = vmatpush1.xpose.msra.mxu0 0.0
      %1474 = vmatprep.subr.mxu0 0.0
      %1475 = vmatpush1.xpose.msra.mxu0 0.0
      %1476 = vmatprep.subr.mxu0 0.0
      %1477 = vmatpush1.xpose.msra.mxu0 0.0
      %1478 = vmatprep.subr.mxu0 0.0
      %1479 = vmatpush1.xpose.msra.mxu0 0.0
      %1480 = vmatprep.mubr.f32.mxu0 0.0
      %1481 = vmatmul.mubr.f32.gmra.mrb[0].mxu0 %v1408
      %v1482 = vpop.f32.mrb[0].mxu0
      %v1483 = vadd.f32 %v592, %v1482
      %v1484 = vpop.f32.mrb[0].mxu0
      %1485 = vmatprep.mubr.f32.mxu0 0.0
      %1486 = vmatmul.mubr.f32.gmra.mrb[0].mxu0 %v1410
      %v1487 = vpop.f32.mrb[0].mxu0
      %v1488 = vadd.f32 %v593, %v1487
      %v1489 = vpop.f32.mrb[0].mxu0
      %1490 = vdwg.mxu0
      %1491 = vrot.lane.b32.xlu0 %v562, 120
      %v1492 = vpop.permute.xlu0 %1491
      %1493 = vrot.lane.b32.xlu0 %v567, 120
      %v1494 = vpop.permute.xlu0 %1493
      %1495 = vrot.lane.b32.xlu0 %v562, 88
      %v1496 = vpop.permute.xlu0 %1495
      %1497 = vrot.lane.b32.xlu0 %v567, 88
      %v1498 = vpop.permute.xlu0 %1497
      %v1499 = vsel %vm604, %v1492, 0
      %v1501 = vsel %vm604, %v1494, 0
      %v1503 = vsel %vm604, %v1496, 0
      %v1505 = vsel %vm604, %v1498, 0
      %1507 = vmatprep.subr.mxu0 0.0
      %1508 = vmatpush1.xpose.msra.mxu0 %v1503
      %1509 = vmatprep.subr.mxu0 0.0
      %1510 = vmatpush1.xpose.msra.mxu0 %v1505
      %1511 = vmatprep.subr.mxu0 0.0
      %1512 = vmatpush1.xpose.msra.mxu0 0.0
      %1513 = vmatprep.subr.mxu0 0.0
      %1514 = vmatpush1.xpose.msra.mxu0 0.0
      %1515 = vmatprep.subr.mxu0 0.0
      %1516 = vmatpush1.xpose.msra.mxu0 0.0
      %1517 = vmatprep.subr.mxu0 0.0
      %1518 = vmatpush1.xpose.msra.mxu0 0.0
      %1519 = vmatprep.subr.mxu0 0.0
      %1520 = vmatpush1.xpose.msra.mxu0 0.0
      %1521 = vmatprep.subr.mxu0 0.0
      %1522 = vmatpush1.xpose.msra.mxu0 0.0
      %1523 = vmatprep.subr.mxu0 0.0
      %1524 = vmatpush1.xpose.msra.mxu0 0.0
      %1525 = vmatprep.subr.mxu0 0.0
      %1526 = vmatpush1.xpose.msra.mxu0 0.0
      %1527 = vmatprep.subr.mxu0 0.0
      %1528 = vmatpush1.xpose.msra.mxu0 0.0
      %1529 = vmatprep.subr.mxu0 0.0
      %1530 = vmatpush1.xpose.msra.mxu0 0.0
      %1531 = vmatprep.subr.mxu0 0.0
      %1532 = vmatpush1.xpose.msra.mxu0 0.0
      %1533 = vmatprep.subr.mxu0 0.0
      %1534 = vmatpush1.xpose.msra.mxu0 0.0
      %1535 = vmatprep.subr.mxu0 0.0
      %1536 = vmatpush1.xpose.msra.mxu0 0.0
      %1537 = vmatprep.subr.mxu0 0.0
      %1538 = vmatpush1.xpose.msra.mxu0 0.0
      %1539 = vmatprep.subr.mxu0 0.0
      %1540 = vmatpush1.xpose.msra.mxu0 0.0
      %1541 = vmatprep.subr.mxu0 0.0
      %1542 = vmatpush1.xpose.msra.mxu0 0.0
      %1543 = vmatprep.subr.mxu0 0.0
      %1544 = vmatpush1.xpose.msra.mxu0 0.0
      %1545 = vmatprep.subr.mxu0 0.0
      %1546 = vmatpush1.xpose.msra.mxu0 0.0
      %1547 = vmatprep.subr.mxu0 0.0
      %1548 = vmatpush1.xpose.msra.mxu0 0.0
      %1549 = vmatprep.subr.mxu0 0.0
      %1550 = vmatpush1.xpose.msra.mxu0 0.0
      %1551 = vmatprep.subr.mxu0 0.0
      %1552 = vmatpush1.xpose.msra.mxu0 0.0
      %1553 = vmatprep.subr.mxu0 0.0
      %1554 = vmatpush1.xpose.msra.mxu0 0.0
      %1555 = vmatprep.subr.mxu0 0.0
      %1556 = vmatpush1.xpose.msra.mxu0 0.0
      %1557 = vmatprep.subr.mxu0 0.0
      %1558 = vmatpush1.xpose.msra.mxu0 0.0
      %1559 = vmatprep.subr.mxu0 0.0
      %1560 = vmatpush1.xpose.msra.mxu0 0.0
      %1561 = vmatprep.subr.mxu0 0.0
      %1562 = vmatpush1.xpose.msra.mxu0 0.0
      %1563 = vmatprep.subr.mxu0 0.0
      %1564 = vmatpush1.xpose.msra.mxu0 0.0
      %1565 = vmatprep.subr.mxu0 0.0
      %1566 = vmatpush1.xpose.msra.mxu0 0.0
      %1567 = vmatprep.subr.mxu0 0.0
      %1568 = vmatpush1.xpose.msra.mxu0 0.0
      %1569 = vmatprep.subr.mxu0 0.0
      %1570 = vmatpush1.xpose.msra.mxu0 0.0
      %1571 = vmatprep.mubr.f32.mxu0 0.0
      %1572 = vmatmul.mubr.f32.gmra.mrb[0].mxu0 %v1499
      %v1573 = vpop.f32.mrb[0].mxu0
      %v1574 = vadd.f32 %v592, %v1573
      %v1575 = vpop.f32.mrb[0].mxu0
      %1576 = vmatprep.mubr.f32.mxu0 0.0
      %1577 = vmatmul.mubr.f32.gmra.mrb[0].mxu0 %v1501
      %v1578 = vpop.f32.mrb[0].mxu0
      %v1579 = vadd.f32 %v593, %v1578
      %v1580 = vpop.f32.mrb[0].mxu0
      %1581 = vdwg.mxu0
      %1582 = vrot.lane.b32.xlu0 %v572, 120
      %v1583 = vpop.permute.xlu0 %1582
      %1584 = vrot.lane.b32.xlu0 %v577, 120
      %v1585 = vpop.permute.xlu0 %1584
      %1586 = vrot.lane.b32.xlu0 %v572, 88
      %v1587 = vpop.permute.xlu0 %1586
      %1588 = vrot.lane.b32.xlu0 %v577, 88
      %v1589 = vpop.permute.xlu0 %1588
      %v1590 = vsel %vm604, %v1583, 0
      %v1592 = vsel %vm604, %v1585, 0
      %v1594 = vsel %vm604, %v1587, 0
      %v1596 = vsel %vm604, %v1589, 0
      %1598 = vmatprep.subr.mxu0 0.0
      %1599 = vmatpush1.xpose.msra.mxu0 %v1594
      %1600 = vmatprep.subr.mxu0 0.0
      %1601 = vmatpush1.xpose.msra.mxu0 %v1596
      %1602 = vmatprep.subr.mxu0 0.0
      %1603 = vmatpush1.xpose.msra.mxu0 0.0
      %1604 = vmatprep.subr.mxu0 0.0
      %1605 = vmatpush1.xpose.msra.mxu0 0.0
      %1606 = vmatprep.subr.mxu0 0.0
      %1607 = vmatpush1.xpose.msra.mxu0 0.0
      %1608 = vmatprep.subr.mxu0 0.0
      %1609 = vmatpush1.xpose.msra.mxu0 0.0
      %1610 = vmatprep.subr.mxu0 0.0
      %1611 = vmatpush1.xpose.msra.mxu0 0.0
      %1612 = vmatprep.subr.mxu0 0.0
      %1613 = vmatpush1.xpose.msra.mxu0 0.0
      %1614 = vmatprep.subr.mxu0 0.0
      %1615 = vmatpush1.xpose.msra.mxu0 0.0
      %1616 = vmatprep.subr.mxu0 0.0
      %1617 = vmatpush1.xpose.msra.mxu0 0.0
      %1618 = vmatprep.subr.mxu0 0.0
      %1619 = vmatpush1.xpose.msra.mxu0 0.0
      %1620 = vmatprep.subr.mxu0 0.0
      %1621 = vmatpush1.xpose.msra.mxu0 0.0
      %1622 = vmatprep.subr.mxu0 0.0
      %1623 = vmatpush1.xpose.msra.mxu0 0.0
      %1624 = vmatprep.subr.mxu0 0.0
      %1625 = vmatpush1.xpose.msra.mxu0 0.0
      %1626 = vmatprep.subr.mxu0 0.0
      %1627 = vmatpush1.xpose.msra.mxu0 0.0
      %1628 = vmatprep.subr.mxu0 0.0
      %1629 = vmatpush1.xpose.msra.mxu0 0.0
      %1630 = vmatprep.subr.mxu0 0.0
      %1631 = vmatpush1.xpose.msra.mxu0 0.0
      %1632 = vmatprep.subr.mxu0 0.0
      %1633 = vmatpush1.xpose.msra.mxu0 0.0
      %1634 = vmatprep.subr.mxu0 0.0
      %1635 = vmatpush1.xpose.msra.mxu0 0.0
      %1636 = vmatprep.subr.mxu0 0.0
      %1637 = vmatpush1.xpose.msra.mxu0 0.0
      %1638 = vmatprep.subr.mxu0 0.0
      %1639 = vmatpush1.xpose.msra.mxu0 0.0
      %1640 = vmatprep.subr.mxu0 0.0
      %1641 = vmatpush1.xpose.msra.mxu0 0.0
      %1642 = vmatprep.subr.mxu0 0.0
      %1643 = vmatpush1.xpose.msra.mxu0 0.0
      %1644 = vmatprep.subr.mxu0 0.0
      %1645 = vmatpush1.xpose.msra.mxu0 0.0
      %1646 = vmatprep.subr.mxu0 0.0
      %1647 = vmatpush1.xpose.msra.mxu0 0.0
      %1648 = vmatprep.subr.mxu0 0.0
      %1649 = vmatpush1.xpose.msra.mxu0 0.0
      %1650 = vmatprep.subr.mxu0 0.0
      %1651 = vmatpush1.xpose.msra.mxu0 0.0
      %1652 = vmatprep.subr.mxu0 0.0
      %1653 = vmatpush1.xpose.msra.mxu0 0.0
      %1654 = vmatprep.subr.mxu0 0.0
      %1655 = vmatpush1.xpose.msra.mxu0 0.0
      %1656 = vmatprep.subr.mxu0 0.0
      %1657 = vmatpush1.xpose.msra.mxu0 0.0
      %1658 = vmatprep.subr.mxu0 0.0
      %1659 = vmatpush1.xpose.msra.mxu0 0.0
      %1660 = vmatprep.subr.mxu0 0.0
      %1661 = vmatpush1.xpose.msra.mxu0 0.0
      %1662 = vmatprep.mubr.f32.mxu0 0.0
      %1663 = vmatmul.mubr.f32.gmra.mrb[0].mxu0 %v1590
      %v1664 = vpop.f32.mrb[0].mxu0
      %v1665 = vadd.f32 %v592, %v1664
      %v1666 = vpop.f32.mrb[0].mxu0
      %1667 = vmatprep.mubr.f32.mxu0 0.0
      %1668 = vmatmul.mubr.f32.gmra.mrb[0].mxu0 %v1592
      %v1669 = vpop.f32.mrb[0].mxu0
      %v1670 = vadd.f32 %v593, %v1669
      %v1671 = vpop.f32.mrb[0].mxu0
      %1672 = vdwg.mxu0
      %1673 = vrot.lane.b32.xlu0 %v582, 120
      %v1674 = vpop.permute.xlu0 %1673
      %1675 = vrot.lane.b32.xlu0 %v587, 120
      %v1676 = vpop.permute.xlu0 %1675
      %1677 = vrot.lane.b32.xlu0 %v582, 88
      %v1678 = vpop.permute.xlu0 %1677
      %1679 = vrot.lane.b32.xlu0 %v587, 88
      %v1680 = vpop.permute.xlu0 %1679
      %v1681 = vsel %vm604, %v1674, 0
      %v1683 = vsel %vm604, %v1676, 0
      %v1685 = vsel %vm604, %v1678, 0
      %v1687 = vsel %vm604, %v1680, 0
      %1689 = vmatprep.subr.mxu0 0.0
      %1690 = vmatpush1.xpose.msra.mxu0 %v1685
      %1691 = vmatprep.subr.mxu0 0.0
      %1692 = vmatpush1.xpose.msra.mxu0 %v1687
      %1693 = vmatprep.subr.mxu0 0.0
      %1694 = vmatpush1.xpose.msra.mxu0 0.0
      %1695 = vmatprep.subr.mxu0 0.0
      %1696 = vmatpush1.xpose.msra.mxu0 0.0
      %1697 = vmatprep.subr.mxu0 0.0
      %1698 = vmatpush1.xpose.msra.mxu0 0.0
      %1699 = vmatprep.subr.mxu0 0.0
      %1700 = vmatpush1.xpose.msra.mxu0 0.0
      %1701 = vmatprep.subr.mxu0 0.0
      %1702 = vmatpush1.xpose.msra.mxu0 0.0
      %1703 = vmatprep.subr.mxu0 0.0
      %1704 = vmatpush1.xpose.msra.mxu0 0.0
      %1705 = vmatprep.subr.mxu0 0.0
      %1706 = vmatpush1.xpose.msra.mxu0 0.0
      %1707 = vmatprep.subr.mxu0 0.0
      %1708 = vmatpush1.xpose.msra.mxu0 0.0
      %1709 = vmatprep.subr.mxu0 0.0
      %1710 = vmatpush1.xpose.msra.mxu0 0.0
      %1711 = vmatprep.subr.mxu0 0.0
      %1712 = vmatpush1.xpose.msra.mxu0 0.0
      %1713 = vmatprep.subr.mxu0 0.0
      %1714 = vmatpush1.xpose.msra.mxu0 0.0
      %1715 = vmatprep.subr.mxu0 0.0
      %1716 = vmatpush1.xpose.msra.mxu0 0.0
      %1717 = vmatprep.subr.mxu0 0.0
      %1718 = vmatpush1.xpose.msra.mxu0 0.0
      %1719 = vmatprep.subr.mxu0 0.0
      %1720 = vmatpush1.xpose.msra.mxu0 0.0
      %1721 = vmatprep.subr.mxu0 0.0
      %1722 = vmatpush1.xpose.msra.mxu0 0.0
      %1723 = vmatprep.subr.mxu0 0.0
      %1724 = vmatpush1.xpose.msra.mxu0 0.0
      %1725 = vmatprep.subr.mxu0 0.0
      %1726 = vmatpush1.xpose.msra.mxu0 0.0
      %1727 = vmatprep.subr.mxu0 0.0
      %1728 = vmatpush1.xpose.msra.mxu0 0.0
      %1729 = vmatprep.subr.mxu0 0.0
      %1730 = vmatpush1.xpose.msra.mxu0 0.0
      %1731 = vmatprep.subr.mxu0 0.0
      %1732 = vmatpush1.xpose.msra.mxu0 0.0
      %1733 = vmatprep.subr.mxu0 0.0
      %1734 = vmatpush1.xpose.msra.mxu0 0.0
      %1735 = vmatprep.subr.mxu0 0.0
      %1736 = vmatpush1.xpose.msra.mxu0 0.0
      %1737 = vmatprep.subr.mxu0 0.0
      %1738 = vmatpush1.xpose.msra.mxu0 0.0
      %1739 = vmatprep.subr.mxu0 0.0
      %1740 = vmatpush1.xpose.msra.mxu0 0.0
      %1741 = vmatprep.subr.mxu0 0.0
      %1742 = vmatpush1.xpose.msra.mxu0 0.0
      %1743 = vmatprep.subr.mxu0 0.0
      %1744 = vmatpush1.xpose.msra.mxu0 0.0
      %1745 = vmatprep.subr.mxu0 0.0
      %1746 = vmatpush1.xpose.msra.mxu0 0.0
      %1747 = vmatprep.subr.mxu0 0.0
      %1748 = vmatpush1.xpose.msra.mxu0 0.0
      %1749 = vmatprep.subr.mxu0 0.0
      %1750 = vmatpush1.xpose.msra.mxu0 0.0
      %1751 = vmatprep.subr.mxu0 0.0
      %1752 = vmatpush1.xpose.msra.mxu0 0.0
      %1753 = vmatprep.mubr.f32.mxu0 0.0
      %1754 = vmatmul.mubr.f32.gmra.mrb[0].mxu0 %v1681
      %v1755 = vpop.f32.mrb[0].mxu0
      %v1756 = vadd.f32 %v592, %v1755
      %v1757 = vpop.f32.mrb[0].mxu0
      %1758 = vmatprep.mubr.f32.mxu0 0.0
      %1759 = vmatmul.mubr.f32.gmra.mrb[0].mxu0 %v1683
      %v1760 = vpop.f32.mrb[0].mxu0
      %v1761 = vadd.f32 %v593, %v1760
      %v1762 = vpop.f32.mrb[0].mxu0
      %1763 = vdwg.mxu0
      %v1764 = vsel %vm955, %v1483, -inf
      %1765 = vmax.xlane.f32.xlu0 %v1764
      %v1766 = vpop.xlane.xlu0 %1765
      %v1767 = vsel %vm955, %v1488, -inf
      %1768 = vmax.xlane.f32.xlu0 %v1767
      %v1769 = vpop.xlane.xlu0 %1768
      %v1770 = vsel %vm955, %v1574, -inf
      %1771 = vmax.xlane.f32.xlu0 %v1770
      %v1772 = vpop.xlane.xlu0 %1771
      %v1773 = vsel %vm955, %v1579, -inf
      %1774 = vmax.xlane.f32.xlu0 %v1773
      %v1775 = vpop.xlane.xlu0 %1774
      %v1776 = vsel %vm955, %v1665, -inf
      %1777 = vmax.xlane.f32.xlu0 %v1776
      %v1778 = vpop.xlane.xlu0 %1777
      %v1779 = vsel %vm955, %v1670, -inf
      %1780 = vmax.xlane.f32.xlu0 %v1779
      %v1781 = vpop.xlane.xlu0 %1780
      %v1782 = vsel %vm955, %v1756, -inf
      %1783 = vmax.xlane.f32.xlu0 %v1782
      %v1784 = vpop.xlane.xlu0 %1783
      %v1785 = vsel %vm955, %v1761, -inf
      %1786 = vmax.xlane.f32.xlu0 %v1785
      %v1787 = vpop.xlane.xlu0 %1786
      %v1788 = vsub.f32 %v1483, %v1766
      %v1789 = vsub.f32 %v1488, %v1769
      %v1790 = vsub.f32 %v1574, %v1772
      %v1791 = vsub.f32 %v1579, %v1775
      %v1792 = vsub.f32 %v1665, %v1778
      %v1793 = vsub.f32 %v1670, %v1781
      %v1794 = vsub.f32 %v1756, %v1784
      %v1795 = vsub.f32 %v1761, %v1787
      %v1796 = vmul.f32 %v1788, 1.442695
      %v1797 = vpow.pop %v1796
      %v1798 = vmul.f32 %v1789, 1.442695
      %v1799 = vpow.pop %v1798
      %v1800 = vmul.f32 %v1790, 1.442695
      %v1801 = vpow.pop %v1800
      %v1802 = vmul.f32 %v1791, 1.442695
      %v1803 = vpow.pop %v1802
      %v1804 = vmul.f32 %v1792, 1.442695
      %v1805 = vpow.pop %v1804
      %v1806 = vmul.f32 %v1793, 1.442695
      %v1807 = vpow.pop %v1806
      %v1808 = vmul.f32 %v1794, 1.442695
      %v1809 = vpow.pop %v1808
      %v1810 = vmul.f32 %v1795, 1.442695
      %v1811 = vpow.pop %v1810
      %v1812 = vsel %vm955, %v1797, 0.0
      %1813 = vadd.xlane.f32.xlu0 %v1812
      %v1814 = vpop.xlane.xlu0 %1813
      %v1815 = vsel %vm955, %v1799, 0.0
      %1816 = vadd.xlane.f32.xlu0 %v1815
      %v1817 = vpop.xlane.xlu0 %1816
      %v1818 = vsel %vm955, %v1801, 0.0
      %1819 = vadd.xlane.f32.xlu0 %v1818
      %v1820 = vpop.xlane.xlu0 %1819
      %v1821 = vsel %vm955, %v1803, 0.0
      %1822 = vadd.xlane.f32.xlu0 %v1821
      %v1823 = vpop.xlane.xlu0 %1822
      %v1824 = vsel %vm955, %v1805, 0.0
      %1825 = vadd.xlane.f32.xlu0 %v1824
      %v1826 = vpop.xlane.xlu0 %1825
      %v1827 = vsel %vm955, %v1807, 0.0
      %1828 = vadd.xlane.f32.xlu0 %v1827
      %v1829 = vpop.xlane.xlu0 %1828
      %v1830 = vsel %vm955, %v1809, 0.0
      %1831 = vadd.xlane.f32.xlu0 %v1830
      %v1832 = vpop.xlane.xlu0 %1831
      %v1833 = vsel %vm955, %v1811, 0.0
      %1834 = vadd.xlane.f32.xlu0 %v1833
      %v1835 = vpop.xlane.xlu0 %1834
      %v1836 = vrcp.pop %v1814
      %v1837 = vrcp.pop %v1817
      %v1838 = vrcp.pop %v1820
      %v1839 = vrcp.pop %v1823
      %v1840 = vrcp.pop %v1826
      %v1841 = vrcp.pop %v1829
      %v1842 = vrcp.pop %v1832
      %v1843 = vrcp.pop %v1835
      %v1844 = vmul.f32 %v1797, %v1836
      %v1845 = vmul.f32 %v1799, %v1837
      %v1846 = vmul.f32 %v1801, %v1838
      %v1847 = vmul.f32 %v1803, %v1839
      %v1848 = vmul.f32 %v1805, %v1840
      %v1849 = vmul.f32 %v1807, %v1841
      %v1850 = vmul.f32 %v1809, %v1842
      %v1851 = vmul.f32 %v1811, %v1843
      %1852 = vrot.lane.b32.xlu0 %v552, 56
      %v1853 = vpop.permute.xlu0 %1852
      %1854 = vrot.lane.b32.xlu0 %v557, 56
      %v1855 = vpop.permute.xlu0 %1854
      %v1859 = vsel %vm955, %v1844, 0
      %v1862 = vsel %vm955, %v1845, 0
      %1864 = vmatprep.subr.mxu0 0.0
      %1865 = vmatpush1.msra.mxu0 %v1853
      %1866 = vmatprep.subr.mxu0 0.0
      %1867 = vmatpush1.msra.mxu0 %v1855
      %1868 = vmatprep.subr.mxu0 0.0
      %1869 = vmatpush1.msra.mxu0 0.0
      %1870 = vmatprep.subr.mxu0 0.0
      %1871 = vmatpush1.msra.mxu0 0.0
      %1872 = vmatprep.subr.mxu0 0.0
      %1873 = vmatpush1.msra.mxu0 0.0
      %1874 = vmatprep.subr.mxu0 0.0
      %1875 = vmatpush1.msra.mxu0 0.0
      %1876 = vmatprep.subr.mxu0 0.0
      %1877 = vmatpush1.msra.mxu0 0.0
      %1878 = vmatprep.subr.mxu0 0.0
      %1879 = vmatpush1.msra.mxu0 0.0
      %1880 = vmatprep.subr.mxu0 0.0
      %1881 = vmatpush1.msra.mxu0 0.0
      %1882 = vmatprep.subr.mxu0 0.0
      %1883 = vmatpush1.msra.mxu0 0.0
      %1884 = vmatprep.subr.mxu0 0.0
      %1885 = vmatpush1.msra.mxu0 0.0
      %1886 = vmatprep.subr.mxu0 0.0
      %1887 = vmatpush1.msra.mxu0 0.0
      %1888 = vmatprep.subr.mxu0 0.0
      %1889 = vmatpush1.msra.mxu0 0.0
      %1890 = vmatprep.subr.mxu0 0.0
      %1891 = vmatpush1.msra.mxu0 0.0
      %1892 = vmatprep.subr.mxu0 0.0
      %1893 = vmatpush1.msra.mxu0 0.0
      %1894 = vmatprep.subr.mxu0 0.0
      %1895 = vmatpush1.msra.mxu0 0.0
      %1896 = vmatprep.subr.mxu0 0.0
      %1897 = vmatpush1.msra.mxu0 0.0
      %1898 = vmatprep.subr.mxu0 0.0
      %1899 = vmatpush1.msra.mxu0 0.0
      %1900 = vmatprep.subr.mxu0 0.0
      %1901 = vmatpush1.msra.mxu0 0.0
      %1902 = vmatprep.subr.mxu0 0.0
      %1903 = vmatpush1.msra.mxu0 0.0
      %1904 = vmatprep.subr.mxu0 0.0
      %1905 = vmatpush1.msra.mxu0 0.0
      %1906 = vmatprep.subr.mxu0 0.0
      %1907 = vmatpush1.msra.mxu0 0.0
      %1908 = vmatprep.subr.mxu0 0.0
      %1909 = vmatpush1.msra.mxu0 0.0
      %1910 = vmatprep.subr.mxu0 0.0
      %1911 = vmatpush1.msra.mxu0 0.0
      %1912 = vmatprep.subr.mxu0 0.0
      %1913 = vmatpush1.msra.mxu0 0.0
      %1914 = vmatprep.subr.mxu0 0.0
      %1915 = vmatpush1.msra.mxu0 0.0
      %1916 = vmatprep.subr.mxu0 0.0
      %1917 = vmatpush1.msra.mxu0 0.0
      %1918 = vmatprep.subr.mxu0 0.0
      %1919 = vmatpush1.msra.mxu0 0.0
      %1920 = vmatprep.subr.mxu0 0.0
      %1921 = vmatpush1.msra.mxu0 0.0
      %1922 = vmatprep.subr.mxu0 0.0
      %1923 = vmatpush1.msra.mxu0 0.0
      %1924 = vmatprep.subr.mxu0 0.0
      %1925 = vmatpush1.msra.mxu0 0.0
      %1926 = vmatprep.subr.mxu0 0.0
      %1927 = vmatpush1.msra.mxu0 0.0
      %1928 = vmatprep.mubr.f32.mxu0 0.0
      %1929 = vmatmul.mubr.f32.gmra.mrb[0].mxu0 %v1859
      %v1930 = vpop.f32.mrb[0].mxu0
      %v1931 = vadd.f32 0.0, %v1930
      %v1932 = vpop.f32.mrb[0].mxu0
      %1933 = vmatprep.mubr.f32.mxu0 0.0
      %1934 = vmatmul.mubr.f32.gmra.mrb[0].mxu0 %v1862
      %v1935 = vpop.f32.mrb[0].mxu0
      %v1936 = vadd.f32 0.0, %v1935
      %v1937 = vpop.f32.mrb[0].mxu0
      %1938 = vdwg.mxu0
      %1939 = vrot.lane.b32.xlu0 %v562, 56
      %v1940 = vpop.permute.xlu0 %1939
      %1941 = vrot.lane.b32.xlu0 %v567, 56
      %v1942 = vpop.permute.xlu0 %1941
      %v1946 = vsel %vm955, %v1846, 0
      %v1949 = vsel %vm955, %v1847, 0
      %1951 = vmatprep.subr.mxu0 0.0
      %1952 = vmatpush1.msra.mxu0 %v1940
      %1953 = vmatprep.subr.mxu0 0.0
      %1954 = vmatpush1.msra.mxu0 %v1942
      %1955 = vmatprep.subr.mxu0 0.0
      %1956 = vmatpush1.msra.mxu0 0.0
      %1957 = vmatprep.subr.mxu0 0.0
      %1958 = vmatpush1.msra.mxu0 0.0
      %1959 = vmatprep.subr.mxu0 0.0
      %1960 = vmatpush1.msra.mxu0 0.0
      %1961 = vmatprep.subr.mxu0 0.0
      %1962 = vmatpush1.msra.mxu0 0.0
      %1963 = vmatprep.subr.mxu0 0.0
      %1964 = vmatpush1.msra.mxu0 0.0
      %1965 = vmatprep.subr.mxu0 0.0
      %1966 = vmatpush1.msra.mxu0 0.0
      %1967 = vmatprep.subr.mxu0 0.0
      %1968 = vmatpush1.msra.mxu0 0.0
      %1969 = vmatprep.subr.mxu0 0.0
      %1970 = vmatpush1.msra.mxu0 0.0
      %1971 = vmatprep.subr.mxu0 0.0
      %1972 = vmatpush1.msra.mxu0 0.0
      %1973 = vmatprep.subr.mxu0 0.0
      %1974 = vmatpush1.msra.mxu0 0.0
      %1975 = vmatprep.subr.mxu0 0.0
      %1976 = vmatpush1.msra.mxu0 0.0
      %1977 = vmatprep.subr.mxu0 0.0
      %1978 = vmatpush1.msra.mxu0 0.0
      %1979 = vmatprep.subr.mxu0 0.0
      %1980 = vmatpush1.msra.mxu0 0.0
      %1981 = vmatprep.subr.mxu0 0.0
      %1982 = vmatpush1.msra.mxu0 0.0
      %1983 = vmatprep.subr.mxu0 0.0
      %1984 = vmatpush1.msra.mxu0 0.0
      %1985 = vmatprep.subr.mxu0 0.0
      %1986 = vmatpush1.msra.mxu0 0.0
      %1987 = vmatprep.subr.mxu0 0.0
      %1988 = vmatpush1.msra.mxu0 0.0
      %1989 = vmatprep.subr.mxu0 0.0
      %1990 = vmatpush1.msra.mxu0 0.0
      %1991 = vmatprep.subr.mxu0 0.0
      %1992 = vmatpush1.msra.mxu0 0.0
      %1993 = vmatprep.subr.mxu0 0.0
      %1994 = vmatpush1.msra.mxu0 0.0
      %1995 = vmatprep.subr.mxu0 0.0
      %1996 = vmatpush1.msra.mxu0 0.0
      %1997 = vmatprep.subr.mxu0 0.0
      %1998 = vmatpush1.msra.mxu0 0.0
      %1999 = vmatprep.subr.mxu0 0.0
      %2000 = vmatpush1.msra.mxu0 0.0
      %2001 = vmatprep.subr.mxu0 0.0
      %2002 = vmatpush1.msra.mxu0 0.0
      %2003 = vmatprep.subr.mxu0 0.0
      %2004 = vmatpush1.msra.mxu0 0.0
      %2005 = vmatprep.subr.mxu0 0.0
      %2006 = vmatpush1.msra.mxu0 0.0
      %2007 = vmatprep.subr.mxu0 0.0
      %2008 = vmatpush1.msra.mxu0 0.0
      %2009 = vmatprep.subr.mxu0 0.0
      %2010 = vmatpush1.msra.mxu0 0.0
      %2011 = vmatprep.subr.mxu0 0.0
      %2012 = vmatpush1.msra.mxu0 0.0
      %2013 = vmatprep.subr.mxu0 0.0
      %2014 = vmatpush1.msra.mxu0 0.0
      %2015 = vmatprep.mubr.f32.mxu0 0.0
      %2016 = vmatmul.mubr.f32.gmra.mrb[0].mxu0 %v1946
      %v2017 = vpop.f32.mrb[0].mxu0
      %v2018 = vadd.f32 0.0, %v2017
      %v2019 = vpop.f32.mrb[0].mxu0
      %2020 = vmatprep.mubr.f32.mxu0 0.0
      %2021 = vmatmul.mubr.f32.gmra.mrb[0].mxu0 %v1949
      %v2022 = vpop.f32.mrb[0].mxu0
      %v2023 = vadd.f32 0.0, %v2022
      %v2024 = vpop.f32.mrb[0].mxu0
      %2025 = vdwg.mxu0
      %2026 = vrot.lane.b32.xlu0 %v572, 56
      %v2027 = vpop.permute.xlu0 %2026
      %2028 = vrot.lane.b32.xlu0 %v577, 56
      %v2029 = vpop.permute.xlu0 %2028
      %v2033 = vsel %vm955, %v1848, 0
      %v2036 = vsel %vm955, %v1849, 0
      %2038 = vmatprep.subr.mxu0 0.0
      %2039 = vmatpush1.msra.mxu0 %v2027
      %2040 = vmatprep.subr.mxu0 0.0
      %2041 = vmatpush1.msra.mxu0 %v2029
      %2042 = vmatprep.subr.mxu0 0.0
      %2043 = vmatpush1.msra.mxu0 0.0
      %2044 = vmatprep.subr.mxu0 0.0
      %2045 = vmatpush1.msra.mxu0 0.0
      %2046 = vmatprep.subr.mxu0 0.0
      %2047 = vmatpush1.msra.mxu0 0.0
      %2048 = vmatprep.subr.mxu0 0.0
      %2049 = vmatpush1.msra.mxu0 0.0
      %2050 = vmatprep.subr.mxu0 0.0
      %2051 = vmatpush1.msra.mxu0 0.0
      %2052 = vmatprep.subr.mxu0 0.0
      %2053 = vmatpush1.msra.mxu0 0.0
      %2054 = vmatprep.subr.mxu0 0.0
      %2055 = vmatpush1.msra.mxu0 0.0
      %2056 = vmatprep.subr.mxu0 0.0
      %2057 = vmatpush1.msra.mxu0 0.0
      %2058 = vmatprep.subr.mxu0 0.0
      %2059 = vmatpush1.msra.mxu0 0.0
      %2060 = vmatprep.subr.mxu0 0.0
      %2061 = vmatpush1.msra.mxu0 0.0
      %2062 = vmatprep.subr.mxu0 0.0
      %2063 = vmatpush1.msra.mxu0 0.0
      %2064 = vmatprep.subr.mxu0 0.0
      %2065 = vmatpush1.msra.mxu0 0.0
      %2066 = vmatprep.subr.mxu0 0.0
      %2067 = vmatpush1.msra.mxu0 0.0
      %2068 = vmatprep.subr.mxu0 0.0
      %2069 = vmatpush1.msra.mxu0 0.0
      %2070 = vmatprep.subr.mxu0 0.0
      %2071 = vmatpush1.msra.mxu0 0.0
      %2072 = vmatprep.subr.mxu0 0.0
      %2073 = vmatpush1.msra.mxu0 0.0
      %2074 = vmatprep.subr.mxu0 0.0
      %2075 = vmatpush1.msra.mxu0 0.0
      %2076 = vmatprep.subr.mxu0 0.0
      %2077 = vmatpush1.msra.mxu0 0.0
      %2078 = vmatprep.subr.mxu0 0.0
      %2079 = vmatpush1.msra.mxu0 0.0
      %2080 = vmatprep.subr.mxu0 0.0
      %2081 = vmatpush1.msra.mxu0 0.0
      %2082 = vmatprep.subr.mxu0 0.0
      %2083 = vmatpush1.msra.mxu0 0.0
      %2084 = vmatprep.subr.mxu0 0.0
      %2085 = vmatpush1.msra.mxu0 0.0
      %2086 = vmatprep.subr.mxu0 0.0
      %2087 = vmatpush1.msra.mxu0 0.0
      %2088 = vmatprep.subr.mxu0 0.0
      %2089 = vmatpush1.msra.mxu0 0.0
      %2090 = vmatprep.subr.mxu0 0.0
      %2091 = vmatpush1.msra.mxu0 0.0
      %2092 = vmatprep.subr.mxu0 0.0
      %2093 = vmatpush1.msra.mxu0 0.0
      %2094 = vmatprep.subr.mxu0 0.0
      %2095 = vmatpush1.msra.mxu0 0.0
      %2096 = vmatprep.subr.mxu0 0.0
      %2097 = vmatpush1.msra.mxu0 0.0
      %2098 = vmatprep.subr.mxu0 0.0
      %2099 = vmatpush1.msra.mxu0 0.0
      %2100 = vmatprep.subr.mxu0 0.0
      %2101 = vmatpush1.msra.mxu0 0.0
      %2102 = vmatprep.mubr.f32.mxu0 0.0
      %2103 = vmatmul.mubr.f32.gmra.mrb[0].mxu0 %v2033
      %v2104 = vpop.f32.mrb[0].mxu0
      %v2105 = vadd.f32 0.0, %v2104
      %v2106 = vpop.f32.mrb[0].mxu0
      %2107 = vmatprep.mubr.f32.mxu0 0.0
      %2108 = vmatmul.mubr.f32.gmra.mrb[0].mxu0 %v2036
      %v2109 = vpop.f32.mrb[0].mxu0
      %v2110 = vadd.f32 0.0, %v2109
      %v2111 = vpop.f32.mrb[0].mxu0
      %2112 = vdwg.mxu0
      %2113 = vrot.lane.b32.xlu0 %v582, 56
      %v2114 = vpop.permute.xlu0 %2113
      %2115 = vrot.lane.b32.xlu0 %v587, 56
      %v2116 = vpop.permute.xlu0 %2115
      %v2120 = vsel %vm955, %v1850, 0
      %v2123 = vsel %vm955, %v1851, 0
      %2125 = vmatprep.subr.mxu0 0.0
      %2126 = vmatpush1.msra.mxu0 %v2114
      %2127 = vmatprep.subr.mxu0 0.0
      %2128 = vmatpush1.msra.mxu0 %v2116
      %2129 = vmatprep.subr.mxu0 0.0
      %2130 = vmatpush1.msra.mxu0 0.0
      %2131 = vmatprep.subr.mxu0 0.0
      %2132 = vmatpush1.msra.mxu0 0.0
      %2133 = vmatprep.subr.mxu0 0.0
      %2134 = vmatpush1.msra.mxu0 0.0
      %2135 = vmatprep.subr.mxu0 0.0
      %2136 = vmatpush1.msra.mxu0 0.0
      %2137 = vmatprep.subr.mxu0 0.0
      %2138 = vmatpush1.msra.mxu0 0.0
      %2139 = vmatprep.subr.mxu0 0.0
      %2140 = vmatpush1.msra.mxu0 0.0
      %2141 = vmatprep.subr.mxu0 0.0
      %2142 = vmatpush1.msra.mxu0 0.0
      %2143 = vmatprep.subr.mxu0 0.0
      %2144 = vmatpush1.msra.mxu0 0.0
      %2145 = vmatprep.subr.mxu0 0.0
      %2146 = vmatpush1.msra.mxu0 0.0
      %2147 = vmatprep.subr.mxu0 0.0
      %2148 = vmatpush1.msra.mxu0 0.0
      %2149 = vmatprep.subr.mxu0 0.0
      %2150 = vmatpush1.msra.mxu0 0.0
      %2151 = vmatprep.subr.mxu0 0.0
      %2152 = vmatpush1.msra.mxu0 0.0
      %2153 = vmatprep.subr.mxu0 0.0
      %2154 = vmatpush1.msra.mxu0 0.0
      %2155 = vmatprep.subr.mxu0 0.0
      %2156 = vmatpush1.msra.mxu0 0.0
      %2157 = vmatprep.subr.mxu0 0.0
      %2158 = vmatpush1.msra.mxu0 0.0
      %2159 = vmatprep.subr.mxu0 0.0
      %2160 = vmatpush1.msra.mxu0 0.0
      %2161 = vmatprep.subr.mxu0 0.0
      %2162 = vmatpush1.msra.mxu0 0.0
      %2163 = vmatprep.subr.mxu0 0.0
      %2164 = vmatpush1.msra.mxu0 0.0
      %2165 = vmatprep.subr.mxu0 0.0
      %2166 = vmatpush1.msra.mxu0 0.0
      %2167 = vmatprep.subr.mxu0 0.0
      %2168 = vmatpush1.msra.mxu0 0.0
      %2169 = vmatprep.subr.mxu0 0.0
      %2170 = vmatpush1.msra.mxu0 0.0
      %2171 = vmatprep.subr.mxu0 0.0
      %2172 = vmatpush1.msra.mxu0 0.0
      %2173 = vmatprep.subr.mxu0 0.0
      %2174 = vmatpush1.msra.mxu0 0.0
      %2175 = vmatprep.subr.mxu0 0.0
      %2176 = vmatpush1.msra.mxu0 0.0
      %2177 = vmatprep.subr.mxu0 0.0
      %2178 = vmatpush1.msra.mxu0 0.0
      %2179 = vmatprep.subr.mxu0 0.0
      %2180 = vmatpush1.msra.mxu0 0.0
      %2181 = vmatprep.subr.mxu0 0.0
      %2182 = vmatpush1.msra.mxu0 0.0
      %2183 = vmatprep.subr.mxu0 0.0
      %2184 = vmatpush1.msra.mxu0 0.0
      %2185 = vmatprep.subr.mxu0 0.0
      %2186 = vmatpush1.msra.mxu0 0.0
      %2187 = vmatprep.subr.mxu0 0.0
      %2188 = vmatpush1.msra.mxu0 0.0
      %2189 = vmatprep.mubr.f32.mxu0 0.0
      %2190 = vmatmul.mubr.f32.gmra.mrb[0].mxu0 %v2120
      %v2191 = vpop.f32.mrb[0].mxu0
      %v2192 = vadd.f32 0.0, %v2191
      %v2193 = vpop.f32.mrb[0].mxu0
      %2194 = vmatprep.mubr.f32.mxu0 0.0
      %2195 = vmatmul.mubr.f32.gmra.mrb[0].mxu0 %v2123
      %v2196 = vpop.f32.mrb[0].mxu0
      %v2197 = vadd.f32 0.0, %v2196
      %v2198 = vpop.f32.mrb[0].mxu0
      %2199 = vdwg.mxu0
      %2208 = vrot.lane.b32.xlu0 %v1931, 8
      %v2209 = vpop.permute.xlu0 %2208
      %2210 = vrot.lane.b32.xlu0 %v1936, 8
      %v2211 = vpop.permute.xlu0 %2210
      %2212 = vrot.lane.b32.xlu0 %v2018, 8
      %v2213 = vpop.permute.xlu0 %2212
      %2214 = vrot.lane.b32.xlu0 %v2023, 8
      %v2215 = vpop.permute.xlu0 %2214
      %2216 = vrot.lane.b32.xlu0 %v2105, 8
      %v2217 = vpop.permute.xlu0 %2216
      %2218 = vrot.lane.b32.xlu0 %v2110, 8
      %v2219 = vpop.permute.xlu0 %2218
      %2220 = vrot.lane.b32.xlu0 %v2192, 8
      %v2221 = vpop.permute.xlu0 %2220
      %2222 = vrot.lane.b32.xlu0 %v2197, 8
      %v2223 = vpop.permute.xlu0 %2222
      %vm2232 = vcmask 130112
      %2233 = vst.msk [vmem:[#allocation2] sm:$0xff] %vm2232, %v2209
      %2234 = vst.msk [vmem:[#allocation2 + $0x8] sm:$0xff] %vm2232, %v2211
      %2235 = vst.msk [vmem:[#allocation2 + $0x10] sm:$0xff] %vm2232, %v2213
      %2236 = vst.msk [vmem:[#allocation2 + $0x18] sm:$0xff] %vm2232, %v2215
      %2237 = vst.msk [vmem:[#allocation2 + $0x20] sm:$0xff] %vm2232, %v2217
      %2238 = vst.msk [vmem:[#allocation2 + $0x28] sm:$0xff] %vm2232, %v2219
      %2239 = vst.msk [vmem:[#allocation2 + $0x30] sm:$0xff] %vm2232, %v2221
      %2240 = vst.msk [vmem:[#allocation2 + $0x38] sm:$0xff] %vm2232, %v2223
      %2241 = vrot.lane.b32.xlu0 %v552, 112
      %v2242 = vpop.permute.xlu0 %2241
      %2243 = vrot.lane.b32.xlu0 %v557, 112
      %v2244 = vpop.permute.xlu0 %2243
      %2245 = vrot.lane.b32.xlu0 %v552, 80
      %v2246 = vpop.permute.xlu0 %2245
      %2247 = vrot.lane.b32.xlu0 %v557, 80
      %v2248 = vpop.permute.xlu0 %2247
      %v2249 = vsel %vm604, %v2242, 0
      %v2251 = vsel %vm604, %v2244, 0
      %v2253 = vsel %vm604, %v2246, 0
      %v2255 = vsel %vm604, %v2248, 0
      %2257 = vmatprep.subr.mxu0 0.0
      %2258 = vmatpush1.xpose.msra.mxu0 %v2253
      %2259 = vmatprep.subr.mxu0 0.0
      %2260 = vmatpush1.xpose.msra.mxu0 %v2255
      %2261 = vmatprep.subr.mxu0 0.0
      %2262 = vmatpush1.xpose.msra.mxu0 0.0
      %2263 = vmatprep.subr.mxu0 0.0
      %2264 = vmatpush1.xpose.msra.mxu0 0.0
      %2265 = vmatprep.subr.mxu0 0.0
      %2266 = vmatpush1.xpose.msra.mxu0 0.0
      %2267 = vmatprep.subr.mxu0 0.0
      %2268 = vmatpush1.xpose.msra.mxu0 0.0
      %2269 = vmatprep.subr.mxu0 0.0
      %2270 = vmatpush1.xpose.msra.mxu0 0.0
      %2271 = vmatprep.subr.mxu0 0.0
      %2272 = vmatpush1.xpose.msra.mxu0 0.0
      %2273 = vmatprep.subr.mxu0 0.0
      %2274 = vmatpush1.xpose.msra.mxu0 0.0
      %2275 = vmatprep.subr.mxu0 0.0
      %2276 = vmatpush1.xpose.msra.mxu0 0.0
      %2277 = vmatprep.subr.mxu0 0.0
      %2278 = vmatpush1.xpose.msra.mxu0 0.0
      %2279 = vmatprep.subr.mxu0 0.0
      %2280 = vmatpush1.xpose.msra.mxu0 0.0
      %2281 = vmatprep.subr.mxu0 0.0
      %2282 = vmatpush1.xpose.msra.mxu0 0.0
      %2283 = vmatprep.subr.mxu0 0.0
      %2284 = vmatpush1.xpose.msra.mxu0 0.0
      %2285 = vmatprep.subr.mxu0 0.0
      %2286 = vmatpush1.xpose.msra.mxu0 0.0
      %2287 = vmatprep.subr.mxu0 0.0
      %2288 = vmatpush1.xpose.msra.mxu0 0.0
      %2289 = vmatprep.subr.mxu0 0.0
      %2290 = vmatpush1.xpose.msra.mxu0 0.0
      %2291 = vmatprep.subr.mxu0 0.0
      %2292 = vmatpush1.xpose.msra.mxu0 0.0
      %2293 = vmatprep.subr.mxu0 0.0
      %2294 = vmatpush1.xpose.msra.mxu0 0.0
      %2295 = vmatprep.subr.mxu0 0.0
      %2296 = vmatpush1.xpose.msra.mxu0 0.0
      %2297 = vmatprep.subr.mxu0 0.0
      %2298 = vmatpush1.xpose.msra.mxu0 0.0
      %2299 = vmatprep.subr.mxu0 0.0
      %2300 = vmatpush1.xpose.msra.mxu0 0.0
      %2301 = vmatprep.subr.mxu0 0.0
      %2302 = vmatpush1.xpose.msra.mxu0 0.0
      %2303 = vmatprep.subr.mxu0 0.0
      %2304 = vmatpush1.xpose.msra.mxu0 0.0
      %2305 = vmatprep.subr.mxu0 0.0
      %2306 = vmatpush1.xpose.msra.mxu0 0.0
      %2307 = vmatprep.subr.mxu0 0.0
      %2308 = vmatpush1.xpose.msra.mxu0 0.0
      %2309 = vmatprep.subr.mxu0 0.0
      %2310 = vmatpush1.xpose.msra.mxu0 0.0
      %2311 = vmatprep.subr.mxu0 0.0
      %2312 = vmatpush1.xpose.msra.mxu0 0.0
      %2313 = vmatprep.subr.mxu0 0.0
      %2314 = vmatpush1.xpose.msra.mxu0 0.0
      %2315 = vmatprep.subr.mxu0 0.0
      %2316 = vmatpush1.xpose.msra.mxu0 0.0
      %2317 = vmatprep.subr.mxu0 0.0
      %2318 = vmatpush1.xpose.msra.mxu0 0.0
      %2319 = vmatprep.subr.mxu0 0.0
      %2320 = vmatpush1.xpose.msra.mxu0 0.0
      %2321 = vmatprep.mubr.f32.mxu0 0.0
      %2322 = vmatmul.mubr.f32.gmra.mrb[0].mxu0 %v2249
      %v2323 = vpop.f32.mrb[0].mxu0
      %v2324 = vadd.f32 %v594, %v2323
      %v2325 = vpop.f32.mrb[0].mxu0
      %2326 = vmatprep.mubr.f32.mxu0 0.0
      %2327 = vmatmul.mubr.f32.gmra.mrb[0].mxu0 %v2251
      %v2328 = vpop.f32.mrb[0].mxu0
      %v2329 = vadd.f32 %v595, %v2328
      %v2330 = vpop.f32.mrb[0].mxu0
      %2331 = vdwg.mxu0
      %2332 = vrot.lane.b32.xlu0 %v562, 112
      %v2333 = vpop.permute.xlu0 %2332
      %2334 = vrot.lane.b32.xlu0 %v567, 112
      %v2335 = vpop.permute.xlu0 %2334
      %2336 = vrot.lane.b32.xlu0 %v562, 80
      %v2337 = vpop.permute.xlu0 %2336
      %2338 = vrot.lane.b32.xlu0 %v567, 80
      %v2339 = vpop.permute.xlu0 %2338
      %v2340 = vsel %vm604, %v2333, 0
      %v2342 = vsel %vm604, %v2335, 0
      %v2344 = vsel %vm604, %v2337, 0
      %v2346 = vsel %vm604, %v2339, 0
      %2348 = vmatprep.subr.mxu0 0.0
      %2349 = vmatpush1.xpose.msra.mxu0 %v2344
      %2350 = vmatprep.subr.mxu0 0.0
      %2351 = vmatpush1.xpose.msra.mxu0 %v2346
      %2352 = vmatprep.subr.mxu0 0.0
      %2353 = vmatpush1.xpose.msra.mxu0 0.0
      %2354 = vmatprep.subr.mxu0 0.0
      %2355 = vmatpush1.xpose.msra.mxu0 0.0
      %2356 = vmatprep.subr.mxu0 0.0
      %2357 = vmatpush1.xpose.msra.mxu0 0.0
      %2358 = vmatprep.subr.mxu0 0.0
      %2359 = vmatpush1.xpose.msra.mxu0 0.0
      %2360 = vmatprep.subr.mxu0 0.0
      %2361 = vmatpush1.xpose.msra.mxu0 0.0
      %2362 = vmatprep.subr.mxu0 0.0
      %2363 = vmatpush1.xpose.msra.mxu0 0.0
      %2364 = vmatprep.subr.mxu0 0.0
      %2365 = vmatpush1.xpose.msra.mxu0 0.0
      %2366 = vmatprep.subr.mxu0 0.0
      %2367 = vmatpush1.xpose.msra.mxu0 0.0
      %2368 = vmatprep.subr.mxu0 0.0
      %2369 = vmatpush1.xpose.msra.mxu0 0.0
      %2370 = vmatprep.subr.mxu0 0.0
      %2371 = vmatpush1.xpose.msra.mxu0 0.0
      %2372 = vmatprep.subr.mxu0 0.0
      %2373 = vmatpush1.xpose.msra.mxu0 0.0
      %2374 = vmatprep.subr.mxu0 0.0
      %2375 = vmatpush1.xpose.msra.mxu0 0.0
      %2376 = vmatprep.subr.mxu0 0.0
      %2377 = vmatpush1.xpose.msra.mxu0 0.0
      %2378 = vmatprep.subr.mxu0 0.0
      %2379 = vmatpush1.xpose.msra.mxu0 0.0
      %2380 = vmatprep.subr.mxu0 0.0
      %2381 = vmatpush1.xpose.msra.mxu0 0.0
      %2382 = vmatprep.subr.mxu0 0.0
      %2383 = vmatpush1.xpose.msra.mxu0 0.0
      %2384 = vmatprep.subr.mxu0 0.0
      %2385 = vmatpush1.xpose.msra.mxu0 0.0
      %2386 = vmatprep.subr.mxu0 0.0
      %2387 = vmatpush1.xpose.msra.mxu0 0.0
      %2388 = vmatprep.subr.mxu0 0.0
      %2389 = vmatpush1.xpose.msra.mxu0 0.0
      %2390 = vmatprep.subr.mxu0 0.0
      %2391 = vmatpush1.xpose.msra.mxu0 0.0
      %2392 = vmatprep.subr.mxu0 0.0
      %2393 = vmatpush1.xpose.msra.mxu0 0.0
      %2394 = vmatprep.subr.mxu0 0.0
      %2395 = vmatpush1.xpose.msra.mxu0 0.0
      %2396 = vmatprep.subr.mxu0 0.0
      %2397 = vmatpush1.xpose.msra.mxu0 0.0
      %2398 = vmatprep.subr.mxu0 0.0
      %2399 = vmatpush1.xpose.msra.mxu0 0.0
      %2400 = vmatprep.subr.mxu0 0.0
      %2401 = vmatpush1.xpose.msra.mxu0 0.0
      %2402 = vmatprep.subr.mxu0 0.0
      %2403 = vmatpush1.xpose.msra.mxu0 0.0
      %2404 = vmatprep.subr.mxu0 0.0
      %2405 = vmatpush1.xpose.msra.mxu0 0.0
      %2406 = vmatprep.subr.mxu0 0.0
      %2407 = vmatpush1.xpose.msra.mxu0 0.0
      %2408 = vmatprep.subr.mxu0 0.0
      %2409 = vmatpush1.xpose.msra.mxu0 0.0
      %2410 = vmatprep.subr.mxu0 0.0
      %2411 = vmatpush1.xpose.msra.mxu0 0.0
      %2412 = vmatprep.mubr.f32.mxu0 0.0
      %2413 = vmatmul.mubr.f32.gmra.mrb[0].mxu0 %v2340
      %v2414 = vpop.f32.mrb[0].mxu0
      %v2415 = vadd.f32 %v594, %v2414
      %v2416 = vpop.f32.mrb[0].mxu0
      %2417 = vmatprep.mubr.f32.mxu0 0.0
      %2418 = vmatmul.mubr.f32.gmra.mrb[0].mxu0 %v2342
      %v2419 = vpop.f32.mrb[0].mxu0
      %v2420 = vadd.f32 %v595, %v2419
      %v2421 = vpop.f32.mrb[0].mxu0
      %2422 = vdwg.mxu0
      %2423 = vrot.lane.b32.xlu0 %v572, 112
      %v2424 = vpop.permute.xlu0 %2423
      %2425 = vrot.lane.b32.xlu0 %v577, 112
      %v2426 = vpop.permute.xlu0 %2425
      %2427 = vrot.lane.b32.xlu0 %v572, 80
      %v2428 = vpop.permute.xlu0 %2427
      %2429 = vrot.lane.b32.xlu0 %v577, 80
      %v2430 = vpop.permute.xlu0 %2429
      %v2431 = vsel %vm604, %v2424, 0
      %v2433 = vsel %vm604, %v2426, 0
      %v2435 = vsel %vm604, %v2428, 0
      %v2437 = vsel %vm604, %v2430, 0
      %2439 = vmatprep.subr.mxu0 0.0
      %2440 = vmatpush1.xpose.msra.mxu0 %v2435
      %2441 = vmatprep.subr.mxu0 0.0
      %2442 = vmatpush1.xpose.msra.mxu0 %v2437
      %2443 = vmatprep.subr.mxu0 0.0
      %2444 = vmatpush1.xpose.msra.mxu0 0.0
      %2445 = vmatprep.subr.mxu0 0.0
      %2446 = vmatpush1.xpose.msra.mxu0 0.0
      %2447 = vmatprep.subr.mxu0 0.0
      %2448 = vmatpush1.xpose.msra.mxu0 0.0
      %2449 = vmatprep.subr.mxu0 0.0
      %2450 = vmatpush1.xpose.msra.mxu0 0.0
      %2451 = vmatprep.subr.mxu0 0.0
      %2452 = vmatpush1.xpose.msra.mxu0 0.0
      %2453 = vmatprep.subr.mxu0 0.0
      %2454 = vmatpush1.xpose.msra.mxu0 0.0
      %2455 = vmatprep.subr.mxu0 0.0
      %2456 = vmatpush1.xpose.msra.mxu0 0.0
      %2457 = vmatprep.subr.mxu0 0.0
      %2458 = vmatpush1.xpose.msra.mxu0 0.0
      %2459 = vmatprep.subr.mxu0 0.0
      %2460 = vmatpush1.xpose.msra.mxu0 0.0
      %2461 = vmatprep.subr.mxu0 0.0
      %2462 = vmatpush1.xpose.msra.mxu0 0.0
      %2463 = vmatprep.subr.mxu0 0.0
      %2464 = vmatpush1.xpose.msra.mxu0 0.0
      %2465 = vmatprep.subr.mxu0 0.0
      %2466 = vmatpush1.xpose.msra.mxu0 0.0
      %2467 = vmatprep.subr.mxu0 0.0
      %2468 = vmatpush1.xpose.msra.mxu0 0.0
      %2469 = vmatprep.subr.mxu0 0.0
      %2470 = vmatpush1.xpose.msra.mxu0 0.0
      %2471 = vmatprep.subr.mxu0 0.0
      %2472 = vmatpush1.xpose.msra.mxu0 0.0
      %2473 = vmatprep.subr.mxu0 0.0
      %2474 = vmatpush1.xpose.msra.mxu0 0.0
      %2475 = vmatprep.subr.mxu0 0.0
      %2476 = vmatpush1.xpose.msra.mxu0 0.0
      %2477 = vmatprep.subr.mxu0 0.0
      %2478 = vmatpush1.xpose.msra.mxu0 0.0
      %2479 = vmatprep.subr.mxu0 0.0
      %2480 = vmatpush1.xpose.msra.mxu0 0.0
      %2481 = vmatprep.subr.mxu0 0.0
      %2482 = vmatpush1.xpose.msra.mxu0 0.0
      %2483 = vmatprep.subr.mxu0 0.0
      %2484 = vmatpush1.xpose.msra.mxu0 0.0
      %2485 = vmatprep.subr.mxu0 0.0
      %2486 = vmatpush1.xpose.msra.mxu0 0.0
      %2487 = vmatprep.subr.mxu0 0.0
      %2488 = vmatpush1.xpose.msra.mxu0 0.0
      %2489 = vmatprep.subr.mxu0 0.0
      %2490 = vmatpush1.xpose.msra.mxu0 0.0
      %2491 = vmatprep.subr.mxu0 0.0
      %2492 = vmatpush1.xpose.msra.mxu0 0.0
      %2493 = vmatprep.subr.mxu0 0.0
      %2494 = vmatpush1.xpose.msra.mxu0 0.0
      %2495 = vmatprep.subr.mxu0 0.0
      %2496 = vmatpush1.xpose.msra.mxu0 0.0
      %2497 = vmatprep.subr.mxu0 0.0
      %2498 = vmatpush1.xpose.msra.mxu0 0.0
      %2499 = vmatprep.subr.mxu0 0.0
      %2500 = vmatpush1.xpose.msra.mxu0 0.0
      %2501 = vmatprep.subr.mxu0 0.0
      %2502 = vmatpush1.xpose.msra.mxu0 0.0
      %2503 = vmatprep.mubr.f32.mxu0 0.0
      %2504 = vmatmul.mubr.f32.gmra.mrb[0].mxu0 %v2431
      %v2505 = vpop.f32.mrb[0].mxu0
      %v2506 = vadd.f32 %v594, %v2505
      %v2507 = vpop.f32.mrb[0].mxu0
      %2508 = vmatprep.mubr.f32.mxu0 0.0
      %2509 = vmatmul.mubr.f32.gmra.mrb[0].mxu0 %v2433
      %v2510 = vpop.f32.mrb[0].mxu0
      %v2511 = vadd.f32 %v595, %v2510
      %v2512 = vpop.f32.mrb[0].mxu0
      %2513 = vdwg.mxu0
      %2514 = vrot.lane.b32.xlu0 %v582, 112
      %v2515 = vpop.permute.xlu0 %2514
      %2516 = vrot.lane.b32.xlu0 %v587, 112
      %v2517 = vpop.permute.xlu0 %2516
      %2518 = vrot.lane.b32.xlu0 %v582, 80
      %v2519 = vpop.permute.xlu0 %2518
      %2520 = vrot.lane.b32.xlu0 %v587, 80
      %v2521 = vpop.permute.xlu0 %2520
      %v2522 = vsel %vm604, %v2515, 0
      %v2524 = vsel %vm604, %v2517, 0
      %v2526 = vsel %vm604, %v2519, 0
      %v2528 = vsel %vm604, %v2521, 0
      %2530 = vmatprep.subr.mxu0 0.0
      %2531 = vmatpush1.xpose.msra.mxu0 %v2526
      %2532 = vmatprep.subr.mxu0 0.0
      %2533 = vmatpush1.xpose.msra.mxu0 %v2528
      %2534 = vmatprep.subr.mxu0 0.0
      %2535 = vmatpush1.xpose.msra.mxu0 0.0
      %2536 = vmatprep.subr.mxu0 0.0
      %2537 = vmatpush1.xpose.msra.mxu0 0.0
      %2538 = vmatprep.subr.mxu0 0.0
      %2539 = vmatpush1.xpose.msra.mxu0 0.0
      %2540 = vmatprep.subr.mxu0 0.0
      %2541 = vmatpush1.xpose.msra.mxu0 0.0
      %2542 = vmatprep.subr.mxu0 0.0
      %2543 = vmatpush1.xpose.msra.mxu0 0.0
      %2544 = vmatprep.subr.mxu0 0.0
      %2545 = vmatpush1.xpose.msra.mxu0 0.0
      %2546 = vmatprep.subr.mxu0 0.0
      %2547 = vmatpush1.xpose.msra.mxu0 0.0
      %2548 = vmatprep.subr.mxu0 0.0
      %2549 = vmatpush1.xpose.msra.mxu0 0.0
      %2550 = vmatprep.subr.mxu0 0.0
      %2551 = vmatpush1.xpose.msra.mxu0 0.0
      %2552 = vmatprep.subr.mxu0 0.0
      %2553 = vmatpush1.xpose.msra.mxu0 0.0
      %2554 = vmatprep.subr.mxu0 0.0
      %2555 = vmatpush1.xpose.msra.mxu0 0.0
      %2556 = vmatprep.subr.mxu0 0.0
      %2557 = vmatpush1.xpose.msra.mxu0 0.0
      %2558 = vmatprep.subr.mxu0 0.0
      %2559 = vmatpush1.xpose.msra.mxu0 0.0
      %2560 = vmatprep.subr.mxu0 0.0
      %2561 = vmatpush1.xpose.msra.mxu0 0.0
      %2562 = vmatprep.subr.mxu0 0.0
      %2563 = vmatpush1.xpose.msra.mxu0 0.0
      %2564 = vmatprep.subr.mxu0 0.0
      %2565 = vmatpush1.xpose.msra.mxu0 0.0
      %2566 = vmatprep.subr.mxu0 0.0
      %2567 = vmatpush1.xpose.msra.mxu0 0.0
      %2568 = vmatprep.subr.mxu0 0.0
      %2569 = vmatpush1.xpose.msra.mxu0 0.0
      %2570 = vmatprep.subr.mxu0 0.0
      %2571 = vmatpush1.xpose.msra.mxu0 0.0
      %2572 = vmatprep.subr.mxu0 0.0
      %2573 = vmatpush1.xpose.msra.mxu0 0.0
      %2574 = vmatprep.subr.mxu0 0.0
      %2575 = vmatpush1.xpose.msra.mxu0 0.0
      %2576 = vmatprep.subr.mxu0 0.0
      %2577 = vmatpush1.xpose.msra.mxu0 0.0
      %2578 = vmatprep.subr.mxu0 0.0
      %2579 = vmatpush1.xpose.msra.mxu0 0.0
      %2580 = vmatprep.subr.mxu0 0.0
      %2581 = vmatpush1.xpose.msra.mxu0 0.0
      %2582 = vmatprep.subr.mxu0 0.0
      %2583 = vmatpush1.xpose.msra.mxu0 0.0
      %2584 = vmatprep.subr.mxu0 0.0
      %2585 = vmatpush1.xpose.msra.mxu0 0.0
      %2586 = vmatprep.subr.mxu0 0.0
      %2587 = vmatpush1.xpose.msra.mxu0 0.0
      %2588 = vmatprep.subr.mxu0 0.0
      %2589 = vmatpush1.xpose.msra.mxu0 0.0
      %2590 = vmatprep.subr.mxu0 0.0
      %2591 = vmatpush1.xpose.msra.mxu0 0.0
      %2592 = vmatprep.subr.mxu0 0.0
      %2593 = vmatpush1.xpose.msra.mxu0 0.0
      %2594 = vmatprep.mubr.f32.mxu0 0.0
      %2595 = vmatmul.mubr.f32.gmra.mrb[0].mxu0 %v2522
      %v2596 = vpop.f32.mrb[0].mxu0
      %v2597 = vadd.f32 %v594, %v2596
      %v2598 = vpop.f32.mrb[0].mxu0
      %2599 = vmatprep.mubr.f32.mxu0 0.0
      %2600 = vmatmul.mubr.f32.gmra.mrb[0].mxu0 %v2524
      %v2601 = vpop.f32.mrb[0].mxu0
      %v2602 = vadd.f32 %v595, %v2601
      %v2603 = vpop.f32.mrb[0].mxu0
      %2604 = vdwg.mxu0
      %v2605 = vsel %vm955, %v2324, -inf
      %2606 = vmax.xlane.f32.xlu0 %v2605
      %v2607 = vpop.xlane.xlu0 %2606
      %v2608 = vsel %vm955, %v2329, -inf
      %2609 = vmax.xlane.f32.xlu0 %v2608
      %v2610 = vpop.xlane.xlu0 %2609
      %v2611 = vsel %vm955, %v2415, -inf
      %2612 = vmax.xlane.f32.xlu0 %v2611
      %v2613 = vpop.xlane.xlu0 %2612
      %v2614 = vsel %vm955, %v2420, -inf
      %2615 = vmax.xlane.f32.xlu0 %v2614
      %v2616 = vpop.xlane.xlu0 %2615
      %v2617 = vsel %vm955, %v2506, -inf
      %2618 = vmax.xlane.f32.xlu0 %v2617
      %v2619 = vpop.xlane.xlu0 %2618
      %v2620 = vsel %vm955, %v2511, -inf
      %2621 = vmax.xlane.f32.xlu0 %v2620
      %v2622 = vpop.xlane.xlu0 %2621
      %v2623 = vsel %vm955, %v2597, -inf
      %2624 = vmax.xlane.f32.xlu0 %v2623
      %v2625 = vpop.xlane.xlu0 %2624
      %v2626 = vsel %vm955, %v2602, -inf
      %2627 = vmax.xlane.f32.xlu0 %v2626
      %v2628 = vpop.xlane.xlu0 %2627
      %v2629 = vsub.f32 %v2324, %v2607
      %v2630 = vsub.f32 %v2329, %v2610
      %v2631 = vsub.f32 %v2415, %v2613
      %v2632 = vsub.f32 %v2420, %v2616
      %v2633 = vsub.f32 %v2506, %v2619
      %v2634 = vsub.f32 %v2511, %v2622
      %v2635 = vsub.f32 %v2597, %v2625
      %v2636 = vsub.f32 %v2602, %v2628
      %v2637 = vmul.f32 %v2629, 1.442695
      %v2638 = vpow.pop %v2637
      %v2639 = vmul.f32 %v2630, 1.442695
      %v2640 = vpow.pop %v2639
      %v2641 = vmul.f32 %v2631, 1.442695
      %v2642 = vpow.pop %v2641
      %v2643 = vmul.f32 %v2632, 1.442695
      %v2644 = vpow.pop %v2643
      %v2645 = vmul.f32 %v2633, 1.442695
      %v2646 = vpow.pop %v2645
      %v2647 = vmul.f32 %v2634, 1.442695
      %v2648 = vpow.pop %v2647
      %v2649 = vmul.f32 %v2635, 1.442695
      %v2650 = vpow.pop %v2649
      %v2651 = vmul.f32 %v2636, 1.442695
      %v2652 = vpow.pop %v2651
      %v2653 = vsel %vm955, %v2638, 0.0
      %2654 = vadd.xlane.f32.xlu0 %v2653
      %v2655 = vpop.xlane.xlu0 %2654
      %v2656 = vsel %vm955, %v2640, 0.0
      %2657 = vadd.xlane.f32.xlu0 %v2656
      %v2658 = vpop.xlane.xlu0 %2657
      %v2659 = vsel %vm955, %v2642, 0.0
      %2660 = vadd.xlane.f32.xlu0 %v2659
      %v2661 = vpop.xlane.xlu0 %2660
      %v2662 = vsel %vm955, %v2644, 0.0
      %2663 = vadd.xlane.f32.xlu0 %v2662
      %v2664 = vpop.xlane.xlu0 %2663
      %v2665 = vsel %vm955, %v2646, 0.0
      %2666 = vadd.xlane.f32.xlu0 %v2665
      %v2667 = vpop.xlane.xlu0 %2666
      %v2668 = vsel %vm955, %v2648, 0.0
      %2669 = vadd.xlane.f32.xlu0 %v2668
      %v2670 = vpop.xlane.xlu0 %2669
      %v2671 = vsel %vm955, %v2650, 0.0
      %2672 = vadd.xlane.f32.xlu0 %v2671
      %v2673 = vpop.xlane.xlu0 %2672
      %v2674 = vsel %vm955, %v2652, 0.0
      %2675 = vadd.xlane.f32.xlu0 %v2674
      %v2676 = vpop.xlane.xlu0 %2675
      %v2677 = vrcp.pop %v2655
      %v2678 = vrcp.pop %v2658
      %v2679 = vrcp.pop %v2661
      %v2680 = vrcp.pop %v2664
      %v2681 = vrcp.pop %v2667
      %v2682 = vrcp.pop %v2670
      %v2683 = vrcp.pop %v2673
      %v2684 = vrcp.pop %v2676
      %v2685 = vmul.f32 %v2638, %v2677
      %v2686 = vmul.f32 %v2640, %v2678
      %v2687 = vmul.f32 %v2642, %v2679
      %v2688 = vmul.f32 %v2644, %v2680
      %v2689 = vmul.f32 %v2646, %v2681
      %v2690 = vmul.f32 %v2648, %v2682
      %v2691 = vmul.f32 %v2650, %v2683
      %v2692 = vmul.f32 %v2652, %v2684
      %2693 = vrot.lane.b32.xlu0 %v552, 48
      %v2694 = vpop.permute.xlu0 %2693
      %2695 = vrot.lane.b32.xlu0 %v557, 48
      %v2696 = vpop.permute.xlu0 %2695
      %v2700 = vsel %vm955, %v2685, 0
      %v2703 = vsel %vm955, %v2686, 0
      %2705 = vmatprep.subr.mxu0 0.0
      %2706 = vmatpush1.msra.mxu0 %v2694
      %2707 = vmatprep.subr.mxu0 0.0
      %2708 = vmatpush1.msra.mxu0 %v2696
      %2709 = vmatprep.subr.mxu0 0.0
      %2710 = vmatpush1.msra.mxu0 0.0
      %2711 = vmatprep.subr.mxu0 0.0
      %2712 = vmatpush1.msra.mxu0 0.0
      %2713 = vmatprep.subr.mxu0 0.0
      %2714 = vmatpush1.msra.mxu0 0.0
      %2715 = vmatprep.subr.mxu0 0.0
      %2716 = vmatpush1.msra.mxu0 0.0
      %2717 = vmatprep.subr.mxu0 0.0
      %2718 = vmatpush1.msra.mxu0 0.0
      %2719 = vmatprep.subr.mxu0 0.0
      %2720 = vmatpush1.msra.mxu0 0.0
      %2721 = vmatprep.subr.mxu0 0.0
      %2722 = vmatpush1.msra.mxu0 0.0
      %2723 = vmatprep.subr.mxu0 0.0
      %2724 = vmatpush1.msra.mxu0 0.0
      %2725 = vmatprep.subr.mxu0 0.0
      %2726 = vmatpush1.msra.mxu0 0.0
      %2727 = vmatprep.subr.mxu0 0.0
      %2728 = vmatpush1.msra.mxu0 0.0
      %2729 = vmatprep.subr.mxu0 0.0
      %2730 = vmatpush1.msra.mxu0 0.0
      %2731 = vmatprep.subr.mxu0 0.0
      %2732 = vmatpush1.msra.mxu0 0.0
      %2733 = vmatprep.subr.mxu0 0.0
      %2734 = vmatpush1.msra.mxu0 0.0
      %2735 = vmatprep.subr.mxu0 0.0
      %2736 = vmatpush1.msra.mxu0 0.0
      %2737 = vmatprep.subr.mxu0 0.0
      %2738 = vmatpush1.msra.mxu0 0.0
      %2739 = vmatprep.subr.mxu0 0.0
      %2740 = vmatpush1.msra.mxu0 0.0
      %2741 = vmatprep.subr.mxu0 0.0
      %2742 = vmatpush1.msra.mxu0 0.0
      %2743 = vmatprep.subr.mxu0 0.0
      %2744 = vmatpush1.msra.mxu0 0.0
      %2745 = vmatprep.subr.mxu0 0.0
      %2746 = vmatpush1.msra.mxu0 0.0
      %2747 = vmatprep.subr.mxu0 0.0
      %2748 = vmatpush1.msra.mxu0 0.0
      %2749 = vmatprep.subr.mxu0 0.0
      %2750 = vmatpush1.msra.mxu0 0.0
      %2751 = vmatprep.subr.mxu0 0.0
      %2752 = vmatpush1.msra.mxu0 0.0
      %2753 = vmatprep.subr.mxu0 0.0
      %2754 = vmatpush1.msra.mxu0 0.0
      %2755 = vmatprep.subr.mxu0 0.0
      %2756 = vmatpush1.msra.mxu0 0.0
      %2757 = vmatprep.subr.mxu0 0.0
      %2758 = vmatpush1.msra.mxu0 0.0
      %2759 = vmatprep.subr.mxu0 0.0
      %2760 = vmatpush1.msra.mxu0 0.0
      %2761 = vmatprep.subr.mxu0 0.0
      %2762 = vmatpush1.msra.mxu0 0.0
      %2763 = vmatprep.subr.mxu0 0.0
      %2764 = vmatpush1.msra.mxu0 0.0
      %2765 = vmatprep.subr.mxu0 0.0
      %2766 = vmatpush1.msra.mxu0 0.0
      %2767 = vmatprep.subr.mxu0 0.0
      %2768 = vmatpush1.msra.mxu0 0.0
      %2769 = vmatprep.mubr.f32.mxu0 0.0
      %2770 = vmatmul.mubr.f32.gmra.mrb[0].mxu0 %v2700
      %v2771 = vpop.f32.mrb[0].mxu0
      %v2772 = vadd.f32 0.0, %v2771
      %v2773 = vpop.f32.mrb[0].mxu0
      %2774 = vmatprep.mubr.f32.mxu0 0.0
      %2775 = vmatmul.mubr.f32.gmra.mrb[0].mxu0 %v2703
      %v2776 = vpop.f32.mrb[0].mxu0
      %v2777 = vadd.f32 0.0, %v2776
      %v2778 = vpop.f32.mrb[0].mxu0
      %2779 = vdwg.mxu0
      %2780 = vrot.lane.b32.xlu0 %v562, 48
      %v2781 = vpop.permute.xlu0 %2780
      %2782 = vrot.lane.b32.xlu0 %v567, 48
      %v2783 = vpop.permute.xlu0 %2782
      %v2787 = vsel %vm955, %v2687, 0
      %v2790 = vsel %vm955, %v2688, 0
      %2792 = vmatprep.subr.mxu0 0.0
      %2793 = vmatpush1.msra.mxu0 %v2781
      %2794 = vmatprep.subr.mxu0 0.0
      %2795 = vmatpush1.msra.mxu0 %v2783
      %2796 = vmatprep.subr.mxu0 0.0
      %2797 = vmatpush1.msra.mxu0 0.0
      %2798 = vmatprep.subr.mxu0 0.0
      %2799 = vmatpush1.msra.mxu0 0.0
      %2800 = vmatprep.subr.mxu0 0.0
      %2801 = vmatpush1.msra.mxu0 0.0
      %2802 = vmatprep.subr.mxu0 0.0
      %2803 = vmatpush1.msra.mxu0 0.0
      %2804 = vmatprep.subr.mxu0 0.0
      %2805 = vmatpush1.msra.mxu0 0.0
      %2806 = vmatprep.subr.mxu0 0.0
      %2807 = vmatpush1.msra.mxu0 0.0
      %2808 = vmatprep.subr.mxu0 0.0
      %2809 = vmatpush1.msra.mxu0 0.0
      %2810 = vmatprep.subr.mxu0 0.0
      %2811 = vmatpush1.msra.mxu0 0.0
      %2812 = vmatprep.subr.mxu0 0.0
      %2813 = vmatpush1.msra.mxu0 0.0
      %2814 = vmatprep.subr.mxu0 0.0
      %2815 = vmatpush1.msra.mxu0 0.0
      %2816 = vmatprep.subr.mxu0 0.0
      %2817 = vmatpush1.msra.mxu0 0.0
      %2818 = vmatprep.subr.mxu0 0.0
      %2819 = vmatpush1.msra.mxu0 0.0
      %2820 = vmatprep.subr.mxu0 0.0
      %2821 = vmatpush1.msra.mxu0 0.0
      %2822 = vmatprep.subr.mxu0 0.0
      %2823 = vmatpush1.msra.mxu0 0.0
      %2824 = vmatprep.subr.mxu0 0.0
      %2825 = vmatpush1.msra.mxu0 0.0
      %2826 = vmatprep.subr.mxu0 0.0
      %2827 = vmatpush1.msra.mxu0 0.0
      %2828 = vmatprep.subr.mxu0 0.0
      %2829 = vmatpush1.msra.mxu0 0.0
      %2830 = vmatprep.subr.mxu0 0.0
      %2831 = vmatpush1.msra.mxu0 0.0
      %2832 = vmatprep.subr.mxu0 0.0
      %2833 = vmatpush1.msra.mxu0 0.0
      %2834 = vmatprep.subr.mxu0 0.0
      %2835 = vmatpush1.msra.mxu0 0.0
      %2836 = vmatprep.subr.mxu0 0.0
      %2837 = vmatpush1.msra.mxu0 0.0
      %2838 = vmatprep.subr.mxu0 0.0
      %2839 = vmatpush1.msra.mxu0 0.0
      %2840 = vmatprep.subr.mxu0 0.0
      %2841 = vmatpush1.msra.mxu0 0.0
      %2842 = vmatprep.subr.mxu0 0.0
      %2843 = vmatpush1.msra.mxu0 0.0
      %2844 = vmatprep.subr.mxu0 0.0
      %2845 = vmatpush1.msra.mxu0 0.0
      %2846 = vmatprep.subr.mxu0 0.0
      %2847 = vmatpush1.msra.mxu0 0.0
      %2848 = vmatprep.subr.mxu0 0.0
      %2849 = vmatpush1.msra.mxu0 0.0
      %2850 = vmatprep.subr.mxu0 0.0
      %2851 = vmatpush1.msra.mxu0 0.0
      %2852 = vmatprep.subr.mxu0 0.0
      %2853 = vmatpush1.msra.mxu0 0.0
      %2854 = vmatprep.subr.mxu0 0.0
      %2855 = vmatpush1.msra.mxu0 0.0
      %2856 = vmatprep.mubr.f32.mxu0 0.0
      %2857 = vmatmul.mubr.f32.gmra.mrb[0].mxu0 %v2787
      %v2858 = vpop.f32.mrb[0].mxu0
      %v2859 = vadd.f32 0.0, %v2858
      %v2860 = vpop.f32.mrb[0].mxu0
      %2861 = vmatprep.mubr.f32.mxu0 0.0
      %2862 = vmatmul.mubr.f32.gmra.mrb[0].mxu0 %v2790
      %v2863 = vpop.f32.mrb[0].mxu0
      %v2864 = vadd.f32 0.0, %v2863
      %v2865 = vpop.f32.mrb[0].mxu0
      %2866 = vdwg.mxu0
      %2867 = vrot.lane.b32.xlu0 %v572, 48
      %v2868 = vpop.permute.xlu0 %2867
      %2869 = vrot.lane.b32.xlu0 %v577, 48
      %v2870 = vpop.permute.xlu0 %2869
      %v2874 = vsel %vm955, %v2689, 0
      %v2877 = vsel %vm955, %v2690, 0
      %2879 = vmatprep.subr.mxu0 0.0
      %2880 = vmatpush1.msra.mxu0 %v2868
      %2881 = vmatprep.subr.mxu0 0.0
      %2882 = vmatpush1.msra.mxu0 %v2870
      %2883 = vmatprep.subr.mxu0 0.0
      %2884 = vmatpush1.msra.mxu0 0.0
      %2885 = vmatprep.subr.mxu0 0.0
      %2886 = vmatpush1.msra.mxu0 0.0
      %2887 = vmatprep.subr.mxu0 0.0
      %2888 = vmatpush1.msra.mxu0 0.0
      %2889 = vmatprep.subr.mxu0 0.0
      %2890 = vmatpush1.msra.mxu0 0.0
      %2891 = vmatprep.subr.mxu0 0.0
      %2892 = vmatpush1.msra.mxu0 0.0
      %2893 = vmatprep.subr.mxu0 0.0
      %2894 = vmatpush1.msra.mxu0 0.0
      %2895 = vmatprep.subr.mxu0 0.0
      %2896 = vmatpush1.msra.mxu0 0.0
      %2897 = vmatprep.subr.mxu0 0.0
      %2898 = vmatpush1.msra.mxu0 0.0
      %2899 = vmatprep.subr.mxu0 0.0
      %2900 = vmatpush1.msra.mxu0 0.0
      %2901 = vmatprep.subr.mxu0 0.0
      %2902 = vmatpush1.msra.mxu0 0.0
      %2903 = vmatprep.subr.mxu0 0.0
      %2904 = vmatpush1.msra.mxu0 0.0
      %2905 = vmatprep.subr.mxu0 0.0
      %2906 = vmatpush1.msra.mxu0 0.0
      %2907 = vmatprep.subr.mxu0 0.0
      %2908 = vmatpush1.msra.mxu0 0.0
      %2909 = vmatprep.subr.mxu0 0.0
      %2910 = vmatpush1.msra.mxu0 0.0
      %2911 = vmatprep.subr.mxu0 0.0
      %2912 = vmatpush1.msra.mxu0 0.0
      %2913 = vmatprep.subr.mxu0 0.0
      %2914 = vmatpush1.msra.mxu0 0.0
      %2915 = vmatprep.subr.mxu0 0.0
      %2916 = vmatpush1.msra.mxu0 0.0
      %2917 = vmatprep.subr.mxu0 0.0
      %2918 = vmatpush1.msra.mxu0 0.0
      %2919 = vmatprep.subr.mxu0 0.0
      %2920 = vmatpush1.msra.mxu0 0.0
      %2921 = vmatprep.subr.mxu0 0.0
      %2922 = vmatpush1.msra.mxu0 0.0
      %2923 = vmatprep.subr.mxu0 0.0
      %2924 = vmatpush1.msra.mxu0 0.0
      %2925 = vmatprep.subr.mxu0 0.0
      %2926 = vmatpush1.msra.mxu0 0.0
      %2927 = vmatprep.subr.mxu0 0.0
      %2928 = vmatpush1.msra.mxu0 0.0
      %2929 = vmatprep.subr.mxu0 0.0
      %2930 = vmatpush1.msra.mxu0 0.0
      %2931 = vmatprep.subr.mxu0 0.0
      %2932 = vmatpush1.msra.mxu0 0.0
      %2933 = vmatprep.subr.mxu0 0.0
      %2934 = vmatpush1.msra.mxu0 0.0
      %2935 = vmatprep.subr.mxu0 0.0
      %2936 = vmatpush1.msra.mxu0 0.0
      %2937 = vmatprep.subr.mxu0 0.0
      %2938 = vmatpush1.msra.mxu0 0.0
      %2939 = vmatprep.subr.mxu0 0.0
      %2940 = vmatpush1.msra.mxu0 0.0
      %2941 = vmatprep.subr.mxu0 0.0
      %2942 = vmatpush1.msra.mxu0 0.0
      %2943 = vmatprep.mubr.f32.mxu0 0.0
      %2944 = vmatmul.mubr.f32.gmra.mrb[0].mxu0 %v2874
      %v2945 = vpop.f32.mrb[0].mxu0
      %v2946 = vadd.f32 0.0, %v2945
      %v2947 = vpop.f32.mrb[0].mxu0
      %2948 = vmatprep.mubr.f32.mxu0 0.0
      %2949 = vmatmul.mubr.f32.gmra.mrb[0].mxu0 %v2877
      %v2950 = vpop.f32.mrb[0].mxu0
      %v2951 = vadd.f32 0.0, %v2950
      %v2952 = vpop.f32.mrb[0].mxu0
      %2953 = vdwg.mxu0
      %2954 = vrot.lane.b32.xlu0 %v582, 48
      %v2955 = vpop.permute.xlu0 %2954
      %2956 = vrot.lane.b32.xlu0 %v587, 48
      %v2957 = vpop.permute.xlu0 %2956
      %v2961 = vsel %vm955, %v2691, 0
      %v2964 = vsel %vm955, %v2692, 0
      %2966 = vmatprep.subr.mxu0 0.0
      %2967 = vmatpush1.msra.mxu0 %v2955
      %2968 = vmatprep.subr.mxu0 0.0
      %2969 = vmatpush1.msra.mxu0 %v2957
      %2970 = vmatprep.subr.mxu0 0.0
      %2971 = vmatpush1.msra.mxu0 0.0
      %2972 = vmatprep.subr.mxu0 0.0
      %2973 = vmatpush1.msra.mxu0 0.0
      %2974 = vmatprep.subr.mxu0 0.0
      %2975 = vmatpush1.msra.mxu0 0.0
      %2976 = vmatprep.subr.mxu0 0.0
      %2977 = vmatpush1.msra.mxu0 0.0
      %2978 = vmatprep.subr.mxu0 0.0
      %2979 = vmatpush1.msra.mxu0 0.0
      %2980 = vmatprep.subr.mxu0 0.0
      %2981 = vmatpush1.msra.mxu0 0.0
      %2982 = vmatprep.subr.mxu0 0.0
      %2983 = vmatpush1.msra.mxu0 0.0
      %2984 = vmatprep.subr.mxu0 0.0
      %2985 = vmatpush1.msra.mxu0 0.0
      %2986 = vmatprep.subr.mxu0 0.0
      %2987 = vmatpush1.msra.mxu0 0.0
      %2988 = vmatprep.subr.mxu0 0.0
      %2989 = vmatpush1.msra.mxu0 0.0
      %2990 = vmatprep.subr.mxu0 0.0
      %2991 = vmatpush1.msra.mxu0 0.0
      %2992 = vmatprep.subr.mxu0 0.0
      %2993 = vmatpush1.msra.mxu0 0.0
      %2994 = vmatprep.subr.mxu0 0.0
      %2995 = vmatpush1.msra.mxu0 0.0
      %2996 = vmatprep.subr.mxu0 0.0
      %2997 = vmatpush1.msra.mxu0 0.0
      %2998 = vmatprep.subr.mxu0 0.0
      %2999 = vmatpush1.msra.mxu0 0.0
      %3000 = vmatprep.subr.mxu0 0.0
      %3001 = vmatpush1.msra.mxu0 0.0
      %3002 = vmatprep.subr.mxu0 0.0
      %3003 = vmatpush1.msra.mxu0 0.0
      %3004 = vmatprep.subr.mxu0 0.0
      %3005 = vmatpush1.msra.mxu0 0.0
      %3006 = vmatprep.subr.mxu0 0.0
      %3007 = vmatpush1.msra.mxu0 0.0
      %3008 = vmatprep.subr.mxu0 0.0
      %3009 = vmatpush1.msra.mxu0 0.0
      %3010 = vmatprep.subr.mxu0 0.0
      %3011 = vmatpush1.msra.mxu0 0.0
      %3012 = vmatprep.subr.mxu0 0.0
      %3013 = vmatpush1.msra.mxu0 0.0
      %3014 = vmatprep.subr.mxu0 0.0
      %3015 = vmatpush1.msra.mxu0 0.0
      %3016 = vmatprep.subr.mxu0 0.0
      %3017 = vmatpush1.msra.mxu0 0.0
      %3018 = vmatprep.subr.mxu0 0.0
      %3019 = vmatpush1.msra.mxu0 0.0
      %3020 = vmatprep.subr.mxu0 0.0
      %3021 = vmatpush1.msra.mxu0 0.0
      %3022 = vmatprep.subr.mxu0 0.0
      %3023 = vmatpush1.msra.mxu0 0.0
      %3024 = vmatprep.subr.mxu0 0.0
      %3025 = vmatpush1.msra.mxu0 0.0
      %3026 = vmatprep.subr.mxu0 0.0
      %3027 = vmatpush1.msra.mxu0 0.0
      %3028 = vmatprep.subr.mxu0 0.0
      %3029 = vmatpush1.msra.mxu0 0.0
      %3030 = vmatprep.mubr.f32.mxu0 0.0
      %3031 = vmatmul.mubr.f32.gmra.mrb[0].mxu0 %v2961
      %v3032 = vpop.f32.mrb[0].mxu0
      %v3033 = vadd.f32 0.0, %v3032
      %v3034 = vpop.f32.mrb[0].mxu0
      %3035 = vmatprep.mubr.f32.mxu0 0.0
      %3036 = vmatmul.mubr.f32.gmra.mrb[0].mxu0 %v2964
      %v3037 = vpop.f32.mrb[0].mxu0
      %v3038 = vadd.f32 0.0, %v3037
      %v3039 = vpop.f32.mrb[0].mxu0
      %3040 = vdwg.mxu0
      %3049 = vrot.lane.b32.xlu0 %v2772, 16
      %v3050 = vpop.permute.xlu0 %3049
      %3051 = vrot.lane.b32.xlu0 %v2777, 16
      %v3052 = vpop.permute.xlu0 %3051
      %3053 = vrot.lane.b32.xlu0 %v2859, 16
      %v3054 = vpop.permute.xlu0 %3053
      %3055 = vrot.lane.b32.xlu0 %v2864, 16
      %v3056 = vpop.permute.xlu0 %3055
      %3057 = vrot.lane.b32.xlu0 %v2946, 16
      %v3058 = vpop.permute.xlu0 %3057
      %3059 = vrot.lane.b32.xlu0 %v2951, 16
      %v3060 = vpop.permute.xlu0 %3059
      %3061 = vrot.lane.b32.xlu0 %v3033, 16
      %v3062 = vpop.permute.xlu0 %3061
      %3063 = vrot.lane.b32.xlu0 %v3038, 16
      %v3064 = vpop.permute.xlu0 %3063
      %vm3073 = vcmask 195712
      %3074 = vst.msk [vmem:[#allocation2] sm:$0xff] %vm3073, %v3050
      %3075 = vst.msk [vmem:[#allocation2 + $0x8] sm:$0xff] %vm3073, %v3052
      %3076 = vst.msk [vmem:[#allocation2 + $0x10] sm:$0xff] %vm3073, %v3054
      %3077 = vst.msk [vmem:[#allocation2 + $0x18] sm:$0xff] %vm3073, %v3056
      %3078 = vst.msk [vmem:[#allocation2 + $0x20] sm:$0xff] %vm3073, %v3058
      %3079 = vst.msk [vmem:[#allocation2 + $0x28] sm:$0xff] %vm3073, %v3060
      %3080 = vst.msk [vmem:[#allocation2 + $0x30] sm:$0xff] %vm3073, %v3062
      %3081 = vst.msk [vmem:[#allocation2 + $0x38] sm:$0xff] %vm3073, %v3064
      %3082 = vrot.lane.b32.xlu0 %v552, 104
      %v3083 = vpop.permute.xlu0 %3082
      %3084 = vrot.lane.b32.xlu0 %v557, 104
      %v3085 = vpop.permute.xlu0 %3084
      %3086 = vrot.lane.b32.xlu0 %v552, 72
      %v3087 = vpop.permute.xlu0 %3086
      %3088 = vrot.lane.b32.xlu0 %v557, 72
      %v3089 = vpop.permute.xlu0 %3088
      %v3090 = vsel %vm604, %v3083, 0
      %v3092 = vsel %vm604, %v3085, 0
      %v3094 = vsel %vm604, %v3087, 0
      %v3096 = vsel %vm604, %v3089, 0
      %3098 = vmatprep.subr.mxu0 0.0
      %3099 = vmatpush1.xpose.msra.mxu0 %v3094
      %3100 = vmatprep.subr.mxu0 0.0
      %3101 = vmatpush1.xpose.msra.mxu0 %v3096
      %3102 = vmatprep.subr.mxu0 0.0
      %3103 = vmatpush1.xpose.msra.mxu0 0.0
      %3104 = vmatprep.subr.mxu0 0.0
      %3105 = vmatpush1.xpose.msra.mxu0 0.0
      %3106 = vmatprep.subr.mxu0 0.0
      %3107 = vmatpush1.xpose.msra.mxu0 0.0
      %3108 = vmatprep.subr.mxu0 0.0
      %3109 = vmatpush1.xpose.msra.mxu0 0.0
      %3110 = vmatprep.subr.mxu0 0.0
      %3111 = vmatpush1.xpose.msra.mxu0 0.0
      %3112 = vmatprep.subr.mxu0 0.0
      %3113 = vmatpush1.xpose.msra.mxu0 0.0
      %3114 = vmatprep.subr.mxu0 0.0
      %3115 = vmatpush1.xpose.msra.mxu0 0.0
      %3116 = vmatprep.subr.mxu0 0.0
      %3117 = vmatpush1.xpose.msra.mxu0 0.0
      %3118 = vmatprep.subr.mxu0 0.0
      %3119 = vmatpush1.xpose.msra.mxu0 0.0
      %3120 = vmatprep.subr.mxu0 0.0
      %3121 = vmatpush1.xpose.msra.mxu0 0.0
      %3122 = vmatprep.subr.mxu0 0.0
      %3123 = vmatpush1.xpose.msra.mxu0 0.0
      %3124 = vmatprep.subr.mxu0 0.0
      %3125 = vmatpush1.xpose.msra.mxu0 0.0
      %3126 = vmatprep.subr.mxu0 0.0
      %3127 = vmatpush1.xpose.msra.mxu0 0.0
      %3128 = vmatprep.subr.mxu0 0.0
      %3129 = vmatpush1.xpose.msra.mxu0 0.0
      %3130 = vmatprep.subr.mxu0 0.0
      %3131 = vmatpush1.xpose.msra.mxu0 0.0
      %3132 = vmatprep.subr.mxu0 0.0
      %3133 = vmatpush1.xpose.msra.mxu0 0.0
      %3134 = vmatprep.subr.mxu0 0.0
      %3135 = vmatpush1.xpose.msra.mxu0 0.0
      %3136 = vmatprep.subr.mxu0 0.0
      %3137 = vmatpush1.xpose.msra.mxu0 0.0
      %3138 = vmatprep.subr.mxu0 0.0
      %3139 = vmatpush1.xpose.msra.mxu0 0.0
      %3140 = vmatprep.subr.mxu0 0.0
      %3141 = vmatpush1.xpose.msra.mxu0 0.0
      %3142 = vmatprep.subr.mxu0 0.0
      %3143 = vmatpush1.xpose.msra.mxu0 0.0
      %3144 = vmatprep.subr.mxu0 0.0
      %3145 = vmatpush1.xpose.msra.mxu0 0.0
      %3146 = vmatprep.subr.mxu0 0.0
      %3147 = vmatpush1.xpose.msra.mxu0 0.0
      %3148 = vmatprep.subr.mxu0 0.0
      %3149 = vmatpush1.xpose.msra.mxu0 0.0
      %3150 = vmatprep.subr.mxu0 0.0
      %3151 = vmatpush1.xpose.msra.mxu0 0.0
      %3152 = vmatprep.subr.mxu0 0.0
      %3153 = vmatpush1.xpose.msra.mxu0 0.0
      %3154 = vmatprep.subr.mxu0 0.0
      %3155 = vmatpush1.xpose.msra.mxu0 0.0
      %3156 = vmatprep.subr.mxu0 0.0
      %3157 = vmatpush1.xpose.msra.mxu0 0.0
      %3158 = vmatprep.subr.mxu0 0.0
      %3159 = vmatpush1.xpose.msra.mxu0 0.0
      %3160 = vmatprep.subr.mxu0 0.0
      %3161 = vmatpush1.xpose.msra.mxu0 0.0
      %3162 = vmatprep.mubr.f32.mxu0 0.0
      %3163 = vmatmul.mubr.f32.gmra.mrb[0].mxu0 %v3090
      %v3164 = vpop.f32.mrb[0].mxu0
      %v3165 = vadd.f32 %v596, %v3164
      %v3166 = vpop.f32.mrb[0].mxu0
      %3167 = vmatprep.mubr.f32.mxu0 0.0
      %3168 = vmatmul.mubr.f32.gmra.mrb[0].mxu0 %v3092
      %v3169 = vpop.f32.mrb[0].mxu0
      %v3170 = vadd.f32 %v597, %v3169
      %v3171 = vpop.f32.mrb[0].mxu0
      %3172 = vdwg.mxu0
      %3173 = vrot.lane.b32.xlu0 %v562, 104
      %v3174 = vpop.permute.xlu0 %3173
      %3175 = vrot.lane.b32.xlu0 %v567, 104
      %v3176 = vpop.permute.xlu0 %3175
      %3177 = vrot.lane.b32.xlu0 %v562, 72
      %v3178 = vpop.permute.xlu0 %3177
      %3179 = vrot.lane.b32.xlu0 %v567, 72
      %v3180 = vpop.permute.xlu0 %3179
      %v3181 = vsel %vm604, %v3174, 0
      %v3183 = vsel %vm604, %v3176, 0
      %v3185 = vsel %vm604, %v3178, 0
      %v3187 = vsel %vm604, %v3180, 0
      %3189 = vmatprep.subr.mxu0 0.0
      %3190 = vmatpush1.xpose.msra.mxu0 %v3185
      %3191 = vmatprep.subr.mxu0 0.0
      %3192 = vmatpush1.xpose.msra.mxu0 %v3187
      %3193 = vmatprep.subr.mxu0 0.0
      %3194 = vmatpush1.xpose.msra.mxu0 0.0
      %3195 = vmatprep.subr.mxu0 0.0
      %3196 = vmatpush1.xpose.msra.mxu0 0.0
      %3197 = vmatprep.subr.mxu0 0.0
      %3198 = vmatpush1.xpose.msra.mxu0 0.0
      %3199 = vmatprep.subr.mxu0 0.0
      %3200 = vmatpush1.xpose.msra.mxu0 0.0
      %3201 = vmatprep.subr.mxu0 0.0
      %3202 = vmatpush1.xpose.msra.mxu0 0.0
      %3203 = vmatprep.subr.mxu0 0.0
      %3204 = vmatpush1.xpose.msra.mxu0 0.0
      %3205 = vmatprep.subr.mxu0 0.0
      %3206 = vmatpush1.xpose.msra.mxu0 0.0
      %3207 = vmatprep.subr.mxu0 0.0
      %3208 = vmatpush1.xpose.msra.mxu0 0.0
      %3209 = vmatprep.subr.mxu0 0.0
      %3210 = vmatpush1.xpose.msra.mxu0 0.0
      %3211 = vmatprep.subr.mxu0 0.0
      %3212 = vmatpush1.xpose.msra.mxu0 0.0
      %3213 = vmatprep.subr.mxu0 0.0
      %3214 = vmatpush1.xpose.msra.mxu0 0.0
      %3215 = vmatprep.subr.mxu0 0.0
      %3216 = vmatpush1.xpose.msra.mxu0 0.0
      %3217 = vmatprep.subr.mxu0 0.0
      %3218 = vmatpush1.xpose.msra.mxu0 0.0
      %3219 = vmatprep.subr.mxu0 0.0
      %3220 = vmatpush1.xpose.msra.mxu0 0.0
      %3221 = vmatprep.subr.mxu0 0.0
      %3222 = vmatpush1.xpose.msra.mxu0 0.0
      %3223 = vmatprep.subr.mxu0 0.0
      %3224 = vmatpush1.xpose.msra.mxu0 0.0
      %3225 = vmatprep.subr.mxu0 0.0
      %3226 = vmatpush1.xpose.msra.mxu0 0.0
      %3227 = vmatprep.subr.mxu0 0.0
      %3228 = vmatpush1.xpose.msra.mxu0 0.0
      %3229 = vmatprep.subr.mxu0 0.0
      %3230 = vmatpush1.xpose.msra.mxu0 0.0
      %3231 = vmatprep.subr.mxu0 0.0
      %3232 = vmatpush1.xpose.msra.mxu0 0.0
      %3233 = vmatprep.subr.mxu0 0.0
      %3234 = vmatpush1.xpose.msra.mxu0 0.0
      %3235 = vmatprep.subr.mxu0 0.0
      %3236 = vmatpush1.xpose.msra.mxu0 0.0
      %3237 = vmatprep.subr.mxu0 0.0
      %3238 = vmatpush1.xpose.msra.mxu0 0.0
      %3239 = vmatprep.subr.mxu0 0.0
      %3240 = vmatpush1.xpose.msra.mxu0 0.0
      %3241 = vmatprep.subr.mxu0 0.0
      %3242 = vmatpush1.xpose.msra.mxu0 0.0
      %3243 = vmatprep.subr.mxu0 0.0
      %3244 = vmatpush1.xpose.msra.mxu0 0.0
      %3245 = vmatprep.subr.mxu0 0.0
      %3246 = vmatpush1.xpose.msra.mxu0 0.0
      %3247 = vmatprep.subr.mxu0 0.0
      %3248 = vmatpush1.xpose.msra.mxu0 0.0
      %3249 = vmatprep.subr.mxu0 0.0
      %3250 = vmatpush1.xpose.msra.mxu0 0.0
      %3251 = vmatprep.subr.mxu0 0.0
      %3252 = vmatpush1.xpose.msra.mxu0 0.0
      %3253 = vmatprep.mubr.f32.mxu0 0.0
      %3254 = vmatmul.mubr.f32.gmra.mrb[0].mxu0 %v3181
      %v3255 = vpop.f32.mrb[0].mxu0
      %v3256 = vadd.f32 %v596, %v3255
      %v3257 = vpop.f32.mrb[0].mxu0
      %3258 = vmatprep.mubr.f32.mxu0 0.0
      %3259 = vmatmul.mubr.f32.gmra.mrb[0].mxu0 %v3183
      %v3260 = vpop.f32.mrb[0].mxu0
      %v3261 = vadd.f32 %v597, %v3260
      %v3262 = vpop.f32.mrb[0].mxu0
      %3263 = vdwg.mxu0
      %3264 = vrot.lane.b32.xlu0 %v572, 104
      %v3265 = vpop.permute.xlu0 %3264
      %3266 = vrot.lane.b32.xlu0 %v577, 104
      %v3267 = vpop.permute.xlu0 %3266
      %3268 = vrot.lane.b32.xlu0 %v572, 72
      %v3269 = vpop.permute.xlu0 %3268
      %3270 = vrot.lane.b32.xlu0 %v577, 72
      %v3271 = vpop.permute.xlu0 %3270
      %v3272 = vsel %vm604, %v3265, 0
      %v3274 = vsel %vm604, %v3267, 0
      %v3276 = vsel %vm604, %v3269, 0
      %v3278 = vsel %vm604, %v3271, 0
      %3280 = vmatprep.subr.mxu0 0.0
      %3281 = vmatpush1.xpose.msra.mxu0 %v3276
      %3282 = vmatprep.subr.mxu0 0.0
      %3283 = vmatpush1.xpose.msra.mxu0 %v3278
      %3284 = vmatprep.subr.mxu0 0.0
      %3285 = vmatpush1.xpose.msra.mxu0 0.0
      %3286 = vmatprep.subr.mxu0 0.0
      %3287 = vmatpush1.xpose.msra.mxu0 0.0
      %3288 = vmatprep.subr.mxu0 0.0
      %3289 = vmatpush1.xpose.msra.mxu0 0.0
      %3290 = vmatprep.subr.mxu0 0.0
      %3291 = vmatpush1.xpose.msra.mxu0 0.0
      %3292 = vmatprep.subr.mxu0 0.0
      %3293 = vmatpush1.xpose.msra.mxu0 0.0
      %3294 = vmatprep.subr.mxu0 0.0
      %3295 = vmatpush1.xpose.msra.mxu0 0.0
      %3296 = vmatprep.subr.mxu0 0.0
      %3297 = vmatpush1.xpose.msra.mxu0 0.0
      %3298 = vmatprep.subr.mxu0 0.0
      %3299 = vmatpush1.xpose.msra.mxu0 0.0
      %3300 = vmatprep.subr.mxu0 0.0
      %3301 = vmatpush1.xpose.msra.mxu0 0.0
      %3302 = vmatprep.subr.mxu0 0.0
      %3303 = vmatpush1.xpose.msra.mxu0 0.0
      %3304 = vmatprep.subr.mxu0 0.0
      %3305 = vmatpush1.xpose.msra.mxu0 0.0
      %3306 = vmatprep.subr.mxu0 0.0
      %3307 = vmatpush1.xpose.msra.mxu0 0.0
      %3308 = vmatprep.subr.mxu0 0.0
      %3309 = vmatpush1.xpose.msra.mxu0 0.0
      %3310 = vmatprep.subr.mxu0 0.0
      %3311 = vmatpush1.xpose.msra.mxu0 0.0
      %3312 = vmatprep.subr.mxu0 0.0
      %3313 = vmatpush1.xpose.msra.mxu0 0.0
      %3314 = vmatprep.subr.mxu0 0.0
      %3315 = vmatpush1.xpose.msra.mxu0 0.0
      %3316 = vmatprep.subr.mxu0 0.0
      %3317 = vmatpush1.xpose.msra.mxu0 0.0
      %3318 = vmatprep.subr.mxu0 0.0
      %3319 = vmatpush1.xpose.msra.mxu0 0.0
      %3320 = vmatprep.subr.mxu0 0.0
      %3321 = vmatpush1.xpose.msra.mxu0 0.0
      %3322 = vmatprep.subr.mxu0 0.0
      %3323 = vmatpush1.xpose.msra.mxu0 0.0
      %3324 = vmatprep.subr.mxu0 0.0
      %3325 = vmatpush1.xpose.msra.mxu0 0.0
      %3326 = vmatprep.subr.mxu0 0.0
      %3327 = vmatpush1.xpose.msra.mxu0 0.0
      %3328 = vmatprep.subr.mxu0 0.0
      %3329 = vmatpush1.xpose.msra.mxu0 0.0
      %3330 = vmatprep.subr.mxu0 0.0
      %3331 = vmatpush1.xpose.msra.mxu0 0.0
      %3332 = vmatprep.subr.mxu0 0.0
      %3333 = vmatpush1.xpose.msra.mxu0 0.0
      %3334 = vmatprep.subr.mxu0 0.0
      %3335 = vmatpush1.xpose.msra.mxu0 0.0
      %3336 = vmatprep.subr.mxu0 0.0
      %3337 = vmatpush1.xpose.msra.mxu0 0.0
      %3338 = vmatprep.subr.mxu0 0.0
      %3339 = vmatpush1.xpose.msra.mxu0 0.0
      %3340 = vmatprep.subr.mxu0 0.0
      %3341 = vmatpush1.xpose.msra.mxu0 0.0
      %3342 = vmatprep.subr.mxu0 0.0
      %3343 = vmatpush1.xpose.msra.mxu0 0.0
      %3344 = vmatprep.mubr.f32.mxu0 0.0
      %3345 = vmatmul.mubr.f32.gmra.mrb[0].mxu0 %v3272
      %v3346 = vpop.f32.mrb[0].mxu0
      %v3347 = vadd.f32 %v596, %v3346
      %v3348 = vpop.f32.mrb[0].mxu0
      %3349 = vmatprep.mubr.f32.mxu0 0.0
      %3350 = vmatmul.mubr.f32.gmra.mrb[0].mxu0 %v3274
      %v3351 = vpop.f32.mrb[0].mxu0
      %v3352 = vadd.f32 %v597, %v3351
      %v3353 = vpop.f32.mrb[0].mxu0
      %3354 = vdwg.mxu0
      %3355 = vrot.lane.b32.xlu0 %v582, 104
      %v3356 = vpop.permute.xlu0 %3355
      %3357 = vrot.lane.b32.xlu0 %v587, 104
      %v3358 = vpop.permute.xlu0 %3357
      %3359 = vrot.lane.b32.xlu0 %v582, 72
      %v3360 = vpop.permute.xlu0 %3359
      %3361 = vrot.lane.b32.xlu0 %v587, 72
      %v3362 = vpop.permute.xlu0 %3361
      %v3363 = vsel %vm604, %v3356, 0
      %v3365 = vsel %vm604, %v3358, 0
      %v3367 = vsel %vm604, %v3360, 0
      %v3369 = vsel %vm604, %v3362, 0
      %3371 = vmatprep.subr.mxu0 0.0
      %3372 = vmatpush1.xpose.msra.mxu0 %v3367
      %3373 = vmatprep.subr.mxu0 0.0
      %3374 = vmatpush1.xpose.msra.mxu0 %v3369
      %3375 = vmatprep.subr.mxu0 0.0
      %3376 = vmatpush1.xpose.msra.mxu0 0.0
      %3377 = vmatprep.subr.mxu0 0.0
      %3378 = vmatpush1.xpose.msra.mxu0 0.0
      %3379 = vmatprep.subr.mxu0 0.0
      %3380 = vmatpush1.xpose.msra.mxu0 0.0
      %3381 = vmatprep.subr.mxu0 0.0
      %3382 = vmatpush1.xpose.msra.mxu0 0.0
      %3383 = vmatprep.subr.mxu0 0.0
      %3384 = vmatpush1.xpose.msra.mxu0 0.0
      %3385 = vmatprep.subr.mxu0 0.0
      %3386 = vmatpush1.xpose.msra.mxu0 0.0
      %3387 = vmatprep.subr.mxu0 0.0
      %3388 = vmatpush1.xpose.msra.mxu0 0.0
      %3389 = vmatprep.subr.mxu0 0.0
      %3390 = vmatpush1.xpose.msra.mxu0 0.0
      %3391 = vmatprep.subr.mxu0 0.0
      %3392 = vmatpush1.xpose.msra.mxu0 0.0
      %3393 = vmatprep.subr.mxu0 0.0
      %3394 = vmatpush1.xpose.msra.mxu0 0.0
      %3395 = vmatprep.subr.mxu0 0.0
      %3396 = vmatpush1.xpose.msra.mxu0 0.0
      %3397 = vmatprep.subr.mxu0 0.0
      %3398 = vmatpush1.xpose.msra.mxu0 0.0
      %3399 = vmatprep.subr.mxu0 0.0
      %3400 = vmatpush1.xpose.msra.mxu0 0.0
      %3401 = vmatprep.subr.mxu0 0.0
      %3402 = vmatpush1.xpose.msra.mxu0 0.0
      %3403 = vmatprep.subr.mxu0 0.0
      %3404 = vmatpush1.xpose.msra.mxu0 0.0
      %3405 = vmatprep.subr.mxu0 0.0
      %3406 = vmatpush1.xpose.msra.mxu0 0.0
      %3407 = vmatprep.subr.mxu0 0.0
      %3408 = vmatpush1.xpose.msra.mxu0 0.0
      %3409 = vmatprep.subr.mxu0 0.0
      %3410 = vmatpush1.xpose.msra.mxu0 0.0
      %3411 = vmatprep.subr.mxu0 0.0
      %3412 = vmatpush1.xpose.msra.mxu0 0.0
      %3413 = vmatprep.subr.mxu0 0.0
      %3414 = vmatpush1.xpose.msra.mxu0 0.0
      %3415 = vmatprep.subr.mxu0 0.0
      %3416 = vmatpush1.xpose.msra.mxu0 0.0
      %3417 = vmatprep.subr.mxu0 0.0
      %3418 = vmatpush1.xpose.msra.mxu0 0.0
      %3419 = vmatprep.subr.mxu0 0.0
      %3420 = vmatpush1.xpose.msra.mxu0 0.0
      %3421 = vmatprep.subr.mxu0 0.0
      %3422 = vmatpush1.xpose.msra.mxu0 0.0
      %3423 = vmatprep.subr.mxu0 0.0
      %3424 = vmatpush1.xpose.msra.mxu0 0.0
      %3425 = vmatprep.subr.mxu0 0.0
      %3426 = vmatpush1.xpose.msra.mxu0 0.0
      %3427 = vmatprep.subr.mxu0 0.0
      %3428 = vmatpush1.xpose.msra.mxu0 0.0
      %3429 = vmatprep.subr.mxu0 0.0
      %3430 = vmatpush1.xpose.msra.mxu0 0.0
      %3431 = vmatprep.subr.mxu0 0.0
      %3432 = vmatpush1.xpose.msra.mxu0 0.0
      %3433 = vmatprep.subr.mxu0 0.0
      %3434 = vmatpush1.xpose.msra.mxu0 0.0
      %3435 = vmatprep.mubr.f32.mxu0 0.0
      %3436 = vmatmul.mubr.f32.gmra.mrb[0].mxu0 %v3363
      %v3437 = vpop.f32.mrb[0].mxu0
      %v3438 = vadd.f32 %v596, %v3437
      %v3439 = vpop.f32.mrb[0].mxu0
      %3440 = vmatprep.mubr.f32.mxu0 0.0
      %3441 = vmatmul.mubr.f32.gmra.mrb[0].mxu0 %v3365
      %v3442 = vpop.f32.mrb[0].mxu0
      %v3443 = vadd.f32 %v597, %v3442
      %v3444 = vpop.f32.mrb[0].mxu0
      %3445 = vdwg.mxu0
      %v3446 = vsel %vm955, %v3165, -inf
      %3447 = vmax.xlane.f32.xlu0 %v3446
      %v3448 = vpop.xlane.xlu0 %3447
      %v3449 = vsel %vm955, %v3170, -inf
      %3450 = vmax.xlane.f32.xlu0 %v3449
      %v3451 = vpop.xlane.xlu0 %3450
      %v3452 = vsel %vm955, %v3256, -inf
      %3453 = vmax.xlane.f32.xlu0 %v3452
      %v3454 = vpop.xlane.xlu0 %3453
      %v3455 = vsel %vm955, %v3261, -inf
      %3456 = vmax.xlane.f32.xlu0 %v3455
      %v3457 = vpop.xlane.xlu0 %3456
      %v3458 = vsel %vm955, %v3347, -inf
      %3459 = vmax.xlane.f32.xlu0 %v3458
      %v3460 = vpop.xlane.xlu0 %3459
      %v3461 = vsel %vm955, %v3352, -inf
      %3462 = vmax.xlane.f32.xlu0 %v3461
      %v3463 = vpop.xlane.xlu0 %3462
      %v3464 = vsel %vm955, %v3438, -inf
      %3465 = vmax.xlane.f32.xlu0 %v3464
      %v3466 = vpop.xlane.xlu0 %3465
      %v3467 = vsel %vm955, %v3443, -inf
      %3468 = vmax.xlane.f32.xlu0 %v3467
      %v3469 = vpop.xlane.xlu0 %3468
      %v3470 = vsub.f32 %v3165, %v3448
      %v3471 = vsub.f32 %v3170, %v3451
      %v3472 = vsub.f32 %v3256, %v3454
      %v3473 = vsub.f32 %v3261, %v3457
      %v3474 = vsub.f32 %v3347, %v3460
      %v3475 = vsub.f32 %v3352, %v3463
      %v3476 = vsub.f32 %v3438, %v3466
      %v3477 = vsub.f32 %v3443, %v3469
      %v3478 = vmul.f32 %v3470, 1.442695
      %v3479 = vpow.pop %v3478
      %v3480 = vmul.f32 %v3471, 1.442695
      %v3481 = vpow.pop %v3480
      %v3482 = vmul.f32 %v3472, 1.442695
      %v3483 = vpow.pop %v3482
      %v3484 = vmul.f32 %v3473, 1.442695
      %v3485 = vpow.pop %v3484
      %v3486 = vmul.f32 %v3474, 1.442695
      %v3487 = vpow.pop %v3486
      %v3488 = vmul.f32 %v3475, 1.442695
      %v3489 = vpow.pop %v3488
      %v3490 = vmul.f32 %v3476, 1.442695
      %v3491 = vpow.pop %v3490
      %v3492 = vmul.f32 %v3477, 1.442695
      %v3493 = vpow.pop %v3492
      %v3494 = vsel %vm955, %v3479, 0.0
      %3495 = vadd.xlane.f32.xlu0 %v3494
      %v3496 = vpop.xlane.xlu0 %3495
      %v3497 = vsel %vm955, %v3481, 0.0
      %3498 = vadd.xlane.f32.xlu0 %v3497
      %v3499 = vpop.xlane.xlu0 %3498
      %v3500 = vsel %vm955, %v3483, 0.0
      %3501 = vadd.xlane.f32.xlu0 %v3500
      %v3502 = vpop.xlane.xlu0 %3501
      %v3503 = vsel %vm955, %v3485, 0.0
      %3504 = vadd.xlane.f32.xlu0 %v3503
      %v3505 = vpop.xlane.xlu0 %3504
      %v3506 = vsel %vm955, %v3487, 0.0
      %3507 = vadd.xlane.f32.xlu0 %v3506
      %v3508 = vpop.xlane.xlu0 %3507
      %v3509 = vsel %vm955, %v3489, 0.0
      %3510 = vadd.xlane.f32.xlu0 %v3509
      %v3511 = vpop.xlane.xlu0 %3510
      %v3512 = vsel %vm955, %v3491, 0.0
      %3513 = vadd.xlane.f32.xlu0 %v3512
      %v3514 = vpop.xlane.xlu0 %3513
      %v3515 = vsel %vm955, %v3493, 0.0
      %3516 = vadd.xlane.f32.xlu0 %v3515
      %v3517 = vpop.xlane.xlu0 %3516
      %v3518 = vrcp.pop %v3496
      %v3519 = vrcp.pop %v3499
      %v3520 = vrcp.pop %v3502
      %v3521 = vrcp.pop %v3505
      %v3522 = vrcp.pop %v3508
      %v3523 = vrcp.pop %v3511
      %v3524 = vrcp.pop %v3514
      %v3525 = vrcp.pop %v3517
      %v3526 = vmul.f32 %v3479, %v3518
      %v3527 = vmul.f32 %v3481, %v3519
      %v3528 = vmul.f32 %v3483, %v3520
      %v3529 = vmul.f32 %v3485, %v3521
      %v3530 = vmul.f32 %v3487, %v3522
      %v3531 = vmul.f32 %v3489, %v3523
      %v3532 = vmul.f32 %v3491, %v3524
      %v3533 = vmul.f32 %v3493, %v3525
      %3534 = vrot.lane.b32.xlu0 %v552, 40
      %v3535 = vpop.permute.xlu0 %3534
      %3536 = vrot.lane.b32.xlu0 %v557, 40
      %v3537 = vpop.permute.xlu0 %3536
      %v3541 = vsel %vm955, %v3526, 0
      %v3544 = vsel %vm955, %v3527, 0
      %3546 = vmatprep.subr.mxu0 0.0
      %3547 = vmatpush1.msra.mxu0 %v3535
      %3548 = vmatprep.subr.mxu0 0.0
      %3549 = vmatpush1.msra.mxu0 %v3537
      %3550 = vmatprep.subr.mxu0 0.0
      %3551 = vmatpush1.msra.mxu0 0.0
      %3552 = vmatprep.subr.mxu0 0.0
      %3553 = vmatpush1.msra.mxu0 0.0
      %3554 = vmatprep.subr.mxu0 0.0
      %3555 = vmatpush1.msra.mxu0 0.0
      %3556 = vmatprep.subr.mxu0 0.0
      %3557 = vmatpush1.msra.mxu0 0.0
      %3558 = vmatprep.subr.mxu0 0.0
      %3559 = vmatpush1.msra.mxu0 0.0
      %3560 = vmatprep.subr.mxu0 0.0
      %3561 = vmatpush1.msra.mxu0 0.0
      %3562 = vmatprep.subr.mxu0 0.0
      %3563 = vmatpush1.msra.mxu0 0.0
      %3564 = vmatprep.subr.mxu0 0.0
      %3565 = vmatpush1.msra.mxu0 0.0
      %3566 = vmatprep.subr.mxu0 0.0
      %3567 = vmatpush1.msra.mxu0 0.0
      %3568 = vmatprep.subr.mxu0 0.0
      %3569 = vmatpush1.msra.mxu0 0.0
      %3570 = vmatprep.subr.mxu0 0.0
      %3571 = vmatpush1.msra.mxu0 0.0
      %3572 = vmatprep.subr.mxu0 0.0
      %3573 = vmatpush1.msra.mxu0 0.0
      %3574 = vmatprep.subr.mxu0 0.0
      %3575 = vmatpush1.msra.mxu0 0.0
      %3576 = vmatprep.subr.mxu0 0.0
      %3577 = vmatpush1.msra.mxu0 0.0
      %3578 = vmatprep.subr.mxu0 0.0
      %3579 = vmatpush1.msra.mxu0 0.0
      %3580 = vmatprep.subr.mxu0 0.0
      %3581 = vmatpush1.msra.mxu0 0.0
      %3582 = vmatprep.subr.mxu0 0.0
      %3583 = vmatpush1.msra.mxu0 0.0
      %3584 = vmatprep.subr.mxu0 0.0
      %3585 = vmatpush1.msra.mxu0 0.0
      %3586 = vmatprep.subr.mxu0 0.0
      %3587 = vmatpush1.msra.mxu0 0.0
      %3588 = vmatprep.subr.mxu0 0.0
      %3589 = vmatpush1.msra.mxu0 0.0
      %3590 = vmatprep.subr.mxu0 0.0
      %3591 = vmatpush1.msra.mxu0 0.0
      %3592 = vmatprep.subr.mxu0 0.0
      %3593 = vmatpush1.msra.mxu0 0.0
      %3594 = vmatprep.subr.mxu0 0.0
      %3595 = vmatpush1.msra.mxu0 0.0
      %3596 = vmatprep.subr.mxu0 0.0
      %3597 = vmatpush1.msra.mxu0 0.0
      %3598 = vmatprep.subr.mxu0 0.0
      %3599 = vmatpush1.msra.mxu0 0.0
      %3600 = vmatprep.subr.mxu0 0.0
      %3601 = vmatpush1.msra.mxu0 0.0
      %3602 = vmatprep.subr.mxu0 0.0
      %3603 = vmatpush1.msra.mxu0 0.0
      %3604 = vmatprep.subr.mxu0 0.0
      %3605 = vmatpush1.msra.mxu0 0.0
      %3606 = vmatprep.subr.mxu0 0.0
      %3607 = vmatpush1.msra.mxu0 0.0
      %3608 = vmatprep.subr.mxu0 0.0
      %3609 = vmatpush1.msra.mxu0 0.0
      %3610 = vmatprep.mubr.f32.mxu0 0.0
      %3611 = vmatmul.mubr.f32.gmra.mrb[0].mxu0 %v3541
      %v3612 = vpop.f32.mrb[0].mxu0
      %v3613 = vadd.f32 0.0, %v3612
      %v3614 = vpop.f32.mrb[0].mxu0
      %3615 = vmatprep.mubr.f32.mxu0 0.0
      %3616 = vmatmul.mubr.f32.gmra.mrb[0].mxu0 %v3544
      %v3617 = vpop.f32.mrb[0].mxu0
      %v3618 = vadd.f32 0.0, %v3617
      %v3619 = vpop.f32.mrb[0].mxu0
      %3620 = vdwg.mxu0
      %3621 = vrot.lane.b32.xlu0 %v562, 40
      %v3622 = vpop.permute.xlu0 %3621
      %3623 = vrot.lane.b32.xlu0 %v567, 40
      %v3624 = vpop.permute.xlu0 %3623
      %v3628 = vsel %vm955, %v3528, 0
      %v3631 = vsel %vm955, %v3529, 0
      %3633 = vmatprep.subr.mxu0 0.0
      %3634 = vmatpush1.msra.mxu0 %v3622
      %3635 = vmatprep.subr.mxu0 0.0
      %3636 = vmatpush1.msra.mxu0 %v3624
      %3637 = vmatprep.subr.mxu0 0.0
      %3638 = vmatpush1.msra.mxu0 0.0
      %3639 = vmatprep.subr.mxu0 0.0
      %3640 = vmatpush1.msra.mxu0 0.0
      %3641 = vmatprep.subr.mxu0 0.0
      %3642 = vmatpush1.msra.mxu0 0.0
      %3643 = vmatprep.subr.mxu0 0.0
      %3644 = vmatpush1.msra.mxu0 0.0
      %3645 = vmatprep.subr.mxu0 0.0
      %3646 = vmatpush1.msra.mxu0 0.0
      %3647 = vmatprep.subr.mxu0 0.0
      %3648 = vmatpush1.msra.mxu0 0.0
      %3649 = vmatprep.subr.mxu0 0.0
      %3650 = vmatpush1.msra.mxu0 0.0
      %3651 = vmatprep.subr.mxu0 0.0
      %3652 = vmatpush1.msra.mxu0 0.0
      %3653 = vmatprep.subr.mxu0 0.0
      %3654 = vmatpush1.msra.mxu0 0.0
      %3655 = vmatprep.subr.mxu0 0.0
      %3656 = vmatpush1.msra.mxu0 0.0
      %3657 = vmatprep.subr.mxu0 0.0
      %3658 = vmatpush1.msra.mxu0 0.0
      %3659 = vmatprep.subr.mxu0 0.0
      %3660 = vmatpush1.msra.mxu0 0.0
      %3661 = vmatprep.subr.mxu0 0.0
      %3662 = vmatpush1.msra.mxu0 0.0
      %3663 = vmatprep.subr.mxu0 0.0
      %3664 = vmatpush1.msra.mxu0 0.0
      %3665 = vmatprep.subr.mxu0 0.0
      %3666 = vmatpush1.msra.mxu0 0.0
      %3667 = vmatprep.subr.mxu0 0.0
      %3668 = vmatpush1.msra.mxu0 0.0
      %3669 = vmatprep.subr.mxu0 0.0
      %3670 = vmatpush1.msra.mxu0 0.0
      %3671 = vmatprep.subr.mxu0 0.0
      %3672 = vmatpush1.msra.mxu0 0.0
      %3673 = vmatprep.subr.mxu0 0.0
      %3674 = vmatpush1.msra.mxu0 0.0
      %3675 = vmatprep.subr.mxu0 0.0
      %3676 = vmatpush1.msra.mxu0 0.0
      %3677 = vmatprep.subr.mxu0 0.0
      %3678 = vmatpush1.msra.mxu0 0.0
      %3679 = vmatprep.subr.mxu0 0.0
      %3680 = vmatpush1.msra.mxu0 0.0
      %3681 = vmatprep.subr.mxu0 0.0
      %3682 = vmatpush1.msra.mxu0 0.0
      %3683 = vmatprep.subr.mxu0 0.0
      %3684 = vmatpush1.msra.mxu0 0.0
      %3685 = vmatprep.subr.mxu0 0.0
      %3686 = vmatpush1.msra.mxu0 0.0
      %3687 = vmatprep.subr.mxu0 0.0
      %3688 = vmatpush1.msra.mxu0 0.0
      %3689 = vmatprep.subr.mxu0 0.0
      %3690 = vmatpush1.msra.mxu0 0.0
      %3691 = vmatprep.subr.mxu0 0.0
      %3692 = vmatpush1.msra.mxu0 0.0
      %3693 = vmatprep.subr.mxu0 0.0
      %3694 = vmatpush1.msra.mxu0 0.0
      %3695 = vmatprep.subr.mxu0 0.0
      %3696 = vmatpush1.msra.mxu0 0.0
      %3697 = vmatprep.mubr.f32.mxu0 0.0
      %3698 = vmatmul.mubr.f32.gmra.mrb[0].mxu0 %v3628
      %v3699 = vpop.f32.mrb[0].mxu0
      %v3700 = vadd.f32 0.0, %v3699
      %v3701 = vpop.f32.mrb[0].mxu0
      %3702 = vmatprep.mubr.f32.mxu0 0.0
      %3703 = vmatmul.mubr.f32.gmra.mrb[0].mxu0 %v3631
      %v3704 = vpop.f32.mrb[0].mxu0
      %v3705 = vadd.f32 0.0, %v3704
      %v3706 = vpop.f32.mrb[0].mxu0
      %3707 = vdwg.mxu0
      %3708 = vrot.lane.b32.xlu0 %v572, 40
      %v3709 = vpop.permute.xlu0 %3708
      %3710 = vrot.lane.b32.xlu0 %v577, 40
      %v3711 = vpop.permute.xlu0 %3710
      %v3715 = vsel %vm955, %v3530, 0
      %v3718 = vsel %vm955, %v3531, 0
      %3720 = vmatprep.subr.mxu0 0.0
      %3721 = vmatpush1.msra.mxu0 %v3709
      %3722 = vmatprep.subr.mxu0 0.0
      %3723 = vmatpush1.msra.mxu0 %v3711
      %3724 = vmatprep.subr.mxu0 0.0
      %3725 = vmatpush1.msra.mxu0 0.0
      %3726 = vmatprep.subr.mxu0 0.0
      %3727 = vmatpush1.msra.mxu0 0.0
      %3728 = vmatprep.subr.mxu0 0.0
      %3729 = vmatpush1.msra.mxu0 0.0
      %3730 = vmatprep.subr.mxu0 0.0
      %3731 = vmatpush1.msra.mxu0 0.0
      %3732 = vmatprep.subr.mxu0 0.0
      %3733 = vmatpush1.msra.mxu0 0.0
      %3734 = vmatprep.subr.mxu0 0.0
      %3735 = vmatpush1.msra.mxu0 0.0
      %3736 = vmatprep.subr.mxu0 0.0
      %3737 = vmatpush1.msra.mxu0 0.0
      %3738 = vmatprep.subr.mxu0 0.0
      %3739 = vmatpush1.msra.mxu0 0.0
      %3740 = vmatprep.subr.mxu0 0.0
      %3741 = vmatpush1.msra.mxu0 0.0
      %3742 = vmatprep.subr.mxu0 0.0
      %3743 = vmatpush1.msra.mxu0 0.0
      %3744 = vmatprep.subr.mxu0 0.0
      %3745 = vmatpush1.msra.mxu0 0.0
      %3746 = vmatprep.subr.mxu0 0.0
      %3747 = vmatpush1.msra.mxu0 0.0
      %3748 = vmatprep.subr.mxu0 0.0
      %3749 = vmatpush1.msra.mxu0 0.0
      %3750 = vmatprep.subr.mxu0 0.0
      %3751 = vmatpush1.msra.mxu0 0.0
      %3752 = vmatprep.subr.mxu0 0.0
      %3753 = vmatpush1.msra.mxu0 0.0
      %3754 = vmatprep.subr.mxu0 0.0
      %3755 = vmatpush1.msra.mxu0 0.0
      %3756 = vmatprep.subr.mxu0 0.0
      %3757 = vmatpush1.msra.mxu0 0.0
      %3758 = vmatprep.subr.mxu0 0.0
      %3759 = vmatpush1.msra.mxu0 0.0
      %3760 = vmatprep.subr.mxu0 0.0
      %3761 = vmatpush1.msra.mxu0 0.0
      %3762 = vmatprep.subr.mxu0 0.0
      %3763 = vmatpush1.msra.mxu0 0.0
      %3764 = vmatprep.subr.mxu0 0.0
      %3765 = vmatpush1.msra.mxu0 0.0
      %3766 = vmatprep.subr.mxu0 0.0
      %3767 = vmatpush1.msra.mxu0 0.0
      %3768 = vmatprep.subr.mxu0 0.0
      %3769 = vmatpush1.msra.mxu0 0.0
      %3770 = vmatprep.subr.mxu0 0.0
      %3771 = vmatpush1.msra.mxu0 0.0
      %3772 = vmatprep.subr.mxu0 0.0
      %3773 = vmatpush1.msra.mxu0 0.0
      %3774 = vmatprep.subr.mxu0 0.0
      %3775 = vmatpush1.msra.mxu0 0.0
      %3776 = vmatprep.subr.mxu0 0.0
      %3777 = vmatpush1.msra.mxu0 0.0
      %3778 = vmatprep.subr.mxu0 0.0
      %3779 = vmatpush1.msra.mxu0 0.0
      %3780 = vmatprep.subr.mxu0 0.0
      %3781 = vmatpush1.msra.mxu0 0.0
      %3782 = vmatprep.subr.mxu0 0.0
      %3783 = vmatpush1.msra.mxu0 0.0
      %3784 = vmatprep.mubr.f32.mxu0 0.0
      %3785 = vmatmul.mubr.f32.gmra.mrb[0].mxu0 %v3715
      %v3786 = vpop.f32.mrb[0].mxu0
      %v3787 = vadd.f32 0.0, %v3786
      %v3788 = vpop.f32.mrb[0].mxu0
      %3789 = vmatprep.mubr.f32.mxu0 0.0
      %3790 = vmatmul.mubr.f32.gmra.mrb[0].mxu0 %v3718
      %v3791 = vpop.f32.mrb[0].mxu0
      %v3792 = vadd.f32 0.0, %v3791
      %v3793 = vpop.f32.mrb[0].mxu0
      %3794 = vdwg.mxu0
      %3795 = vrot.lane.b32.xlu0 %v582, 40
      %v3796 = vpop.permute.xlu0 %3795
      %3797 = vrot.lane.b32.xlu0 %v587, 40
      %v3798 = vpop.permute.xlu0 %3797
      %v3802 = vsel %vm955, %v3532, 0
      %v3805 = vsel %vm955, %v3533, 0
      %3807 = vmatprep.subr.mxu0 0.0
      %3808 = vmatpush1.msra.mxu0 %v3796
      %3809 = vmatprep.subr.mxu0 0.0
      %3810 = vmatpush1.msra.mxu0 %v3798
      %3811 = vmatprep.subr.mxu0 0.0
      %3812 = vmatpush1.msra.mxu0 0.0
      %3813 = vmatprep.subr.mxu0 0.0
      %3814 = vmatpush1.msra.mxu0 0.0
      %3815 = vmatprep.subr.mxu0 0.0
      %3816 = vmatpush1.msra.mxu0 0.0
      %3817 = vmatprep.subr.mxu0 0.0
      %3818 = vmatpush1.msra.mxu0 0.0
      %3819 = vmatprep.subr.mxu0 0.0
      %3820 = vmatpush1.msra.mxu0 0.0
      %3821 = vmatprep.subr.mxu0 0.0
      %3822 = vmatpush1.msra.mxu0 0.0
      %3823 = vmatprep.subr.mxu0 0.0
      %3824 = vmatpush1.msra.mxu0 0.0
      %3825 = vmatprep.subr.mxu0 0.0
      %3826 = vmatpush1.msra.mxu0 0.0
      %3827 = vmatprep.subr.mxu0 0.0
      %3828 = vmatpush1.msra.mxu0 0.0
      %3829 = vmatprep.subr.mxu0 0.0
      %3830 = vmatpush1.msra.mxu0 0.0
      %3831 = vmatprep.subr.mxu0 0.0
      %3832 = vmatpush1.msra.mxu0 0.0
      %3833 = vmatprep.subr.mxu0 0.0
      %3834 = vmatpush1.msra.mxu0 0.0
      %3835 = vmatprep.subr.mxu0 0.0
      %3836 = vmatpush1.msra.mxu0 0.0
      %3837 = vmatprep.subr.mxu0 0.0
      %3838 = vmatpush1.msra.mxu0 0.0
      %3839 = vmatprep.subr.mxu0 0.0
      %3840 = vmatpush1.msra.mxu0 0.0
      %3841 = vmatprep.subr.mxu0 0.0
      %3842 = vmatpush1.msra.mxu0 0.0
      %3843 = vmatprep.subr.mxu0 0.0
      %3844 = vmatpush1.msra.mxu0 0.0
      %3845 = vmatprep.subr.mxu0 0.0
      %3846 = vmatpush1.msra.mxu0 0.0
      %3847 = vmatprep.subr.mxu0 0.0
      %3848 = vmatpush1.msra.mxu0 0.0
      %3849 = vmatprep.subr.mxu0 0.0
      %3850 = vmatpush1.msra.mxu0 0.0
      %3851 = vmatprep.subr.mxu0 0.0
      %3852 = vmatpush1.msra.mxu0 0.0
      %3853 = vmatprep.subr.mxu0 0.0
      %3854 = vmatpush1.msra.mxu0 0.0
      %3855 = vmatprep.subr.mxu0 0.0
      %3856 = vmatpush1.msra.mxu0 0.0
      %3857 = vmatprep.subr.mxu0 0.0
      %3858 = vmatpush1.msra.mxu0 0.0
      %3859 = vmatprep.subr.mxu0 0.0
      %3860 = vmatpush1.msra.mxu0 0.0
      %3861 = vmatprep.subr.mxu0 0.0
      %3862 = vmatpush1.msra.mxu0 0.0
      %3863 = vmatprep.subr.mxu0 0.0
      %3864 = vmatpush1.msra.mxu0 0.0
      %3865 = vmatprep.subr.mxu0 0.0
      %3866 = vmatpush1.msra.mxu0 0.0
      %3867 = vmatprep.subr.mxu0 0.0
      %3868 = vmatpush1.msra.mxu0 0.0
      %3869 = vmatprep.subr.mxu0 0.0
      %3870 = vmatpush1.msra.mxu0 0.0
      %3871 = vmatprep.mubr.f32.mxu0 0.0
      %3872 = vmatmul.mubr.f32.gmra.mrb[0].mxu0 %v3802
      %v3873 = vpop.f32.mrb[0].mxu0
      %v3874 = vadd.f32 0.0, %v3873
      %v3875 = vpop.f32.mrb[0].mxu0
      %3876 = vmatprep.mubr.f32.mxu0 0.0
      %3877 = vmatmul.mubr.f32.gmra.mrb[0].mxu0 %v3805
      %v3878 = vpop.f32.mrb[0].mxu0
      %v3879 = vadd.f32 0.0, %v3878
      %v3880 = vpop.f32.mrb[0].mxu0
      %3881 = vdwg.mxu0
      %3890 = vrot.lane.b32.xlu0 %v3613, 24
      %v3891 = vpop.permute.xlu0 %3890
      %3892 = vrot.lane.b32.xlu0 %v3618, 24
      %v3893 = vpop.permute.xlu0 %3892
      %3894 = vrot.lane.b32.xlu0 %v3700, 24
      %v3895 = vpop.permute.xlu0 %3894
      %3896 = vrot.lane.b32.xlu0 %v3705, 24
      %v3897 = vpop.permute.xlu0 %3896
      %3898 = vrot.lane.b32.xlu0 %v3787, 24
      %v3899 = vpop.permute.xlu0 %3898
      %3900 = vrot.lane.b32.xlu0 %v3792, 24
      %v3901 = vpop.permute.xlu0 %3900
      %3902 = vrot.lane.b32.xlu0 %v3874, 24
      %v3903 = vpop.permute.xlu0 %3902
      %3904 = vrot.lane.b32.xlu0 %v3879, 24
      %v3905 = vpop.permute.xlu0 %3904
      %vm3914 = vcmask 261312
      %3915 = vst.msk [vmem:[#allocation2] sm:$0xff] %vm3914, %v3891
      %3916 = vst.msk [vmem:[#allocation2 + $0x8] sm:$0xff] %vm3914, %v3893
      %3917 = vst.msk [vmem:[#allocation2 + $0x10] sm:$0xff] %vm3914, %v3895
      %3918 = vst.msk [vmem:[#allocation2 + $0x18] sm:$0xff] %vm3914, %v3897
      %3919 = vst.msk [vmem:[#allocation2 + $0x20] sm:$0xff] %vm3914, %v3899
      %3920 = vst.msk [vmem:[#allocation2 + $0x28] sm:$0xff] %vm3914, %v3901
      %3921 = vst.msk [vmem:[#allocation2 + $0x30] sm:$0xff] %vm3914, %v3903
      %3922 = vst.msk [vmem:[#allocation2 + $0x38] sm:$0xff] %vm3914, %v3905
      %v3923 = vld [vmem:[#allocation2] sm:$0xff]
      %v3924 = vld [vmem:[#allocation2 + $0x8] sm:$0xff]
      %v3925 = vld [vmem:[#allocation2 + $0x10] sm:$0xff]
      %v3926 = vld [vmem:[#allocation2 + $0x18] sm:$0xff]
      %v3927 = vld [vmem:[#allocation2 + $0x20] sm:$0xff]
      %v3928 = vld [vmem:[#allocation2 + $0x28] sm:$0xff]
      %v3929 = vld [vmem:[#allocation2 + $0x30] sm:$0xff]
      %v3930 = vld [vmem:[#allocation2 + $0x38] sm:$0xff]
      %v3931 = vld [vmem:[%s5] sm:$0xff]
      %v3932 = vld [vmem:[%s5 + $0x8] sm:$0xff]
      %v3933 = vld [vmem:[%s5 + $0x10] sm:$0xff]
      %v3934 = vld [vmem:[%s5 + $0x18] sm:$0xff]
      %v3935 = vld [vmem:[%s6] sm:$0x1]
      %v3937 = vlaneseq
      %v3938 = vshrl.u32 %v3937, 7
      %v3939 = vsub.s32 0, %v3938
      %v3940 = vrot.slane %v3935, %v3939
      %v3943 = vsel %vm314, %v3923, 0
      %v3946 = vsel %vm314, %v3924, 0
      %v3949 = vsel %vm314, %v3925, 0
      %v3952 = vsel %vm314, %v3926, 0
      %v3955 = vsel %vm314, %v3927, 0
      %v3958 = vsel %vm314, %v3928, 0
      %v3961 = vsel %vm314, %v3929, 0
      %v3964 = vsel %vm314, %v3930, 0
      %3966 = vmatprep.subr.mxu0 0.0
      %3967 = vmatpush1.msra.mxu0 %v3931
      %3968 = vmatprep.subr.mxu0 0.0
      %3969 = vmatpush1.msra.mxu0 %v3932
      %3970 = vmatprep.subr.mxu0 0.0
      %3971 = vmatpush1.msra.mxu0 %v3933
      %3972 = vmatprep.subr.mxu0 0.0
      %3973 = vmatpush1.msra.mxu0 %v3934
      %3974 = vmatprep.subr.mxu0 0.0
      %3975 = vmatpush1.msra.mxu0 0.0
      %3976 = vmatprep.subr.mxu0 0.0
      %3977 = vmatpush1.msra.mxu0 0.0
      %3978 = vmatprep.subr.mxu0 0.0
      %3979 = vmatpush1.msra.mxu0 0.0
      %3980 = vmatprep.subr.mxu0 0.0
      %3981 = vmatpush1.msra.mxu0 0.0
      %3982 = vmatprep.subr.mxu0 0.0
      %3983 = vmatpush1.msra.mxu0 0.0
      %3984 = vmatprep.subr.mxu0 0.0
      %3985 = vmatpush1.msra.mxu0 0.0
      %3986 = vmatprep.subr.mxu0 0.0
      %3987 = vmatpush1.msra.mxu0 0.0
      %3988 = vmatprep.subr.mxu0 0.0
      %3989 = vmatpush1.msra.mxu0 0.0
      %3990 = vmatprep.subr.mxu0 0.0
      %3991 = vmatpush1.msra.mxu0 0.0
      %3992 = vmatprep.subr.mxu0 0.0
      %3993 = vmatpush1.msra.mxu0 0.0
      %3994 = vmatprep.subr.mxu0 0.0
      %3995 = vmatpush1.msra.mxu0 0.0
      %3996 = vmatprep.subr.mxu0 0.0
      %3997 = vmatpush1.msra.mxu0 0.0
      %3998 = vmatprep.subr.mxu0 0.0
      %3999 = vmatpush1.msra.mxu0 0.0
      %4000 = vmatprep.subr.mxu0 0.0
      %4001 = vmatpush1.msra.mxu0 0.0
      %4002 = vmatprep.subr.mxu0 0.0
      %4003 = vmatpush1.msra.mxu0 0.0
      %4004 = vmatprep.subr.mxu0 0.0
      %4005 = vmatpush1.msra.mxu0 0.0
      %4006 = vmatprep.subr.mxu0 0.0
      %4007 = vmatpush1.msra.mxu0 0.0
      %4008 = vmatprep.subr.mxu0 0.0
      %4009 = vmatpush1.msra.mxu0 0.0
      %4010 = vmatprep.subr.mxu0 0.0
      %4011 = vmatpush1.msra.mxu0 0.0
      %4012 = vmatprep.subr.mxu0 0.0
      %4013 = vmatpush1.msra.mxu0 0.0
      %4014 = vmatprep.subr.mxu0 0.0
      %4015 = vmatpush1.msra.mxu0 0.0
      %4016 = vmatprep.subr.mxu0 0.0
      %4017 = vmatpush1.msra.mxu0 0.0
      %4018 = vmatprep.subr.mxu0 0.0
      %4019 = vmatpush1.msra.mxu0 0.0
      %4020 = vmatprep.subr.mxu0 0.0
      %4021 = vmatpush1.msra.mxu0 0.0
      %4022 = vmatprep.subr.mxu0 0.0
      %4023 = vmatpush1.msra.mxu0 0.0
      %4024 = vmatprep.subr.mxu0 0.0
      %4025 = vmatpush1.msra.mxu0 0.0
      %4026 = vmatprep.subr.mxu0 0.0
      %4027 = vmatpush1.msra.mxu0 0.0
      %4028 = vmatprep.subr.mxu0 0.0
      %4029 = vmatpush1.msra.mxu0 0.0
      %4030 = vmatprep.mubr.f32.mxu0 0.0
      %4031 = vmatmul.mubr.f32.gmra.mrb[0].mxu0 %v3943
      %v4032 = vpop.f32.mrb[0].mxu0
      %v4033 = vadd.f32 %v3940, %v4032
      %v4034 = vpop.f32.mrb[0].mxu0
      %4035 = vmatprep.mubr.f32.mxu0 0.0
      %4036 = vmatmul.mubr.f32.gmra.mrb[0].mxu0 %v3946
      %v4037 = vpop.f32.mrb[0].mxu0
      %v4038 = vadd.f32 %v3940, %v4037
      %v4039 = vpop.f32.mrb[0].mxu0
      %4040 = vmatprep.mubr.f32.mxu0 0.0
      %4041 = vmatmul.mubr.f32.gmra.mrb[0].mxu0 %v3949
      %v4042 = vpop.f32.mrb[0].mxu0
      %v4043 = vadd.f32 %v3940, %v4042
      %v4044 = vpop.f32.mrb[0].mxu0
      %4045 = vmatprep.mubr.f32.mxu0 0.0
      %4046 = vmatmul.mubr.f32.gmra.mrb[0].mxu0 %v3952
      %v4047 = vpop.f32.mrb[0].mxu0
      %v4048 = vadd.f32 %v3940, %v4047
      %v4049 = vpop.f32.mrb[0].mxu0
      %4050 = vmatprep.mubr.f32.mxu0 0.0
      %4051 = vmatmul.mubr.f32.gmra.mrb[0].mxu0 %v3955
      %v4052 = vpop.f32.mrb[0].mxu0
      %v4053 = vadd.f32 %v3940, %v4052
      %v4054 = vpop.f32.mrb[0].mxu0
      %4055 = vmatprep.mubr.f32.mxu0 0.0
      %4056 = vmatmul.mubr.f32.gmra.mrb[0].mxu0 %v3958
      %v4057 = vpop.f32.mrb[0].mxu0
      %v4058 = vadd.f32 %v3940, %v4057
      %v4059 = vpop.f32.mrb[0].mxu0
      %4060 = vmatprep.mubr.f32.mxu0 0.0
      %4061 = vmatmul.mubr.f32.gmra.mrb[0].mxu0 %v3961
      %v4062 = vpop.f32.mrb[0].mxu0
      %v4063 = vadd.f32 %v3940, %v4062
      %v4064 = vpop.f32.mrb[0].mxu0
      %4065 = vmatprep.mubr.f32.mxu0 0.0
      %4066 = vmatmul.mubr.f32.gmra.mrb[0].mxu0 %v3964
      %v4067 = vpop.f32.mrb[0].mxu0
      %v4068 = vadd.f32 %v3940, %v4067
      %v4069 = vpop.f32.mrb[0].mxu0
      %4070 = vdwg.mxu0
      %4071 = vst.msk [vmem:[%s305] sm:$0xff] %vm314, %v4033
      %4072 = vst.msk [vmem:[%s305 + $0x8] sm:$0xff] %vm314, %v4038
      %4073 = vst.msk [vmem:[%s305 + $0x10] sm:$0xff] %vm314, %v4043
      %4074 = vst.msk [vmem:[%s305 + $0x18] sm:$0xff] %vm314, %v4048
      %4075 = vst.msk [vmem:[%s305 + $0x20] sm:$0xff] %vm314, %v4053
      %4076 = vst.msk [vmem:[%s305 + $0x28] sm:$0xff] %vm314, %v4058
      %4077 = vst.msk [vmem:[%s305 + $0x30] sm:$0xff] %vm314, %v4063
      %4078 = vst.msk [vmem:[%s305 + $0x38] sm:$0xff] %vm314, %v4068
      %p4079 = scmp.lt.s32.totalorder %s19, 1
      %s4080 = scalar_select %p4079, %s19, 1
      %s4081 = smul.addr %s4080, 8
      %s4082 = smul.addr %s4081, 8
      %s4083 = scalar_lea.vmem %s8, %s4082
      // Predicated region
      $region53: #{_lambda_.4} parent=51 // pred_check
        %p4084 = pneg %p210
      $region54: #{_lambda_.4} parent=51 // pred_check_branch
        %4086 = sbr.rel (%p4084) target = $region56
      $region55: #{_lambda_.4} parent=51 // pred_region
        _
      $region56: #{_lambda_.4} parent=51 // pred_fallthru
        _
    $region52: #{_lambda_.4} parent=5 // pred_fallthru
      _
    %p4087 = scmp.le.s32.totalorder 2, %s14
    // Predicated region
    $region57: #{_lambda_.4} parent=5 // pred_check
      %p4088 = pneg %p4087
    $region58: #{_lambda_.4} parent=5 // pred_check_branch
      %4090 = sbr.rel (%p4088) target = $region60
    $region59: #{_lambda_.4} parent=5 // pred_region
      %s4091 = ssub.s32 %s14, 2
      // Predicated region
      $region61: #{_lambda_.4} parent=59 // pred_check
        %p4092 = pneg %p216
      $region62: #{_lambda_.4} parent=59 // pred_check_branch
        %4094 = sbr.rel (%p4092) target = $region64
      $region63: #{_lambda_.4} parent=59 // pred_region
        %p4095 = scmp.lt.s32.totalorder %s20, 1
        %s4096 = scalar_select %p4095, %s20, 1
        %s4097 = smul.addr %s4096, 8
        %s4098 = smul.addr %s4097, 8
        %s4099 = scalar_lea.vmem %s8, %s4098
      $region64: #{_lambda_.4} parent=59 // pred_fallthru
        _
    $region60: #{_lambda_.4} parent=5 // pred_fallthru
      _
  $region6: #{_lambda_.4} parent=0 // loop_footer
    %s18 = sadd.s32 1, %s14
  $region7: #{_lambda_.4} parent=0 // loop_footer_branch
    %13 = sbr.rel target = $region3
  $region8: #{_lambda_.4} parent=0 // loop_exit
    _

// kernel: _lambda_.6
$region0: #{_lambda_.6}
  #allocation0 [shape = 'u32[]', space=smem, size = 0x4, offset = 0x4, fixed_abs, tag = 'smem constant byte address 0x4 - core index']
  #allocation1 [shape = 'u32[144,128]{1,0:T(1,128)}', space=vmem, size = 0x12000, scoped, tag = 'internal scratch']
  #allocation2 [shape = 'f32[64,32]{1,0:T(8,128)}', space=vmem, size = 0x8000, scoped, tag = 'scratch operand']
  %s0 = inlined_call_operand.vmem [shape: f32[2,4,16,32], index: 0, kind: input, shape index: {}]
  %s1 = inlined_call_operand.vmem [shape: f32[1,32], index: 1, kind: input, shape index: {}]
  %s2 = inlined_call_operand.vmem [shape: f32[1,32], index: 2, kind: input, shape index: {}]
  %s3 = inlined_call_operand.vmem [shape: f32[32,96], index: 3, kind: input, shape index: {}]
  %s4 = inlined_call_operand.vmem [shape: f32[1,96], index: 4, kind: input, shape index: {}]
  %s5 = inlined_call_operand.vmem [shape: f32[32,32], index: 5, kind: input, shape index: {}]
  %s6 = inlined_call_operand.vmem [shape: f32[1,32], index: 6, kind: input, shape index: {}]
  %s7 = inlined_call_operand.vmem [shape: f32[4,4,16,16], index: 7, kind: input, shape index: {}]
  %s8 = inlined_call_operand.vmem [shape: f32[2,4,16,32], index: 8, kind: output, shape index: {}]
  %s9 = sld [smem:[#allocation0]]
  $region65: #{_lambda_.6} parent=0
    _
  %s11 = ssub.s32 1, %s9
  %s12 = scalar_select 0, %s11, %s9
  loop: start=0, step=1, limit=4
  $region2: #{_lambda_.6} parent=0 // loop_pre_header
    _
  $region3: #{_lambda_.6} parent=0 // loop_header
    %s14 = sphi 0, %s18
    %p15 = scmp.ge.s32.totalorder %s14, 4
    %s24 = sphi 0, %s26
    %s27 = sphi 0, %s24
    %s28 = sphi 0, %s27
    %s44 = sphi 0, %s28
    %s48 = sphi 0, %s48
    %s50 = sphi 0, %s48
    %s51 = sphi 0, %s50
    %s65 = sphi 0, %s51
    %s69 = sphi 0, %s69
    %s71 = sphi 0, %s69
    %s72 = sphi 0, %s71
    %s86 = sphi 0, %s72
    %s90 = sphi 0, %s90
    %s92 = sphi 0, %s90
    %s93 = sphi 0, %s92
    %s107 = sphi 0, %s93
    %s111 = sphi 0, %s111
    %s113 = sphi 0, %s111
    %s114 = sphi 0, %s113
    %s128 = sphi 0, %s114
    %s132 = sphi 0, %s132
    %s134 = sphi 0, %s132
    %s135 = sphi 0, %s134
    %s149 = sphi 0, %s135
    %s153 = sphi 0, %s153
    %s155 = sphi 0, %s153
    %s156 = sphi 0, %s155
    %s170 = sphi 0, %s156
    %s174 = sphi 0, %s174
    %s176 = sphi 0, %s174
    %s177 = sphi 0, %s176
    %s191 = sphi 0, %s177
    %s197 = sphi 0, %s199
    %s200 = sphi 0, %s197
    %s201 = sphi 0, %s200
    %s217 = sphi 0, %s201
  $region4: #{_lambda_.6} parent=0 // loop_header_branch
    %17 = sbr.rel (%p15) target = $region8
  $region5: #{_lambda_.6} parent=0 // loop_body
    %s19 = ssub.s32 %s14, 1
    %s20 = ssub.s32 %s14, 2
    %s21 = sadd.s32 %s14, 1
    %s22 = ssub.s32 %s14, %s21
    %p23 = scmp.eq.s32.totalorder %s22, 0
    %s25 = sadd.s32 %s24, 1
    %s26 = scalar_select %p23, %s24, %s25
    %p29 = pneg %p23
    %p30 = scmp.eq.s32.totalorder %s14, 1
    %p31 = por %p29, %p30
    %p32 = scmp.ne.s32.totalorder %s24, %s27
    %p33 = scmp.eq.s32.totalorder %s14, 0
    %p34 = por %p32, %p33
    %p35 = scmp.ne.s32.totalorder %s24, %s27
    %p36 = scmp.eq.s32.totalorder %s19, 1
    %p37 = por %p35, %p36
    %p38 = scmp.ne.s32.totalorder %s27, %s28
    %p39 = scmp.eq.s32.totalorder %s19, 0
    %p40 = por %p38, %p39
    %p41 = scmp.ne.s32.totalorder %s27, %s28
    %p42 = scmp.eq.s32.totalorder %s20, 1
    %p43 = por %p41, %p42
    %p45 = scmp.ne.s32.totalorder %s28, %s44
    %p46 = scmp.eq.s32.totalorder %s20, 0
    %p47 = por %p45, %p46
    %s49 = sadd.s32 %s48, 1
    %p52 = scmp.eq.s32.totalorder %s14, 1
    %p53 = scmp.ne.s32.totalorder %s48, %s50
    %p54 = scmp.eq.s32.totalorder %s14, 0
    %p55 = por %p53, %p54
    %p56 = scmp.ne.s32.totalorder %s48, %s50
    %p57 = scmp.eq.s32.totalorder %s19, 1
    %p58 = por %p56, %p57
    %p59 = scmp.ne.s32.totalorder %s50, %s51
    %p60 = scmp.eq.s32.totalorder %s19, 0
    %p61 = por %p59, %p60
    %p62 = scmp.ne.s32.totalorder %s50, %s51
    %p63 = scmp.eq.s32.totalorder %s20, 1
    %p64 = por %p62, %p63
    %p66 = scmp.ne.s32.totalorder %s51, %s65
    %p67 = scmp.eq.s32.totalorder %s20, 0
    %p68 = por %p66, %p67
    %s70 = sadd.s32 %s69, 1
    %p73 = scmp.eq.s32.totalorder %s14, 1
    %p74 = scmp.ne.s32.totalorder %s69, %s71
    %p75 = scmp.eq.s32.totalorder %s14, 0
    %p76 = por %p74, %p75
    %p77 = scmp.ne.s32.totalorder %s69, %s71
    %p78 = scmp.eq.s32.totalorder %s19, 1
    %p79 = por %p77, %p78
    %p80 = scmp.ne.s32.totalorder %s71, %s72
    %p81 = scmp.eq.s32.totalorder %s19, 0
    %p82 = por %p80, %p81
    %p83 = scmp.ne.s32.totalorder %s71, %s72
    %p84 = scmp.eq.s32.totalorder %s20, 1
    %p85 = por %p83, %p84
    %p87 = scmp.ne.s32.totalorder %s72, %s86
    %p88 = scmp.eq.s32.totalorder %s20, 0
    %p89 = por %p87, %p88
    %s91 = sadd.s32 %s90, 1
    %p94 = scmp.eq.s32.totalorder %s14, 1
    %p95 = scmp.ne.s32.totalorder %s90, %s92
    %p96 = scmp.eq.s32.totalorder %s14, 0
    %p97 = por %p95, %p96
    %p98 = scmp.ne.s32.totalorder %s90, %s92
    %p99 = scmp.eq.s32.totalorder %s19, 1
    %p100 = por %p98, %p99
    %p101 = scmp.ne.s32.totalorder %s92, %s93
    %p102 = scmp.eq.s32.totalorder %s19, 0
    %p103 = por %p101, %p102
    %p104 = scmp.ne.s32.totalorder %s92, %s93
    %p105 = scmp.eq.s32.totalorder %s20, 1
    %p106 = por %p104, %p105
    %p108 = scmp.ne.s32.totalorder %s93, %s107
    %p109 = scmp.eq.s32.totalorder %s20, 0
    %p110 = por %p108, %p109
    %s112 = sadd.s32 %s111, 1
    %p115 = scmp.eq.s32.totalorder %s14, 1
    %p116 = scmp.ne.s32.totalorder %s111, %s113
    %p117 = scmp.eq.s32.totalorder %s14, 0
    %p118 = por %p116, %p117
    %p119 = scmp.ne.s32.totalorder %s111, %s113
    %p120 = scmp.eq.s32.totalorder %s19, 1
    %p121 = por %p119, %p120
    %p122 = scmp.ne.s32.totalorder %s113, %s114
    %p123 = scmp.eq.s32.totalorder %s19, 0
    %p124 = por %p122, %p123
    %p125 = scmp.ne.s32.totalorder %s113, %s114
    %p126 = scmp.eq.s32.totalorder %s20, 1
    %p127 = por %p125, %p126
    %p129 = scmp.ne.s32.totalorder %s114, %s128
    %p130 = scmp.eq.s32.totalorder %s20, 0
    %p131 = por %p129, %p130
    %s133 = sadd.s32 %s132, 1
    %p136 = scmp.eq.s32.totalorder %s14, 1
    %p137 = scmp.ne.s32.totalorder %s132, %s134
    %p138 = scmp.eq.s32.totalorder %s14, 0
    %p139 = por %p137, %p138
    %p140 = scmp.ne.s32.totalorder %s132, %s134
    %p141 = scmp.eq.s32.totalorder %s19, 1
    %p142 = por %p140, %p141
    %p143 = scmp.ne.s32.totalorder %s134, %s135
    %p144 = scmp.eq.s32.totalorder %s19, 0
    %p145 = por %p143, %p144
    %p146 = scmp.ne.s32.totalorder %s134, %s135
    %p147 = scmp.eq.s32.totalorder %s20, 1
    %p148 = por %p146, %p147
    %p150 = scmp.ne.s32.totalorder %s135, %s149
    %p151 = scmp.eq.s32.totalorder %s20, 0
    %p152 = por %p150, %p151
    %s154 = sadd.s32 %s153, 1
    %p157 = scmp.eq.s32.totalorder %s14, 1
    %p158 = scmp.ne.s32.totalorder %s153, %s155
    %p159 = scmp.eq.s32.totalorder %s14, 0
    %p160 = por %p158, %p159
    %p161 = scmp.ne.s32.totalorder %s153, %s155
    %p162 = scmp.eq.s32.totalorder %s19, 1
    %p163 = por %p161, %p162
    %p164 = scmp.ne.s32.totalorder %s155, %s156
    %p165 = scmp.eq.s32.totalorder %s19, 0
    %p166 = por %p164, %p165
    %p167 = scmp.ne.s32.totalorder %s155, %s156
    %p168 = scmp.eq.s32.totalorder %s20, 1
    %p169 = por %p167, %p168
    %p171 = scmp.ne.s32.totalorder %s156, %s170
    %p172 = scmp.eq.s32.totalorder %s20, 0
    %p173 = por %p171, %p172
    %s175 = sadd.s32 %s174, 1
    %p178 = scmp.eq.s32.totalorder %s14, 1
    %p179 = scmp.ne.s32.totalorder %s174, %s176
    %p180 = scmp.eq.s32.totalorder %s14, 0
    %p181 = por %p179, %p180
    %p182 = scmp.ne.s32.totalorder %s174, %s176
    %p183 = scmp.eq.s32.totalorder %s19, 1
    %p184 = por %p182, %p183
    %p185 = scmp.ne.s32.totalorder %s176, %s177
    %p186 = scmp.eq.s32.totalorder %s19, 0
    %p187 = por %p185, %p186
    %p188 = scmp.ne.s32.totalorder %s176, %s177
    %p189 = scmp.eq.s32.totalorder %s20, 1
    %p190 = por %p188, %p189
    %p192 = scmp.ne.s32.totalorder %s177, %s191
    %p193 = scmp.eq.s32.totalorder %s20, 0
    %p194 = por %p192, %p193
    %s195 = ssub.s32 %s14, %s21
    %p196 = scmp.eq.s32.totalorder %s195, 0
    %s198 = sadd.s32 %s197, 1
    %s199 = scalar_select %p196, %s197, %s198
    %p202 = pneg %p196
    %p203 = scmp.eq.s32.totalorder %s14, 1
    %p204 = por %p202, %p203
    %p205 = scmp.ne.s32.totalorder %s197, %s200
    %p206 = scmp.eq.s32.totalorder %s14, 0
    %p207 = por %p205, %p206
    %p208 = scmp.ne.s32.totalorder %s197, %s200
    %p209 = scmp.eq.s32.totalorder %s19, 1
    %p210 = por %p208, %p209
    %p211 = scmp.ne.s32.totalorder %s200, %s201
    %p212 = scmp.eq.s32.totalorder %s19, 0
    %p213 = por %p211, %p212
    %p214 = scmp.ne.s32.totalorder %s200, %s201
    %p215 = scmp.eq.s32.totalorder %s20, 1
    %p216 = por %p214, %p215
    %p218 = scmp.ne.s32.totalorder %s201, %s217
    %p219 = scmp.eq.s32.totalorder %s20, 0
    %p220 = por %p218, %p219
    %p221 = scmp.le.s32.totalorder 1, %s14
    %p222 = scmp.lt.s32.totalorder %s14, 3
    %p223 = pnand %p221, %p222
    %p224 = pneg %p223
    // Predicated region
    $region9: #{_lambda_.6} parent=5 // pred_check
      _
    $region10: #{_lambda_.6} parent=5 // pred_check_branch
      %226 = sbr.rel (%p223) target = $region12
    $region11: #{_lambda_.6} parent=5 // pred_region
      %s227 = ssub.s32 %s14, 1
      // Predicated region
      $region13: #{_lambda_.6} parent=11 // pred_check
        %p228 = pneg %p61
      $region14: #{_lambda_.6} parent=11 // pred_check_branch
        %230 = sbr.rel (%p228) target = $region16
      $region15: #{_lambda_.6} parent=11 // pred_region
        _
      $region16: #{_lambda_.6} parent=11 // pred_fallthru
        _
      // Predicated region
      $region17: #{_lambda_.6} parent=11 // pred_check
        %p231 = pneg %p82
      $region18: #{_lambda_.6} parent=11 // pred_check_branch
        %233 = sbr.rel (%p231) target = $region20
      $region19: #{_lambda_.6} parent=11 // pred_region
        _
      $region20: #{_lambda_.6} parent=11 // pred_fallthru
        _
      // Predicated region
      $region21: #{_lambda_.6} parent=11 // pred_check
        %p234 = pneg %p103
      $region22: #{_lambda_.6} parent=11 // pred_check_branch
        %236 = sbr.rel (%p234) target = $region24
      $region23: #{_lambda_.6} parent=11 // pred_region
        _
      $region24: #{_lambda_.6} parent=11 // pred_fallthru
        _
      // Predicated region
      $region25: #{_lambda_.6} parent=11 // pred_check
        %p237 = pneg %p124
      $region26: #{_lambda_.6} parent=11 // pred_check_branch
        %239 = sbr.rel (%p237) target = $region28
      $region27: #{_lambda_.6} parent=11 // pred_region
        _
      $region28: #{_lambda_.6} parent=11 // pred_fallthru
        _
      // Predicated region
      $region29: #{_lambda_.6} parent=11 // pred_check
        %p240 = pneg %p145
      $region30: #{_lambda_.6} parent=11 // pred_check_branch
        %242 = sbr.rel (%p240) target = $region32
      $region31: #{_lambda_.6} parent=11 // pred_region
        _
      $region32: #{_lambda_.6} parent=11 // pred_fallthru
        _
      // Predicated region
      $region33: #{_lambda_.6} parent=11 // pred_check
        %p243 = pneg %p166
      $region34: #{_lambda_.6} parent=11 // pred_check_branch
        %245 = sbr.rel (%p243) target = $region36
      $region35: #{_lambda_.6} parent=11 // pred_region
        _
      $region36: #{_lambda_.6} parent=11 // pred_fallthru
        _
      // Predicated region
      $region37: #{_lambda_.6} parent=11 // pred_check
        %p246 = pneg %p187
      $region38: #{_lambda_.6} parent=11 // pred_check_branch
        %248 = sbr.rel (%p246) target = $region40
      $region39: #{_lambda_.6} parent=11 // pred_region
        _
      $region40: #{_lambda_.6} parent=11 // pred_fallthru
        _
    $region12: #{_lambda_.6} parent=5 // pred_fallthru
      _
    %p249 = scmp.lt.s32.totalorder %s14, 2
    // Predicated region
    $region41: #{_lambda_.6} parent=5 // pred_check
      %p250 = pneg %p249
    $region42: #{_lambda_.6} parent=5 // pred_check_branch
      %252 = sbr.rel (%p250) target = $region44
    $region43: #{_lambda_.6} parent=5 // pred_region
      // Predicated region
      $region45: #{_lambda_.6} parent=43 // pred_check
        %p253 = pneg %p34
      $region46: #{_lambda_.6} parent=43 // pred_check_branch
        %255 = sbr.rel (%p253) target = $region48
      $region47: #{_lambda_.6} parent=43 // pred_region
        %p256 = scmp.lt.s32.totalorder %s14, 1
        %s257 = scalar_select %p256, %s14, 1
        %s258 = smul.addr %s257, 8
        %s259 = smul.addr %s258, 8
        %s260 = scalar_lea.vmem %s0, %s259
      $region48: #{_lambda_.6} parent=43 // pred_fallthru
        _
    $region44: #{_lambda_.6} parent=5 // pred_fallthru
      _
    %p261 = scmp.le.s32.totalorder 1, %s14
    %p262 = scmp.lt.s32.totalorder %s14, 3
    %p263 = pnand %p261, %p262
    %p264 = pneg %p263
    // Predicated region
    $region49: #{_lambda_.6} parent=5 // pred_check
      _
    $region50: #{_lambda_.6} parent=5 // pred_check_branch
      %266 = sbr.rel (%p263) target = $region52
    $region51: #{_lambda_.6} parent=5 // pred_region
      %s267 = ssub.s32 %s14, 1
      %p268 = scmp.lt.s32.totalorder %s19, 1
      %s269 = scalar_select %p268, %s19, 1
      %s270 = smul.addr %s269, 8
      %s271 = smul.addr %s270, 8
      %s272 = scalar_lea.vmem %s0, %s271
      %p273 = pneg %p40
      %p274 = pneg %p37
      %p275 = pneg %p61
      %p276 = pneg %p58
      %p277 = pneg %p82
      %p278 = pneg %p79
      %p279 = pneg %p103
      %p280 = pneg %p100
      %p281 = pneg %p124
      %p282 = pneg %p121
      %p283 = pneg %p145
      %p284 = pneg %p142
      %p285 = pneg %p166
      %p286 = pneg %p163
      %p287 = pneg %p187
      %p288 = pneg %p184
      %p289 = pneg %p213
      %p290 = pneg %p210
      %p291 = scmp.lt.s32.totalorder %s19, 1
      %s292 = scalar_select %p291, %s19, 1
      %s293 = smul.addr %s292, 8
      %s294 = smul.addr %s293, 8
      %s295 = scalar_lea.vmem %s8, %s294
      %p296 = scmp.lt.s32.totalorder %s19, 1
      %s297 = scalar_select %p296, %s19, 1
      %s298 = smul.addr %s297, 8
      %s299 = smul.addr %s298, 8
      %s300 = scalar_lea.vmem %s0, %s299
      %p301 = scmp.lt.s32.totalorder %s19, 1
      %s302 = scalar_select %p301, %s19, 1
      %s303 = smul.addr %s302, 8
      %s304 = smul.addr %s303, 8
      %s305 = scalar_lea.vmem %s8, %s304
      %v306 = vld [vmem:[%s300] sm:$0xff]
      %v307 = vld [vmem:[%s300 + $0x8] sm:$0xff]
      %v308 = vld [vmem:[%s300 + $0x10] sm:$0xff]
      %v309 = vld [vmem:[%s300 + $0x18] sm:$0xff]
      %v310 = vld [vmem:[%s300 + $0x20] sm:$0xff]
      %v311 = vld [vmem:[%s300 + $0x28] sm:$0xff]
      %v312 = vld [vmem:[%s300 + $0x30] sm:$0xff]
      %v313 = vld [vmem:[%s300 + $0x38] sm:$0xff]
      %vm314 = vcmask 261120
      %v315 = vsel %vm314, %v306, 0.0
      %316 = vadd.xlane.f32.xlu0 %v315
      %v317 = vpop.xlane.xlu0 %316
      %v318 = vsel %vm314, %v307, 0.0
      %319 = vadd.xlane.f32.xlu0 %v318
      %v320 = vpop.xlane.xlu0 %319
      %v321 = vsel %vm314, %v308, 0.0
      %322 = vadd.xlane.f32.xlu0 %v321
      %v323 = vpop.xlane.xlu0 %322
      %v324 = vsel %vm314, %v309, 0.0
      %325 = vadd.xlane.f32.xlu0 %v324
      %v326 = vpop.xlane.xlu0 %325
      %v327 = vsel %vm314, %v310, 0.0
      %328 = vadd.xlane.f32.xlu0 %v327
      %v329 = vpop.xlane.xlu0 %328
      %v330 = vsel %vm314, %v311, 0.0
      %331 = vadd.xlane.f32.xlu0 %v330
      %v332 = vpop.xlane.xlu0 %331
      %v333 = vsel %vm314, %v312, 0.0
      %334 = vadd.xlane.f32.xlu0 %v333
      %v335 = vpop.xlane.xlu0 %334
      %v336 = vsel %vm314, %v313, 0.0
      %337 = vadd.xlane.f32.xlu0 %v336
      %v338 = vpop.xlane.xlu0 %337
      %v339 = vrcp.pop 32.0
      %v340 = vmul.f32 %v317, %v339
      %v341 = vmul.f32 %v320, %v339
      %v342 = vmul.f32 %v323, %v339
      %v343 = vmul.f32 %v326, %v339
      %v344 = vmul.f32 %v329, %v339
      %v345 = vmul.f32 %v332, %v339
      %v346 = vmul.f32 %v335, %v339
      %v347 = vmul.f32 %v338, %v339
      %v348 = vsub.f32 %v306, %v340
      %v349 = vsub.f32 %v307, %v341
      %v350 = vsub.f32 %v308, %v342
      %v351 = vsub.f32 %v309, %v343
      %v352 = vsub.f32 %v310, %v344
      %v353 = vsub.f32 %v311, %v345
      %v354 = vsub.f32 %v312, %v346
      %v355 = vsub.f32 %v313, %v347
      %v356 = vmul.f32 %v348, %v348
      %v357 = vmul.f32 %v349, %v349
      %v358 = vmul.f32 %v350, %v350
      %v359 = vmul.f32 %v351, %v351
      %v360 = vmul.f32 %v352, %v352
      %v361 = vmul.f32 %v353, %v353
      %v362 = vmul.f32 %v354, %v354
      %v363 = vmul.f32 %v355, %v355
      %v364 = vsel %vm314, %v356, 0.0
      %365 = vadd.xlane.f32.xlu0 %v364
      %v366 = vpop.xlane.xlu0 %365
      %v367 = vsel %vm314, %v357, 0.0
      %368 = vadd.xlane.f32.xlu0 %v367
      %v369 = vpop.xlane.xlu0 %368
      %v370 = vsel %vm314, %v358, 0.0
      %371 = vadd.xlane.f32.xlu0 %v370
      %v372 = vpop.xlane.xlu0 %371
      %v373 = vsel %vm314, %v359, 0.0
      %374 = vadd.xlane.f32.xlu0 %v373
      %v375 = vpop.xlane.xlu0 %374
      %v376 = vsel %vm314, %v360, 0.0
      %377 = vadd.xlane.f32.xlu0 %v376
      %v378 = vpop.xlane.xlu0 %377
      %v379 = vsel %vm314, %v361, 0.0
      %380 = vadd.xlane.f32.xlu0 %v379
      %v381 = vpop.xlane.xlu0 %380
      %v382 = vsel %vm314, %v362, 0.0
      %383 = vadd.xlane.f32.xlu0 %v382
      %v384 = vpop.xlane.xlu0 %383
      %v385 = vsel %vm314, %v363, 0.0
      %386 = vadd.xlane.f32.xlu0 %v385
      %v387 = vpop.xlane.xlu0 %386
      %v388 = vmul.f32 %v366, %v339
      %v389 = vmul.f32 %v369, %v339
      %v390 = vmul.f32 %v372, %v339
      %v391 = vmul.f32 %v375, %v339
      %v392 = vmul.f32 %v378, %v339
      %v393 = vmul.f32 %v381, %v339
      %v394 = vmul.f32 %v384, %v339
      %v395 = vmul.f32 %v387, %v339
      %v396 = vadd.f32 %v388, 1e-05
      %v397 = vadd.f32 %v389, 1e-05
      %v398 = vadd.f32 %v390, 1e-05
      %v399 = vadd.f32 %v391, 1e-05
      %v400 = vadd.f32 %v392, 1e-05
      %v401 = vadd.f32 %v393, 1e-05
      %v402 = vadd.f32 %v394, 1e-05
      %v403 = vadd.f32 %v395, 1e-05
      %v404 = vrsqrt.pop %v396
      %v405 = vrsqrt.pop %v397
      %v406 = vrsqrt.pop %v398
      %v407 = vrsqrt.pop %v399
      %v408 = vrsqrt.pop %v400
      %v409 = vrsqrt.pop %v401
      %v410 = vrsqrt.pop %v402
      %v411 = vrsqrt.pop %v403
      %v412 = vmul.f32 %v348, %v404
      %v413 = vmul.f32 %v349, %v405
      %v414 = vmul.f32 %v350, %v406
      %v415 = vmul.f32 %v351, %v407
      %v416 = vmul.f32 %v352, %v408
      %v417 = vmul.f32 %v353, %v409
      %v418 = vmul.f32 %v354, %v410
      %v419 = vmul.f32 %v355, %v411
      %v420 = vld [vmem:[%s1] sm:$0x1]
      %v422 = vlaneseq
      %v423 = vshrl.u32 %v422, 7
      %v424 = vsub.s32 0, %v423
      %v425 = vrot.slane %v420, %v424
      %v427 = vmul.f32 %v412, %v425
      %v428 = vmul.f32 %v413, %v425
      %v429 = vmul.f32 %v414, %v425
      %v430 = vmul.f32 %v415, %v425
      %v431 = vmul.f32 %v416, %v425
      %v432 = vmul.f32 %v417, %v425
      %v433 = vmul.f32 %v418, %v425
      %v434 = vmul.f32 %v419, %v425
      %v435 = vld [vmem:[%s2] sm:$0x1]
      %v437 = vlaneseq
      %v438 = vshrl.u32 %v437, 7
      %v439 = vsub.s32 0, %v438
      %v440 = vrot.slane %v435, %v439
      %v442 = vadd.f32 %v427, %v440
      %v443 = vadd.f32 %v428, %v440
      %v444 = vadd.f32 %v429, %v440
      %v445 = vadd.f32 %v430, %v440
      %v446 = vadd.f32 %v431, %v440
      %v447 = vadd.f32 %v432, %v440
      %v448 = vadd.f32 %v433, %v440
      %v449 = vadd.f32 %v434, %v440
      %v450 = vld [vmem:[%s3] sm:$0xff]
      %v451 = vld [vmem:[%s3 + $0x8] sm:$0xff]
      %v452 = vld [vmem:[%s3 + $0x10] sm:$0xff]
      %v453 = vld [vmem:[%s3 + $0x18] sm:$0xff]
      %v454 = vld [vmem:[%s4] sm:$0x1]
      %v456 = vlaneseq
      %v457 = vshrl.u32 %v456, 7
      %v458 = vsub.s32 0, %v457
      %v459 = vrot.slane %v454, %v458
      %v462 = vsel %vm314, %v442, 0
      %v465 = vsel %vm314, %v443, 0
      %v468 = vsel %vm314, %v444, 0
      %v471 = vsel %vm314, %v445, 0
      %v474 = vsel %vm314, %v446, 0
      %v477 = vsel %vm314, %v447, 0
      %v480 = vsel %vm314, %v448, 0
      %v483 = vsel %vm314, %v449, 0
      %485 = vmatprep.subr.mxu0 0.0
      %486 = vmatpush1.msra.mxu0 %v450
      %487 = vmatprep.subr.mxu0 0.0
      %488 = vmatpush1.msra.mxu0 %v451
      %489 = vmatprep.subr.mxu0 0.0
      %490 = vmatpush1.msra.mxu0 %v452
      %491 = vmatprep.subr.mxu0 0.0
      %492 = vmatpush1.msra.mxu0 %v453
      %493 = vmatprep.subr.mxu0 0.0
      %494 = vmatpush1.msra.mxu0 0.0
      %495 = vmatprep.subr.mxu0 0.0
      %496 = vmatpush1.msra.mxu0 0.0
      %497 = vmatprep.subr.mxu0 0.0
      %498 = vmatpush1.msra.mxu0 0.0
      %499 = vmatprep.subr.mxu0 0.0
      %500 = vmatpush1.msra.mxu0 0.0
      %501 = vmatprep.subr.mxu0 0.0
      %502 = vmatpush1.msra.mxu0 0.0
      %503 = vmatprep.subr.mxu0 0.0
      %504 = vmatpush1.msra.mxu0 0.0
      %505 = vmatprep.subr.mxu0 0.0
      %506 = vmatpush1.msra.mxu0 0.0
      %507 = vmatprep.subr.mxu0 0.0
      %508 = vmatpush1.msra.mxu0 0.0
      %509 = vmatprep.subr.mxu0 0.0
      %510 = vmatpush1.msra.mxu0 0.0
      %511 = vmatprep.subr.mxu0 0.0
      %512 = vmatpush1.msra.mxu0 0.0
      %513 = vmatprep.subr.mxu0 0.0
      %514 = vmatpush1.msra.mxu0 0.0
      %515 = vmatprep.subr.mxu0 0.0
      %516 = vmatpush1.msra.mxu0 0.0
      %517 = vmatprep.subr.mxu0 0.0
      %518 = vmatpush1.msra.mxu0 0.0
      %519 = vmatprep.subr.mxu0 0.0
      %520 = vmatpush1.msra.mxu0 0.0
      %521 = vmatprep.subr.mxu0 0.0
      %522 = vmatpush1.msra.mxu0 0.0
      %523 = vmatprep.subr.mxu0 0.0
      %524 = vmatpush1.msra.mxu0 0.0
      %525 = vmatprep.subr.mxu0 0.0
      %526 = vmatpush1.msra.mxu0 0.0
      %527 = vmatprep.subr.mxu0 0.0
      %528 = vmatpush1.msra.mxu0 0.0
      %529 = vmatprep.subr.mxu0 0.0
      %530 = vmatpush1.msra.mxu0 0.0
      %531 = vmatprep.subr.mxu0 0.0
      %532 = vmatpush1.msra.mxu0 0.0
      %533 = vmatprep.subr.mxu0 0.0
      %534 = vmatpush1.msra.mxu0 0.0
      %535 = vmatprep.subr.mxu0 0.0
      %536 = vmatpush1.msra.mxu0 0.0
      %537 = vmatprep.subr.mxu0 0.0
      %538 = vmatpush1.msra.mxu0 0.0
      %539 = vmatprep.subr.mxu0 0.0
      %540 = vmatpush1.msra.mxu0 0.0
      %541 = vmatprep.subr.mxu0 0.0
      %542 = vmatpush1.msra.mxu0 0.0
      %543 = vmatprep.subr.mxu0 0.0
      %544 = vmatpush1.msra.mxu0 0.0
      %545 = vmatprep.subr.mxu0 0.0
      %546 = vmatpush1.msra.mxu0 0.0
      %547 = vmatprep.subr.mxu0 0.0
      %548 = vmatpush1.msra.mxu0 0.0
      %549 = vmatprep.mubr.f32.mxu0 0.0
      %550 = vmatmul.mubr.f32.gmra.mrb[0].mxu0 %v462
      %v551 = vpop.f32.mrb[0].mxu0
      %v552 = vadd.f32 %v459, %v551
      %v553 = vpop.f32.mrb[0].mxu0
      %554 = vmatprep.mubr.f32.mxu0 0.0
      %555 = vmatmul.mubr.f32.gmra.mrb[0].mxu0 %v465
      %v556 = vpop.f32.mrb[0].mxu0
      %v557 = vadd.f32 %v459, %v556
      %v558 = vpop.f32.mrb[0].mxu0
      %559 = vmatprep.mubr.f32.mxu0 0.0
      %560 = vmatmul.mubr.f32.gmra.mrb[0].mxu0 %v468
      %v561 = vpop.f32.mrb[0].mxu0
      %v562 = vadd.f32 %v459, %v561
      %v563 = vpop.f32.mrb[0].mxu0
      %564 = vmatprep.mubr.f32.mxu0 0.0
      %565 = vmatmul.mubr.f32.gmra.mrb[0].mxu0 %v471
      %v566 = vpop.f32.mrb[0].mxu0
      %v567 = vadd.f32 %v459, %v566
      %v568 = vpop.f32.mrb[0].mxu0
      %569 = vmatprep.mubr.f32.mxu0 0.0
      %570 = vmatmul.mubr.f32.gmra.mrb[0].mxu0 %v474
      %v571 = vpop.f32.mrb[0].mxu0
      %v572 = vadd.f32 %v459, %v571
      %v573 = vpop.f32.mrb[0].mxu0
      %574 = vmatprep.mubr.f32.mxu0 0.0
      %575 = vmatmul.mubr.f32.gmra.mrb[0].mxu0 %v477
      %v576 = vpop.f32.mrb[0].mxu0
      %v577 = vadd.f32 %v459, %v576
      %v578 = vpop.f32.mrb[0].mxu0
      %579 = vmatprep.mubr.f32.mxu0 0.0
      %580 = vmatmul.mubr.f32.gmra.mrb[0].mxu0 %v480
      %v581 = vpop.f32.mrb[0].mxu0
      %v582 = vadd.f32 %v459, %v581
      %v583 = vpop.f32.mrb[0].mxu0
      %584 = vmatprep.mubr.f32.mxu0 0.0
      %585 = vmatmul.mubr.f32.gmra.mrb[0].mxu0 %v483
      %v586 = vpop.f32.mrb[0].mxu0
      %v587 = vadd.f32 %v459, %v586
      %v588 = vpop.f32.mrb[0].mxu0
      %589 = vdwg.mxu0
      %v590 = vld [vmem:[%s7] sm:$0xff]
      %v591 = vld [vmem:[%s7 + $0x8] sm:$0xff]
      %v592 = vld [vmem:[%s7 + $0x10] sm:$0xff]
      %v593 = vld [vmem:[%s7 + $0x18] sm:$0xff]
      %v594 = vld [vmem:[%s7 + $0x20] sm:$0xff]
      %v595 = vld [vmem:[%s7 + $0x28] sm:$0xff]
      %v596 = vld [vmem:[%s7 + $0x30] sm:$0xff]
      %v597 = vld [vmem:[%s7 + $0x38] sm:$0xff]
      %v598 = vld [vmem:[%s7 + $0x40] sm:$0xff]
      %v599 = vld [vmem:[%s7 + $0x48] sm:$0xff]
      %v600 = vld [vmem:[%s7 + $0x50] sm:$0xff]
      %v601 = vld [vmem:[%s7 + $0x58] sm:$0xff]
      %v602 = vld [vmem:[%s7 + $0x60] sm:$0xff]
      %v603 = vld [vmem:[%s7 + $0x68] sm:$0xff]
      %v604 = vld [vmem:[%s7 + $0x70] sm:$0xff]
      %v605 = vld [vmem:[%s7 + $0x78] sm:$0xff]
      %v606 = vld [vmem:[%s7 + $0x80] sm:$0xff]
      %v607 = vld [vmem:[%s7 + $0x88] sm:$0xff]
      %v608 = vld [vmem:[%s7 + $0x90] sm:$0xff]
      %v609 = vld [vmem:[%s7 + $0x98] sm:$0xff]
      %v610 = vld [vmem:[%s7 + $0xa0] sm:$0xff]
      %v611 = vld [vmem:[%s7 + $0xa8] sm:$0xff]
      %v612 = vld [vmem:[%s7 + $0xb0] sm:$0xff]
      %v613 = vld [vmem:[%s7 + $0xb8] sm:$0xff]
      %v614 = vld [vmem:[%s7 + $0xc0] sm:$0xff]
      %v615 = vld [vmem:[%s7 + $0xc8] sm:$0xff]
      %v616 = vld [vmem:[%s7 + $0xd0] sm:$0xff]
      %v617 = vld [vmem:[%s7 + $0xd8] sm:$0xff]
      %v618 = vld [vmem:[%s7 + $0xe0] sm:$0xff]
      %v619 = vld [vmem:[%s7 + $0xe8] sm:$0xff]
      %v620 = vld [vmem:[%s7 + $0xf0] sm:$0xff]
      %v621 = vld [vmem:[%s7 + $0xf8] sm:$0xff]
      %624 = vrot.lane.b32.xlu0 %v552, 96
      %v625 = vpop.permute.xlu0 %624
      %626 = vrot.lane.b32.xlu0 %v557, 96
      %v627 = vpop.permute.xlu0 %626
      %vm628 = vcmask 64512
      %v629 = vsel %vm628, %v552, 0
      %v631 = vsel %vm628, %v557, 0
      %v633 = vsel %vm628, %v625, 0
      %v635 = vsel %vm628, %v627, 0
      %637 = vmatprep.subr.mxu0 0.0
      %638 = vmatpush1.xpose.msra.mxu0 %v633
      %639 = vmatprep.subr.mxu0 0.0
      %640 = vmatpush1.xpose.msra.mxu0 %v635
      %641 = vmatprep.subr.mxu0 0.0
      %642 = vmatpush1.xpose.msra.mxu0 0.0
      %643 = vmatprep.subr.mxu0 0.0
      %644 = vmatpush1.xpose.msra.mxu0 0.0
      %645 = vmatprep.subr.mxu0 0.0
      %646 = vmatpush1.xpose.msra.mxu0 0.0
      %647 = vmatprep.subr.mxu0 0.0
      %648 = vmatpush1.xpose.msra.mxu0 0.0
      %649 = vmatprep.subr.mxu0 0.0
      %650 = vmatpush1.xpose.msra.mxu0 0.0
      %651 = vmatprep.subr.mxu0 0.0
      %652 = vmatpush1.xpose.msra.mxu0 0.0
      %653 = vmatprep.subr.mxu0 0.0
      %654 = vmatpush1.xpose.msra.mxu0 0.0
      %655 = vmatprep.subr.mxu0 0.0
      %656 = vmatpush1.xpose.msra.mxu0 0.0
      %657 = vmatprep.subr.mxu0 0.0
      %658 = vmatpush1.xpose.msra.mxu0 0.0
      %659 = vmatprep.subr.mxu0 0.0
      %660 = vmatpush1.xpose.msra.mxu0 0.0
      %661 = vmatprep.subr.mxu0 0.0
      %662 = vmatpush1.xpose.msra.mxu0 0.0
      %663 = vmatprep.subr.mxu0 0.0
      %664 = vmatpush1.xpose.msra.mxu0 0.0
      %665 = vmatprep.subr.mxu0 0.0
      %666 = vmatpush1.xpose.msra.mxu0 0.0
      %667 = vmatprep.subr.mxu0 0.0
      %668 = vmatpush1.xpose.msra.mxu0 0.0
      %669 = vmatprep.subr.mxu0 0.0
      %670 = vmatpush1.xpose.msra.mxu0 0.0
      %671 = vmatprep.subr.mxu0 0.0
      %672 = vmatpush1.xpose.msra.mxu0 0.0
      %673 = vmatprep.subr.mxu0 0.0
      %674 = vmatpush1.xpose.msra.mxu0 0.0
      %675 = vmatprep.subr.mxu0 0.0
      %676 = vmatpush1.xpose.msra.mxu0 0.0
      %677 = vmatprep.subr.mxu0 0.0
      %678 = vmatpush1.xpose.msra.mxu0 0.0
      %679 = vmatprep.subr.mxu0 0.0
      %680 = vmatpush1.xpose.msra.mxu0 0.0
      %681 = vmatprep.subr.mxu0 0.0
      %682 = vmatpush1.xpose.msra.mxu0 0.0
      %683 = vmatprep.subr.mxu0 0.0
      %684 = vmatpush1.xpose.msra.mxu0 0.0
      %685 = vmatprep.subr.mxu0 0.0
      %686 = vmatpush1.xpose.msra.mxu0 0.0
      %687 = vmatprep.subr.mxu0 0.0
      %688 = vmatpush1.xpose.msra.mxu0 0.0
      %689 = vmatprep.subr.mxu0 0.0
      %690 = vmatpush1.xpose.msra.mxu0 0.0
      %691 = vmatprep.subr.mxu0 0.0
      %692 = vmatpush1.xpose.msra.mxu0 0.0
      %693 = vmatprep.subr.mxu0 0.0
      %694 = vmatpush1.xpose.msra.mxu0 0.0
      %695 = vmatprep.subr.mxu0 0.0
      %696 = vmatpush1.xpose.msra.mxu0 0.0
      %697 = vmatprep.subr.mxu0 0.0
      %698 = vmatpush1.xpose.msra.mxu0 0.0
      %699 = vmatprep.subr.mxu0 0.0
      %700 = vmatpush1.xpose.msra.mxu0 0.0
      %701 = vmatprep.mubr.f32.mxu0 0.0
      %702 = vmatmul.mubr.f32.gmra.mrb[0].mxu0 %v629
      %v703 = vpop.f32.mrb[0].mxu0
      %v704 = vadd.f32 %v590, %v703
      %v705 = vpop.f32.mrb[0].mxu0
      %706 = vmatprep.mubr.f32.mxu0 0.0
      %707 = vmatmul.mubr.f32.gmra.mrb[0].mxu0 %v631
      %v708 = vpop.f32.mrb[0].mxu0
      %v709 = vadd.f32 %v591, %v708
      %v710 = vpop.f32.mrb[0].mxu0
      %711 = vdwg.mxu0
      %714 = vrot.lane.b32.xlu0 %v562, 96
      %v715 = vpop.permute.xlu0 %714
      %716 = vrot.lane.b32.xlu0 %v567, 96
      %v717 = vpop.permute.xlu0 %716
      %v718 = vsel %vm628, %v562, 0
      %v720 = vsel %vm628, %v567, 0
      %v722 = vsel %vm628, %v715, 0
      %v724 = vsel %vm628, %v717, 0
      %726 = vmatprep.subr.mxu0 0.0
      %727 = vmatpush1.xpose.msra.mxu0 %v722
      %728 = vmatprep.subr.mxu0 0.0
      %729 = vmatpush1.xpose.msra.mxu0 %v724
      %730 = vmatprep.subr.mxu0 0.0
      %731 = vmatpush1.xpose.msra.mxu0 0.0
      %732 = vmatprep.subr.mxu0 0.0
      %733 = vmatpush1.xpose.msra.mxu0 0.0
      %734 = vmatprep.subr.mxu0 0.0
      %735 = vmatpush1.xpose.msra.mxu0 0.0
      %736 = vmatprep.subr.mxu0 0.0
      %737 = vmatpush1.xpose.msra.mxu0 0.0
      %738 = vmatprep.subr.mxu0 0.0
      %739 = vmatpush1.xpose.msra.mxu0 0.0
      %740 = vmatprep.subr.mxu0 0.0
      %741 = vmatpush1.xpose.msra.mxu0 0.0
      %742 = vmatprep.subr.mxu0 0.0
      %743 = vmatpush1.xpose.msra.mxu0 0.0
      %744 = vmatprep.subr.mxu0 0.0
      %745 = vmatpush1.xpose.msra.mxu0 0.0
      %746 = vmatprep.subr.mxu0 0.0
      %747 = vmatpush1.xpose.msra.mxu0 0.0
      %748 = vmatprep.subr.mxu0 0.0
      %749 = vmatpush1.xpose.msra.mxu0 0.0
      %750 = vmatprep.subr.mxu0 0.0
      %751 = vmatpush1.xpose.msra.mxu0 0.0
      %752 = vmatprep.subr.mxu0 0.0
      %753 = vmatpush1.xpose.msra.mxu0 0.0
      %754 = vmatprep.subr.mxu0 0.0
      %755 = vmatpush1.xpose.msra.mxu0 0.0
      %756 = vmatprep.subr.mxu0 0.0
      %757 = vmatpush1.xpose.msra.mxu0 0.0
      %758 = vmatprep.subr.mxu0 0.0
      %759 = vmatpush1.xpose.msra.mxu0 0.0
      %760 = vmatprep.subr.mxu0 0.0
      %761 = vmatpush1.xpose.msra.mxu0 0.0
      %762 = vmatprep.subr.mxu0 0.0
      %763 = vmatpush1.xpose.msra.mxu0 0.0
      %764 = vmatprep.subr.mxu0 0.0
      %765 = vmatpush1.xpose.msra.mxu0 0.0
      %766 = vmatprep.subr.mxu0 0.0
      %767 = vmatpush1.xpose.msra.mxu0 0.0
      %768 = vmatprep.subr.mxu0 0.0
      %769 = vmatpush1.xpose.msra.mxu0 0.0
      %770 = vmatprep.subr.mxu0 0.0
      %771 = vmatpush1.xpose.msra.mxu0 0.0
      %772 = vmatprep.subr.mxu0 0.0
      %773 = vmatpush1.xpose.msra.mxu0 0.0
      %774 = vmatprep.subr.mxu0 0.0
      %775 = vmatpush1.xpose.msra.mxu0 0.0
      %776 = vmatprep.subr.mxu0 0.0
      %777 = vmatpush1.xpose.msra.mxu0 0.0
      %778 = vmatprep.subr.mxu0 0.0
      %779 = vmatpush1.xpose.msra.mxu0 0.0
      %780 = vmatprep.subr.mxu0 0.0
      %781 = vmatpush1.xpose.msra.mxu0 0.0
      %782 = vmatprep.subr.mxu0 0.0
      %783 = vmatpush1.xpose.msra.mxu0 0.0
      %784 = vmatprep.subr.mxu0 0.0
      %785 = vmatpush1.xpose.msra.mxu0 0.0
      %786 = vmatprep.subr.mxu0 0.0
      %787 = vmatpush1.xpose.msra.mxu0 0.0
      %788 = vmatprep.subr.mxu0 0.0
      %789 = vmatpush1.xpose.msra.mxu0 0.0
      %790 = vmatprep.mubr.f32.mxu0 0.0
      %791 = vmatmul.mubr.f32.gmra.mrb[0].mxu0 %v718
      %v792 = vpop.f32.mrb[0].mxu0
      %v793 = vadd.f32 %v598, %v792
      %v794 = vpop.f32.mrb[0].mxu0
      %795 = vmatprep.mubr.f32.mxu0 0.0
      %796 = vmatmul.mubr.f32.gmra.mrb[0].mxu0 %v720
      %v797 = vpop.f32.mrb[0].mxu0
      %v798 = vadd.f32 %v599, %v797
      %v799 = vpop.f32.mrb[0].mxu0
      %800 = vdwg.mxu0
      %803 = vrot.lane.b32.xlu0 %v572, 96
      %v804 = vpop.permute.xlu0 %803
      %805 = vrot.lane.b32.xlu0 %v577, 96
      %v806 = vpop.permute.xlu0 %805
      %v807 = vsel %vm628, %v572, 0
      %v809 = vsel %vm628, %v577, 0
      %v811 = vsel %vm628, %v804, 0
      %v813 = vsel %vm628, %v806, 0
      %815 = vmatprep.subr.mxu0 0.0
      %816 = vmatpush1.xpose.msra.mxu0 %v811
      %817 = vmatprep.subr.mxu0 0.0
      %818 = vmatpush1.xpose.msra.mxu0 %v813
      %819 = vmatprep.subr.mxu0 0.0
      %820 = vmatpush1.xpose.msra.mxu0 0.0
      %821 = vmatprep.subr.mxu0 0.0
      %822 = vmatpush1.xpose.msra.mxu0 0.0
      %823 = vmatprep.subr.mxu0 0.0
      %824 = vmatpush1.xpose.msra.mxu0 0.0
      %825 = vmatprep.subr.mxu0 0.0
      %826 = vmatpush1.xpose.msra.mxu0 0.0
      %827 = vmatprep.subr.mxu0 0.0
      %828 = vmatpush1.xpose.msra.mxu0 0.0
      %829 = vmatprep.subr.mxu0 0.0
      %830 = vmatpush1.xpose.msra.mxu0 0.0
      %831 = vmatprep.subr.mxu0 0.0
      %832 = vmatpush1.xpose.msra.mxu0 0.0
      %833 = vmatprep.subr.mxu0 0.0
      %834 = vmatpush1.xpose.msra.mxu0 0.0
      %835 = vmatprep.subr.mxu0 0.0
      %836 = vmatpush1.xpose.msra.mxu0 0.0
      %837 = vmatprep.subr.mxu0 0.0
      %838 = vmatpush1.xpose.msra.mxu0 0.0
      %839 = vmatprep.subr.mxu0 0.0
      %840 = vmatpush1.xpose.msra.mxu0 0.0
      %841 = vmatprep.subr.mxu0 0.0
      %842 = vmatpush1.xpose.msra.mxu0 0.0
      %843 = vmatprep.subr.mxu0 0.0
      %844 = vmatpush1.xpose.msra.mxu0 0.0
      %845 = vmatprep.subr.mxu0 0.0
      %846 = vmatpush1.xpose.msra.mxu0 0.0
      %847 = vmatprep.subr.mxu0 0.0
      %848 = vmatpush1.xpose.msra.mxu0 0.0
      %849 = vmatprep.subr.mxu0 0.0
      %850 = vmatpush1.xpose.msra.mxu0 0.0
      %851 = vmatprep.subr.mxu0 0.0
      %852 = vmatpush1.xpose.msra.mxu0 0.0
      %853 = vmatprep.subr.mxu0 0.0
      %854 = vmatpush1.xpose.msra.mxu0 0.0
      %855 = vmatprep.subr.mxu0 0.0
      %856 = vmatpush1.xpose.msra.mxu0 0.0
      %857 = vmatprep.subr.mxu0 0.0
      %858 = vmatpush1.xpose.msra.mxu0 0.0
      %859 = vmatprep.subr.mxu0 0.0
      %860 = vmatpush1.xpose.msra.mxu0 0.0
      %861 = vmatprep.subr.mxu0 0.0
      %862 = vmatpush1.xpose.msra.mxu0 0.0
      %863 = vmatprep.subr.mxu0 0.0
      %864 = vmatpush1.xpose.msra.mxu0 0.0
      %865 = vmatprep.subr.mxu0 0.0
      %866 = vmatpush1.xpose.msra.mxu0 0.0
      %867 = vmatprep.subr.mxu0 0.0
      %868 = vmatpush1.xpose.msra.mxu0 0.0
      %869 = vmatprep.subr.mxu0 0.0
      %870 = vmatpush1.xpose.msra.mxu0 0.0
      %871 = vmatprep.subr.mxu0 0.0
      %872 = vmatpush1.xpose.msra.mxu0 0.0
      %873 = vmatprep.subr.mxu0 0.0
      %874 = vmatpush1.xpose.msra.mxu0 0.0
      %875 = vmatprep.subr.mxu0 0.0
      %876 = vmatpush1.xpose.msra.mxu0 0.0
      %877 = vmatprep.subr.mxu0 0.0
      %878 = vmatpush1.xpose.msra.mxu0 0.0
      %879 = vmatprep.mubr.f32.mxu0 0.0
      %880 = vmatmul.mubr.f32.gmra.mrb[0].mxu0 %v807
      %v881 = vpop.f32.mrb[0].mxu0
      %v882 = vadd.f32 %v606, %v881
      %v883 = vpop.f32.mrb[0].mxu0
      %884 = vmatprep.mubr.f32.mxu0 0.0
      %885 = vmatmul.mubr.f32.gmra.mrb[0].mxu0 %v809
      %v886 = vpop.f32.mrb[0].mxu0
      %v887 = vadd.f32 %v607, %v886
      %v888 = vpop.f32.mrb[0].mxu0
      %889 = vdwg.mxu0
      %892 = vrot.lane.b32.xlu0 %v582, 96
      %v893 = vpop.permute.xlu0 %892
      %894 = vrot.lane.b32.xlu0 %v587, 96
      %v895 = vpop.permute.xlu0 %894
      %v896 = vsel %vm628, %v582, 0
      %v898 = vsel %vm628, %v587, 0
      %v900 = vsel %vm628, %v893, 0
      %v902 = vsel %vm628, %v895, 0
      %904 = vmatprep.subr.mxu0 0.0
      %905 = vmatpush1.xpose.msra.mxu0 %v900
      %906 = vmatprep.subr.mxu0 0.0
      %907 = vmatpush1.xpose.msra.mxu0 %v902
      %908 = vmatprep.subr.mxu0 0.0
      %909 = vmatpush1.xpose.msra.mxu0 0.0
      %910 = vmatprep.subr.mxu0 0.0
      %911 = vmatpush1.xpose.msra.mxu0 0.0
      %912 = vmatprep.subr.mxu0 0.0
      %913 = vmatpush1.xpose.msra.mxu0 0.0
      %914 = vmatprep.subr.mxu0 0.0
      %915 = vmatpush1.xpose.msra.mxu0 0.0
      %916 = vmatprep.subr.mxu0 0.0
      %917 = vmatpush1.xpose.msra.mxu0 0.0
      %918 = vmatprep.subr.mxu0 0.0
      %919 = vmatpush1.xpose.msra.mxu0 0.0
      %920 = vmatprep.subr.mxu0 0.0
      %921 = vmatpush1.xpose.msra.mxu0 0.0
      %922 = vmatprep.subr.mxu0 0.0
      %923 = vmatpush1.xpose.msra.mxu0 0.0
      %924 = vmatprep.subr.mxu0 0.0
      %925 = vmatpush1.xpose.msra.mxu0 0.0
      %926 = vmatprep.subr.mxu0 0.0
      %927 = vmatpush1.xpose.msra.mxu0 0.0
      %928 = vmatprep.subr.mxu0 0.0
      %929 = vmatpush1.xpose.msra.mxu0 0.0
      %930 = vmatprep.subr.mxu0 0.0
      %931 = vmatpush1.xpose.msra.mxu0 0.0
      %932 = vmatprep.subr.mxu0 0.0
      %933 = vmatpush1.xpose.msra.mxu0 0.0
      %934 = vmatprep.subr.mxu0 0.0
      %935 = vmatpush1.xpose.msra.mxu0 0.0
      %936 = vmatprep.subr.mxu0 0.0
      %937 = vmatpush1.xpose.msra.mxu0 0.0
      %938 = vmatprep.subr.mxu0 0.0
      %939 = vmatpush1.xpose.msra.mxu0 0.0
      %940 = vmatprep.subr.mxu0 0.0
      %941 = vmatpush1.xpose.msra.mxu0 0.0
      %942 = vmatprep.subr.mxu0 0.0
      %943 = vmatpush1.xpose.msra.mxu0 0.0
      %944 = vmatprep.subr.mxu0 0.0
      %945 = vmatpush1.xpose.msra.mxu0 0.0
      %946 = vmatprep.subr.mxu0 0.0
      %947 = vmatpush1.xpose.msra.mxu0 0.0
      %948 = vmatprep.subr.mxu0 0.0
      %949 = vmatpush1.xpose.msra.mxu0 0.0
      %950 = vmatprep.subr.mxu0 0.0
      %951 = vmatpush1.xpose.msra.mxu0 0.0
      %952 = vmatprep.subr.mxu0 0.0
      %953 = vmatpush1.xpose.msra.mxu0 0.0
      %954 = vmatprep.subr.mxu0 0.0
      %955 = vmatpush1.xpose.msra.mxu0 0.0
      %956 = vmatprep.subr.mxu0 0.0
      %957 = vmatpush1.xpose.msra.mxu0 0.0
      %958 = vmatprep.subr.mxu0 0.0
      %959 = vmatpush1.xpose.msra.mxu0 0.0
      %960 = vmatprep.subr.mxu0 0.0
      %961 = vmatpush1.xpose.msra.mxu0 0.0
      %962 = vmatprep.subr.mxu0 0.0
      %963 = vmatpush1.xpose.msra.mxu0 0.0
      %964 = vmatprep.subr.mxu0 0.0
      %965 = vmatpush1.xpose.msra.mxu0 0.0
      %966 = vmatprep.subr.mxu0 0.0
      %967 = vmatpush1.xpose.msra.mxu0 0.0
      %968 = vmatprep.mubr.f32.mxu0 0.0
      %969 = vmatmul.mubr.f32.gmra.mrb[0].mxu0 %v896
      %v970 = vpop.f32.mrb[0].mxu0
      %v971 = vadd.f32 %v614, %v970
      %v972 = vpop.f32.mrb[0].mxu0
      %973 = vmatprep.mubr.f32.mxu0 0.0
      %974 = vmatmul.mubr.f32.gmra.mrb[0].mxu0 %v898
      %v975 = vpop.f32.mrb[0].mxu0
      %v976 = vadd.f32 %v615, %v975
      %v977 = vpop.f32.mrb[0].mxu0
      %978 = vdwg.mxu0
      %vm979 = vcmask 130048
      %v980 = vsel %vm979, %v704, -inf
      %981 = vmax.xlane.f32.xlu0 %v980
      %v982 = vpop.xlane.xlu0 %981
      %v983 = vsel %vm979, %v709, -inf
      %984 = vmax.xlane.f32.xlu0 %v983
      %v985 = vpop.xlane.xlu0 %984
      %v986 = vsel %vm979, %v793, -inf
      %987 = vmax.xlane.f32.xlu0 %v986
      %v988 = vpop.xlane.xlu0 %987
      %v989 = vsel %vm979, %v798, -inf
      %990 = vmax.xlane.f32.xlu0 %v989
      %v991 = vpop.xlane.xlu0 %990
      %v992 = vsel %vm979, %v882, -inf
      %993 = vmax.xlane.f32.xlu0 %v992
      %v994 = vpop.xlane.xlu0 %993
      %v995 = vsel %vm979, %v887, -inf
      %996 = vmax.xlane.f32.xlu0 %v995
      %v997 = vpop.xlane.xlu0 %996
      %v998 = vsel %vm979, %v971, -inf
      %999 = vmax.xlane.f32.xlu0 %v998
      %v1000 = vpop.xlane.xlu0 %999
      %v1001 = vsel %vm979, %v976, -inf
      %1002 = vmax.xlane.f32.xlu0 %v1001
      %v1003 = vpop.xlane.xlu0 %1002
      %v1004 = vsub.f32 %v704, %v982
      %v1005 = vsub.f32 %v709, %v985
      %v1006 = vsub.f32 %v793, %v988
      %v1007 = vsub.f32 %v798, %v991
      %v1008 = vsub.f32 %v882, %v994
      %v1009 = vsub.f32 %v887, %v997
      %v1010 = vsub.f32 %v971, %v1000
      %v1011 = vsub.f32 %v976, %v1003
      %v1012 = vmul.f32 %v1004, 1.442695
      %v1013 = vpow.pop %v1012
      %v1014 = vmul.f32 %v1005, 1.442695
      %v1015 = vpow.pop %v1014
      %v1016 = vmul.f32 %v1006, 1.442695
      %v1017 = vpow.pop %v1016
      %v1018 = vmul.f32 %v1007, 1.442695
      %v1019 = vpow.pop %v1018
      %v1020 = vmul.f32 %v1008, 1.442695
      %v1021 = vpow.pop %v1020
      %v1022 = vmul.f32 %v1009, 1.442695
      %v1023 = vpow.pop %v1022
      %v1024 = vmul.f32 %v1010, 1.442695
      %v1025 = vpow.pop %v1024
      %v1026 = vmul.f32 %v1011, 1.442695
      %v1027 = vpow.pop %v1026
      %v1028 = vsel %vm979, %v1013, 0.0
      %1029 = vadd.xlane.f32.xlu0 %v1028
      %v1030 = vpop.xlane.xlu0 %1029
      %v1031 = vsel %vm979, %v1015, 0.0
      %1032 = vadd.xlane.f32.xlu0 %v1031
      %v1033 = vpop.xlane.xlu0 %1032
      %v1034 = vsel %vm979, %v1017, 0.0
      %1035 = vadd.xlane.f32.xlu0 %v1034
      %v1036 = vpop.xlane.xlu0 %1035
      %v1037 = vsel %vm979, %v1019, 0.0
      %1038 = vadd.xlane.f32.xlu0 %v1037
      %v1039 = vpop.xlane.xlu0 %1038
      %v1040 = vsel %vm979, %v1021, 0.0
      %1041 = vadd.xlane.f32.xlu0 %v1040
      %v1042 = vpop.xlane.xlu0 %1041
      %v1043 = vsel %vm979, %v1023, 0.0
      %1044 = vadd.xlane.f32.xlu0 %v1043
      %v1045 = vpop.xlane.xlu0 %1044
      %v1046 = vsel %vm979, %v1025, 0.0
      %1047 = vadd.xlane.f32.xlu0 %v1046
      %v1048 = vpop.xlane.xlu0 %1047
      %v1049 = vsel %vm979, %v1027, 0.0
      %1050 = vadd.xlane.f32.xlu0 %v1049
      %v1051 = vpop.xlane.xlu0 %1050
      %v1052 = vrcp.pop %v1030
      %v1053 = vrcp.pop %v1033
      %v1054 = vrcp.pop %v1036
      %v1055 = vrcp.pop %v1039
      %v1056 = vrcp.pop %v1042
      %v1057 = vrcp.pop %v1045
      %v1058 = vrcp.pop %v1048
      %v1059 = vrcp.pop %v1051
      %v1060 = vmul.f32 %v1013, %v1052
      %v1061 = vmul.f32 %v1015, %v1053
      %v1062 = vmul.f32 %v1017, %v1054
      %v1063 = vmul.f32 %v1019, %v1055
      %v1064 = vmul.f32 %v1021, %v1056
      %v1065 = vmul.f32 %v1023, %v1057
      %v1066 = vmul.f32 %v1025, %v1058
      %v1067 = vmul.f32 %v1027, %v1059
      %1068 = vrot.lane.b32.xlu0 %v552, 64
      %v1069 = vpop.permute.xlu0 %1068
      %1070 = vrot.lane.b32.xlu0 %v557, 64
      %v1071 = vpop.permute.xlu0 %1070
      %v1075 = vsel %vm979, %v1060, 0
      %v1078 = vsel %vm979, %v1061, 0
      %1080 = vmatprep.subr.mxu0 0.0
      %1081 = vmatpush1.msra.mxu0 %v1069
      %1082 = vmatprep.subr.mxu0 0.0
      %1083 = vmatpush1.msra.mxu0 %v1071
      %1084 = vmatprep.subr.mxu0 0.0
      %1085 = vmatpush1.msra.mxu0 0.0
      %1086 = vmatprep.subr.mxu0 0.0
      %1087 = vmatpush1.msra.mxu0 0.0
      %1088 = vmatprep.subr.mxu0 0.0
      %1089 = vmatpush1.msra.mxu0 0.0
      %1090 = vmatprep.subr.mxu0 0.0
      %1091 = vmatpush1.msra.mxu0 0.0
      %1092 = vmatprep.subr.mxu0 0.0
      %1093 = vmatpush1.msra.mxu0 0.0
      %1094 = vmatprep.subr.mxu0 0.0
      %1095 = vmatpush1.msra.mxu0 0.0
      %1096 = vmatprep.subr.mxu0 0.0
      %1097 = vmatpush1.msra.mxu0 0.0
      %1098 = vmatprep.subr.mxu0 0.0
      %1099 = vmatpush1.msra.mxu0 0.0
      %1100 = vmatprep.subr.mxu0 0.0
      %1101 = vmatpush1.msra.mxu0 0.0
      %1102 = vmatprep.subr.mxu0 0.0
      %1103 = vmatpush1.msra.mxu0 0.0
      %1104 = vmatprep.subr.mxu0 0.0
      %1105 = vmatpush1.msra.mxu0 0.0
      %1106 = vmatprep.subr.mxu0 0.0
      %1107 = vmatpush1.msra.mxu0 0.0
      %1108 = vmatprep.subr.mxu0 0.0
      %1109 = vmatpush1.msra.mxu0 0.0
      %1110 = vmatprep.subr.mxu0 0.0
      %1111 = vmatpush1.msra.mxu0 0.0
      %1112 = vmatprep.subr.mxu0 0.0
      %1113 = vmatpush1.msra.mxu0 0.0
      %1114 = vmatprep.subr.mxu0 0.0
      %1115 = vmatpush1.msra.mxu0 0.0
      %1116 = vmatprep.subr.mxu0 0.0
      %1117 = vmatpush1.msra.mxu0 0.0
      %1118 = vmatprep.subr.mxu0 0.0
      %1119 = vmatpush1.msra.mxu0 0.0
      %1120 = vmatprep.subr.mxu0 0.0
      %1121 = vmatpush1.msra.mxu0 0.0
      %1122 = vmatprep.subr.mxu0 0.0
      %1123 = vmatpush1.msra.mxu0 0.0
      %1124 = vmatprep.subr.mxu0 0.0
      %1125 = vmatpush1.msra.mxu0 0.0
      %1126 = vmatprep.subr.mxu0 0.0
      %1127 = vmatpush1.msra.mxu0 0.0
      %1128 = vmatprep.subr.mxu0 0.0
      %1129 = vmatpush1.msra.mxu0 0.0
      %1130 = vmatprep.subr.mxu0 0.0
      %1131 = vmatpush1.msra.mxu0 0.0
      %1132 = vmatprep.subr.mxu0 0.0
      %1133 = vmatpush1.msra.mxu0 0.0
      %1134 = vmatprep.subr.mxu0 0.0
      %1135 = vmatpush1.msra.mxu0 0.0
      %1136 = vmatprep.subr.mxu0 0.0
      %1137 = vmatpush1.msra.mxu0 0.0
      %1138 = vmatprep.subr.mxu0 0.0
      %1139 = vmatpush1.msra.mxu0 0.0
      %1140 = vmatprep.subr.mxu0 0.0
      %1141 = vmatpush1.msra.mxu0 0.0
      %1142 = vmatprep.subr.mxu0 0.0
      %1143 = vmatpush1.msra.mxu0 0.0
      %1144 = vmatprep.mubr.f32.mxu0 0.0
      %1145 = vmatmul.mubr.f32.gmra.mrb[0].mxu0 %v1075
      %v1146 = vpop.f32.mrb[0].mxu0
      %v1147 = vadd.f32 0.0, %v1146
      %v1148 = vpop.f32.mrb[0].mxu0
      %1149 = vmatprep.mubr.f32.mxu0 0.0
      %1150 = vmatmul.mubr.f32.gmra.mrb[0].mxu0 %v1078
      %v1151 = vpop.f32.mrb[0].mxu0
      %v1152 = vadd.f32 0.0, %v1151
      %v1153 = vpop.f32.mrb[0].mxu0
      %1154 = vdwg.mxu0
      %1155 = vrot.lane.b32.xlu0 %v562, 64
      %v1156 = vpop.permute.xlu0 %1155
      %1157 = vrot.lane.b32.xlu0 %v567, 64
      %v1158 = vpop.permute.xlu0 %1157
      %v1162 = vsel %vm979, %v1062, 0
      %v1165 = vsel %vm979, %v1063, 0
      %1167 = vmatprep.subr.mxu0 0.0
      %1168 = vmatpush1.msra.mxu0 %v1156
      %1169 = vmatprep.subr.mxu0 0.0
      %1170 = vmatpush1.msra.mxu0 %v1158
      %1171 = vmatprep.subr.mxu0 0.0
      %1172 = vmatpush1.msra.mxu0 0.0
      %1173 = vmatprep.subr.mxu0 0.0
      %1174 = vmatpush1.msra.mxu0 0.0
      %1175 = vmatprep.subr.mxu0 0.0
      %1176 = vmatpush1.msra.mxu0 0.0
      %1177 = vmatprep.subr.mxu0 0.0
      %1178 = vmatpush1.msra.mxu0 0.0
      %1179 = vmatprep.subr.mxu0 0.0
      %1180 = vmatpush1.msra.mxu0 0.0
      %1181 = vmatprep.subr.mxu0 0.0
      %1182 = vmatpush1.msra.mxu0 0.0
      %1183 = vmatprep.subr.mxu0 0.0
      %1184 = vmatpush1.msra.mxu0 0.0
      %1185 = vmatprep.subr.mxu0 0.0
      %1186 = vmatpush1.msra.mxu0 0.0
      %1187 = vmatprep.subr.mxu0 0.0
      %1188 = vmatpush1.msra.mxu0 0.0
      %1189 = vmatprep.subr.mxu0 0.0
      %1190 = vmatpush1.msra.mxu0 0.0
      %1191 = vmatprep.subr.mxu0 0.0
      %1192 = vmatpush1.msra.mxu0 0.0
      %1193 = vmatprep.subr.mxu0 0.0
      %1194 = vmatpush1.msra.mxu0 0.0
      %1195 = vmatprep.subr.mxu0 0.0
      %1196 = vmatpush1.msra.mxu0 0.0
      %1197 = vmatprep.subr.mxu0 0.0
      %1198 = vmatpush1.msra.mxu0 0.0
      %1199 = vmatprep.subr.mxu0 0.0
      %1200 = vmatpush1.msra.mxu0 0.0
      %1201 = vmatprep.subr.mxu0 0.0
      %1202 = vmatpush1.msra.mxu0 0.0
      %1203 = vmatprep.subr.mxu0 0.0
      %1204 = vmatpush1.msra.mxu0 0.0
      %1205 = vmatprep.subr.mxu0 0.0
      %1206 = vmatpush1.msra.mxu0 0.0
      %1207 = vmatprep.subr.mxu0 0.0
      %1208 = vmatpush1.msra.mxu0 0.0
      %1209 = vmatprep.subr.mxu0 0.0
      %1210 = vmatpush1.msra.mxu0 0.0
      %1211 = vmatprep.subr.mxu0 0.0
      %1212 = vmatpush1.msra.mxu0 0.0
      %1213 = vmatprep.subr.mxu0 0.0
      %1214 = vmatpush1.msra.mxu0 0.0
      %1215 = vmatprep.subr.mxu0 0.0
      %1216 = vmatpush1.msra.mxu0 0.0
      %1217 = vmatprep.subr.mxu0 0.0
      %1218 = vmatpush1.msra.mxu0 0.0
      %1219 = vmatprep.subr.mxu0 0.0
      %1220 = vmatpush1.msra.mxu0 0.0
      %1221 = vmatprep.subr.mxu0 0.0
      %1222 = vmatpush1.msra.mxu0 0.0
      %1223 = vmatprep.subr.mxu0 0.0
      %1224 = vmatpush1.msra.mxu0 0.0
      %1225 = vmatprep.subr.mxu0 0.0
      %1226 = vmatpush1.msra.mxu0 0.0
      %1227 = vmatprep.subr.mxu0 0.0
      %1228 = vmatpush1.msra.mxu0 0.0
      %1229 = vmatprep.subr.mxu0 0.0
      %1230 = vmatpush1.msra.mxu0 0.0
      %1231 = vmatprep.mubr.f32.mxu0 0.0
      %1232 = vmatmul.mubr.f32.gmra.mrb[0].mxu0 %v1162
      %v1233 = vpop.f32.mrb[0].mxu0
      %v1234 = vadd.f32 0.0, %v1233
      %v1235 = vpop.f32.mrb[0].mxu0
      %1236 = vmatprep.mubr.f32.mxu0 0.0
      %1237 = vmatmul.mubr.f32.gmra.mrb[0].mxu0 %v1165
      %v1238 = vpop.f32.mrb[0].mxu0
      %v1239 = vadd.f32 0.0, %v1238
      %v1240 = vpop.f32.mrb[0].mxu0
      %1241 = vdwg.mxu0
      %1242 = vrot.lane.b32.xlu0 %v572, 64
      %v1243 = vpop.permute.xlu0 %1242
      %1244 = vrot.lane.b32.xlu0 %v577, 64
      %v1245 = vpop.permute.xlu0 %1244
      %v1249 = vsel %vm979, %v1064, 0
      %v1252 = vsel %vm979, %v1065, 0
      %1254 = vmatprep.subr.mxu0 0.0
      %1255 = vmatpush1.msra.mxu0 %v1243
      %1256 = vmatprep.subr.mxu0 0.0
      %1257 = vmatpush1.msra.mxu0 %v1245
      %1258 = vmatprep.subr.mxu0 0.0
      %1259 = vmatpush1.msra.mxu0 0.0
      %1260 = vmatprep.subr.mxu0 0.0
      %1261 = vmatpush1.msra.mxu0 0.0
      %1262 = vmatprep.subr.mxu0 0.0
      %1263 = vmatpush1.msra.mxu0 0.0
      %1264 = vmatprep.subr.mxu0 0.0
      %1265 = vmatpush1.msra.mxu0 0.0
      %1266 = vmatprep.subr.mxu0 0.0
      %1267 = vmatpush1.msra.mxu0 0.0
      %1268 = vmatprep.subr.mxu0 0.0
      %1269 = vmatpush1.msra.mxu0 0.0
      %1270 = vmatprep.subr.mxu0 0.0
      %1271 = vmatpush1.msra.mxu0 0.0
      %1272 = vmatprep.subr.mxu0 0.0
      %1273 = vmatpush1.msra.mxu0 0.0
      %1274 = vmatprep.subr.mxu0 0.0
      %1275 = vmatpush1.msra.mxu0 0.0
      %1276 = vmatprep.subr.mxu0 0.0
      %1277 = vmatpush1.msra.mxu0 0.0
      %1278 = vmatprep.subr.mxu0 0.0
      %1279 = vmatpush1.msra.mxu0 0.0
      %1280 = vmatprep.subr.mxu0 0.0
      %1281 = vmatpush1.msra.mxu0 0.0
      %1282 = vmatprep.subr.mxu0 0.0
      %1283 = vmatpush1.msra.mxu0 0.0
      %1284 = vmatprep.subr.mxu0 0.0
      %1285 = vmatpush1.msra.mxu0 0.0
      %1286 = vmatprep.subr.mxu0 0.0
      %1287 = vmatpush1.msra.mxu0 0.0
      %1288 = vmatprep.subr.mxu0 0.0
      %1289 = vmatpush1.msra.mxu0 0.0
      %1290 = vmatprep.subr.mxu0 0.0
      %1291 = vmatpush1.msra.mxu0 0.0
      %1292 = vmatprep.subr.mxu0 0.0
      %1293 = vmatpush1.msra.mxu0 0.0
      %1294 = vmatprep.subr.mxu0 0.0
      %1295 = vmatpush1.msra.mxu0 0.0
      %1296 = vmatprep.subr.mxu0 0.0
      %1297 = vmatpush1.msra.mxu0 0.0
      %1298 = vmatprep.subr.mxu0 0.0
      %1299 = vmatpush1.msra.mxu0 0.0
      %1300 = vmatprep.subr.mxu0 0.0
      %1301 = vmatpush1.msra.mxu0 0.0
      %1302 = vmatprep.subr.mxu0 0.0
      %1303 = vmatpush1.msra.mxu0 0.0
      %1304 = vmatprep.subr.mxu0 0.0
      %1305 = vmatpush1.msra.mxu0 0.0
      %1306 = vmatprep.subr.mxu0 0.0
      %1307 = vmatpush1.msra.mxu0 0.0
      %1308 = vmatprep.subr.mxu0 0.0
      %1309 = vmatpush1.msra.mxu0 0.0
      %1310 = vmatprep.subr.mxu0 0.0
      %1311 = vmatpush1.msra.mxu0 0.0
      %1312 = vmatprep.subr.mxu0 0.0
      %1313 = vmatpush1.msra.mxu0 0.0
      %1314 = vmatprep.subr.mxu0 0.0
      %1315 = vmatpush1.msra.mxu0 0.0
      %1316 = vmatprep.subr.mxu0 0.0
      %1317 = vmatpush1.msra.mxu0 0.0
      %1318 = vmatprep.mubr.f32.mxu0 0.0
      %1319 = vmatmul.mubr.f32.gmra.mrb[0].mxu0 %v1249
      %v1320 = vpop.f32.mrb[0].mxu0
      %v1321 = vadd.f32 0.0, %v1320
      %v1322 = vpop.f32.mrb[0].mxu0
      %1323 = vmatprep.mubr.f32.mxu0 0.0
      %1324 = vmatmul.mubr.f32.gmra.mrb[0].mxu0 %v1252
      %v1325 = vpop.f32.mrb[0].mxu0
      %v1326 = vadd.f32 0.0, %v1325
      %v1327 = vpop.f32.mrb[0].mxu0
      %1328 = vdwg.mxu0
      %1329 = vrot.lane.b32.xlu0 %v582, 64
      %v1330 = vpop.permute.xlu0 %1329
      %1331 = vrot.lane.b32.xlu0 %v587, 64
      %v1332 = vpop.permute.xlu0 %1331
      %v1336 = vsel %vm979, %v1066, 0
      %v1339 = vsel %vm979, %v1067, 0
      %1341 = vmatprep.subr.mxu0 0.0
      %1342 = vmatpush1.msra.mxu0 %v1330
      %1343 = vmatprep.subr.mxu0 0.0
      %1344 = vmatpush1.msra.mxu0 %v1332
      %1345 = vmatprep.subr.mxu0 0.0
      %1346 = vmatpush1.msra.mxu0 0.0
      %1347 = vmatprep.subr.mxu0 0.0
      %1348 = vmatpush1.msra.mxu0 0.0
      %1349 = vmatprep.subr.mxu0 0.0
      %1350 = vmatpush1.msra.mxu0 0.0
      %1351 = vmatprep.subr.mxu0 0.0
      %1352 = vmatpush1.msra.mxu0 0.0
      %1353 = vmatprep.subr.mxu0 0.0
      %1354 = vmatpush1.msra.mxu0 0.0
      %1355 = vmatprep.subr.mxu0 0.0
      %1356 = vmatpush1.msra.mxu0 0.0
      %1357 = vmatprep.subr.mxu0 0.0
      %1358 = vmatpush1.msra.mxu0 0.0
      %1359 = vmatprep.subr.mxu0 0.0
      %1360 = vmatpush1.msra.mxu0 0.0
      %1361 = vmatprep.subr.mxu0 0.0
      %1362 = vmatpush1.msra.mxu0 0.0
      %1363 = vmatprep.subr.mxu0 0.0
      %1364 = vmatpush1.msra.mxu0 0.0
      %1365 = vmatprep.subr.mxu0 0.0
      %1366 = vmatpush1.msra.mxu0 0.0
      %1367 = vmatprep.subr.mxu0 0.0
      %1368 = vmatpush1.msra.mxu0 0.0
      %1369 = vmatprep.subr.mxu0 0.0
      %1370 = vmatpush1.msra.mxu0 0.0
      %1371 = vmatprep.subr.mxu0 0.0
      %1372 = vmatpush1.msra.mxu0 0.0
      %1373 = vmatprep.subr.mxu0 0.0
      %1374 = vmatpush1.msra.mxu0 0.0
      %1375 = vmatprep.subr.mxu0 0.0
      %1376 = vmatpush1.msra.mxu0 0.0
      %1377 = vmatprep.subr.mxu0 0.0
      %1378 = vmatpush1.msra.mxu0 0.0
      %1379 = vmatprep.subr.mxu0 0.0
      %1380 = vmatpush1.msra.mxu0 0.0
      %1381 = vmatprep.subr.mxu0 0.0
      %1382 = vmatpush1.msra.mxu0 0.0
      %1383 = vmatprep.subr.mxu0 0.0
      %1384 = vmatpush1.msra.mxu0 0.0
      %1385 = vmatprep.subr.mxu0 0.0
      %1386 = vmatpush1.msra.mxu0 0.0
      %1387 = vmatprep.subr.mxu0 0.0
      %1388 = vmatpush1.msra.mxu0 0.0
      %1389 = vmatprep.subr.mxu0 0.0
      %1390 = vmatpush1.msra.mxu0 0.0
      %1391 = vmatprep.subr.mxu0 0.0
      %1392 = vmatpush1.msra.mxu0 0.0
      %1393 = vmatprep.subr.mxu0 0.0
      %1394 = vmatpush1.msra.mxu0 0.0
      %1395 = vmatprep.subr.mxu0 0.0
      %1396 = vmatpush1.msra.mxu0 0.0
      %1397 = vmatprep.subr.mxu0 0.0
      %1398 = vmatpush1.msra.mxu0 0.0
      %1399 = vmatprep.subr.mxu0 0.0
      %1400 = vmatpush1.msra.mxu0 0.0
      %1401 = vmatprep.subr.mxu0 0.0
      %1402 = vmatpush1.msra.mxu0 0.0
      %1403 = vmatprep.subr.mxu0 0.0
      %1404 = vmatpush1.msra.mxu0 0.0
      %1405 = vmatprep.mubr.f32.mxu0 0.0
      %1406 = vmatmul.mubr.f32.gmra.mrb[0].mxu0 %v1336
      %v1407 = vpop.f32.mrb[0].mxu0
      %v1408 = vadd.f32 0.0, %v1407
      %v1409 = vpop.f32.mrb[0].mxu0
      %1410 = vmatprep.mubr.f32.mxu0 0.0
      %1411 = vmatmul.mubr.f32.gmra.mrb[0].mxu0 %v1339
      %v1412 = vpop.f32.mrb[0].mxu0
      %v1413 = vadd.f32 0.0, %v1412
      %v1414 = vpop.f32.mrb[0].mxu0
      %1415 = vdwg.mxu0
      %1416 = vst.msk [vmem:[#allocation2] sm:$0xff] %vm628, %v1147
      %1417 = vst.msk [vmem:[#allocation2 + $0x8] sm:$0xff] %vm628, %v1152
      %1418 = vst.msk [vmem:[#allocation2 + $0x10] sm:$0xff] %vm628, %v1234
      %1419 = vst.msk [vmem:[#allocation2 + $0x18] sm:$0xff] %vm628, %v1239
      %1420 = vst.msk [vmem:[#allocation2 + $0x20] sm:$0xff] %vm628, %v1321
      %1421 = vst.msk [vmem:[#allocation2 + $0x28] sm:$0xff] %vm628, %v1326
      %1422 = vst.msk [vmem:[#allocation2 + $0x30] sm:$0xff] %vm628, %v1408
      %1423 = vst.msk [vmem:[#allocation2 + $0x38] sm:$0xff] %vm628, %v1413
      %1424 = vrot.lane.b32.xlu0 %v552, 120
      %v1425 = vpop.permute.xlu0 %1424
      %1426 = vrot.lane.b32.xlu0 %v557, 120
      %v1427 = vpop.permute.xlu0 %1426
      %1428 = vrot.lane.b32.xlu0 %v552, 88
      %v1429 = vpop.permute.xlu0 %1428
      %1430 = vrot.lane.b32.xlu0 %v557, 88
      %v1431 = vpop.permute.xlu0 %1430
      %v1432 = vsel %vm628, %v1425, 0
      %v1434 = vsel %vm628, %v1427, 0
      %v1436 = vsel %vm628, %v1429, 0
      %v1438 = vsel %vm628, %v1431, 0
      %1440 = vmatprep.subr.mxu0 0.0
      %1441 = vmatpush1.xpose.msra.mxu0 %v1436
      %1442 = vmatprep.subr.mxu0 0.0
      %1443 = vmatpush1.xpose.msra.mxu0 %v1438
      %1444 = vmatprep.subr.mxu0 0.0
      %1445 = vmatpush1.xpose.msra.mxu0 0.0
      %1446 = vmatprep.subr.mxu0 0.0
      %1447 = vmatpush1.xpose.msra.mxu0 0.0
      %1448 = vmatprep.subr.mxu0 0.0
      %1449 = vmatpush1.xpose.msra.mxu0 0.0
      %1450 = vmatprep.subr.mxu0 0.0
      %1451 = vmatpush1.xpose.msra.mxu0 0.0
      %1452 = vmatprep.subr.mxu0 0.0
      %1453 = vmatpush1.xpose.msra.mxu0 0.0
      %1454 = vmatprep.subr.mxu0 0.0
      %1455 = vmatpush1.xpose.msra.mxu0 0.0
      %1456 = vmatprep.subr.mxu0 0.0
      %1457 = vmatpush1.xpose.msra.mxu0 0.0
      %1458 = vmatprep.subr.mxu0 0.0
      %1459 = vmatpush1.xpose.msra.mxu0 0.0
      %1460 = vmatprep.subr.mxu0 0.0
      %1461 = vmatpush1.xpose.msra.mxu0 0.0
      %1462 = vmatprep.subr.mxu0 0.0
      %1463 = vmatpush1.xpose.msra.mxu0 0.0
      %1464 = vmatprep.subr.mxu0 0.0
      %1465 = vmatpush1.xpose.msra.mxu0 0.0
      %1466 = vmatprep.subr.mxu0 0.0
      %1467 = vmatpush1.xpose.msra.mxu0 0.0
      %1468 = vmatprep.subr.mxu0 0.0
      %1469 = vmatpush1.xpose.msra.mxu0 0.0
      %1470 = vmatprep.subr.mxu0 0.0
      %1471 = vmatpush1.xpose.msra.mxu0 0.0
      %1472 = vmatprep.subr.mxu0 0.0
      %1473 = vmatpush1.xpose.msra.mxu0 0.0
      %1474 = vmatprep.subr.mxu0 0.0
      %1475 = vmatpush1.xpose.msra.mxu0 0.0
      %1476 = vmatprep.subr.mxu0 0.0
      %1477 = vmatpush1.xpose.msra.mxu0 0.0
      %1478 = vmatprep.subr.mxu0 0.0
      %1479 = vmatpush1.xpose.msra.mxu0 0.0
      %1480 = vmatprep.subr.mxu0 0.0
      %1481 = vmatpush1.xpose.msra.mxu0 0.0
      %1482 = vmatprep.subr.mxu0 0.0
      %1483 = vmatpush1.xpose.msra.mxu0 0.0
      %1484 = vmatprep.subr.mxu0 0.0
      %1485 = vmatpush1.xpose.msra.mxu0 0.0
      %1486 = vmatprep.subr.mxu0 0.0
      %1487 = vmatpush1.xpose.msra.mxu0 0.0
      %1488 = vmatprep.subr.mxu0 0.0
      %1489 = vmatpush1.xpose.msra.mxu0 0.0
      %1490 = vmatprep.subr.mxu0 0.0
      %1491 = vmatpush1.xpose.msra.mxu0 0.0
      %1492 = vmatprep.subr.mxu0 0.0
      %1493 = vmatpush1.xpose.msra.mxu0 0.0
      %1494 = vmatprep.subr.mxu0 0.0
      %1495 = vmatpush1.xpose.msra.mxu0 0.0
      %1496 = vmatprep.subr.mxu0 0.0
      %1497 = vmatpush1.xpose.msra.mxu0 0.0
      %1498 = vmatprep.subr.mxu0 0.0
      %1499 = vmatpush1.xpose.msra.mxu0 0.0
      %1500 = vmatprep.subr.mxu0 0.0
      %1501 = vmatpush1.xpose.msra.mxu0 0.0
      %1502 = vmatprep.subr.mxu0 0.0
      %1503 = vmatpush1.xpose.msra.mxu0 0.0
      %1504 = vmatprep.mubr.f32.mxu0 0.0
      %1505 = vmatmul.mubr.f32.gmra.mrb[0].mxu0 %v1432
      %v1506 = vpop.f32.mrb[0].mxu0
      %v1507 = vadd.f32 %v592, %v1506
      %v1508 = vpop.f32.mrb[0].mxu0
      %1509 = vmatprep.mubr.f32.mxu0 0.0
      %1510 = vmatmul.mubr.f32.gmra.mrb[0].mxu0 %v1434
      %v1511 = vpop.f32.mrb[0].mxu0
      %v1512 = vadd.f32 %v593, %v1511
      %v1513 = vpop.f32.mrb[0].mxu0
      %1514 = vdwg.mxu0
      %1515 = vrot.lane.b32.xlu0 %v562, 120
      %v1516 = vpop.permute.xlu0 %1515
      %1517 = vrot.lane.b32.xlu0 %v567, 120
      %v1518 = vpop.permute.xlu0 %1517
      %1519 = vrot.lane.b32.xlu0 %v562, 88
      %v1520 = vpop.permute.xlu0 %1519
      %1521 = vrot.lane.b32.xlu0 %v567, 88
      %v1522 = vpop.permute.xlu0 %1521
      %v1523 = vsel %vm628, %v1516, 0
      %v1525 = vsel %vm628, %v1518, 0
      %v1527 = vsel %vm628, %v1520, 0
      %v1529 = vsel %vm628, %v1522, 0
      %1531 = vmatprep.subr.mxu0 0.0
      %1532 = vmatpush1.xpose.msra.mxu0 %v1527
      %1533 = vmatprep.subr.mxu0 0.0
      %1534 = vmatpush1.xpose.msra.mxu0 %v1529
      %1535 = vmatprep.subr.mxu0 0.0
      %1536 = vmatpush1.xpose.msra.mxu0 0.0
      %1537 = vmatprep.subr.mxu0 0.0
      %1538 = vmatpush1.xpose.msra.mxu0 0.0
      %1539 = vmatprep.subr.mxu0 0.0
      %1540 = vmatpush1.xpose.msra.mxu0 0.0
      %1541 = vmatprep.subr.mxu0 0.0
      %1542 = vmatpush1.xpose.msra.mxu0 0.0
      %1543 = vmatprep.subr.mxu0 0.0
      %1544 = vmatpush1.xpose.msra.mxu0 0.0
      %1545 = vmatprep.subr.mxu0 0.0
      %1546 = vmatpush1.xpose.msra.mxu0 0.0
      %1547 = vmatprep.subr.mxu0 0.0
      %1548 = vmatpush1.xpose.msra.mxu0 0.0
      %1549 = vmatprep.subr.mxu0 0.0
      %1550 = vmatpush1.xpose.msra.mxu0 0.0
      %1551 = vmatprep.subr.mxu0 0.0
      %1552 = vmatpush1.xpose.msra.mxu0 0.0
      %1553 = vmatprep.subr.mxu0 0.0
      %1554 = vmatpush1.xpose.msra.mxu0 0.0
      %1555 = vmatprep.subr.mxu0 0.0
      %1556 = vmatpush1.xpose.msra.mxu0 0.0
      %1557 = vmatprep.subr.mxu0 0.0
      %1558 = vmatpush1.xpose.msra.mxu0 0.0
      %1559 = vmatprep.subr.mxu0 0.0
      %1560 = vmatpush1.xpose.msra.mxu0 0.0
      %1561 = vmatprep.subr.mxu0 0.0
      %1562 = vmatpush1.xpose.msra.mxu0 0.0
      %1563 = vmatprep.subr.mxu0 0.0
      %1564 = vmatpush1.xpose.msra.mxu0 0.0
      %1565 = vmatprep.subr.mxu0 0.0
      %1566 = vmatpush1.xpose.msra.mxu0 0.0
      %1567 = vmatprep.subr.mxu0 0.0
      %1568 = vmatpush1.xpose.msra.mxu0 0.0
      %1569 = vmatprep.subr.mxu0 0.0
      %1570 = vmatpush1.xpose.msra.mxu0 0.0
      %1571 = vmatprep.subr.mxu0 0.0
      %1572 = vmatpush1.xpose.msra.mxu0 0.0
      %1573 = vmatprep.subr.mxu0 0.0
      %1574 = vmatpush1.xpose.msra.mxu0 0.0
      %1575 = vmatprep.subr.mxu0 0.0
      %1576 = vmatpush1.xpose.msra.mxu0 0.0
      %1577 = vmatprep.subr.mxu0 0.0
      %1578 = vmatpush1.xpose.msra.mxu0 0.0
      %1579 = vmatprep.subr.mxu0 0.0
      %1580 = vmatpush1.xpose.msra.mxu0 0.0
      %1581 = vmatprep.subr.mxu0 0.0
      %1582 = vmatpush1.xpose.msra.mxu0 0.0
      %1583 = vmatprep.subr.mxu0 0.0
      %1584 = vmatpush1.xpose.msra.mxu0 0.0
      %1585 = vmatprep.subr.mxu0 0.0
      %1586 = vmatpush1.xpose.msra.mxu0 0.0
      %1587 = vmatprep.subr.mxu0 0.0
      %1588 = vmatpush1.xpose.msra.mxu0 0.0
      %1589 = vmatprep.subr.mxu0 0.0
      %1590 = vmatpush1.xpose.msra.mxu0 0.0
      %1591 = vmatprep.subr.mxu0 0.0
      %1592 = vmatpush1.xpose.msra.mxu0 0.0
      %1593 = vmatprep.subr.mxu0 0.0
      %1594 = vmatpush1.xpose.msra.mxu0 0.0
      %1595 = vmatprep.mubr.f32.mxu0 0.0
      %1596 = vmatmul.mubr.f32.gmra.mrb[0].mxu0 %v1523
      %v1597 = vpop.f32.mrb[0].mxu0
      %v1598 = vadd.f32 %v600, %v1597
      %v1599 = vpop.f32.mrb[0].mxu0
      %1600 = vmatprep.mubr.f32.mxu0 0.0
      %1601 = vmatmul.mubr.f32.gmra.mrb[0].mxu0 %v1525
      %v1602 = vpop.f32.mrb[0].mxu0
      %v1603 = vadd.f32 %v601, %v1602
      %v1604 = vpop.f32.mrb[0].mxu0
      %1605 = vdwg.mxu0
      %1606 = vrot.lane.b32.xlu0 %v572, 120
      %v1607 = vpop.permute.xlu0 %1606
      %1608 = vrot.lane.b32.xlu0 %v577, 120
      %v1609 = vpop.permute.xlu0 %1608
      %1610 = vrot.lane.b32.xlu0 %v572, 88
      %v1611 = vpop.permute.xlu0 %1610
      %1612 = vrot.lane.b32.xlu0 %v577, 88
      %v1613 = vpop.permute.xlu0 %1612
      %v1614 = vsel %vm628, %v1607, 0
      %v1616 = vsel %vm628, %v1609, 0
      %v1618 = vsel %vm628, %v1611, 0
      %v1620 = vsel %vm628, %v1613, 0
      %1622 = vmatprep.subr.mxu0 0.0
      %1623 = vmatpush1.xpose.msra.mxu0 %v1618
      %1624 = vmatprep.subr.mxu0 0.0
      %1625 = vmatpush1.xpose.msra.mxu0 %v1620
      %1626 = vmatprep.subr.mxu0 0.0
      %1627 = vmatpush1.xpose.msra.mxu0 0.0
      %1628 = vmatprep.subr.mxu0 0.0
      %1629 = vmatpush1.xpose.msra.mxu0 0.0
      %1630 = vmatprep.subr.mxu0 0.0
      %1631 = vmatpush1.xpose.msra.mxu0 0.0
      %1632 = vmatprep.subr.mxu0 0.0
      %1633 = vmatpush1.xpose.msra.mxu0 0.0
      %1634 = vmatprep.subr.mxu0 0.0
      %1635 = vmatpush1.xpose.msra.mxu0 0.0
      %1636 = vmatprep.subr.mxu0 0.0
      %1637 = vmatpush1.xpose.msra.mxu0 0.0
      %1638 = vmatprep.subr.mxu0 0.0
      %1639 = vmatpush1.xpose.msra.mxu0 0.0
      %1640 = vmatprep.subr.mxu0 0.0
      %1641 = vmatpush1.xpose.msra.mxu0 0.0
      %1642 = vmatprep.subr.mxu0 0.0
      %1643 = vmatpush1.xpose.msra.mxu0 0.0
      %1644 = vmatprep.subr.mxu0 0.0
      %1645 = vmatpush1.xpose.msra.mxu0 0.0
      %1646 = vmatprep.subr.mxu0 0.0
      %1647 = vmatpush1.xpose.msra.mxu0 0.0
      %1648 = vmatprep.subr.mxu0 0.0
      %1649 = vmatpush1.xpose.msra.mxu0 0.0
      %1650 = vmatprep.subr.mxu0 0.0
      %1651 = vmatpush1.xpose.msra.mxu0 0.0
      %1652 = vmatprep.subr.mxu0 0.0
      %1653 = vmatpush1.xpose.msra.mxu0 0.0
      %1654 = vmatprep.subr.mxu0 0.0
      %1655 = vmatpush1.xpose.msra.mxu0 0.0
      %1656 = vmatprep.subr.mxu0 0.0
      %1657 = vmatpush1.xpose.msra.mxu0 0.0
      %1658 = vmatprep.subr.mxu0 0.0
      %1659 = vmatpush1.xpose.msra.mxu0 0.0
      %1660 = vmatprep.subr.mxu0 0.0
      %1661 = vmatpush1.xpose.msra.mxu0 0.0
      %1662 = vmatprep.subr.mxu0 0.0
      %1663 = vmatpush1.xpose.msra.mxu0 0.0
      %1664 = vmatprep.subr.mxu0 0.0
      %1665 = vmatpush1.xpose.msra.mxu0 0.0
      %1666 = vmatprep.subr.mxu0 0.0
      %1667 = vmatpush1.xpose.msra.mxu0 0.0
      %1668 = vmatprep.subr.mxu0 0.0
      %1669 = vmatpush1.xpose.msra.mxu0 0.0
      %1670 = vmatprep.subr.mxu0 0.0
      %1671 = vmatpush1.xpose.msra.mxu0 0.0
      %1672 = vmatprep.subr.mxu0 0.0
      %1673 = vmatpush1.xpose.msra.mxu0 0.0
      %1674 = vmatprep.subr.mxu0 0.0
      %1675 = vmatpush1.xpose.msra.mxu0 0.0
      %1676 = vmatprep.subr.mxu0 0.0
      %1677 = vmatpush1.xpose.msra.mxu0 0.0
      %1678 = vmatprep.subr.mxu0 0.0
      %1679 = vmatpush1.xpose.msra.mxu0 0.0
      %1680 = vmatprep.subr.mxu0 0.0
      %1681 = vmatpush1.xpose.msra.mxu0 0.0
      %1682 = vmatprep.subr.mxu0 0.0
      %1683 = vmatpush1.xpose.msra.mxu0 0.0
      %1684 = vmatprep.subr.mxu0 0.0
      %1685 = vmatpush1.xpose.msra.mxu0 0.0
      %1686 = vmatprep.mubr.f32.mxu0 0.0
      %1687 = vmatmul.mubr.f32.gmra.mrb[0].mxu0 %v1614
      %v1688 = vpop.f32.mrb[0].mxu0
      %v1689 = vadd.f32 %v608, %v1688
      %v1690 = vpop.f32.mrb[0].mxu0
      %1691 = vmatprep.mubr.f32.mxu0 0.0
      %1692 = vmatmul.mubr.f32.gmra.mrb[0].mxu0 %v1616
      %v1693 = vpop.f32.mrb[0].mxu0
      %v1694 = vadd.f32 %v609, %v1693
      %v1695 = vpop.f32.mrb[0].mxu0
      %1696 = vdwg.mxu0
      %1697 = vrot.lane.b32.xlu0 %v582, 120
      %v1698 = vpop.permute.xlu0 %1697
      %1699 = vrot.lane.b32.xlu0 %v587, 120
      %v1700 = vpop.permute.xlu0 %1699
      %1701 = vrot.lane.b32.xlu0 %v582, 88
      %v1702 = vpop.permute.xlu0 %1701
      %1703 = vrot.lane.b32.xlu0 %v587, 88
      %v1704 = vpop.permute.xlu0 %1703
      %v1705 = vsel %vm628, %v1698, 0
      %v1707 = vsel %vm628, %v1700, 0
      %v1709 = vsel %vm628, %v1702, 0
      %v1711 = vsel %vm628, %v1704, 0
      %1713 = vmatprep.subr.mxu0 0.0
      %1714 = vmatpush1.xpose.msra.mxu0 %v1709
      %1715 = vmatprep.subr.mxu0 0.0
      %1716 = vmatpush1.xpose.msra.mxu0 %v1711
      %1717 = vmatprep.subr.mxu0 0.0
      %1718 = vmatpush1.xpose.msra.mxu0 0.0
      %1719 = vmatprep.subr.mxu0 0.0
      %1720 = vmatpush1.xpose.msra.mxu0 0.0
      %1721 = vmatprep.subr.mxu0 0.0
      %1722 = vmatpush1.xpose.msra.mxu0 0.0
      %1723 = vmatprep.subr.mxu0 0.0
      %1724 = vmatpush1.xpose.msra.mxu0 0.0
      %1725 = vmatprep.subr.mxu0 0.0
      %1726 = vmatpush1.xpose.msra.mxu0 0.0
      %1727 = vmatprep.subr.mxu0 0.0
      %1728 = vmatpush1.xpose.msra.mxu0 0.0
      %1729 = vmatprep.subr.mxu0 0.0
      %1730 = vmatpush1.xpose.msra.mxu0 0.0
      %1731 = vmatprep.subr.mxu0 0.0
      %1732 = vmatpush1.xpose.msra.mxu0 0.0
      %1733 = vmatprep.subr.mxu0 0.0
      %1734 = vmatpush1.xpose.msra.mxu0 0.0
      %1735 = vmatprep.subr.mxu0 0.0
      %1736 = vmatpush1.xpose.msra.mxu0 0.0
      %1737 = vmatprep.subr.mxu0 0.0
      %1738 = vmatpush1.xpose.msra.mxu0 0.0
      %1739 = vmatprep.subr.mxu0 0.0
      %1740 = vmatpush1.xpose.msra.mxu0 0.0
      %1741 = vmatprep.subr.mxu0 0.0
      %1742 = vmatpush1.xpose.msra.mxu0 0.0
      %1743 = vmatprep.subr.mxu0 0.0
      %1744 = vmatpush1.xpose.msra.mxu0 0.0
      %1745 = vmatprep.subr.mxu0 0.0
      %1746 = vmatpush1.xpose.msra.mxu0 0.0
      %1747 = vmatprep.subr.mxu0 0.0
      %1748 = vmatpush1.xpose.msra.mxu0 0.0
      %1749 = vmatprep.subr.mxu0 0.0
      %1750 = vmatpush1.xpose.msra.mxu0 0.0
      %1751 = vmatprep.subr.mxu0 0.0
      %1752 = vmatpush1.xpose.msra.mxu0 0.0
      %1753 = vmatprep.subr.mxu0 0.0
      %1754 = vmatpush1.xpose.msra.mxu0 0.0
      %1755 = vmatprep.subr.mxu0 0.0
      %1756 = vmatpush1.xpose.msra.mxu0 0.0
      %1757 = vmatprep.subr.mxu0 0.0
      %1758 = vmatpush1.xpose.msra.mxu0 0.0
      %1759 = vmatprep.subr.mxu0 0.0
      %1760 = vmatpush1.xpose.msra.mxu0 0.0
      %1761 = vmatprep.subr.mxu0 0.0
      %1762 = vmatpush1.xpose.msra.mxu0 0.0
      %1763 = vmatprep.subr.mxu0 0.0
      %1764 = vmatpush1.xpose.msra.mxu0 0.0
      %1765 = vmatprep.subr.mxu0 0.0
      %1766 = vmatpush1.xpose.msra.mxu0 0.0
      %1767 = vmatprep.subr.mxu0 0.0
      %1768 = vmatpush1.xpose.msra.mxu0 0.0
      %1769 = vmatprep.subr.mxu0 0.0
      %1770 = vmatpush1.xpose.msra.mxu0 0.0
      %1771 = vmatprep.subr.mxu0 0.0
      %1772 = vmatpush1.xpose.msra.mxu0 0.0
      %1773 = vmatprep.subr.mxu0 0.0
      %1774 = vmatpush1.xpose.msra.mxu0 0.0
      %1775 = vmatprep.subr.mxu0 0.0
      %1776 = vmatpush1.xpose.msra.mxu0 0.0
      %1777 = vmatprep.mubr.f32.mxu0 0.0
      %1778 = vmatmul.mubr.f32.gmra.mrb[0].mxu0 %v1705
      %v1779 = vpop.f32.mrb[0].mxu0
      %v1780 = vadd.f32 %v616, %v1779
      %v1781 = vpop.f32.mrb[0].mxu0
      %1782 = vmatprep.mubr.f32.mxu0 0.0
      %1783 = vmatmul.mubr.f32.gmra.mrb[0].mxu0 %v1707
      %v1784 = vpop.f32.mrb[0].mxu0
      %v1785 = vadd.f32 %v617, %v1784
      %v1786 = vpop.f32.mrb[0].mxu0
      %1787 = vdwg.mxu0
      %v1788 = vsel %vm979, %v1507, -inf
      %1789 = vmax.xlane.f32.xlu0 %v1788
      %v1790 = vpop.xlane.xlu0 %1789
      %v1791 = vsel %vm979, %v1512, -inf
      %1792 = vmax.xlane.f32.xlu0 %v1791
      %v1793 = vpop.xlane.xlu0 %1792
      %v1794 = vsel %vm979, %v1598, -inf
      %1795 = vmax.xlane.f32.xlu0 %v1794
      %v1796 = vpop.xlane.xlu0 %1795
      %v1797 = vsel %vm979, %v1603, -inf
      %1798 = vmax.xlane.f32.xlu0 %v1797
      %v1799 = vpop.xlane.xlu0 %1798
      %v1800 = vsel %vm979, %v1689, -inf
      %1801 = vmax.xlane.f32.xlu0 %v1800
      %v1802 = vpop.xlane.xlu0 %1801
      %v1803 = vsel %vm979, %v1694, -inf
      %1804 = vmax.xlane.f32.xlu0 %v1803
      %v1805 = vpop.xlane.xlu0 %1804
      %v1806 = vsel %vm979, %v1780, -inf
      %1807 = vmax.xlane.f32.xlu0 %v1806
      %v1808 = vpop.xlane.xlu0 %1807
      %v1809 = vsel %vm979, %v1785, -inf
      %1810 = vmax.xlane.f32.xlu0 %v1809
      %v1811 = vpop.xlane.xlu0 %1810
      %v1812 = vsub.f32 %v1507, %v1790
      %v1813 = vsub.f32 %v1512, %v1793
      %v1814 = vsub.f32 %v1598, %v1796
      %v1815 = vsub.f32 %v1603, %v1799
      %v1816 = vsub.f32 %v1689, %v1802
      %v1817 = vsub.f32 %v1694, %v1805
      %v1818 = vsub.f32 %v1780, %v1808
      %v1819 = vsub.f32 %v1785, %v1811
      %v1820 = vmul.f32 %v1812, 1.442695
      %v1821 = vpow.pop %v1820
      %v1822 = vmul.f32 %v1813, 1.442695
      %v1823 = vpow.pop %v1822
      %v1824 = vmul.f32 %v1814, 1.442695
      %v1825 = vpow.pop %v1824
      %v1826 = vmul.f32 %v1815, 1.442695
      %v1827 = vpow.pop %v1826
      %v1828 = vmul.f32 %v1816, 1.442695
      %v1829 = vpow.pop %v1828
      %v1830 = vmul.f32 %v1817, 1.442695
      %v1831 = vpow.pop %v1830
      %v1832 = vmul.f32 %v1818, 1.442695
      %v1833 = vpow.pop %v1832
      %v1834 = vmul.f32 %v1819, 1.442695
      %v1835 = vpow.pop %v1834
      %v1836 = vsel %vm979, %v1821, 0.0
      %1837 = vadd.xlane.f32.xlu0 %v1836
      %v1838 = vpop.xlane.xlu0 %1837
      %v1839 = vsel %vm979, %v1823, 0.0
      %1840 = vadd.xlane.f32.xlu0 %v1839
      %v1841 = vpop.xlane.xlu0 %1840
      %v1842 = vsel %vm979, %v1825, 0.0
      %1843 = vadd.xlane.f32.xlu0 %v1842
      %v1844 = vpop.xlane.xlu0 %1843
      %v1845 = vsel %vm979, %v1827, 0.0
      %1846 = vadd.xlane.f32.xlu0 %v1845
      %v1847 = vpop.xlane.xlu0 %1846
      %v1848 = vsel %vm979, %v1829, 0.0
      %1849 = vadd.xlane.f32.xlu0 %v1848
      %v1850 = vpop.xlane.xlu0 %1849
      %v1851 = vsel %vm979, %v1831, 0.0
      %1852 = vadd.xlane.f32.xlu0 %v1851
      %v1853 = vpop.xlane.xlu0 %1852
      %v1854 = vsel %vm979, %v1833, 0.0
      %1855 = vadd.xlane.f32.xlu0 %v1854
      %v1856 = vpop.xlane.xlu0 %1855
      %v1857 = vsel %vm979, %v1835, 0.0
      %1858 = vadd.xlane.f32.xlu0 %v1857
      %v1859 = vpop.xlane.xlu0 %1858
      %v1860 = vrcp.pop %v1838
      %v1861 = vrcp.pop %v1841
      %v1862 = vrcp.pop %v1844
      %v1863 = vrcp.pop %v1847
      %v1864 = vrcp.pop %v1850
      %v1865 = vrcp.pop %v1853
      %v1866 = vrcp.pop %v1856
      %v1867 = vrcp.pop %v1859
      %v1868 = vmul.f32 %v1821, %v1860
      %v1869 = vmul.f32 %v1823, %v1861
      %v1870 = vmul.f32 %v1825, %v1862
      %v1871 = vmul.f32 %v1827, %v1863
      %v1872 = vmul.f32 %v1829, %v1864
      %v1873 = vmul.f32 %v1831, %v1865
      %v1874 = vmul.f32 %v1833, %v1866
      %v1875 = vmul.f32 %v1835, %v1867
      %1876 = vrot.lane.b32.xlu0 %v552, 56
      %v1877 = vpop.permute.xlu0 %1876
      %1878 = vrot.lane.b32.xlu0 %v557, 56
      %v1879 = vpop.permute.xlu0 %1878
      %v1883 = vsel %vm979, %v1868, 0
      %v1886 = vsel %vm979, %v1869, 0
      %1888 = vmatprep.subr.mxu0 0.0
      %1889 = vmatpush1.msra.mxu0 %v1877
      %1890 = vmatprep.subr.mxu0 0.0
      %1891 = vmatpush1.msra.mxu0 %v1879
      %1892 = vmatprep.subr.mxu0 0.0
      %1893 = vmatpush1.msra.mxu0 0.0
      %1894 = vmatprep.subr.mxu0 0.0
      %1895 = vmatpush1.msra.mxu0 0.0
      %1896 = vmatprep.subr.mxu0 0.0
      %1897 = vmatpush1.msra.mxu0 0.0
      %1898 = vmatprep.subr.mxu0 0.0
      %1899 = vmatpush1.msra.mxu0 0.0
      %1900 = vmatprep.subr.mxu0 0.0
      %1901 = vmatpush1.msra.mxu0 0.0
      %1902 = vmatprep.subr.mxu0 0.0
      %1903 = vmatpush1.msra.mxu0 0.0
      %1904 = vmatprep.subr.mxu0 0.0
      %1905 = vmatpush1.msra.mxu0 0.0
      %1906 = vmatprep.subr.mxu0 0.0
      %1907 = vmatpush1.msra.mxu0 0.0
      %1908 = vmatprep.subr.mxu0 0.0
      %1909 = vmatpush1.msra.mxu0 0.0
      %1910 = vmatprep.subr.mxu0 0.0
      %1911 = vmatpush1.msra.mxu0 0.0
      %1912 = vmatprep.subr.mxu0 0.0
      %1913 = vmatpush1.msra.mxu0 0.0
      %1914 = vmatprep.subr.mxu0 0.0
      %1915 = vmatpush1.msra.mxu0 0.0
      %1916 = vmatprep.subr.mxu0 0.0
      %1917 = vmatpush1.msra.mxu0 0.0
      %1918 = vmatprep.subr.mxu0 0.0
      %1919 = vmatpush1.msra.mxu0 0.0
      %1920 = vmatprep.subr.mxu0 0.0
      %1921 = vmatpush1.msra.mxu0 0.0
      %1922 = vmatprep.subr.mxu0 0.0
      %1923 = vmatpush1.msra.mxu0 0.0
      %1924 = vmatprep.subr.mxu0 0.0
      %1925 = vmatpush1.msra.mxu0 0.0
      %1926 = vmatprep.subr.mxu0 0.0
      %1927 = vmatpush1.msra.mxu0 0.0
      %1928 = vmatprep.subr.mxu0 0.0
      %1929 = vmatpush1.msra.mxu0 0.0
      %1930 = vmatprep.subr.mxu0 0.0
      %1931 = vmatpush1.msra.mxu0 0.0
      %1932 = vmatprep.subr.mxu0 0.0
      %1933 = vmatpush1.msra.mxu0 0.0
      %1934 = vmatprep.subr.mxu0 0.0
      %1935 = vmatpush1.msra.mxu0 0.0
      %1936 = vmatprep.subr.mxu0 0.0
      %1937 = vmatpush1.msra.mxu0 0.0
      %1938 = vmatprep.subr.mxu0 0.0
      %1939 = vmatpush1.msra.mxu0 0.0
      %1940 = vmatprep.subr.mxu0 0.0
      %1941 = vmatpush1.msra.mxu0 0.0
      %1942 = vmatprep.subr.mxu0 0.0
      %1943 = vmatpush1.msra.mxu0 0.0
      %1944 = vmatprep.subr.mxu0 0.0
      %1945 = vmatpush1.msra.mxu0 0.0
      %1946 = vmatprep.subr.mxu0 0.0
      %1947 = vmatpush1.msra.mxu0 0.0
      %1948 = vmatprep.subr.mxu0 0.0
      %1949 = vmatpush1.msra.mxu0 0.0
      %1950 = vmatprep.subr.mxu0 0.0
      %1951 = vmatpush1.msra.mxu0 0.0
      %1952 = vmatprep.mubr.f32.mxu0 0.0
      %1953 = vmatmul.mubr.f32.gmra.mrb[0].mxu0 %v1883
      %v1954 = vpop.f32.mrb[0].mxu0
      %v1955 = vadd.f32 0.0, %v1954
      %v1956 = vpop.f32.mrb[0].mxu0
      %1957 = vmatprep.mubr.f32.mxu0 0.0
      %1958 = vmatmul.mubr.f32.gmra.mrb[0].mxu0 %v1886
      %v1959 = vpop.f32.mrb[0].mxu0
      %v1960 = vadd.f32 0.0, %v1959
      %v1961 = vpop.f32.mrb[0].mxu0
      %1962 = vdwg.mxu0
      %1963 = vrot.lane.b32.xlu0 %v562, 56
      %v1964 = vpop.permute.xlu0 %1963
      %1965 = vrot.lane.b32.xlu0 %v567, 56
      %v1966 = vpop.permute.xlu0 %1965
      %v1970 = vsel %vm979, %v1870, 0
      %v1973 = vsel %vm979, %v1871, 0
      %1975 = vmatprep.subr.mxu0 0.0
      %1976 = vmatpush1.msra.mxu0 %v1964
      %1977 = vmatprep.subr.mxu0 0.0
      %1978 = vmatpush1.msra.mxu0 %v1966
      %1979 = vmatprep.subr.mxu0 0.0
      %1980 = vmatpush1.msra.mxu0 0.0
      %1981 = vmatprep.subr.mxu0 0.0
      %1982 = vmatpush1.msra.mxu0 0.0
      %1983 = vmatprep.subr.mxu0 0.0
      %1984 = vmatpush1.msra.mxu0 0.0
      %1985 = vmatprep.subr.mxu0 0.0
      %1986 = vmatpush1.msra.mxu0 0.0
      %1987 = vmatprep.subr.mxu0 0.0
      %1988 = vmatpush1.msra.mxu0 0.0
      %1989 = vmatprep.subr.mxu0 0.0
      %1990 = vmatpush1.msra.mxu0 0.0
      %1991 = vmatprep.subr.mxu0 0.0
      %1992 = vmatpush1.msra.mxu0 0.0
      %1993 = vmatprep.subr.mxu0 0.0
      %1994 = vmatpush1.msra.mxu0 0.0
      %1995 = vmatprep.subr.mxu0 0.0
      %1996 = vmatpush1.msra.mxu0 0.0
      %1997 = vmatprep.subr.mxu0 0.0
      %1998 = vmatpush1.msra.mxu0 0.0
      %1999 = vmatprep.subr.mxu0 0.0
      %2000 = vmatpush1.msra.mxu0 0.0
      %2001 = vmatprep.subr.mxu0 0.0
      %2002 = vmatpush1.msra.mxu0 0.0
      %2003 = vmatprep.subr.mxu0 0.0
      %2004 = vmatpush1.msra.mxu0 0.0
      %2005 = vmatprep.subr.mxu0 0.0
      %2006 = vmatpush1.msra.mxu0 0.0
      %2007 = vmatprep.subr.mxu0 0.0
      %2008 = vmatpush1.msra.mxu0 0.0
      %2009 = vmatprep.subr.mxu0 0.0
      %2010 = vmatpush1.msra.mxu0 0.0
      %2011 = vmatprep.subr.mxu0 0.0
      %2012 = vmatpush1.msra.mxu0 0.0
      %2013 = vmatprep.subr.mxu0 0.0
      %2014 = vmatpush1.msra.mxu0 0.0
      %2015 = vmatprep.subr.mxu0 0.0
      %2016 = vmatpush1.msra.mxu0 0.0
      %2017 = vmatprep.subr.mxu0 0.0
      %2018 = vmatpush1.msra.mxu0 0.0
      %2019 = vmatprep.subr.mxu0 0.0
      %2020 = vmatpush1.msra.mxu0 0.0
      %2021 = vmatprep.subr.mxu0 0.0
      %2022 = vmatpush1.msra.mxu0 0.0
      %2023 = vmatprep.subr.mxu0 0.0
      %2024 = vmatpush1.msra.mxu0 0.0
      %2025 = vmatprep.subr.mxu0 0.0
      %2026 = vmatpush1.msra.mxu0 0.0
      %2027 = vmatprep.subr.mxu0 0.0
      %2028 = vmatpush1.msra.mxu0 0.0
      %2029 = vmatprep.subr.mxu0 0.0
      %2030 = vmatpush1.msra.mxu0 0.0
      %2031 = vmatprep.subr.mxu0 0.0
      %2032 = vmatpush1.msra.mxu0 0.0
      %2033 = vmatprep.subr.mxu0 0.0
      %2034 = vmatpush1.msra.mxu0 0.0
      %2035 = vmatprep.subr.mxu0 0.0
      %2036 = vmatpush1.msra.mxu0 0.0
      %2037 = vmatprep.subr.mxu0 0.0
      %2038 = vmatpush1.msra.mxu0 0.0
      %2039 = vmatprep.mubr.f32.mxu0 0.0
      %2040 = vmatmul.mubr.f32.gmra.mrb[0].mxu0 %v1970
      %v2041 = vpop.f32.mrb[0].mxu0
      %v2042 = vadd.f32 0.0, %v2041
      %v2043 = vpop.f32.mrb[0].mxu0
      %2044 = vmatprep.mubr.f32.mxu0 0.0
      %2045 = vmatmul.mubr.f32.gmra.mrb[0].mxu0 %v1973
      %v2046 = vpop.f32.mrb[0].mxu0
      %v2047 = vadd.f32 0.0, %v2046
      %v2048 = vpop.f32.mrb[0].mxu0
      %2049 = vdwg.mxu0
      %2050 = vrot.lane.b32.xlu0 %v572, 56
      %v2051 = vpop.permute.xlu0 %2050
      %2052 = vrot.lane.b32.xlu0 %v577, 56
      %v2053 = vpop.permute.xlu0 %2052
      %v2057 = vsel %vm979, %v1872, 0
      %v2060 = vsel %vm979, %v1873, 0
      %2062 = vmatprep.subr.mxu0 0.0
      %2063 = vmatpush1.msra.mxu0 %v2051
      %2064 = vmatprep.subr.mxu0 0.0
      %2065 = vmatpush1.msra.mxu0 %v2053
      %2066 = vmatprep.subr.mxu0 0.0
      %2067 = vmatpush1.msra.mxu0 0.0
      %2068 = vmatprep.subr.mxu0 0.0
      %2069 = vmatpush1.msra.mxu0 0.0
      %2070 = vmatprep.subr.mxu0 0.0
      %2071 = vmatpush1.msra.mxu0 0.0
      %2072 = vmatprep.subr.mxu0 0.0
      %2073 = vmatpush1.msra.mxu0 0.0
      %2074 = vmatprep.subr.mxu0 0.0
      %2075 = vmatpush1.msra.mxu0 0.0
      %2076 = vmatprep.subr.mxu0 0.0
      %2077 = vmatpush1.msra.mxu0 0.0
      %2078 = vmatprep.subr.mxu0 0.0
      %2079 = vmatpush1.msra.mxu0 0.0
      %2080 = vmatprep.subr.mxu0 0.0
      %2081 = vmatpush1.msra.mxu0 0.0
      %2082 = vmatprep.subr.mxu0 0.0
      %2083 = vmatpush1.msra.mxu0 0.0
      %2084 = vmatprep.subr.mxu0 0.0
      %2085 = vmatpush1.msra.mxu0 0.0
      %2086 = vmatprep.subr.mxu0 0.0
      %2087 = vmatpush1.msra.mxu0 0.0
      %2088 = vmatprep.subr.mxu0 0.0
      %2089 = vmatpush1.msra.mxu0 0.0
      %2090 = vmatprep.subr.mxu0 0.0
      %2091 = vmatpush1.msra.mxu0 0.0
      %2092 = vmatprep.subr.mxu0 0.0
      %2093 = vmatpush1.msra.mxu0 0.0
      %2094 = vmatprep.subr.mxu0 0.0
      %2095 = vmatpush1.msra.mxu0 0.0
      %2096 = vmatprep.subr.mxu0 0.0
      %2097 = vmatpush1.msra.mxu0 0.0
      %2098 = vmatprep.subr.mxu0 0.0
      %2099 = vmatpush1.msra.mxu0 0.0
      %2100 = vmatprep.subr.mxu0 0.0
      %2101 = vmatpush1.msra.mxu0 0.0
      %2102 = vmatprep.subr.mxu0 0.0
      %2103 = vmatpush1.msra.mxu0 0.0
      %2104 = vmatprep.subr.mxu0 0.0
      %2105 = vmatpush1.msra.mxu0 0.0
      %2106 = vmatprep.subr.mxu0 0.0
      %2107 = vmatpush1.msra.mxu0 0.0
      %2108 = vmatprep.subr.mxu0 0.0
      %2109 = vmatpush1.msra.mxu0 0.0
      %2110 = vmatprep.subr.mxu0 0.0
      %2111 = vmatpush1.msra.mxu0 0.0
      %2112 = vmatprep.subr.mxu0 0.0
      %2113 = vmatpush1.msra.mxu0 0.0
      %2114 = vmatprep.subr.mxu0 0.0
      %2115 = vmatpush1.msra.mxu0 0.0
      %2116 = vmatprep.subr.mxu0 0.0
      %2117 = vmatpush1.msra.mxu0 0.0
      %2118 = vmatprep.subr.mxu0 0.0
      %2119 = vmatpush1.msra.mxu0 0.0
      %2120 = vmatprep.subr.mxu0 0.0
      %2121 = vmatpush1.msra.mxu0 0.0
      %2122 = vmatprep.subr.mxu0 0.0
      %2123 = vmatpush1.msra.mxu0 0.0
      %2124 = vmatprep.subr.mxu0 0.0
      %2125 = vmatpush1.msra.mxu0 0.0
      %2126 = vmatprep.mubr.f32.mxu0 0.0
      %2127 = vmatmul.mubr.f32.gmra.mrb[0].mxu0 %v2057
      %v2128 = vpop.f32.mrb[0].mxu0
      %v2129 = vadd.f32 0.0, %v2128
      %v2130 = vpop.f32.mrb[0].mxu0
      %2131 = vmatprep.mubr.f32.mxu0 0.0
      %2132 = vmatmul.mubr.f32.gmra.mrb[0].mxu0 %v2060
      %v2133 = vpop.f32.mrb[0].mxu0
      %v2134 = vadd.f32 0.0, %v2133
      %v2135 = vpop.f32.mrb[0].mxu0
      %2136 = vdwg.mxu0
      %2137 = vrot.lane.b32.xlu0 %v582, 56
      %v2138 = vpop.permute.xlu0 %2137
      %2139 = vrot.lane.b32.xlu0 %v587, 56
      %v2140 = vpop.permute.xlu0 %2139
      %v2144 = vsel %vm979, %v1874, 0
      %v2147 = vsel %vm979, %v1875, 0
      %2149 = vmatprep.subr.mxu0 0.0
      %2150 = vmatpush1.msra.mxu0 %v2138
      %2151 = vmatprep.subr.mxu0 0.0
      %2152 = vmatpush1.msra.mxu0 %v2140
      %2153 = vmatprep.subr.mxu0 0.0
      %2154 = vmatpush1.msra.mxu0 0.0
      %2155 = vmatprep.subr.mxu0 0.0
      %2156 = vmatpush1.msra.mxu0 0.0
      %2157 = vmatprep.subr.mxu0 0.0
      %2158 = vmatpush1.msra.mxu0 0.0
      %2159 = vmatprep.subr.mxu0 0.0
      %2160 = vmatpush1.msra.mxu0 0.0
      %2161 = vmatprep.subr.mxu0 0.0
      %2162 = vmatpush1.msra.mxu0 0.0
      %2163 = vmatprep.subr.mxu0 0.0
      %2164 = vmatpush1.msra.mxu0 0.0
      %2165 = vmatprep.subr.mxu0 0.0
      %2166 = vmatpush1.msra.mxu0 0.0
      %2167 = vmatprep.subr.mxu0 0.0
      %2168 = vmatpush1.msra.mxu0 0.0
      %2169 = vmatprep.subr.mxu0 0.0
      %2170 = vmatpush1.msra.mxu0 0.0
      %2171 = vmatprep.subr.mxu0 0.0
      %2172 = vmatpush1.msra.mxu0 0.0
      %2173 = vmatprep.subr.mxu0 0.0
      %2174 = vmatpush1.msra.mxu0 0.0
      %2175 = vmatprep.subr.mxu0 0.0
      %2176 = vmatpush1.msra.mxu0 0.0
      %2177 = vmatprep.subr.mxu0 0.0
      %2178 = vmatpush1.msra.mxu0 0.0
      %2179 = vmatprep.subr.mxu0 0.0
      %2180 = vmatpush1.msra.mxu0 0.0
      %2181 = vmatprep.subr.mxu0 0.0
      %2182 = vmatpush1.msra.mxu0 0.0
      %2183 = vmatprep.subr.mxu0 0.0
      %2184 = vmatpush1.msra.mxu0 0.0
      %2185 = vmatprep.subr.mxu0 0.0
      %2186 = vmatpush1.msra.mxu0 0.0
      %2187 = vmatprep.subr.mxu0 0.0
      %2188 = vmatpush1.msra.mxu0 0.0
      %2189 = vmatprep.subr.mxu0 0.0
      %2190 = vmatpush1.msra.mxu0 0.0
      %2191 = vmatprep.subr.mxu0 0.0
      %2192 = vmatpush1.msra.mxu0 0.0
      %2193 = vmatprep.subr.mxu0 0.0
      %2194 = vmatpush1.msra.mxu0 0.0
      %2195 = vmatprep.subr.mxu0 0.0
      %2196 = vmatpush1.msra.mxu0 0.0
      %2197 = vmatprep.subr.mxu0 0.0
      %2198 = vmatpush1.msra.mxu0 0.0
      %2199 = vmatprep.subr.mxu0 0.0
      %2200 = vmatpush1.msra.mxu0 0.0
      %2201 = vmatprep.subr.mxu0 0.0
      %2202 = vmatpush1.msra.mxu0 0.0
      %2203 = vmatprep.subr.mxu0 0.0
      %2204 = vmatpush1.msra.mxu0 0.0
      %2205 = vmatprep.subr.mxu0 0.0
      %2206 = vmatpush1.msra.mxu0 0.0
      %2207 = vmatprep.subr.mxu0 0.0
      %2208 = vmatpush1.msra.mxu0 0.0
      %2209 = vmatprep.subr.mxu0 0.0
      %2210 = vmatpush1.msra.mxu0 0.0
      %2211 = vmatprep.subr.mxu0 0.0
      %2212 = vmatpush1.msra.mxu0 0.0
      %2213 = vmatprep.mubr.f32.mxu0 0.0
      %2214 = vmatmul.mubr.f32.gmra.mrb[0].mxu0 %v2144
      %v2215 = vpop.f32.mrb[0].mxu0
      %v2216 = vadd.f32 0.0, %v2215
      %v2217 = vpop.f32.mrb[0].mxu0
      %2218 = vmatprep.mubr.f32.mxu0 0.0
      %2219 = vmatmul.mubr.f32.gmra.mrb[0].mxu0 %v2147
      %v2220 = vpop.f32.mrb[0].mxu0
      %v2221 = vadd.f32 0.0, %v2220
      %v2222 = vpop.f32.mrb[0].mxu0
      %2223 = vdwg.mxu0
      %2232 = vrot.lane.b32.xlu0 %v1955, 8
      %v2233 = vpop.permute.xlu0 %2232
      %2234 = vrot.lane.b32.xlu0 %v1960, 8
      %v2235 = vpop.permute.xlu0 %2234
      %2236 = vrot.lane.b32.xlu0 %v2042, 8
      %v2237 = vpop.permute.xlu0 %2236
      %2238 = vrot.lane.b32.xlu0 %v2047, 8
      %v2239 = vpop.permute.xlu0 %2238
      %2240 = vrot.lane.b32.xlu0 %v2129, 8
      %v2241 = vpop.permute.xlu0 %2240
      %2242 = vrot.lane.b32.xlu0 %v2134, 8
      %v2243 = vpop.permute.xlu0 %2242
      %2244 = vrot.lane.b32.xlu0 %v2216, 8
      %v2245 = vpop.permute.xlu0 %2244
      %2246 = vrot.lane.b32.xlu0 %v2221, 8
      %v2247 = vpop.permute.xlu0 %2246
      %vm2256 = vcmask 130112
      %2257 = vst.msk [vmem:[#allocation2] sm:$0xff] %vm2256, %v2233
      %2258 = vst.msk [vmem:[#allocation2 + $0x8] sm:$0xff] %vm2256, %v2235
      %2259 = vst.msk [vmem:[#allocation2 + $0x10] sm:$0xff] %vm2256, %v2237
      %2260 = vst.msk [vmem:[#allocation2 + $0x18] sm:$0xff] %vm2256, %v2239
      %2261 = vst.msk [vmem:[#allocation2 + $0x20] sm:$0xff] %vm2256, %v2241
      %2262 = vst.msk [vmem:[#allocation2 + $0x28] sm:$0xff] %vm2256, %v2243
      %2263 = vst.msk [vmem:[#allocation2 + $0x30] sm:$0xff] %vm2256, %v2245
      %2264 = vst.msk [vmem:[#allocation2 + $0x38] sm:$0xff] %vm2256, %v2247
      %2265 = vrot.lane.b32.xlu0 %v552, 112
      %v2266 = vpop.permute.xlu0 %2265
      %2267 = vrot.lane.b32.xlu0 %v557, 112
      %v2268 = vpop.permute.xlu0 %2267
      %2269 = vrot.lane.b32.xlu0 %v552, 80
      %v2270 = vpop.permute.xlu0 %2269
      %2271 = vrot.lane.b32.xlu0 %v557, 80
      %v2272 = vpop.permute.xlu0 %2271
      %v2273 = vsel %vm628, %v2266, 0
      %v2275 = vsel %vm628, %v2268, 0
      %v2277 = vsel %vm628, %v2270, 0
      %v2279 = vsel %vm628, %v2272, 0
      %2281 = vmatprep.subr.mxu0 0.0
      %2282 = vmatpush1.xpose.msra.mxu0 %v2277
      %2283 = vmatprep.subr.mxu0 0.0
      %2284 = vmatpush1.xpose.msra.mxu0 %v2279
      %2285 = vmatprep.subr.mxu0 0.0
      %2286 = vmatpush1.xpose.msra.mxu0 0.0
      %2287 = vmatprep.subr.mxu0 0.0
      %2288 = vmatpush1.xpose.msra.mxu0 0.0
      %2289 = vmatprep.subr.mxu0 0.0
      %2290 = vmatpush1.xpose.msra.mxu0 0.0
      %2291 = vmatprep.subr.mxu0 0.0
      %2292 = vmatpush1.xpose.msra.mxu0 0.0
      %2293 = vmatprep.subr.mxu0 0.0
      %2294 = vmatpush1.xpose.msra.mxu0 0.0
      %2295 = vmatprep.subr.mxu0 0.0
      %2296 = vmatpush1.xpose.msra.mxu0 0.0
      %2297 = vmatprep.subr.mxu0 0.0
      %2298 = vmatpush1.xpose.msra.mxu0 0.0
      %2299 = vmatprep.subr.mxu0 0.0
      %2300 = vmatpush1.xpose.msra.mxu0 0.0
      %2301 = vmatprep.subr.mxu0 0.0
      %2302 = vmatpush1.xpose.msra.mxu0 0.0
      %2303 = vmatprep.subr.mxu0 0.0
      %2304 = vmatpush1.xpose.msra.mxu0 0.0
      %2305 = vmatprep.subr.mxu0 0.0
      %2306 = vmatpush1.xpose.msra.mxu0 0.0
      %2307 = vmatprep.subr.mxu0 0.0
      %2308 = vmatpush1.xpose.msra.mxu0 0.0
      %2309 = vmatprep.subr.mxu0 0.0
      %2310 = vmatpush1.xpose.msra.mxu0 0.0
      %2311 = vmatprep.subr.mxu0 0.0
      %2312 = vmatpush1.xpose.msra.mxu0 0.0
      %2313 = vmatprep.subr.mxu0 0.0
      %2314 = vmatpush1.xpose.msra.mxu0 0.0
      %2315 = vmatprep.subr.mxu0 0.0
      %2316 = vmatpush1.xpose.msra.mxu0 0.0
      %2317 = vmatprep.subr.mxu0 0.0
      %2318 = vmatpush1.xpose.msra.mxu0 0.0
      %2319 = vmatprep.subr.mxu0 0.0
      %2320 = vmatpush1.xpose.msra.mxu0 0.0
      %2321 = vmatprep.subr.mxu0 0.0
      %2322 = vmatpush1.xpose.msra.mxu0 0.0
      %2323 = vmatprep.subr.mxu0 0.0
      %2324 = vmatpush1.xpose.msra.mxu0 0.0
      %2325 = vmatprep.subr.mxu0 0.0
      %2326 = vmatpush1.xpose.msra.mxu0 0.0
      %2327 = vmatprep.subr.mxu0 0.0
      %2328 = vmatpush1.xpose.msra.mxu0 0.0
      %2329 = vmatprep.subr.mxu0 0.0
      %2330 = vmatpush1.xpose.msra.mxu0 0.0
      %2331 = vmatprep.subr.mxu0 0.0
      %2332 = vmatpush1.xpose.msra.mxu0 0.0
      %2333 = vmatprep.subr.mxu0 0.0
      %2334 = vmatpush1.xpose.msra.mxu0 0.0
      %2335 = vmatprep.subr.mxu0 0.0
      %2336 = vmatpush1.xpose.msra.mxu0 0.0
      %2337 = vmatprep.subr.mxu0 0.0
      %2338 = vmatpush1.xpose.msra.mxu0 0.0
      %2339 = vmatprep.subr.mxu0 0.0
      %2340 = vmatpush1.xpose.msra.mxu0 0.0
      %2341 = vmatprep.subr.mxu0 0.0
      %2342 = vmatpush1.xpose.msra.mxu0 0.0
      %2343 = vmatprep.subr.mxu0 0.0
      %2344 = vmatpush1.xpose.msra.mxu0 0.0
      %2345 = vmatprep.mubr.f32.mxu0 0.0
      %2346 = vmatmul.mubr.f32.gmra.mrb[0].mxu0 %v2273
      %v2347 = vpop.f32.mrb[0].mxu0
      %v2348 = vadd.f32 %v594, %v2347
      %v2349 = vpop.f32.mrb[0].mxu0
      %2350 = vmatprep.mubr.f32.mxu0 0.0
      %2351 = vmatmul.mubr.f32.gmra.mrb[0].mxu0 %v2275
      %v2352 = vpop.f32.mrb[0].mxu0
      %v2353 = vadd.f32 %v595, %v2352
      %v2354 = vpop.f32.mrb[0].mxu0
      %2355 = vdwg.mxu0
      %2356 = vrot.lane.b32.xlu0 %v562, 112
      %v2357 = vpop.permute.xlu0 %2356
      %2358 = vrot.lane.b32.xlu0 %v567, 112
      %v2359 = vpop.permute.xlu0 %2358
      %2360 = vrot.lane.b32.xlu0 %v562, 80
      %v2361 = vpop.permute.xlu0 %2360
      %2362 = vrot.lane.b32.xlu0 %v567, 80
      %v2363 = vpop.permute.xlu0 %2362
      %v2364 = vsel %vm628, %v2357, 0
      %v2366 = vsel %vm628, %v2359, 0
      %v2368 = vsel %vm628, %v2361, 0
      %v2370 = vsel %vm628, %v2363, 0
      %2372 = vmatprep.subr.mxu0 0.0
      %2373 = vmatpush1.xpose.msra.mxu0 %v2368
      %2374 = vmatprep.subr.mxu0 0.0
      %2375 = vmatpush1.xpose.msra.mxu0 %v2370
      %2376 = vmatprep.subr.mxu0 0.0
      %2377 = vmatpush1.xpose.msra.mxu0 0.0
      %2378 = vmatprep.subr.mxu0 0.0
      %2379 = vmatpush1.xpose.msra.mxu0 0.0
      %2380 = vmatprep.subr.mxu0 0.0
      %2381 = vmatpush1.xpose.msra.mxu0 0.0
      %2382 = vmatprep.subr.mxu0 0.0
      %2383 = vmatpush1.xpose.msra.mxu0 0.0
      %2384 = vmatprep.subr.mxu0 0.0
      %2385 = vmatpush1.xpose.msra.mxu0 0.0
      %2386 = vmatprep.subr.mxu0 0.0
      %2387 = vmatpush1.xpose.msra.mxu0 0.0
      %2388 = vmatprep.subr.mxu0 0.0
      %2389 = vmatpush1.xpose.msra.mxu0 0.0
      %2390 = vmatprep.subr.mxu0 0.0
      %2391 = vmatpush1.xpose.msra.mxu0 0.0
      %2392 = vmatprep.subr.mxu0 0.0
      %2393 = vmatpush1.xpose.msra.mxu0 0.0
      %2394 = vmatprep.subr.mxu0 0.0
      %2395 = vmatpush1.xpose.msra.mxu0 0.0
      %2396 = vmatprep.subr.mxu0 0.0
      %2397 = vmatpush1.xpose.msra.mxu0 0.0
      %2398 = vmatprep.subr.mxu0 0.0
      %2399 = vmatpush1.xpose.msra.mxu0 0.0
      %2400 = vmatprep.subr.mxu0 0.0
      %2401 = vmatpush1.xpose.msra.mxu0 0.0
      %2402 = vmatprep.subr.mxu0 0.0
      %2403 = vmatpush1.xpose.msra.mxu0 0.0
      %2404 = vmatprep.subr.mxu0 0.0
      %2405 = vmatpush1.xpose.msra.mxu0 0.0
      %2406 = vmatprep.subr.mxu0 0.0
      %2407 = vmatpush1.xpose.msra.mxu0 0.0
      %2408 = vmatprep.subr.mxu0 0.0
      %2409 = vmatpush1.xpose.msra.mxu0 0.0
      %2410 = vmatprep.subr.mxu0 0.0
      %2411 = vmatpush1.xpose.msra.mxu0 0.0
      %2412 = vmatprep.subr.mxu0 0.0
      %2413 = vmatpush1.xpose.msra.mxu0 0.0
      %2414 = vmatprep.subr.mxu0 0.0
      %2415 = vmatpush1.xpose.msra.mxu0 0.0
      %2416 = vmatprep.subr.mxu0 0.0
      %2417 = vmatpush1.xpose.msra.mxu0 0.0
      %2418 = vmatprep.subr.mxu0 0.0
      %2419 = vmatpush1.xpose.msra.mxu0 0.0
      %2420 = vmatprep.subr.mxu0 0.0
      %2421 = vmatpush1.xpose.msra.mxu0 0.0
      %2422 = vmatprep.subr.mxu0 0.0
      %2423 = vmatpush1.xpose.msra.mxu0 0.0
      %2424 = vmatprep.subr.mxu0 0.0
      %2425 = vmatpush1.xpose.msra.mxu0 0.0
      %2426 = vmatprep.subr.mxu0 0.0
      %2427 = vmatpush1.xpose.msra.mxu0 0.0
      %2428 = vmatprep.subr.mxu0 0.0
      %2429 = vmatpush1.xpose.msra.mxu0 0.0
      %2430 = vmatprep.subr.mxu0 0.0
      %2431 = vmatpush1.xpose.msra.mxu0 0.0
      %2432 = vmatprep.subr.mxu0 0.0
      %2433 = vmatpush1.xpose.msra.mxu0 0.0
      %2434 = vmatprep.subr.mxu0 0.0
      %2435 = vmatpush1.xpose.msra.mxu0 0.0
      %2436 = vmatprep.mubr.f32.mxu0 0.0
      %2437 = vmatmul.mubr.f32.gmra.mrb[0].mxu0 %v2364
      %v2438 = vpop.f32.mrb[0].mxu0
      %v2439 = vadd.f32 %v602, %v2438
      %v2440 = vpop.f32.mrb[0].mxu0
      %2441 = vmatprep.mubr.f32.mxu0 0.0
      %2442 = vmatmul.mubr.f32.gmra.mrb[0].mxu0 %v2366
      %v2443 = vpop.f32.mrb[0].mxu0
      %v2444 = vadd.f32 %v603, %v2443
      %v2445 = vpop.f32.mrb[0].mxu0
      %2446 = vdwg.mxu0
      %2447 = vrot.lane.b32.xlu0 %v572, 112
      %v2448 = vpop.permute.xlu0 %2447
      %2449 = vrot.lane.b32.xlu0 %v577, 112
      %v2450 = vpop.permute.xlu0 %2449
      %2451 = vrot.lane.b32.xlu0 %v572, 80
      %v2452 = vpop.permute.xlu0 %2451
      %2453 = vrot.lane.b32.xlu0 %v577, 80
      %v2454 = vpop.permute.xlu0 %2453
      %v2455 = vsel %vm628, %v2448, 0
      %v2457 = vsel %vm628, %v2450, 0
      %v2459 = vsel %vm628, %v2452, 0
      %v2461 = vsel %vm628, %v2454, 0
      %2463 = vmatprep.subr.mxu0 0.0
      %2464 = vmatpush1.xpose.msra.mxu0 %v2459
      %2465 = vmatprep.subr.mxu0 0.0
      %2466 = vmatpush1.xpose.msra.mxu0 %v2461
      %2467 = vmatprep.subr.mxu0 0.0
      %2468 = vmatpush1.xpose.msra.mxu0 0.0
      %2469 = vmatprep.subr.mxu0 0.0
      %2470 = vmatpush1.xpose.msra.mxu0 0.0
      %2471 = vmatprep.subr.mxu0 0.0
      %2472 = vmatpush1.xpose.msra.mxu0 0.0
      %2473 = vmatprep.subr.mxu0 0.0
      %2474 = vmatpush1.xpose.msra.mxu0 0.0
      %2475 = vmatprep.subr.mxu0 0.0
      %2476 = vmatpush1.xpose.msra.mxu0 0.0
      %2477 = vmatprep.subr.mxu0 0.0
      %2478 = vmatpush1.xpose.msra.mxu0 0.0
      %2479 = vmatprep.subr.mxu0 0.0
      %2480 = vmatpush1.xpose.msra.mxu0 0.0
      %2481 = vmatprep.subr.mxu0 0.0
      %2482 = vmatpush1.xpose.msra.mxu0 0.0
      %2483 = vmatprep.subr.mxu0 0.0
      %2484 = vmatpush1.xpose.msra.mxu0 0.0
      %2485 = vmatprep.subr.mxu0 0.0
      %2486 = vmatpush1.xpose.msra.mxu0 0.0
      %2487 = vmatprep.subr.mxu0 0.0
      %2488 = vmatpush1.xpose.msra.mxu0 0.0
      %2489 = vmatprep.subr.mxu0 0.0
      %2490 = vmatpush1.xpose.msra.mxu0 0.0
      %2491 = vmatprep.subr.mxu0 0.0
      %2492 = vmatpush1.xpose.msra.mxu0 0.0
      %2493 = vmatprep.subr.mxu0 0.0
      %2494 = vmatpush1.xpose.msra.mxu0 0.0
      %2495 = vmatprep.subr.mxu0 0.0
      %2496 = vmatpush1.xpose.msra.mxu0 0.0
      %2497 = vmatprep.subr.mxu0 0.0
      %2498 = vmatpush1.xpose.msra.mxu0 0.0
      %2499 = vmatprep.subr.mxu0 0.0
      %2500 = vmatpush1.xpose.msra.mxu0 0.0
      %2501 = vmatprep.subr.mxu0 0.0
      %2502 = vmatpush1.xpose.msra.mxu0 0.0
      %2503 = vmatprep.subr.mxu0 0.0
      %2504 = vmatpush1.xpose.msra.mxu0 0.0
      %2505 = vmatprep.subr.mxu0 0.0
      %2506 = vmatpush1.xpose.msra.mxu0 0.0
      %2507 = vmatprep.subr.mxu0 0.0
      %2508 = vmatpush1.xpose.msra.mxu0 0.0
      %2509 = vmatprep.subr.mxu0 0.0
      %2510 = vmatpush1.xpose.msra.mxu0 0.0
      %2511 = vmatprep.subr.mxu0 0.0
      %2512 = vmatpush1.xpose.msra.mxu0 0.0
      %2513 = vmatprep.subr.mxu0 0.0
      %2514 = vmatpush1.xpose.msra.mxu0 0.0
      %2515 = vmatprep.subr.mxu0 0.0
      %2516 = vmatpush1.xpose.msra.mxu0 0.0
      %2517 = vmatprep.subr.mxu0 0.0
      %2518 = vmatpush1.xpose.msra.mxu0 0.0
      %2519 = vmatprep.subr.mxu0 0.0
      %2520 = vmatpush1.xpose.msra.mxu0 0.0
      %2521 = vmatprep.subr.mxu0 0.0
      %2522 = vmatpush1.xpose.msra.mxu0 0.0
      %2523 = vmatprep.subr.mxu0 0.0
      %2524 = vmatpush1.xpose.msra.mxu0 0.0
      %2525 = vmatprep.subr.mxu0 0.0
      %2526 = vmatpush1.xpose.msra.mxu0 0.0
      %2527 = vmatprep.mubr.f32.mxu0 0.0
      %2528 = vmatmul.mubr.f32.gmra.mrb[0].mxu0 %v2455
      %v2529 = vpop.f32.mrb[0].mxu0
      %v2530 = vadd.f32 %v610, %v2529
      %v2531 = vpop.f32.mrb[0].mxu0
      %2532 = vmatprep.mubr.f32.mxu0 0.0
      %2533 = vmatmul.mubr.f32.gmra.mrb[0].mxu0 %v2457
      %v2534 = vpop.f32.mrb[0].mxu0
      %v2535 = vadd.f32 %v611, %v2534
      %v2536 = vpop.f32.mrb[0].mxu0
      %2537 = vdwg.mxu0
      %2538 = vrot.lane.b32.xlu0 %v582, 112
      %v2539 = vpop.permute.xlu0 %2538
      %2540 = vrot.lane.b32.xlu0 %v587, 112
      %v2541 = vpop.permute.xlu0 %2540
      %2542 = vrot.lane.b32.xlu0 %v582, 80
      %v2543 = vpop.permute.xlu0 %2542
      %2544 = vrot.lane.b32.xlu0 %v587, 80
      %v2545 = vpop.permute.xlu0 %2544
      %v2546 = vsel %vm628, %v2539, 0
      %v2548 = vsel %vm628, %v2541, 0
      %v2550 = vsel %vm628, %v2543, 0
      %v2552 = vsel %vm628, %v2545, 0
      %2554 = vmatprep.subr.mxu0 0.0
      %2555 = vmatpush1.xpose.msra.mxu0 %v2550
      %2556 = vmatprep.subr.mxu0 0.0
      %2557 = vmatpush1.xpose.msra.mxu0 %v2552
      %2558 = vmatprep.subr.mxu0 0.0
      %2559 = vmatpush1.xpose.msra.mxu0 0.0
      %2560 = vmatprep.subr.mxu0 0.0
      %2561 = vmatpush1.xpose.msra.mxu0 0.0
      %2562 = vmatprep.subr.mxu0 0.0
      %2563 = vmatpush1.xpose.msra.mxu0 0.0
      %2564 = vmatprep.subr.mxu0 0.0
      %2565 = vmatpush1.xpose.msra.mxu0 0.0
      %2566 = vmatprep.subr.mxu0 0.0
      %2567 = vmatpush1.xpose.msra.mxu0 0.0
      %2568 = vmatprep.subr.mxu0 0.0
      %2569 = vmatpush1.xpose.msra.mxu0 0.0
      %2570 = vmatprep.subr.mxu0 0.0
      %2571 = vmatpush1.xpose.msra.mxu0 0.0
      %2572 = vmatprep.subr.mxu0 0.0
      %2573 = vmatpush1.xpose.msra.mxu0 0.0
      %2574 = vmatprep.subr.mxu0 0.0
      %2575 = vmatpush1.xpose.msra.mxu0 0.0
      %2576 = vmatprep.subr.mxu0 0.0
      %2577 = vmatpush1.xpose.msra.mxu0 0.0
      %2578 = vmatprep.subr.mxu0 0.0
      %2579 = vmatpush1.xpose.msra.mxu0 0.0
      %2580 = vmatprep.subr.mxu0 0.0
      %2581 = vmatpush1.xpose.msra.mxu0 0.0
      %2582 = vmatprep.subr.mxu0 0.0
      %2583 = vmatpush1.xpose.msra.mxu0 0.0
      %2584 = vmatprep.subr.mxu0 0.0
      %2585 = vmatpush1.xpose.msra.mxu0 0.0
      %2586 = vmatprep.subr.mxu0 0.0
      %2587 = vmatpush1.xpose.msra.mxu0 0.0
      %2588 = vmatprep.subr.mxu0 0.0
      %2589 = vmatpush1.xpose.msra.mxu0 0.0
      %2590 = vmatprep.subr.mxu0 0.0
      %2591 = vmatpush1.xpose.msra.mxu0 0.0
      %2592 = vmatprep.subr.mxu0 0.0
      %2593 = vmatpush1.xpose.msra.mxu0 0.0
      %2594 = vmatprep.subr.mxu0 0.0
      %2595 = vmatpush1.xpose.msra.mxu0 0.0
      %2596 = vmatprep.subr.mxu0 0.0
      %2597 = vmatpush1.xpose.msra.mxu0 0.0
      %2598 = vmatprep.subr.mxu0 0.0
      %2599 = vmatpush1.xpose.msra.mxu0 0.0
      %2600 = vmatprep.subr.mxu0 0.0
      %2601 = vmatpush1.xpose.msra.mxu0 0.0
      %2602 = vmatprep.subr.mxu0 0.0
      %2603 = vmatpush1.xpose.msra.mxu0 0.0
      %2604 = vmatprep.subr.mxu0 0.0
      %2605 = vmatpush1.xpose.msra.mxu0 0.0
      %2606 = vmatprep.subr.mxu0 0.0
      %2607 = vmatpush1.xpose.msra.mxu0 0.0
      %2608 = vmatprep.subr.mxu0 0.0
      %2609 = vmatpush1.xpose.msra.mxu0 0.0
      %2610 = vmatprep.subr.mxu0 0.0
      %2611 = vmatpush1.xpose.msra.mxu0 0.0
      %2612 = vmatprep.subr.mxu0 0.0
      %2613 = vmatpush1.xpose.msra.mxu0 0.0
      %2614 = vmatprep.subr.mxu0 0.0
      %2615 = vmatpush1.xpose.msra.mxu0 0.0
      %2616 = vmatprep.subr.mxu0 0.0
      %2617 = vmatpush1.xpose.msra.mxu0 0.0
      %2618 = vmatprep.mubr.f32.mxu0 0.0
      %2619 = vmatmul.mubr.f32.gmra.mrb[0].mxu0 %v2546
      %v2620 = vpop.f32.mrb[0].mxu0
      %v2621 = vadd.f32 %v618, %v2620
      %v2622 = vpop.f32.mrb[0].mxu0
      %2623 = vmatprep.mubr.f32.mxu0 0.0
      %2624 = vmatmul.mubr.f32.gmra.mrb[0].mxu0 %v2548
      %v2625 = vpop.f32.mrb[0].mxu0
      %v2626 = vadd.f32 %v619, %v2625
      %v2627 = vpop.f32.mrb[0].mxu0
      %2628 = vdwg.mxu0
      %v2629 = vsel %vm979, %v2348, -inf
      %2630 = vmax.xlane.f32.xlu0 %v2629
      %v2631 = vpop.xlane.xlu0 %2630
      %v2632 = vsel %vm979, %v2353, -inf
      %2633 = vmax.xlane.f32.xlu0 %v2632
      %v2634 = vpop.xlane.xlu0 %2633
      %v2635 = vsel %vm979, %v2439, -inf
      %2636 = vmax.xlane.f32.xlu0 %v2635
      %v2637 = vpop.xlane.xlu0 %2636
      %v2638 = vsel %vm979, %v2444, -inf
      %2639 = vmax.xlane.f32.xlu0 %v2638
      %v2640 = vpop.xlane.xlu0 %2639
      %v2641 = vsel %vm979, %v2530, -inf
      %2642 = vmax.xlane.f32.xlu0 %v2641
      %v2643 = vpop.xlane.xlu0 %2642
      %v2644 = vsel %vm979, %v2535, -inf
      %2645 = vmax.xlane.f32.xlu0 %v2644
      %v2646 = vpop.xlane.xlu0 %2645
      %v2647 = vsel %vm979, %v2621, -inf
      %2648 = vmax.xlane.f32.xlu0 %v2647
      %v2649 = vpop.xlane.xlu0 %2648
      %v2650 = vsel %vm979, %v2626, -inf
      %2651 = vmax.xlane.f32.xlu0 %v2650
      %v2652 = vpop.xlane.xlu0 %2651
      %v2653 = vsub.f32 %v2348, %v2631
      %v2654 = vsub.f32 %v2353, %v2634
      %v2655 = vsub.f32 %v2439, %v2637
      %v2656 = vsub.f32 %v2444, %v2640
      %v2657 = vsub.f32 %v2530, %v2643
      %v2658 = vsub.f32 %v2535, %v2646
      %v2659 = vsub.f32 %v2621, %v2649
      %v2660 = vsub.f32 %v2626, %v2652
      %v2661 = vmul.f32 %v2653, 1.442695
      %v2662 = vpow.pop %v2661
      %v2663 = vmul.f32 %v2654, 1.442695
      %v2664 = vpow.pop %v2663
      %v2665 = vmul.f32 %v2655, 1.442695
      %v2666 = vpow.pop %v2665
      %v2667 = vmul.f32 %v2656, 1.442695
      %v2668 = vpow.pop %v2667
      %v2669 = vmul.f32 %v2657, 1.442695
      %v2670 = vpow.pop %v2669
      %v2671 = vmul.f32 %v2658, 1.442695
      %v2672 = vpow.pop %v2671
      %v2673 = vmul.f32 %v2659, 1.442695
      %v2674 = vpow.pop %v2673
      %v2675 = vmul.f32 %v2660, 1.442695
      %v2676 = vpow.pop %v2675
      %v2677 = vsel %vm979, %v2662, 0.0
      %2678 = vadd.xlane.f32.xlu0 %v2677
      %v2679 = vpop.xlane.xlu0 %2678
      %v2680 = vsel %vm979, %v2664, 0.0
      %2681 = vadd.xlane.f32.xlu0 %v2680
      %v2682 = vpop.xlane.xlu0 %2681
      %v2683 = vsel %vm979, %v2666, 0.0
      %2684 = vadd.xlane.f32.xlu0 %v2683
      %v2685 = vpop.xlane.xlu0 %2684
      %v2686 = vsel %vm979, %v2668, 0.0
      %2687 = vadd.xlane.f32.xlu0 %v2686
      %v2688 = vpop.xlane.xlu0 %2687
      %v2689 = vsel %vm979, %v2670, 0.0
      %2690 = vadd.xlane.f32.xlu0 %v2689
      %v2691 = vpop.xlane.xlu0 %2690
      %v2692 = vsel %vm979, %v2672, 0.0
      %2693 = vadd.xlane.f32.xlu0 %v2692
      %v2694 = vpop.xlane.xlu0 %2693
      %v2695 = vsel %vm979, %v2674, 0.0
      %2696 = vadd.xlane.f32.xlu0 %v2695
      %v2697 = vpop.xlane.xlu0 %2696
      %v2698 = vsel %vm979, %v2676, 0.0
      %2699 = vadd.xlane.f32.xlu0 %v2698
      %v2700 = vpop.xlane.xlu0 %2699
      %v2701 = vrcp.pop %v2679
      %v2702 = vrcp.pop %v2682
      %v2703 = vrcp.pop %v2685
      %v2704 = vrcp.pop %v2688
      %v2705 = vrcp.pop %v2691
      %v2706 = vrcp.pop %v2694
      %v2707 = vrcp.pop %v2697
      %v2708 = vrcp.pop %v2700
      %v2709 = vmul.f32 %v2662, %v2701
      %v2710 = vmul.f32 %v2664, %v2702
      %v2711 = vmul.f32 %v2666, %v2703
      %v2712 = vmul.f32 %v2668, %v2704
      %v2713 = vmul.f32 %v2670, %v2705
      %v2714 = vmul.f32 %v2672, %v2706
      %v2715 = vmul.f32 %v2674, %v2707
      %v2716 = vmul.f32 %v2676, %v2708
      %2717 = vrot.lane.b32.xlu0 %v552, 48
      %v2718 = vpop.permute.xlu0 %2717
      %2719 = vrot.lane.b32.xlu0 %v557, 48
      %v2720 = vpop.permute.xlu0 %2719
      %v2724 = vsel %vm979, %v2709, 0
      %v2727 = vsel %vm979, %v2710, 0
      %2729 = vmatprep.subr.mxu0 0.0
      %2730 = vmatpush1.msra.mxu0 %v2718
      %2731 = vmatprep.subr.mxu0 0.0
      %2732 = vmatpush1.msra.mxu0 %v2720
      %2733 = vmatprep.subr.mxu0 0.0
      %2734 = vmatpush1.msra.mxu0 0.0
      %2735 = vmatprep.subr.mxu0 0.0
      %2736 = vmatpush1.msra.mxu0 0.0
      %2737 = vmatprep.subr.mxu0 0.0
      %2738 = vmatpush1.msra.mxu0 0.0
      %2739 = vmatprep.subr.mxu0 0.0
      %2740 = vmatpush1.msra.mxu0 0.0
      %2741 = vmatprep.subr.mxu0 0.0
      %2742 = vmatpush1.msra.mxu0 0.0
      %2743 = vmatprep.subr.mxu0 0.0
      %2744 = vmatpush1.msra.mxu0 0.0
      %2745 = vmatprep.subr.mxu0 0.0
      %2746 = vmatpush1.msra.mxu0 0.0
      %2747 = vmatprep.subr.mxu0 0.0
      %2748 = vmatpush1.msra.mxu0 0.0
      %2749 = vmatprep.subr.mxu0 0.0
      %2750 = vmatpush1.msra.mxu0 0.0
      %2751 = vmatprep.subr.mxu0 0.0
      %2752 = vmatpush1.msra.mxu0 0.0
      %2753 = vmatprep.subr.mxu0 0.0
      %2754 = vmatpush1.msra.mxu0 0.0
      %2755 = vmatprep.subr.mxu0 0.0
      %2756 = vmatpush1.msra.mxu0 0.0
      %2757 = vmatprep.subr.mxu0 0.0
      %2758 = vmatpush1.msra.mxu0 0.0
      %2759 = vmatprep.subr.mxu0 0.0
      %2760 = vmatpush1.msra.mxu0 0.0
      %2761 = vmatprep.subr.mxu0 0.0
      %2762 = vmatpush1.msra.mxu0 0.0
      %2763 = vmatprep.subr.mxu0 0.0
      %2764 = vmatpush1.msra.mxu0 0.0
      %2765 = vmatprep.subr.mxu0 0.0
      %2766 = vmatpush1.msra.mxu0 0.0
      %2767 = vmatprep.subr.mxu0 0.0
      %2768 = vmatpush1.msra.mxu0 0.0
      %2769 = vmatprep.subr.mxu0 0.0
      %2770 = vmatpush1.msra.mxu0 0.0
      %2771 = vmatprep.subr.mxu0 0.0
      %2772 = vmatpush1.msra.mxu0 0.0
      %2773 = vmatprep.subr.mxu0 0.0
      %2774 = vmatpush1.msra.mxu0 0.0
      %2775 = vmatprep.subr.mxu0 0.0
      %2776 = vmatpush1.msra.mxu0 0.0
      %2777 = vmatprep.subr.mxu0 0.0
      %2778 = vmatpush1.msra.mxu0 0.0
      %2779 = vmatprep.subr.mxu0 0.0
      %2780 = vmatpush1.msra.mxu0 0.0
      %2781 = vmatprep.subr.mxu0 0.0
      %2782 = vmatpush1.msra.mxu0 0.0
      %2783 = vmatprep.subr.mxu0 0.0
      %2784 = vmatpush1.msra.mxu0 0.0
      %2785 = vmatprep.subr.mxu0 0.0
      %2786 = vmatpush1.msra.mxu0 0.0
      %2787 = vmatprep.subr.mxu0 0.0
      %2788 = vmatpush1.msra.mxu0 0.0
      %2789 = vmatprep.subr.mxu0 0.0
      %2790 = vmatpush1.msra.mxu0 0.0
      %2791 = vmatprep.subr.mxu0 0.0
      %2792 = vmatpush1.msra.mxu0 0.0
      %2793 = vmatprep.mubr.f32.mxu0 0.0
      %2794 = vmatmul.mubr.f32.gmra.mrb[0].mxu0 %v2724
      %v2795 = vpop.f32.mrb[0].mxu0
      %v2796 = vadd.f32 0.0, %v2795
      %v2797 = vpop.f32.mrb[0].mxu0
      %2798 = vmatprep.mubr.f32.mxu0 0.0
      %2799 = vmatmul.mubr.f32.gmra.mrb[0].mxu0 %v2727
      %v2800 = vpop.f32.mrb[0].mxu0
      %v2801 = vadd.f32 0.0, %v2800
      %v2802 = vpop.f32.mrb[0].mxu0
      %2803 = vdwg.mxu0
      %2804 = vrot.lane.b32.xlu0 %v562, 48
      %v2805 = vpop.permute.xlu0 %2804
      %2806 = vrot.lane.b32.xlu0 %v567, 48
      %v2807 = vpop.permute.xlu0 %2806
      %v2811 = vsel %vm979, %v2711, 0
      %v2814 = vsel %vm979, %v2712, 0
      %2816 = vmatprep.subr.mxu0 0.0
      %2817 = vmatpush1.msra.mxu0 %v2805
      %2818 = vmatprep.subr.mxu0 0.0
      %2819 = vmatpush1.msra.mxu0 %v2807
      %2820 = vmatprep.subr.mxu0 0.0
      %2821 = vmatpush1.msra.mxu0 0.0
      %2822 = vmatprep.subr.mxu0 0.0
      %2823 = vmatpush1.msra.mxu0 0.0
      %2824 = vmatprep.subr.mxu0 0.0
      %2825 = vmatpush1.msra.mxu0 0.0
      %2826 = vmatprep.subr.mxu0 0.0
      %2827 = vmatpush1.msra.mxu0 0.0
      %2828 = vmatprep.subr.mxu0 0.0
      %2829 = vmatpush1.msra.mxu0 0.0
      %2830 = vmatprep.subr.mxu0 0.0
      %2831 = vmatpush1.msra.mxu0 0.0
      %2832 = vmatprep.subr.mxu0 0.0
      %2833 = vmatpush1.msra.mxu0 0.0
      %2834 = vmatprep.subr.mxu0 0.0
      %2835 = vmatpush1.msra.mxu0 0.0
      %2836 = vmatprep.subr.mxu0 0.0
      %2837 = vmatpush1.msra.mxu0 0.0
      %2838 = vmatprep.subr.mxu0 0.0
      %2839 = vmatpush1.msra.mxu0 0.0
      %2840 = vmatprep.subr.mxu0 0.0
      %2841 = vmatpush1.msra.mxu0 0.0
      %2842 = vmatprep.subr.mxu0 0.0
      %2843 = vmatpush1.msra.mxu0 0.0
      %2844 = vmatprep.subr.mxu0 0.0
      %2845 = vmatpush1.msra.mxu0 0.0
      %2846 = vmatprep.subr.mxu0 0.0
      %2847 = vmatpush1.msra.mxu0 0.0
      %2848 = vmatprep.subr.mxu0 0.0
      %2849 = vmatpush1.msra.mxu0 0.0
      %2850 = vmatprep.subr.mxu0 0.0
      %2851 = vmatpush1.msra.mxu0 0.0
      %2852 = vmatprep.subr.mxu0 0.0
      %2853 = vmatpush1.msra.mxu0 0.0
      %2854 = vmatprep.subr.mxu0 0.0
      %2855 = vmatpush1.msra.mxu0 0.0
      %2856 = vmatprep.subr.mxu0 0.0
      %2857 = vmatpush1.msra.mxu0 0.0
      %2858 = vmatprep.subr.mxu0 0.0
      %2859 = vmatpush1.msra.mxu0 0.0
      %2860 = vmatprep.subr.mxu0 0.0
      %2861 = vmatpush1.msra.mxu0 0.0
      %2862 = vmatprep.subr.mxu0 0.0
      %2863 = vmatpush1.msra.mxu0 0.0
      %2864 = vmatprep.subr.mxu0 0.0
      %2865 = vmatpush1.msra.mxu0 0.0
      %2866 = vmatprep.subr.mxu0 0.0
      %2867 = vmatpush1.msra.mxu0 0.0
      %2868 = vmatprep.subr.mxu0 0.0
      %2869 = vmatpush1.msra.mxu0 0.0
      %2870 = vmatprep.subr.mxu0 0.0
      %2871 = vmatpush1.msra.mxu0 0.0
      %2872 = vmatprep.subr.mxu0 0.0
      %2873 = vmatpush1.msra.mxu0 0.0
      %2874 = vmatprep.subr.mxu0 0.0
      %2875 = vmatpush1.msra.mxu0 0.0
      %2876 = vmatprep.subr.mxu0 0.0
      %2877 = vmatpush1.msra.mxu0 0.0
      %2878 = vmatprep.subr.mxu0 0.0
      %2879 = vmatpush1.msra.mxu0 0.0
      %2880 = vmatprep.mubr.f32.mxu0 0.0
      %2881 = vmatmul.mubr.f32.gmra.mrb[0].mxu0 %v2811
      %v2882 = vpop.f32.mrb[0].mxu0
      %v2883 = vadd.f32 0.0, %v2882
      %v2884 = vpop.f32.mrb[0].mxu0
      %2885 = vmatprep.mubr.f32.mxu0 0.0
      %2886 = vmatmul.mubr.f32.gmra.mrb[0].mxu0 %v2814
      %v2887 = vpop.f32.mrb[0].mxu0
      %v2888 = vadd.f32 0.0, %v2887
      %v2889 = vpop.f32.mrb[0].mxu0
      %2890 = vdwg.mxu0
      %2891 = vrot.lane.b32.xlu0 %v572, 48
      %v2892 = vpop.permute.xlu0 %2891
      %2893 = vrot.lane.b32.xlu0 %v577, 48
      %v2894 = vpop.permute.xlu0 %2893
      %v2898 = vsel %vm979, %v2713, 0
      %v2901 = vsel %vm979, %v2714, 0
      %2903 = vmatprep.subr.mxu0 0.0
      %2904 = vmatpush1.msra.mxu0 %v2892
      %2905 = vmatprep.subr.mxu0 0.0
      %2906 = vmatpush1.msra.mxu0 %v2894
      %2907 = vmatprep.subr.mxu0 0.0
      %2908 = vmatpush1.msra.mxu0 0.0
      %2909 = vmatprep.subr.mxu0 0.0
      %2910 = vmatpush1.msra.mxu0 0.0
      %2911 = vmatprep.subr.mxu0 0.0
      %2912 = vmatpush1.msra.mxu0 0.0
      %2913 = vmatprep.subr.mxu0 0.0
      %2914 = vmatpush1.msra.mxu0 0.0
      %2915 = vmatprep.subr.mxu0 0.0
      %2916 = vmatpush1.msra.mxu0 0.0
      %2917 = vmatprep.subr.mxu0 0.0
      %2918 = vmatpush1.msra.mxu0 0.0
      %2919 = vmatprep.subr.mxu0 0.0
      %2920 = vmatpush1.msra.mxu0 0.0
      %2921 = vmatprep.subr.mxu0 0.0
      %2922 = vmatpush1.msra.mxu0 0.0
      %2923 = vmatprep.subr.mxu0 0.0
      %2924 = vmatpush1.msra.mxu0 0.0
      %2925 = vmatprep.subr.mxu0 0.0
      %2926 = vmatpush1.msra.mxu0 0.0
      %2927 = vmatprep.subr.mxu0 0.0
      %2928 = vmatpush1.msra.mxu0 0.0
      %2929 = vmatprep.subr.mxu0 0.0
      %2930 = vmatpush1.msra.mxu0 0.0
      %2931 = vmatprep.subr.mxu0 0.0
      %2932 = vmatpush1.msra.mxu0 0.0
      %2933 = vmatprep.subr.mxu0 0.0
      %2934 = vmatpush1.msra.mxu0 0.0
      %2935 = vmatprep.subr.mxu0 0.0
      %2936 = vmatpush1.msra.mxu0 0.0
      %2937 = vmatprep.subr.mxu0 0.0
      %2938 = vmatpush1.msra.mxu0 0.0
      %2939 = vmatprep.subr.mxu0 0.0
      %2940 = vmatpush1.msra.mxu0 0.0
      %2941 = vmatprep.subr.mxu0 0.0
      %2942 = vmatpush1.msra.mxu0 0.0
      %2943 = vmatprep.subr.mxu0 0.0
      %2944 = vmatpush1.msra.mxu0 0.0
      %2945 = vmatprep.subr.mxu0 0.0
      %2946 = vmatpush1.msra.mxu0 0.0
      %2947 = vmatprep.subr.mxu0 0.0
      %2948 = vmatpush1.msra.mxu0 0.0
      %2949 = vmatprep.subr.mxu0 0.0
      %2950 = vmatpush1.msra.mxu0 0.0
      %2951 = vmatprep.subr.mxu0 0.0
      %2952 = vmatpush1.msra.mxu0 0.0
      %2953 = vmatprep.subr.mxu0 0.0
      %2954 = vmatpush1.msra.mxu0 0.0
      %2955 = vmatprep.subr.mxu0 0.0
      %2956 = vmatpush1.msra.mxu0 0.0
      %2957 = vmatprep.subr.mxu0 0.0
      %2958 = vmatpush1.msra.mxu0 0.0
      %2959 = vmatprep.subr.mxu0 0.0
      %2960 = vmatpush1.msra.mxu0 0.0
      %2961 = vmatprep.subr.mxu0 0.0
      %2962 = vmatpush1.msra.mxu0 0.0
      %2963 = vmatprep.subr.mxu0 0.0
      %2964 = vmatpush1.msra.mxu0 0.0
      %2965 = vmatprep.subr.mxu0 0.0
      %2966 = vmatpush1.msra.mxu0 0.0
      %2967 = vmatprep.mubr.f32.mxu0 0.0
      %2968 = vmatmul.mubr.f32.gmra.mrb[0].mxu0 %v2898
      %v2969 = vpop.f32.mrb[0].mxu0
      %v2970 = vadd.f32 0.0, %v2969
      %v2971 = vpop.f32.mrb[0].mxu0
      %2972 = vmatprep.mubr.f32.mxu0 0.0
      %2973 = vmatmul.mubr.f32.gmra.mrb[0].mxu0 %v2901
      %v2974 = vpop.f32.mrb[0].mxu0
      %v2975 = vadd.f32 0.0, %v2974
      %v2976 = vpop.f32.mrb[0].mxu0
      %2977 = vdwg.mxu0
      %2978 = vrot.lane.b32.xlu0 %v582, 48
      %v2979 = vpop.permute.xlu0 %2978
      %2980 = vrot.lane.b32.xlu0 %v587, 48
      %v2981 = vpop.permute.xlu0 %2980
      %v2985 = vsel %vm979, %v2715, 0
      %v2988 = vsel %vm979, %v2716, 0
      %2990 = vmatprep.subr.mxu0 0.0
      %2991 = vmatpush1.msra.mxu0 %v2979
      %2992 = vmatprep.subr.mxu0 0.0
      %2993 = vmatpush1.msra.mxu0 %v2981
      %2994 = vmatprep.subr.mxu0 0.0
      %2995 = vmatpush1.msra.mxu0 0.0
      %2996 = vmatprep.subr.mxu0 0.0
      %2997 = vmatpush1.msra.mxu0 0.0
      %2998 = vmatprep.subr.mxu0 0.0
      %2999 = vmatpush1.msra.mxu0 0.0
      %3000 = vmatprep.subr.mxu0 0.0
      %3001 = vmatpush1.msra.mxu0 0.0
      %3002 = vmatprep.subr.mxu0 0.0
      %3003 = vmatpush1.msra.mxu0 0.0
      %3004 = vmatprep.subr.mxu0 0.0
      %3005 = vmatpush1.msra.mxu0 0.0
      %3006 = vmatprep.subr.mxu0 0.0
      %3007 = vmatpush1.msra.mxu0 0.0
      %3008 = vmatprep.subr.mxu0 0.0
      %3009 = vmatpush1.msra.mxu0 0.0
      %3010 = vmatprep.subr.mxu0 0.0
      %3011 = vmatpush1.msra.mxu0 0.0
      %3012 = vmatprep.subr.mxu0 0.0
      %3013 = vmatpush1.msra.mxu0 0.0
      %3014 = vmatprep.subr.mxu0 0.0
      %3015 = vmatpush1.msra.mxu0 0.0
      %3016 = vmatprep.subr.mxu0 0.0
      %3017 = vmatpush1.msra.mxu0 0.0
      %3018 = vmatprep.subr.mxu0 0.0
      %3019 = vmatpush1.msra.mxu0 0.0
      %3020 = vmatprep.subr.mxu0 0.0
      %3021 = vmatpush1.msra.mxu0 0.0
      %3022 = vmatprep.subr.mxu0 0.0
      %3023 = vmatpush1.msra.mxu0 0.0
      %3024 = vmatprep.subr.mxu0 0.0
      %3025 = vmatpush1.msra.mxu0 0.0
      %3026 = vmatprep.subr.mxu0 0.0
      %3027 = vmatpush1.msra.mxu0 0.0
      %3028 = vmatprep.subr.mxu0 0.0
      %3029 = vmatpush1.msra.mxu0 0.0
      %3030 = vmatprep.subr.mxu0 0.0
      %3031 = vmatpush1.msra.mxu0 0.0
      %3032 = vmatprep.subr.mxu0 0.0
      %3033 = vmatpush1.msra.mxu0 0.0
      %3034 = vmatprep.subr.mxu0 0.0
      %3035 = vmatpush1.msra.mxu0 0.0
      %3036 = vmatprep.subr.mxu0 0.0
      %3037 = vmatpush1.msra.mxu0 0.0
      %3038 = vmatprep.subr.mxu0 0.0
      %3039 = vmatpush1.msra.mxu0 0.0
      %3040 = vmatprep.subr.mxu0 0.0
      %3041 = vmatpush1.msra.mxu0 0.0
      %3042 = vmatprep.subr.mxu0 0.0
      %3043 = vmatpush1.msra.mxu0 0.0
      %3044 = vmatprep.subr.mxu0 0.0
      %3045 = vmatpush1.msra.mxu0 0.0
      %3046 = vmatprep.subr.mxu0 0.0
      %3047 = vmatpush1.msra.mxu0 0.0
      %3048 = vmatprep.subr.mxu0 0.0
      %3049 = vmatpush1.msra.mxu0 0.0
      %3050 = vmatprep.subr.mxu0 0.0
      %3051 = vmatpush1.msra.mxu0 0.0
      %3052 = vmatprep.subr.mxu0 0.0
      %3053 = vmatpush1.msra.mxu0 0.0
      %3054 = vmatprep.mubr.f32.mxu0 0.0
      %3055 = vmatmul.mubr.f32.gmra.mrb[0].mxu0 %v2985
      %v3056 = vpop.f32.mrb[0].mxu0
      %v3057 = vadd.f32 0.0, %v3056
      %v3058 = vpop.f32.mrb[0].mxu0
      %3059 = vmatprep.mubr.f32.mxu0 0.0
      %3060 = vmatmul.mubr.f32.gmra.mrb[0].mxu0 %v2988
      %v3061 = vpop.f32.mrb[0].mxu0
      %v3062 = vadd.f32 0.0, %v3061
      %v3063 = vpop.f32.mrb[0].mxu0
      %3064 = vdwg.mxu0
      %3073 = vrot.lane.b32.xlu0 %v2796, 16
      %v3074 = vpop.permute.xlu0 %3073
      %3075 = vrot.lane.b32.xlu0 %v2801, 16
      %v3076 = vpop.permute.xlu0 %3075
      %3077 = vrot.lane.b32.xlu0 %v2883, 16
      %v3078 = vpop.permute.xlu0 %3077
      %3079 = vrot.lane.b32.xlu0 %v2888, 16
      %v3080 = vpop.permute.xlu0 %3079
      %3081 = vrot.lane.b32.xlu0 %v2970, 16
      %v3082 = vpop.permute.xlu0 %3081
      %3083 = vrot.lane.b32.xlu0 %v2975, 16
      %v3084 = vpop.permute.xlu0 %3083
      %3085 = vrot.lane.b32.xlu0 %v3057, 16
      %v3086 = vpop.permute.xlu0 %3085
      %3087 = vrot.lane.b32.xlu0 %v3062, 16
      %v3088 = vpop.permute.xlu0 %3087
      %vm3097 = vcmask 195712
      %3098 = vst.msk [vmem:[#allocation2] sm:$0xff] %vm3097, %v3074
      %3099 = vst.msk [vmem:[#allocation2 + $0x8] sm:$0xff] %vm3097, %v3076
      %3100 = vst.msk [vmem:[#allocation2 + $0x10] sm:$0xff] %vm3097, %v3078
      %3101 = vst.msk [vmem:[#allocation2 + $0x18] sm:$0xff] %vm3097, %v3080
      %3102 = vst.msk [vmem:[#allocation2 + $0x20] sm:$0xff] %vm3097, %v3082
      %3103 = vst.msk [vmem:[#allocation2 + $0x28] sm:$0xff] %vm3097, %v3084
      %3104 = vst.msk [vmem:[#allocation2 + $0x30] sm:$0xff] %vm3097, %v3086
      %3105 = vst.msk [vmem:[#allocation2 + $0x38] sm:$0xff] %vm3097, %v3088
      %3106 = vrot.lane.b32.xlu0 %v552, 104
      %v3107 = vpop.permute.xlu0 %3106
      %3108 = vrot.lane.b32.xlu0 %v557, 104
      %v3109 = vpop.permute.xlu0 %3108
      %3110 = vrot.lane.b32.xlu0 %v552, 72
      %v3111 = vpop.permute.xlu0 %3110
      %3112 = vrot.lane.b32.xlu0 %v557, 72
      %v3113 = vpop.permute.xlu0 %3112
      %v3114 = vsel %vm628, %v3107, 0
      %v3116 = vsel %vm628, %v3109, 0
      %v3118 = vsel %vm628, %v3111, 0
      %v3120 = vsel %vm628, %v3113, 0
      %3122 = vmatprep.subr.mxu0 0.0
      %3123 = vmatpush1.xpose.msra.mxu0 %v3118
      %3124 = vmatprep.subr.mxu0 0.0
      %3125 = vmatpush1.xpose.msra.mxu0 %v3120
      %3126 = vmatprep.subr.mxu0 0.0
      %3127 = vmatpush1.xpose.msra.mxu0 0.0
      %3128 = vmatprep.subr.mxu0 0.0
      %3129 = vmatpush1.xpose.msra.mxu0 0.0
      %3130 = vmatprep.subr.mxu0 0.0
      %3131 = vmatpush1.xpose.msra.mxu0 0.0
      %3132 = vmatprep.subr.mxu0 0.0
      %3133 = vmatpush1.xpose.msra.mxu0 0.0
      %3134 = vmatprep.subr.mxu0 0.0
      %3135 = vmatpush1.xpose.msra.mxu0 0.0
      %3136 = vmatprep.subr.mxu0 0.0
      %3137 = vmatpush1.xpose.msra.mxu0 0.0
      %3138 = vmatprep.subr.mxu0 0.0
      %3139 = vmatpush1.xpose.msra.mxu0 0.0
      %3140 = vmatprep.subr.mxu0 0.0
      %3141 = vmatpush1.xpose.msra.mxu0 0.0
      %3142 = vmatprep.subr.mxu0 0.0
      %3143 = vmatpush1.xpose.msra.mxu0 0.0
      %3144 = vmatprep.subr.mxu0 0.0
      %3145 = vmatpush1.xpose.msra.mxu0 0.0
      %3146 = vmatprep.subr.mxu0 0.0
      %3147 = vmatpush1.xpose.msra.mxu0 0.0
      %3148 = vmatprep.subr.mxu0 0.0
      %3149 = vmatpush1.xpose.msra.mxu0 0.0
      %3150 = vmatprep.subr.mxu0 0.0
      %3151 = vmatpush1.xpose.msra.mxu0 0.0
      %3152 = vmatprep.subr.mxu0 0.0
      %3153 = vmatpush1.xpose.msra.mxu0 0.0
      %3154 = vmatprep.subr.mxu0 0.0
      %3155 = vmatpush1.xpose.msra.mxu0 0.0
      %3156 = vmatprep.subr.mxu0 0.0
      %3157 = vmatpush1.xpose.msra.mxu0 0.0
      %3158 = vmatprep.subr.mxu0 0.0
      %3159 = vmatpush1.xpose.msra.mxu0 0.0
      %3160 = vmatprep.subr.mxu0 0.0
      %3161 = vmatpush1.xpose.msra.mxu0 0.0
      %3162 = vmatprep.subr.mxu0 0.0
      %3163 = vmatpush1.xpose.msra.mxu0 0.0
      %3164 = vmatprep.subr.mxu0 0.0
      %3165 = vmatpush1.xpose.msra.mxu0 0.0
      %3166 = vmatprep.subr.mxu0 0.0
      %3167 = vmatpush1.xpose.msra.mxu0 0.0
      %3168 = vmatprep.subr.mxu0 0.0
      %3169 = vmatpush1.xpose.msra.mxu0 0.0
      %3170 = vmatprep.subr.mxu0 0.0
      %3171 = vmatpush1.xpose.msra.mxu0 0.0
      %3172 = vmatprep.subr.mxu0 0.0
      %3173 = vmatpush1.xpose.msra.mxu0 0.0
      %3174 = vmatprep.subr.mxu0 0.0
      %3175 = vmatpush1.xpose.msra.mxu0 0.0
      %3176 = vmatprep.subr.mxu0 0.0
      %3177 = vmatpush1.xpose.msra.mxu0 0.0
      %3178 = vmatprep.subr.mxu0 0.0
      %3179 = vmatpush1.xpose.msra.mxu0 0.0
      %3180 = vmatprep.subr.mxu0 0.0
      %3181 = vmatpush1.xpose.msra.mxu0 0.0
      %3182 = vmatprep.subr.mxu0 0.0
      %3183 = vmatpush1.xpose.msra.mxu0 0.0
      %3184 = vmatprep.subr.mxu0 0.0
      %3185 = vmatpush1.xpose.msra.mxu0 0.0
      %3186 = vmatprep.mubr.f32.mxu0 0.0
      %3187 = vmatmul.mubr.f32.gmra.mrb[0].mxu0 %v3114
      %v3188 = vpop.f32.mrb[0].mxu0
      %v3189 = vadd.f32 %v596, %v3188
      %v3190 = vpop.f32.mrb[0].mxu0
      %3191 = vmatprep.mubr.f32.mxu0 0.0
      %3192 = vmatmul.mubr.f32.gmra.mrb[0].mxu0 %v3116
      %v3193 = vpop.f32.mrb[0].mxu0
      %v3194 = vadd.f32 %v597, %v3193
      %v3195 = vpop.f32.mrb[0].mxu0
      %3196 = vdwg.mxu0
      %3197 = vrot.lane.b32.xlu0 %v562, 104
      %v3198 = vpop.permute.xlu0 %3197
      %3199 = vrot.lane.b32.xlu0 %v567, 104
      %v3200 = vpop.permute.xlu0 %3199
      %3201 = vrot.lane.b32.xlu0 %v562, 72
      %v3202 = vpop.permute.xlu0 %3201
      %3203 = vrot.lane.b32.xlu0 %v567, 72
      %v3204 = vpop.permute.xlu0 %3203
      %v3205 = vsel %vm628, %v3198, 0
      %v3207 = vsel %vm628, %v3200, 0
      %v3209 = vsel %vm628, %v3202, 0
      %v3211 = vsel %vm628, %v3204, 0
      %3213 = vmatprep.subr.mxu0 0.0
      %3214 = vmatpush1.xpose.msra.mxu0 %v3209
      %3215 = vmatprep.subr.mxu0 0.0
      %3216 = vmatpush1.xpose.msra.mxu0 %v3211
      %3217 = vmatprep.subr.mxu0 0.0
      %3218 = vmatpush1.xpose.msra.mxu0 0.0
      %3219 = vmatprep.subr.mxu0 0.0
      %3220 = vmatpush1.xpose.msra.mxu0 0.0
      %3221 = vmatprep.subr.mxu0 0.0
      %3222 = vmatpush1.xpose.msra.mxu0 0.0
      %3223 = vmatprep.subr.mxu0 0.0
      %3224 = vmatpush1.xpose.msra.mxu0 0.0
      %3225 = vmatprep.subr.mxu0 0.0
      %3226 = vmatpush1.xpose.msra.mxu0 0.0
      %3227 = vmatprep.subr.mxu0 0.0
      %3228 = vmatpush1.xpose.msra.mxu0 0.0
      %3229 = vmatprep.subr.mxu0 0.0
      %3230 = vmatpush1.xpose.msra.mxu0 0.0
      %3231 = vmatprep.subr.mxu0 0.0
      %3232 = vmatpush1.xpose.msra.mxu0 0.0
      %3233 = vmatprep.subr.mxu0 0.0
      %3234 = vmatpush1.xpose.msra.mxu0 0.0
      %3235 = vmatprep.subr.mxu0 0.0
      %3236 = vmatpush1.xpose.msra.mxu0 0.0
      %3237 = vmatprep.subr.mxu0 0.0
      %3238 = vmatpush1.xpose.msra.mxu0 0.0
      %3239 = vmatprep.subr.mxu0 0.0
      %3240 = vmatpush1.xpose.msra.mxu0 0.0
      %3241 = vmatprep.subr.mxu0 0.0
      %3242 = vmatpush1.xpose.msra.mxu0 0.0
      %3243 = vmatprep.subr.mxu0 0.0
      %3244 = vmatpush1.xpose.msra.mxu0 0.0
      %3245 = vmatprep.subr.mxu0 0.0
      %3246 = vmatpush1.xpose.msra.mxu0 0.0
      %3247 = vmatprep.subr.mxu0 0.0
      %3248 = vmatpush1.xpose.msra.mxu0 0.0
      %3249 = vmatprep.subr.mxu0 0.0
      %3250 = vmatpush1.xpose.msra.mxu0 0.0
      %3251 = vmatprep.subr.mxu0 0.0
      %3252 = vmatpush1.xpose.msra.mxu0 0.0
      %3253 = vmatprep.subr.mxu0 0.0
      %3254 = vmatpush1.xpose.msra.mxu0 0.0
      %3255 = vmatprep.subr.mxu0 0.0
      %3256 = vmatpush1.xpose.msra.mxu0 0.0
      %3257 = vmatprep.subr.mxu0 0.0
      %3258 = vmatpush1.xpose.msra.mxu0 0.0
      %3259 = vmatprep.subr.mxu0 0.0
      %3260 = vmatpush1.xpose.msra.mxu0 0.0
      %3261 = vmatprep.subr.mxu0 0.0
      %3262 = vmatpush1.xpose.msra.mxu0 0.0
      %3263 = vmatprep.subr.mxu0 0.0
      %3264 = vmatpush1.xpose.msra.mxu0 0.0
      %3265 = vmatprep.subr.mxu0 0.0
      %3266 = vmatpush1.xpose.msra.mxu0 0.0
      %3267 = vmatprep.subr.mxu0 0.0
      %3268 = vmatpush1.xpose.msra.mxu0 0.0
      %3269 = vmatprep.subr.mxu0 0.0
      %3270 = vmatpush1.xpose.msra.mxu0 0.0
      %3271 = vmatprep.subr.mxu0 0.0
      %3272 = vmatpush1.xpose.msra.mxu0 0.0
      %3273 = vmatprep.subr.mxu0 0.0
      %3274 = vmatpush1.xpose.msra.mxu0 0.0
      %3275 = vmatprep.subr.mxu0 0.0
      %3276 = vmatpush1.xpose.msra.mxu0 0.0
      %3277 = vmatprep.mubr.f32.mxu0 0.0
      %3278 = vmatmul.mubr.f32.gmra.mrb[0].mxu0 %v3205
      %v3279 = vpop.f32.mrb[0].mxu0
      %v3280 = vadd.f32 %v604, %v3279
      %v3281 = vpop.f32.mrb[0].mxu0
      %3282 = vmatprep.mubr.f32.mxu0 0.0
      %3283 = vmatmul.mubr.f32.gmra.mrb[0].mxu0 %v3207
      %v3284 = vpop.f32.mrb[0].mxu0
      %v3285 = vadd.f32 %v605, %v3284
      %v3286 = vpop.f32.mrb[0].mxu0
      %3287 = vdwg.mxu0
      %3288 = vrot.lane.b32.xlu0 %v572, 104
      %v3289 = vpop.permute.xlu0 %3288
      %3290 = vrot.lane.b32.xlu0 %v577, 104
      %v3291 = vpop.permute.xlu0 %3290
      %3292 = vrot.lane.b32.xlu0 %v572, 72
      %v3293 = vpop.permute.xlu0 %3292
      %3294 = vrot.lane.b32.xlu0 %v577, 72
      %v3295 = vpop.permute.xlu0 %3294
      %v3296 = vsel %vm628, %v3289, 0
      %v3298 = vsel %vm628, %v3291, 0
      %v3300 = vsel %vm628, %v3293, 0
      %v3302 = vsel %vm628, %v3295, 0
      %3304 = vmatprep.subr.mxu0 0.0
      %3305 = vmatpush1.xpose.msra.mxu0 %v3300
      %3306 = vmatprep.subr.mxu0 0.0
      %3307 = vmatpush1.xpose.msra.mxu0 %v3302
      %3308 = vmatprep.subr.mxu0 0.0
      %3309 = vmatpush1.xpose.msra.mxu0 0.0
      %3310 = vmatprep.subr.mxu0 0.0
      %3311 = vmatpush1.xpose.msra.mxu0 0.0
      %3312 = vmatprep.subr.mxu0 0.0
      %3313 = vmatpush1.xpose.msra.mxu0 0.0
      %3314 = vmatprep.subr.mxu0 0.0
      %3315 = vmatpush1.xpose.msra.mxu0 0.0
      %3316 = vmatprep.subr.mxu0 0.0
      %3317 = vmatpush1.xpose.msra.mxu0 0.0
      %3318 = vmatprep.subr.mxu0 0.0
      %3319 = vmatpush1.xpose.msra.mxu0 0.0
      %3320 = vmatprep.subr.mxu0 0.0
      %3321 = vmatpush1.xpose.msra.mxu0 0.0
      %3322 = vmatprep.subr.mxu0 0.0
      %3323 = vmatpush1.xpose.msra.mxu0 0.0
      %3324 = vmatprep.subr.mxu0 0.0
      %3325 = vmatpush1.xpose.msra.mxu0 0.0
      %3326 = vmatprep.subr.mxu0 0.0
      %3327 = vmatpush1.xpose.msra.mxu0 0.0
      %3328 = vmatprep.subr.mxu0 0.0
      %3329 = vmatpush1.xpose.msra.mxu0 0.0
      %3330 = vmatprep.subr.mxu0 0.0
      %3331 = vmatpush1.xpose.msra.mxu0 0.0
      %3332 = vmatprep.subr.mxu0 0.0
      %3333 = vmatpush1.xpose.msra.mxu0 0.0
      %3334 = vmatprep.subr.mxu0 0.0
      %3335 = vmatpush1.xpose.msra.mxu0 0.0
      %3336 = vmatprep.subr.mxu0 0.0
      %3337 = vmatpush1.xpose.msra.mxu0 0.0
      %3338 = vmatprep.subr.mxu0 0.0
      %3339 = vmatpush1.xpose.msra.mxu0 0.0
      %3340 = vmatprep.subr.mxu0 0.0
      %3341 = vmatpush1.xpose.msra.mxu0 0.0
      %3342 = vmatprep.subr.mxu0 0.0
      %3343 = vmatpush1.xpose.msra.mxu0 0.0
      %3344 = vmatprep.subr.mxu0 0.0
      %3345 = vmatpush1.xpose.msra.mxu0 0.0
      %3346 = vmatprep.subr.mxu0 0.0
      %3347 = vmatpush1.xpose.msra.mxu0 0.0
      %3348 = vmatprep.subr.mxu0 0.0
      %3349 = vmatpush1.xpose.msra.mxu0 0.0
      %3350 = vmatprep.subr.mxu0 0.0
      %3351 = vmatpush1.xpose.msra.mxu0 0.0
      %3352 = vmatprep.subr.mxu0 0.0
      %3353 = vmatpush1.xpose.msra.mxu0 0.0
      %3354 = vmatprep.subr.mxu0 0.0
      %3355 = vmatpush1.xpose.msra.mxu0 0.0
      %3356 = vmatprep.subr.mxu0 0.0
      %3357 = vmatpush1.xpose.msra.mxu0 0.0
      %3358 = vmatprep.subr.mxu0 0.0
      %3359 = vmatpush1.xpose.msra.mxu0 0.0
      %3360 = vmatprep.subr.mxu0 0.0
      %3361 = vmatpush1.xpose.msra.mxu0 0.0
      %3362 = vmatprep.subr.mxu0 0.0
      %3363 = vmatpush1.xpose.msra.mxu0 0.0
      %3364 = vmatprep.subr.mxu0 0.0
      %3365 = vmatpush1.xpose.msra.mxu0 0.0
      %3366 = vmatprep.subr.mxu0 0.0
      %3367 = vmatpush1.xpose.msra.mxu0 0.0
      %3368 = vmatprep.mubr.f32.mxu0 0.0
      %3369 = vmatmul.mubr.f32.gmra.mrb[0].mxu0 %v3296
      %v3370 = vpop.f32.mrb[0].mxu0
      %v3371 = vadd.f32 %v612, %v3370
      %v3372 = vpop.f32.mrb[0].mxu0
      %3373 = vmatprep.mubr.f32.mxu0 0.0
      %3374 = vmatmul.mubr.f32.gmra.mrb[0].mxu0 %v3298
      %v3375 = vpop.f32.mrb[0].mxu0
      %v3376 = vadd.f32 %v613, %v3375
      %v3377 = vpop.f32.mrb[0].mxu0
      %3378 = vdwg.mxu0
      %3379 = vrot.lane.b32.xlu0 %v582, 104
      %v3380 = vpop.permute.xlu0 %3379
      %3381 = vrot.lane.b32.xlu0 %v587, 104
      %v3382 = vpop.permute.xlu0 %3381
      %3383 = vrot.lane.b32.xlu0 %v582, 72
      %v3384 = vpop.permute.xlu0 %3383
      %3385 = vrot.lane.b32.xlu0 %v587, 72
      %v3386 = vpop.permute.xlu0 %3385
      %v3387 = vsel %vm628, %v3380, 0
      %v3389 = vsel %vm628, %v3382, 0
      %v3391 = vsel %vm628, %v3384, 0
      %v3393 = vsel %vm628, %v3386, 0
      %3395 = vmatprep.subr.mxu0 0.0
      %3396 = vmatpush1.xpose.msra.mxu0 %v3391
      %3397 = vmatprep.subr.mxu0 0.0
      %3398 = vmatpush1.xpose.msra.mxu0 %v3393
      %3399 = vmatprep.subr.mxu0 0.0
      %3400 = vmatpush1.xpose.msra.mxu0 0.0
      %3401 = vmatprep.subr.mxu0 0.0
      %3402 = vmatpush1.xpose.msra.mxu0 0.0
      %3403 = vmatprep.subr.mxu0 0.0
      %3404 = vmatpush1.xpose.msra.mxu0 0.0
      %3405 = vmatprep.subr.mxu0 0.0
      %3406 = vmatpush1.xpose.msra.mxu0 0.0
      %3407 = vmatprep.subr.mxu0 0.0
      %3408 = vmatpush1.xpose.msra.mxu0 0.0
      %3409 = vmatprep.subr.mxu0 0.0
      %3410 = vmatpush1.xpose.msra.mxu0 0.0
      %3411 = vmatprep.subr.mxu0 0.0
      %3412 = vmatpush1.xpose.msra.mxu0 0.0
      %3413 = vmatprep.subr.mxu0 0.0
      %3414 = vmatpush1.xpose.msra.mxu0 0.0
      %3415 = vmatprep.subr.mxu0 0.0
      %3416 = vmatpush1.xpose.msra.mxu0 0.0
      %3417 = vmatprep.subr.mxu0 0.0
      %3418 = vmatpush1.xpose.msra.mxu0 0.0
      %3419 = vmatprep.subr.mxu0 0.0
      %3420 = vmatpush1.xpose.msra.mxu0 0.0
      %3421 = vmatprep.subr.mxu0 0.0
      %3422 = vmatpush1.xpose.msra.mxu0 0.0
      %3423 = vmatprep.subr.mxu0 0.0
      %3424 = vmatpush1.xpose.msra.mxu0 0.0
      %3425 = vmatprep.subr.mxu0 0.0
      %3426 = vmatpush1.xpose.msra.mxu0 0.0
      %3427 = vmatprep.subr.mxu0 0.0
      %3428 = vmatpush1.xpose.msra.mxu0 0.0
      %3429 = vmatprep.subr.mxu0 0.0
      %3430 = vmatpush1.xpose.msra.mxu0 0.0
      %3431 = vmatprep.subr.mxu0 0.0
      %3432 = vmatpush1.xpose.msra.mxu0 0.0
      %3433 = vmatprep.subr.mxu0 0.0
      %3434 = vmatpush1.xpose.msra.mxu0 0.0
      %3435 = vmatprep.subr.mxu0 0.0
      %3436 = vmatpush1.xpose.msra.mxu0 0.0
      %3437 = vmatprep.subr.mxu0 0.0
      %3438 = vmatpush1.xpose.msra.mxu0 0.0
      %3439 = vmatprep.subr.mxu0 0.0
      %3440 = vmatpush1.xpose.msra.mxu0 0.0
      %3441 = vmatprep.subr.mxu0 0.0
      %3442 = vmatpush1.xpose.msra.mxu0 0.0
      %3443 = vmatprep.subr.mxu0 0.0
      %3444 = vmatpush1.xpose.msra.mxu0 0.0
      %3445 = vmatprep.subr.mxu0 0.0
      %3446 = vmatpush1.xpose.msra.mxu0 0.0
      %3447 = vmatprep.subr.mxu0 0.0
      %3448 = vmatpush1.xpose.msra.mxu0 0.0
      %3449 = vmatprep.subr.mxu0 0.0
      %3450 = vmatpush1.xpose.msra.mxu0 0.0
      %3451 = vmatprep.subr.mxu0 0.0
      %3452 = vmatpush1.xpose.msra.mxu0 0.0
      %3453 = vmatprep.subr.mxu0 0.0
      %3454 = vmatpush1.xpose.msra.mxu0 0.0
      %3455 = vmatprep.subr.mxu0 0.0
      %3456 = vmatpush1.xpose.msra.mxu0 0.0
      %3457 = vmatprep.subr.mxu0 0.0
      %3458 = vmatpush1.xpose.msra.mxu0 0.0
      %3459 = vmatprep.mubr.f32.mxu0 0.0
      %3460 = vmatmul.mubr.f32.gmra.mrb[0].mxu0 %v3387
      %v3461 = vpop.f32.mrb[0].mxu0
      %v3462 = vadd.f32 %v620, %v3461
      %v3463 = vpop.f32.mrb[0].mxu0
      %3464 = vmatprep.mubr.f32.mxu0 0.0
      %3465 = vmatmul.mubr.f32.gmra.mrb[0].mxu0 %v3389
      %v3466 = vpop.f32.mrb[0].mxu0
      %v3467 = vadd.f32 %v621, %v3466
      %v3468 = vpop.f32.mrb[0].mxu0
      %3469 = vdwg.mxu0
      %v3470 = vsel %vm979, %v3189, -inf
      %3471 = vmax.xlane.f32.xlu0 %v3470
      %v3472 = vpop.xlane.xlu0 %3471
      %v3473 = vsel %vm979, %v3194, -inf
      %3474 = vmax.xlane.f32.xlu0 %v3473
      %v3475 = vpop.xlane.xlu0 %3474
      %v3476 = vsel %vm979, %v3280, -inf
      %3477 = vmax.xlane.f32.xlu0 %v3476
      %v3478 = vpop.xlane.xlu0 %3477
      %v3479 = vsel %vm979, %v3285, -inf
      %3480 = vmax.xlane.f32.xlu0 %v3479
      %v3481 = vpop.xlane.xlu0 %3480
      %v3482 = vsel %vm979, %v3371, -inf
      %3483 = vmax.xlane.f32.xlu0 %v3482
      %v3484 = vpop.xlane.xlu0 %3483
      %v3485 = vsel %vm979, %v3376, -inf
      %3486 = vmax.xlane.f32.xlu0 %v3485
      %v3487 = vpop.xlane.xlu0 %3486
      %v3488 = vsel %vm979, %v3462, -inf
      %3489 = vmax.xlane.f32.xlu0 %v3488
      %v3490 = vpop.xlane.xlu0 %3489
      %v3491 = vsel %vm979, %v3467, -inf
      %3492 = vmax.xlane.f32.xlu0 %v3491
      %v3493 = vpop.xlane.xlu0 %3492
      %v3494 = vsub.f32 %v3189, %v3472
      %v3495 = vsub.f32 %v3194, %v3475
      %v3496 = vsub.f32 %v3280, %v3478
      %v3497 = vsub.f32 %v3285, %v3481
      %v3498 = vsub.f32 %v3371, %v3484
      %v3499 = vsub.f32 %v3376, %v3487
      %v3500 = vsub.f32 %v3462, %v3490
      %v3501 = vsub.f32 %v3467, %v3493
      %v3502 = vmul.f32 %v3494, 1.442695
      %v3503 = vpow.pop %v3502
      %v3504 = vmul.f32 %v3495, 1.442695
      %v3505 = vpow.pop %v3504
      %v3506 = vmul.f32 %v3496, 1.442695
      %v3507 = vpow.pop %v3506
      %v3508 = vmul.f32 %v3497, 1.442695
      %v3509 = vpow.pop %v3508
      %v3510 = vmul.f32 %v3498, 1.442695
      %v3511 = vpow.pop %v3510
      %v3512 = vmul.f32 %v3499, 1.442695
      %v3513 = vpow.pop %v3512
      %v3514 = vmul.f32 %v3500, 1.442695
      %v3515 = vpow.pop %v3514
      %v3516 = vmul.f32 %v3501, 1.442695
      %v3517 = vpow.pop %v3516
      %v3518 = vsel %vm979, %v3503, 0.0
      %3519 = vadd.xlane.f32.xlu0 %v3518
      %v3520 = vpop.xlane.xlu0 %3519
      %v3521 = vsel %vm979, %v3505, 0.0
      %3522 = vadd.xlane.f32.xlu0 %v3521
      %v3523 = vpop.xlane.xlu0 %3522
      %v3524 = vsel %vm979, %v3507, 0.0
      %3525 = vadd.xlane.f32.xlu0 %v3524
      %v3526 = vpop.xlane.xlu0 %3525
      %v3527 = vsel %vm979, %v3509, 0.0
      %3528 = vadd.xlane.f32.xlu0 %v3527
      %v3529 = vpop.xlane.xlu0 %3528
      %v3530 = vsel %vm979, %v3511, 0.0
      %3531 = vadd.xlane.f32.xlu0 %v3530
      %v3532 = vpop.xlane.xlu0 %3531
      %v3533 = vsel %vm979, %v3513, 0.0
      %3534 = vadd.xlane.f32.xlu0 %v3533
      %v3535 = vpop.xlane.xlu0 %3534
      %v3536 = vsel %vm979, %v3515, 0.0
      %3537 = vadd.xlane.f32.xlu0 %v3536
      %v3538 = vpop.xlane.xlu0 %3537
      %v3539 = vsel %vm979, %v3517, 0.0
      %3540 = vadd.xlane.f32.xlu0 %v3539
      %v3541 = vpop.xlane.xlu0 %3540
      %v3542 = vrcp.pop %v3520
      %v3543 = vrcp.pop %v3523
      %v3544 = vrcp.pop %v3526
      %v3545 = vrcp.pop %v3529
      %v3546 = vrcp.pop %v3532
      %v3547 = vrcp.pop %v3535
      %v3548 = vrcp.pop %v3538
      %v3549 = vrcp.pop %v3541
      %v3550 = vmul.f32 %v3503, %v3542
      %v3551 = vmul.f32 %v3505, %v3543
      %v3552 = vmul.f32 %v3507, %v3544
      %v3553 = vmul.f32 %v3509, %v3545
      %v3554 = vmul.f32 %v3511, %v3546
      %v3555 = vmul.f32 %v3513, %v3547
      %v3556 = vmul.f32 %v3515, %v3548
      %v3557 = vmul.f32 %v3517, %v3549
      %3558 = vrot.lane.b32.xlu0 %v552, 40
      %v3559 = vpop.permute.xlu0 %3558
      %3560 = vrot.lane.b32.xlu0 %v557, 40
      %v3561 = vpop.permute.xlu0 %3560
      %v3565 = vsel %vm979, %v3550, 0
      %v3568 = vsel %vm979, %v3551, 0
      %3570 = vmatprep.subr.mxu0 0.0
      %3571 = vmatpush1.msra.mxu0 %v3559
      %3572 = vmatprep.subr.mxu0 0.0
      %3573 = vmatpush1.msra.mxu0 %v3561
      %3574 = vmatprep.subr.mxu0 0.0
      %3575 = vmatpush1.msra.mxu0 0.0
      %3576 = vmatprep.subr.mxu0 0.0
      %3577 = vmatpush1.msra.mxu0 0.0
      %3578 = vmatprep.subr.mxu0 0.0
      %3579 = vmatpush1.msra.mxu0 0.0
      %3580 = vmatprep.subr.mxu0 0.0
      %3581 = vmatpush1.msra.mxu0 0.0
      %3582 = vmatprep.subr.mxu0 0.0
      %3583 = vmatpush1.msra.mxu0 0.0
      %3584 = vmatprep.subr.mxu0 0.0
      %3585 = vmatpush1.msra.mxu0 0.0
      %3586 = vmatprep.subr.mxu0 0.0
      %3587 = vmatpush1.msra.mxu0 0.0
      %3588 = vmatprep.subr.mxu0 0.0
      %3589 = vmatpush1.msra.mxu0 0.0
      %3590 = vmatprep.subr.mxu0 0.0
      %3591 = vmatpush1.msra.mxu0 0.0
      %3592 = vmatprep.subr.mxu0 0.0
      %3593 = vmatpush1.msra.mxu0 0.0
      %3594 = vmatprep.subr.mxu0 0.0
      %3595 = vmatpush1.msra.mxu0 0.0
      %3596 = vmatprep.subr.mxu0 0.0
      %3597 = vmatpush1.msra.mxu0 0.0
      %3598 = vmatprep.subr.mxu0 0.0
      %3599 = vmatpush1.msra.mxu0 0.0
      %3600 = vmatprep.subr.mxu0 0.0
      %3601 = vmatpush1.msra.mxu0 0.0
      %3602 = vmatprep.subr.mxu0 0.0
      %3603 = vmatpush1.msra.mxu0 0.0
      %3604 = vmatprep.subr.mxu0 0.0
      %3605 = vmatpush1.msra.mxu0 0.0
      %3606 = vmatprep.subr.mxu0 0.0
      %3607 = vmatpush1.msra.mxu0 0.0
      %3608 = vmatprep.subr.mxu0 0.0
      %3609 = vmatpush1.msra.mxu0 0.0
      %3610 = vmatprep.subr.mxu0 0.0
      %3611 = vmatpush1.msra.mxu0 0.0
      %3612 = vmatprep.subr.mxu0 0.0
      %3613 = vmatpush1.msra.mxu0 0.0
      %3614 = vmatprep.subr.mxu0 0.0
      %3615 = vmatpush1.msra.mxu0 0.0
      %3616 = vmatprep.subr.mxu0 0.0
      %3617 = vmatpush1.msra.mxu0 0.0
      %3618 = vmatprep.subr.mxu0 0.0
      %3619 = vmatpush1.msra.mxu0 0.0
      %3620 = vmatprep.subr.mxu0 0.0
      %3621 = vmatpush1.msra.mxu0 0.0
      %3622 = vmatprep.subr.mxu0 0.0
      %3623 = vmatpush1.msra.mxu0 0.0
      %3624 = vmatprep.subr.mxu0 0.0
      %3625 = vmatpush1.msra.mxu0 0.0
      %3626 = vmatprep.subr.mxu0 0.0
      %3627 = vmatpush1.msra.mxu0 0.0
      %3628 = vmatprep.subr.mxu0 0.0
      %3629 = vmatpush1.msra.mxu0 0.0
      %3630 = vmatprep.subr.mxu0 0.0
      %3631 = vmatpush1.msra.mxu0 0.0
      %3632 = vmatprep.subr.mxu0 0.0
      %3633 = vmatpush1.msra.mxu0 0.0
      %3634 = vmatprep.mubr.f32.mxu0 0.0
      %3635 = vmatmul.mubr.f32.gmra.mrb[0].mxu0 %v3565
      %v3636 = vpop.f32.mrb[0].mxu0
      %v3637 = vadd.f32 0.0, %v3636
      %v3638 = vpop.f32.mrb[0].mxu0
      %3639 = vmatprep.mubr.f32.mxu0 0.0
      %3640 = vmatmul.mubr.f32.gmra.mrb[0].mxu0 %v3568
      %v3641 = vpop.f32.mrb[0].mxu0
      %v3642 = vadd.f32 0.0, %v3641
      %v3643 = vpop.f32.mrb[0].mxu0
      %3644 = vdwg.mxu0
      %3645 = vrot.lane.b32.xlu0 %v562, 40
      %v3646 = vpop.permute.xlu0 %3645
      %3647 = vrot.lane.b32.xlu0 %v567, 40
      %v3648 = vpop.permute.xlu0 %3647
      %v3652 = vsel %vm979, %v3552, 0
      %v3655 = vsel %vm979, %v3553, 0
      %3657 = vmatprep.subr.mxu0 0.0
      %3658 = vmatpush1.msra.mxu0 %v3646
      %3659 = vmatprep.subr.mxu0 0.0
      %3660 = vmatpush1.msra.mxu0 %v3648
      %3661 = vmatprep.subr.mxu0 0.0
      %3662 = vmatpush1.msra.mxu0 0.0
      %3663 = vmatprep.subr.mxu0 0.0
      %3664 = vmatpush1.msra.mxu0 0.0
      %3665 = vmatprep.subr.mxu0 0.0
      %3666 = vmatpush1.msra.mxu0 0.0
      %3667 = vmatprep.subr.mxu0 0.0
      %3668 = vmatpush1.msra.mxu0 0.0
      %3669 = vmatprep.subr.mxu0 0.0
      %3670 = vmatpush1.msra.mxu0 0.0
      %3671 = vmatprep.subr.mxu0 0.0
      %3672 = vmatpush1.msra.mxu0 0.0
      %3673 = vmatprep.subr.mxu0 0.0
      %3674 = vmatpush1.msra.mxu0 0.0
      %3675 = vmatprep.subr.mxu0 0.0
      %3676 = vmatpush1.msra.mxu0 0.0
      %3677 = vmatprep.subr.mxu0 0.0
      %3678 = vmatpush1.msra.mxu0 0.0
      %3679 = vmatprep.subr.mxu0 0.0
      %3680 = vmatpush1.msra.mxu0 0.0
      %3681 = vmatprep.subr.mxu0 0.0
      %3682 = vmatpush1.msra.mxu0 0.0
      %3683 = vmatprep.subr.mxu0 0.0
      %3684 = vmatpush1.msra.mxu0 0.0
      %3685 = vmatprep.subr.mxu0 0.0
      %3686 = vmatpush1.msra.mxu0 0.0
      %3687 = vmatprep.subr.mxu0 0.0
      %3688 = vmatpush1.msra.mxu0 0.0
      %3689 = vmatprep.subr.mxu0 0.0
      %3690 = vmatpush1.msra.mxu0 0.0
      %3691 = vmatprep.subr.mxu0 0.0
      %3692 = vmatpush1.msra.mxu0 0.0
      %3693 = vmatprep.subr.mxu0 0.0
      %3694 = vmatpush1.msra.mxu0 0.0
      %3695 = vmatprep.subr.mxu0 0.0
      %3696 = vmatpush1.msra.mxu0 0.0
      %3697 = vmatprep.subr.mxu0 0.0
      %3698 = vmatpush1.msra.mxu0 0.0
      %3699 = vmatprep.subr.mxu0 0.0
      %3700 = vmatpush1.msra.mxu0 0.0
      %3701 = vmatprep.subr.mxu0 0.0
      %3702 = vmatpush1.msra.mxu0 0.0
      %3703 = vmatprep.subr.mxu0 0.0
      %3704 = vmatpush1.msra.mxu0 0.0
      %3705 = vmatprep.subr.mxu0 0.0
      %3706 = vmatpush1.msra.mxu0 0.0
      %3707 = vmatprep.subr.mxu0 0.0
      %3708 = vmatpush1.msra.mxu0 0.0
      %3709 = vmatprep.subr.mxu0 0.0
      %3710 = vmatpush1.msra.mxu0 0.0
      %3711 = vmatprep.subr.mxu0 0.0
      %3712 = vmatpush1.msra.mxu0 0.0
      %3713 = vmatprep.subr.mxu0 0.0
      %3714 = vmatpush1.msra.mxu0 0.0
      %3715 = vmatprep.subr.mxu0 0.0
      %3716 = vmatpush1.msra.mxu0 0.0
      %3717 = vmatprep.subr.mxu0 0.0
      %3718 = vmatpush1.msra.mxu0 0.0
      %3719 = vmatprep.subr.mxu0 0.0
      %3720 = vmatpush1.msra.mxu0 0.0
      %3721 = vmatprep.mubr.f32.mxu0 0.0
      %3722 = vmatmul.mubr.f32.gmra.mrb[0].mxu0 %v3652
      %v3723 = vpop.f32.mrb[0].mxu0
      %v3724 = vadd.f32 0.0, %v3723
      %v3725 = vpop.f32.mrb[0].mxu0
      %3726 = vmatprep.mubr.f32.mxu0 0.0
      %3727 = vmatmul.mubr.f32.gmra.mrb[0].mxu0 %v3655
      %v3728 = vpop.f32.mrb[0].mxu0
      %v3729 = vadd.f32 0.0, %v3728
      %v3730 = vpop.f32.mrb[0].mxu0
      %3731 = vdwg.mxu0
      %3732 = vrot.lane.b32.xlu0 %v572, 40
      %v3733 = vpop.permute.xlu0 %3732
      %3734 = vrot.lane.b32.xlu0 %v577, 40
      %v3735 = vpop.permute.xlu0 %3734
      %v3739 = vsel %vm979, %v3554, 0
      %v3742 = vsel %vm979, %v3555, 0
      %3744 = vmatprep.subr.mxu0 0.0
      %3745 = vmatpush1.msra.mxu0 %v3733
      %3746 = vmatprep.subr.mxu0 0.0
      %3747 = vmatpush1.msra.mxu0 %v3735
      %3748 = vmatprep.subr.mxu0 0.0
      %3749 = vmatpush1.msra.mxu0 0.0
      %3750 = vmatprep.subr.mxu0 0.0
      %3751 = vmatpush1.msra.mxu0 0.0
      %3752 = vmatprep.subr.mxu0 0.0
      %3753 = vmatpush1.msra.mxu0 0.0
      %3754 = vmatprep.subr.mxu0 0.0
      %3755 = vmatpush1.msra.mxu0 0.0
      %3756 = vmatprep.subr.mxu0 0.0
      %3757 = vmatpush1.msra.mxu0 0.0
      %3758 = vmatprep.subr.mxu0 0.0
      %3759 = vmatpush1.msra.mxu0 0.0
      %3760 = vmatprep.subr.mxu0 0.0
      %3761 = vmatpush1.msra.mxu0 0.0
      %3762 = vmatprep.subr.mxu0 0.0
      %3763 = vmatpush1.msra.mxu0 0.0
      %3764 = vmatprep.subr.mxu0 0.0
      %3765 = vmatpush1.msra.mxu0 0.0
      %3766 = vmatprep.subr.mxu0 0.0
      %3767 = vmatpush1.msra.mxu0 0.0
      %3768 = vmatprep.subr.mxu0 0.0
      %3769 = vmatpush1.msra.mxu0 0.0
      %3770 = vmatprep.subr.mxu0 0.0
      %3771 = vmatpush1.msra.mxu0 0.0
      %3772 = vmatprep.subr.mxu0 0.0
      %3773 = vmatpush1.msra.mxu0 0.0
      %3774 = vmatprep.subr.mxu0 0.0
      %3775 = vmatpush1.msra.mxu0 0.0
      %3776 = vmatprep.subr.mxu0 0.0
      %3777 = vmatpush1.msra.mxu0 0.0
      %3778 = vmatprep.subr.mxu0 0.0
      %3779 = vmatpush1.msra.mxu0 0.0
      %3780 = vmatprep.subr.mxu0 0.0
      %3781 = vmatpush1.msra.mxu0 0.0
      %3782 = vmatprep.subr.mxu0 0.0
      %3783 = vmatpush1.msra.mxu0 0.0
      %3784 = vmatprep.subr.mxu0 0.0
      %3785 = vmatpush1.msra.mxu0 0.0
      %3786 = vmatprep.subr.mxu0 0.0
      %3787 = vmatpush1.msra.mxu0 0.0
      %3788 = vmatprep.subr.mxu0 0.0
      %3789 = vmatpush1.msra.mxu0 0.0
      %3790 = vmatprep.subr.mxu0 0.0
      %3791 = vmatpush1.msra.mxu0 0.0
      %3792 = vmatprep.subr.mxu0 0.0
      %3793 = vmatpush1.msra.mxu0 0.0
      %3794 = vmatprep.subr.mxu0 0.0
      %3795 = vmatpush1.msra.mxu0 0.0
      %3796 = vmatprep.subr.mxu0 0.0
      %3797 = vmatpush1.msra.mxu0 0.0
      %3798 = vmatprep.subr.mxu0 0.0
      %3799 = vmatpush1.msra.mxu0 0.0
      %3800 = vmatprep.subr.mxu0 0.0
      %3801 = vmatpush1.msra.mxu0 0.0
      %3802 = vmatprep.subr.mxu0 0.0
      %3803 = vmatpush1.msra.mxu0 0.0
      %3804 = vmatprep.subr.mxu0 0.0
      %3805 = vmatpush1.msra.mxu0 0.0
      %3806 = vmatprep.subr.mxu0 0.0
      %3807 = vmatpush1.msra.mxu0 0.0
      %3808 = vmatprep.mubr.f32.mxu0 0.0
      %3809 = vmatmul.mubr.f32.gmra.mrb[0].mxu0 %v3739
      %v3810 = vpop.f32.mrb[0].mxu0
      %v3811 = vadd.f32 0.0, %v3810
      %v3812 = vpop.f32.mrb[0].mxu0
      %3813 = vmatprep.mubr.f32.mxu0 0.0
      %3814 = vmatmul.mubr.f32.gmra.mrb[0].mxu0 %v3742
      %v3815 = vpop.f32.mrb[0].mxu0
      %v3816 = vadd.f32 0.0, %v3815
      %v3817 = vpop.f32.mrb[0].mxu0
      %3818 = vdwg.mxu0
      %3819 = vrot.lane.b32.xlu0 %v582, 40
      %v3820 = vpop.permute.xlu0 %3819
      %3821 = vrot.lane.b32.xlu0 %v587, 40
      %v3822 = vpop.permute.xlu0 %3821
      %v3826 = vsel %vm979, %v3556, 0
      %v3829 = vsel %vm979, %v3557, 0
      %3831 = vmatprep.subr.mxu0 0.0
      %3832 = vmatpush1.msra.mxu0 %v3820
      %3833 = vmatprep.subr.mxu0 0.0
      %3834 = vmatpush1.msra.mxu0 %v3822
      %3835 = vmatprep.subr.mxu0 0.0
      %3836 = vmatpush1.msra.mxu0 0.0
      %3837 = vmatprep.subr.mxu0 0.0
      %3838 = vmatpush1.msra.mxu0 0.0
      %3839 = vmatprep.subr.mxu0 0.0
      %3840 = vmatpush1.msra.mxu0 0.0
      %3841 = vmatprep.subr.mxu0 0.0
      %3842 = vmatpush1.msra.mxu0 0.0
      %3843 = vmatprep.subr.mxu0 0.0
      %3844 = vmatpush1.msra.mxu0 0.0
      %3845 = vmatprep.subr.mxu0 0.0
      %3846 = vmatpush1.msra.mxu0 0.0
      %3847 = vmatprep.subr.mxu0 0.0
      %3848 = vmatpush1.msra.mxu0 0.0
      %3849 = vmatprep.subr.mxu0 0.0
      %3850 = vmatpush1.msra.mxu0 0.0
      %3851 = vmatprep.subr.mxu0 0.0
      %3852 = vmatpush1.msra.mxu0 0.0
      %3853 = vmatprep.subr.mxu0 0.0
      %3854 = vmatpush1.msra.mxu0 0.0
      %3855 = vmatprep.subr.mxu0 0.0
      %3856 = vmatpush1.msra.mxu0 0.0
      %3857 = vmatprep.subr.mxu0 0.0
      %3858 = vmatpush1.msra.mxu0 0.0
      %3859 = vmatprep.subr.mxu0 0.0
      %3860 = vmatpush1.msra.mxu0 0.0
      %3861 = vmatprep.subr.mxu0 0.0
      %3862 = vmatpush1.msra.mxu0 0.0
      %3863 = vmatprep.subr.mxu0 0.0
      %3864 = vmatpush1.msra.mxu0 0.0
      %3865 = vmatprep.subr.mxu0 0.0
      %3866 = vmatpush1.msra.mxu0 0.0
      %3867 = vmatprep.subr.mxu0 0.0
      %3868 = vmatpush1.msra.mxu0 0.0
      %3869 = vmatprep.subr.mxu0 0.0
      %3870 = vmatpush1.msra.mxu0 0.0
      %3871 = vmatprep.subr.mxu0 0.0
      %3872 = vmatpush1.msra.mxu0 0.0
      %3873 = vmatprep.subr.mxu0 0.0
      %3874 = vmatpush1.msra.mxu0 0.0
      %3875 = vmatprep.subr.mxu0 0.0
      %3876 = vmatpush1.msra.mxu0 0.0
      %3877 = vmatprep.subr.mxu0 0.0
      %3878 = vmatpush1.msra.mxu0 0.0
      %3879 = vmatprep.subr.mxu0 0.0
      %3880 = vmatpush1.msra.mxu0 0.0
      %3881 = vmatprep.subr.mxu0 0.0
      %3882 = vmatpush1.msra.mxu0 0.0
      %3883 = vmatprep.subr.mxu0 0.0
      %3884 = vmatpush1.msra.mxu0 0.0
      %3885 = vmatprep.subr.mxu0 0.0
      %3886 = vmatpush1.msra.mxu0 0.0
      %3887 = vmatprep.subr.mxu0 0.0
      %3888 = vmatpush1.msra.mxu0 0.0
      %3889 = vmatprep.subr.mxu0 0.0
      %3890 = vmatpush1.msra.mxu0 0.0
      %3891 = vmatprep.subr.mxu0 0.0
      %3892 = vmatpush1.msra.mxu0 0.0
      %3893 = vmatprep.subr.mxu0 0.0
      %3894 = vmatpush1.msra.mxu0 0.0
      %3895 = vmatprep.mubr.f32.mxu0 0.0
      %3896 = vmatmul.mubr.f32.gmra.mrb[0].mxu0 %v3826
      %v3897 = vpop.f32.mrb[0].mxu0
      %v3898 = vadd.f32 0.0, %v3897
      %v3899 = vpop.f32.mrb[0].mxu0
      %3900 = vmatprep.mubr.f32.mxu0 0.0
      %3901 = vmatmul.mubr.f32.gmra.mrb[0].mxu0 %v3829
      %v3902 = vpop.f32.mrb[0].mxu0
      %v3903 = vadd.f32 0.0, %v3902
      %v3904 = vpop.f32.mrb[0].mxu0
      %3905 = vdwg.mxu0
      %3914 = vrot.lane.b32.xlu0 %v3637, 24
      %v3915 = vpop.permute.xlu0 %3914
      %3916 = vrot.lane.b32.xlu0 %v3642, 24
      %v3917 = vpop.permute.xlu0 %3916
      %3918 = vrot.lane.b32.xlu0 %v3724, 24
      %v3919 = vpop.permute.xlu0 %3918
      %3920 = vrot.lane.b32.xlu0 %v3729, 24
      %v3921 = vpop.permute.xlu0 %3920
      %3922 = vrot.lane.b32.xlu0 %v3811, 24
      %v3923 = vpop.permute.xlu0 %3922
      %3924 = vrot.lane.b32.xlu0 %v3816, 24
      %v3925 = vpop.permute.xlu0 %3924
      %3926 = vrot.lane.b32.xlu0 %v3898, 24
      %v3927 = vpop.permute.xlu0 %3926
      %3928 = vrot.lane.b32.xlu0 %v3903, 24
      %v3929 = vpop.permute.xlu0 %3928
      %vm3938 = vcmask 261312
      %3939 = vst.msk [vmem:[#allocation2] sm:$0xff] %vm3938, %v3915
      %3940 = vst.msk [vmem:[#allocation2 + $0x8] sm:$0xff] %vm3938, %v3917
      %3941 = vst.msk [vmem:[#allocation2 + $0x10] sm:$0xff] %vm3938, %v3919
      %3942 = vst.msk [vmem:[#allocation2 + $0x18] sm:$0xff] %vm3938, %v3921
      %3943 = vst.msk [vmem:[#allocation2 + $0x20] sm:$0xff] %vm3938, %v3923
      %3944 = vst.msk [vmem:[#allocation2 + $0x28] sm:$0xff] %vm3938, %v3925
      %3945 = vst.msk [vmem:[#allocation2 + $0x30] sm:$0xff] %vm3938, %v3927
      %3946 = vst.msk [vmem:[#allocation2 + $0x38] sm:$0xff] %vm3938, %v3929
      %v3947 = vld [vmem:[#allocation2] sm:$0xff]
      %v3948 = vld [vmem:[#allocation2 + $0x8] sm:$0xff]
      %v3949 = vld [vmem:[#allocation2 + $0x10] sm:$0xff]
      %v3950 = vld [vmem:[#allocation2 + $0x18] sm:$0xff]
      %v3951 = vld [vmem:[#allocation2 + $0x20] sm:$0xff]
      %v3952 = vld [vmem:[#allocation2 + $0x28] sm:$0xff]
      %v3953 = vld [vmem:[#allocation2 + $0x30] sm:$0xff]
      %v3954 = vld [vmem:[#allocation2 + $0x38] sm:$0xff]
      %v3955 = vld [vmem:[%s5] sm:$0xff]
      %v3956 = vld [vmem:[%s5 + $0x8] sm:$0xff]
      %v3957 = vld [vmem:[%s5 + $0x10] sm:$0xff]
      %v3958 = vld [vmem:[%s5 + $0x18] sm:$0xff]
      %v3959 = vld [vmem:[%s6] sm:$0x1]
      %v3961 = vlaneseq
      %v3962 = vshrl.u32 %v3961, 7
      %v3963 = vsub.s32 0, %v3962
      %v3964 = vrot.slane %v3959, %v3963
      %v3967 = vsel %vm314, %v3947, 0
      %v3970 = vsel %vm314, %v3948, 0
      %v3973 = vsel %vm314, %v3949, 0
      %v3976 = vsel %vm314, %v3950, 0
      %v3979 = vsel %vm314, %v3951, 0
      %v3982 = vsel %vm314, %v3952, 0
      %v3985 = vsel %vm314, %v3953, 0
      %v3988 = vsel %vm314, %v3954, 0
      %3990 = vmatprep.subr.mxu0 0.0
      %3991 = vmatpush1.msra.mxu0 %v3955
      %3992 = vmatprep.subr.mxu0 0.0
      %3993 = vmatpush1.msra.mxu0 %v3956
      %3994 = vmatprep.subr.mxu0 0.0
      %3995 = vmatpush1.msra.mxu0 %v3957
      %3996 = vmatprep.subr.mxu0 0.0
      %3997 = vmatpush1.msra.mxu0 %v3958
      %3998 = vmatprep.subr.mxu0 0.0
      %3999 = vmatpush1.msra.mxu0 0.0
      %4000 = vmatprep.subr.mxu0 0.0
      %4001 = vmatpush1.msra.mxu0 0.0
      %4002 = vmatprep.subr.mxu0 0.0
      %4003 = vmatpush1.msra.mxu0 0.0
      %4004 = vmatprep.subr.mxu0 0.0
      %4005 = vmatpush1.msra.mxu0 0.0
      %4006 = vmatprep.subr.mxu0 0.0
      %4007 = vmatpush1.msra.mxu0 0.0
      %4008 = vmatprep.subr.mxu0 0.0
      %4009 = vmatpush1.msra.mxu0 0.0
      %4010 = vmatprep.subr.mxu0 0.0
      %4011 = vmatpush1.msra.mxu0 0.0
      %4012 = vmatprep.subr.mxu0 0.0
      %4013 = vmatpush1.msra.mxu0 0.0
      %4014 = vmatprep.subr.mxu0 0.0
      %4015 = vmatpush1.msra.mxu0 0.0
      %4016 = vmatprep.subr.mxu0 0.0
      %4017 = vmatpush1.msra.mxu0 0.0
      %4018 = vmatprep.subr.mxu0 0.0
      %4019 = vmatpush1.msra.mxu0 0.0
      %4020 = vmatprep.subr.mxu0 0.0
      %4021 = vmatpush1.msra.mxu0 0.0
      %4022 = vmatprep.subr.mxu0 0.0
      %4023 = vmatpush1.msra.mxu0 0.0
      %4024 = vmatprep.subr.mxu0 0.0
      %4025 = vmatpush1.msra.mxu0 0.0
      %4026 = vmatprep.subr.mxu0 0.0
      %4027 = vmatpush1.msra.mxu0 0.0
      %4028 = vmatprep.subr.mxu0 0.0
      %4029 = vmatpush1.msra.mxu0 0.0
      %4030 = vmatprep.subr.mxu0 0.0
      %4031 = vmatpush1.msra.mxu0 0.0
      %4032 = vmatprep.subr.mxu0 0.0
      %4033 = vmatpush1.msra.mxu0 0.0
      %4034 = vmatprep.subr.mxu0 0.0
      %4035 = vmatpush1.msra.mxu0 0.0
      %4036 = vmatprep.subr.mxu0 0.0
      %4037 = vmatpush1.msra.mxu0 0.0
      %4038 = vmatprep.subr.mxu0 0.0
      %4039 = vmatpush1.msra.mxu0 0.0
      %4040 = vmatprep.subr.mxu0 0.0
      %4041 = vmatpush1.msra.mxu0 0.0
      %4042 = vmatprep.subr.mxu0 0.0
      %4043 = vmatpush1.msra.mxu0 0.0
      %4044 = vmatprep.subr.mxu0 0.0
      %4045 = vmatpush1.msra.mxu0 0.0
      %4046 = vmatprep.subr.mxu0 0.0
      %4047 = vmatpush1.msra.mxu0 0.0
      %4048 = vmatprep.subr.mxu0 0.0
      %4049 = vmatpush1.msra.mxu0 0.0
      %4050 = vmatprep.subr.mxu0 0.0
      %4051 = vmatpush1.msra.mxu0 0.0
      %4052 = vmatprep.subr.mxu0 0.0
      %4053 = vmatpush1.msra.mxu0 0.0
      %4054 = vmatprep.mubr.f32.mxu0 0.0
      %4055 = vmatmul.mubr.f32.gmra.mrb[0].mxu0 %v3967
      %v4056 = vpop.f32.mrb[0].mxu0
      %v4057 = vadd.f32 %v3964, %v4056
      %v4058 = vpop.f32.mrb[0].mxu0
      %4059 = vmatprep.mubr.f32.mxu0 0.0
      %4060 = vmatmul.mubr.f32.gmra.mrb[0].mxu0 %v3970
      %v4061 = vpop.f32.mrb[0].mxu0
      %v4062 = vadd.f32 %v3964, %v4061
      %v4063 = vpop.f32.mrb[0].mxu0
      %4064 = vmatprep.mubr.f32.mxu0 0.0
      %4065 = vmatmul.mubr.f32.gmra.mrb[0].mxu0 %v3973
      %v4066 = vpop.f32.mrb[0].mxu0
      %v4067 = vadd.f32 %v3964, %v4066
      %v4068 = vpop.f32.mrb[0].mxu0
      %4069 = vmatprep.mubr.f32.mxu0 0.0
      %4070 = vmatmul.mubr.f32.gmra.mrb[0].mxu0 %v3976
      %v4071 = vpop.f32.mrb[0].mxu0
      %v4072 = vadd.f32 %v3964, %v4071
      %v4073 = vpop.f32.mrb[0].mxu0
      %4074 = vmatprep.mubr.f32.mxu0 0.0
      %4075 = vmatmul.mubr.f32.gmra.mrb[0].mxu0 %v3979
      %v4076 = vpop.f32.mrb[0].mxu0
      %v4077 = vadd.f32 %v3964, %v4076
      %v4078 = vpop.f32.mrb[0].mxu0
      %4079 = vmatprep.mubr.f32.mxu0 0.0
      %4080 = vmatmul.mubr.f32.gmra.mrb[0].mxu0 %v3982
      %v4081 = vpop.f32.mrb[0].mxu0
      %v4082 = vadd.f32 %v3964, %v4081
      %v4083 = vpop.f32.mrb[0].mxu0
      %4084 = vmatprep.mubr.f32.mxu0 0.0
      %4085 = vmatmul.mubr.f32.gmra.mrb[0].mxu0 %v3985
      %v4086 = vpop.f32.mrb[0].mxu0
      %v4087 = vadd.f32 %v3964, %v4086
      %v4088 = vpop.f32.mrb[0].mxu0
      %4089 = vmatprep.mubr.f32.mxu0 0.0
      %4090 = vmatmul.mubr.f32.gmra.mrb[0].mxu0 %v3988
      %v4091 = vpop.f32.mrb[0].mxu0
      %v4092 = vadd.f32 %v3964, %v4091
      %v4093 = vpop.f32.mrb[0].mxu0
      %4094 = vdwg.mxu0
      %4095 = vst.msk [vmem:[%s305] sm:$0xff] %vm314, %v4057
      %4096 = vst.msk [vmem:[%s305 + $0x8] sm:$0xff] %vm314, %v4062
      %4097 = vst.msk [vmem:[%s305 + $0x10] sm:$0xff] %vm314, %v4067
      %4098 = vst.msk [vmem:[%s305 + $0x18] sm:$0xff] %vm314, %v4072
      %4099 = vst.msk [vmem:[%s305 + $0x20] sm:$0xff] %vm314, %v4077
      %4100 = vst.msk [vmem:[%s305 + $0x28] sm:$0xff] %vm314, %v4082
      %4101 = vst.msk [vmem:[%s305 + $0x30] sm:$0xff] %vm314, %v4087
      %4102 = vst.msk [vmem:[%s305 + $0x38] sm:$0xff] %vm314, %v4092
      %p4103 = scmp.lt.s32.totalorder %s19, 1
      %s4104 = scalar_select %p4103, %s19, 1
      %s4105 = smul.addr %s4104, 8
      %s4106 = smul.addr %s4105, 8
      %s4107 = scalar_lea.vmem %s8, %s4106
      // Predicated region
      $region53: #{_lambda_.6} parent=51 // pred_check
        %p4108 = pneg %p210
      $region54: #{_lambda_.6} parent=51 // pred_check_branch
        %4110 = sbr.rel (%p4108) target = $region56
      $region55: #{_lambda_.6} parent=51 // pred_region
        _
      $region56: #{_lambda_.6} parent=51 // pred_fallthru
        _
    $region52: #{_lambda_.6} parent=5 // pred_fallthru
      _
    %p4111 = scmp.le.s32.totalorder 2, %s14
    // Predicated region
    $region57: #{_lambda_.6} parent=5 // pred_check
      %p4112 = pneg %p4111
    $region58: #{_lambda_.6} parent=5 // pred_check_branch
      %4114 = sbr.rel (%p4112) target = $region60
    $region59: #{_lambda_.6} parent=5 // pred_region
      %s4115 = ssub.s32 %s14, 2
      // Predicated region
      $region61: #{_lambda_.6} parent=59 // pred_check
        %p4116 = pneg %p216
      $region62: #{_lambda_.6} parent=59 // pred_check_branch
        %4118 = sbr.rel (%p4116) target = $region64
      $region63: #{_lambda_.6} parent=59 // pred_region
        %p4119 = scmp.lt.s32.totalorder %s20, 1
        %s4120 = scalar_select %p4119, %s20, 1
        %s4121 = smul.addr %s4120, 8
        %s4122 = smul.addr %s4121, 8
        %s4123 = scalar_lea.vmem %s8, %s4122
      $region64: #{_lambda_.6} parent=59 // pred_fallthru
        _
    $region60: #{_lambda_.6} parent=5 // pred_fallthru
      _
  $region6: #{_lambda_.6} parent=0 // loop_footer
    %s18 = sadd.s32 1, %s14
  $region7: #{_lambda_.6} parent=0 // loop_footer_branch
    %13 = sbr.rel target = $region3
  $region8: #{_lambda_.6} parent=0 // loop_exit
    _

</llo_original>
